<compile_context>
chip_gen: v7x
topology: tpu7x:2x2x1
jax: 0.10.0
libtpu: 0.0.40
codegen_flags: <defaults>
</compile_context>

<pallas_src>
import functools

import numpy as np
import jax
import jax.numpy as jnp
from jax.experimental import pallas as pl
from jax.experimental.pallas import tpu as pltpu


# ---------------------------------------------------------------------------
# Generation-aware VMEM budgeting
# ---------------------------------------------------------------------------
def _vmem_limit_bytes():
    try:
        cap = int(pltpu.get_tpu_info().vmem_capacity_bytes)
    except Exception:
        cap = 64 * 1024 * 1024  # conservative (v7x physical)
    # ~100 MiB on 128 MiB parts (v5e/v6e), ~48 MiB on 64 MiB parts (v7x).
    return max(32 * 1024 * 1024, min(int(cap * 0.78), cap - 16 * 1024 * 1024))


VMEM_LIMIT_BYTES = _vmem_limit_bytes()
VMEM_BUDGET_BYTES = int(VMEM_LIMIT_BYTES * 0.85)  # headroom for compiler scratch


def _probe_const_buffering():
    """Use pl.Buffered(1) for time-invariant operands if this JAX/Mosaic build
    supports it; fall back to default double-buffering on any failure."""
    try:
        spec = pl.BlockSpec((8, 128), lambda i: (0, 0),
                            pipeline_mode=pl.Buffered(1))

        def k(x_ref, o_ref):
            o_ref[...] = x_ref[...] + 1.0

        out = pl.pallas_call(
            k,
            out_shape=jax.ShapeDtypeStruct((8, 128), jnp.float32),
            grid_spec=pltpu.PrefetchScalarGridSpec(
                num_scalar_prefetch=0,
                grid=(2,),
                in_specs=[spec],
                out_specs=pl.BlockSpec((8, 128), lambda i: (0, 0)),
            ),
        )(jnp.zeros((8, 128), jnp.float32))
        jax.block_until_ready(out)
        return {"pipeline_mode": pl.Buffered(1)}
    except Exception:
        return {}


_CONST_BUF = _probe_const_buffering()


# ---------------------------------------------------------------------------
# small helpers
# ---------------------------------------------------------------------------
def _round_up(x, m):
    return (x + m - 1) // m * m


def _pad_rows(a, rows):
    return jnp.pad(a, ((0, rows - a.shape[0]), (0, 0)))


def _pack_gate_cols(w, hp):
    """(3, I, H) per-gate weights -> fused (I, 3*hp); gate g at cols [g*hp, g*hp+H)."""
    _, i, h = w.shape
    out = jnp.zeros((i, 3 * hp), jnp.float32)
    for g in range(3):
        out = out.at[:, g * hp:g * hp + h].set(w[g])
    return out


def _pack_gate_bias(b, hp):
    """(3, H) per-gate biases -> fused (3*hp,) vector."""
    h = b.shape[1]
    out = jnp.zeros((3 * hp,), jnp.float32)
    for g in range(3):
        out = out.at[g * hp:g * hp + h].set(b[g])
    return out


def _pick_chunk(t, bb, hp, budget):
    """Timesteps per grid iteration: largest multiple of 8 (<=64) whose
    double-buffered bf16 gi/out blocks + resident constants fit `budget`."""
    g = 3 * hp
    const_bytes = (2 * (bb * g + bb * hp + hp) * 4   # gbias, h0, bhn (f32, x2 buf)
                   + 2 * hp * g * 2                  # W_hh bf16 (x2 buf)
                   + 3 * bb * hp * 4)                # hfin out (x2 buf) + scratch
    per_step = 2 * 2 * bb * (g + hp)                 # gi + out blocks, bf16, x2 buf
    avail = max(budget - const_bytes, 8 * per_step)
    cap = max(8, min(64, (avail // per_step) // 8 * 8))
    chunk = min(cap, _round_up(t, 8))
    n_chunks = -(-t // chunk)
    return _round_up(-(-t // n_chunks), 8)           # re-balance to minimize T padding


def _matmul_tiles(m, k, n, x_bytes, w_bytes, o_bytes, budget):
    """Pick (tm, tn): tn lane-dense, then tm grown to cover as much of M as the
    VMEM budget allows so the (K, N) weight streams from HBM ~once."""
    tn = min(_round_up(n, 128), 2048)

    def blk_bytes(tm, tn):
        return 2 * (k * tn * w_bytes + tn * 4 + tm * (k * x_bytes + tn * o_bytes))

    while tn > 128 and blk_bytes(8, tn) > budget:
        tn = max(128, (tn // 2) // 128 * 128)

    tm_cap = min(_round_up(m, 8), 4096)
    tm = 8
    cand = 16
    while cand <= tm_cap:
        if blk_bytes(cand, tn) <= budget:
            tm = cand
        cand *= 2
    if blk_bytes(tm_cap, tn) <= budget:
        tm = tm_cap
    return tm, tn


# ---------------------------------------------------------------------------
# Tiled matmul (+ per-column bias) kernel: used for the hoisted x@W_ih
# precompute, the context@W_ctx bias, and the final dense projection.
# ---------------------------------------------------------------------------
def _matmul_bias_kernel(x_ref, w_ref, b_ref, o_ref):
    o_ref[...] = (jnp.dot(x_ref[...], w_ref[...],
                          preferred_element_type=jnp.float32)
                  + b_ref[...]).astype(o_ref.dtype)


def matmul_bias(x, w, b, out_dtype=jnp.float32):
    """x: (M, K), w: (K, N), b: (N,) f32. Tiled over (M, N), full K per block."""
    m, k = x.shape
    n = w.shape[1]
    tm, tn = _matmul_tiles(m, k, n, x.dtype.itemsize, w.dtype.itemsize,
                           np.dtype(out_dtype).itemsize, VMEM_BUDGET_BYTES)
    mp, np_ = _round_up(m, tm), _round_up(n, tn)

    xp = x if mp == m else jnp.pad(x, ((0, mp - m), (0, 0)))
    wp = w if np_ == n else jnp.pad(w, ((0, 0), (0, np_ - n)))
    bpad = (b if np_ == n else jnp.pad(b, (0, np_ - n)))
    bpad = bpad.reshape(1, np_).astype(jnp.float32)

    out = pl.pallas_call(
        _matmul_bias_kernel,
        out_shape=jax.ShapeDtypeStruct((mp, np_), out_dtype),
        grid_spec=pltpu.PrefetchScalarGridSpec(
            num_scalar_prefetch=0,
            grid=(mp // tm, np_ // tn),
            in_specs=[
                pl.BlockSpec((tm, k), lambda i, j: (i, 0)),
                pl.BlockSpec((k, tn), lambda i, j: (0, j)),
                pl.BlockSpec((1, tn), lambda i, j: (0, j)),
            ],
            out_specs=pl.BlockSpec((tm, tn), lambda i, j: (i, j)),
        ),
        compiler_params=pltpu.CompilerParams(
            dimension_semantics=("parallel", "parallel"),
            vmem_limit_bytes=VMEM_LIMIT_BYTES),
    )(xp, wp, bpad)
    return out[:m, :n]


# ---------------------------------------------------------------------------
# Recurrent GRU-layer kernel.  Grid = (batch-blocks "parallel", time-chunks
# "arbitrary").  Inside a chunk only h @ W_hh (one fused (bb,Hp)@(Hp,3Hp) bf16
# matmul) + gate math runs per step; h is carried in VMEM scratch.
# Gate order follows PyTorch: [r, z, n].  Layout is batch-major everywhere.
# ---------------------------------------------------------------------------
def _gru_layer_kernel(*refs, hp, chunk, t_real, add_gbias, static_unroll):
    if add_gbias:
        gi_ref, gbias_ref, h0_ref, whh_ref, bhn_ref, out_ref, hfin_ref, h_scr = refs
    else:
        gi_ref, h0_ref, whh_ref, bhn_ref, out_ref, hfin_ref, h_scr = refs
        gbias_ref = None

    c = pl.program_id(1)

    @pl.when(c == 0)
    def _init():
        h_scr[...] = h0_ref[...]

    # Hoisted loop invariants (JAX does not CSE broadcast_in_dim).
    whh = whh_ref[...]                                    # (Hp, 3Hp) bf16
    bhn = jnp.broadcast_to(bhn_ref[...], h_scr.shape)     # (bb, Hp) f32
    gbias = gbias_ref[...] if add_gbias else None         # (bb, 3Hp) f32 (layer 0)
    has_tail = (t_real % chunk) != 0

    def step(tt, h):
        gi = gi_ref[:, tt, :].astype(jnp.float32)         # (bb, 3Hp)
        if add_gbias:
            gi = gi + gbias
        gh = jnp.dot(h.astype(jnp.bfloat16), whh,
                     preferred_element_type=jnp.float32)  # (bb, 3Hp)
        # Gate-by-gate so the wide 3Hp temporaries die early (vreg pressure).
        r = jax.nn.sigmoid(gi[:, :hp] + gh[:, :hp])
        z = jax.nn.sigmoid(gi[:, hp:2 * hp] + gh[:, hp:2 * hp])
        n = jnp.tanh(gi[:, 2 * hp:] + r * (gh[:, 2 * hp:] + bhn))
        h_new = (1.0 - z) * n + z * h
        if has_tail:
            h_new = jnp.where(c * chunk + tt < t_real, h_new, h)
        out_ref[:, tt, :] = h_new.astype(out_ref.dtype)
        return h_new

    if static_unroll:
        # Small working set: fully unrolled with static indices / static stores.
        h = h_scr[...]
        for tt in range(chunk):
            h = step(tt, h)
    else:
        # Large Hp: cap unroll to keep vreg pressure / spills in check.
        h = jax.lax.fori_loop(0, chunk, step, h_scr[...], unroll=2)

    h_scr[...] = h

    @pl.when(c == pl.num_programs(1) - 1)
    def _final():
        hfin_ref[...] = h


def gru_layer(gi_seq, h0, w_hh, b_hn, gbias=None, *, chunk, t_real, bb):
    """gi_seq: (Bp, Tp, 3Hp) bf16 precomputed x@W_ih (+ folded bias for l>0);
       gbias:  (Bp, 3Hp) f32 per-batch gate bias (layer 0 only, else None);
       h0: (Bp, Hp) f32; w_hh: (Hp, 3Hp) bf16; b_hn: (1, Hp) f32.
       Returns (h_seq (Bp, Tp, Hp) bf16, h_T (Bp, Hp) f32)."""
    bp, tp, g = gi_seq.shape
    hp = g // 3
    nb = bp // bb
    n_chunks = tp // chunk
    add_gbias = gbias is not None
    static_unroll = (bb * hp) <= 4096   # heuristic vreg-pressure bound

    kernel = functools.partial(
        _gru_layer_kernel, hp=hp, chunk=chunk, t_real=t_real,
        add_gbias=add_gbias, static_unroll=static_unroll)

    in_specs = [pl.BlockSpec((bb, chunk, g), lambda bl, c: (bl, c, 0))]
    operands = [gi_seq]
    if add_gbias:
        in_specs.append(pl.BlockSpec((bb, g), lambda bl, c: (bl, 0), **_CONST_BUF))
        operands.append(gbias)
    in_specs.extend([
        pl.BlockSpec((bb, hp), lambda bl, c: (bl, 0), **_CONST_BUF),
        pl.BlockSpec((hp, g), lambda bl, c: (0, 0), **_CONST_BUF),
        pl.BlockSpec((1, hp), lambda bl, c: (0, 0), **_CONST_BUF),
    ])
    operands.extend([h0, w_hh, b_hn])

    out_seq, h_final = pl.pallas_call(
        kernel,
        out_shape=(
            jax.ShapeDtypeStruct((bp, tp, hp), jnp.bfloat16),
            jax.ShapeDtypeStruct((bp, hp), jnp.float32),
        ),
        grid_spec=pltpu.PrefetchScalarGridSpec(
            num_scalar_prefetch=0,
            grid=(nb, n_chunks),
            in_specs=in_specs,
            out_specs=[
                pl.BlockSpec((bb, chunk, hp), lambda bl, c: (bl, c, 0)),
                pl.BlockSpec((bb, hp), lambda bl, c: (bl, 0)),
            ],
            scratch_shapes=[pltpu.VMEM((bb, hp), jnp.float32)],
        ),
        compiler_params=pltpu.CompilerParams(
            dimension_semantics=("parallel", "arbitrary"),
            vmem_limit_bytes=VMEM_LIMIT_BYTES),
    )(*operands)
    return out_seq, h_final


# ---------------------------------------------------------------------------
# Seq2SeqDecoder forward
# ---------------------------------------------------------------------------
class Seq2SeqDecoderPallas:
    def __init__(self, vocab_size, embed_size, num_hiddens, num_layers,
                 dropout: float = 0.0, key=None):
        # TODO(synk): dropout between GRU layers is not applied (eval / dropout=0).
        # TODO(synk): W_hh could be staged once per chunk via matmul_push_rhs/acc_lhs.
        self.vocab_size = vocab_size
        self.embed_size = embed_size
        self.num_hiddens = num_hiddens
        self.num_layers = num_layers
        self.h_pad = _round_up(num_hiddens, 128)

        e, h, hp = embed_size, num_hiddens, self.h_pad
        key = jax.random.PRNGKey(0) if key is None else key
        ks = jax.random.split(key, 3 + 4 * num_layers)
        scale = 0.1

        # Embedding table (vocab, E) f32 (gathered values cast to bf16 at use).
        self.embedding = scale * jax.random.normal(ks[0], (vocab_size, e), jnp.float32)

        # GRU params in fused / padded layout.
        self.w_ih, self.w_hh, self.gbias, self.b_hn = [], [], [], []
        self.w_emb0 = None
        self.w_ctx0 = None
        for l in range(num_layers):
            in_dim = (e + h) if l == 0 else h
            k0, k1, k2, k3 = ks[1 + 4 * l:5 + 4 * l]
            w_ih_u = scale * jax.random.normal(k0, (3, in_dim, h), jnp.float32)
            w_hh_u = scale * jax.random.normal(k1, (3, h, h), jnp.float32)
            b_ih_u = scale * jax.random.normal(k2, (3, h), jnp.float32)
            b_hh_u = scale * jax.random.normal(k3, (3, h), jnp.float32)

            if l == 0:
                # Split input weights: embedding part (hoisted precompute) and
                # context part (time-invariant -> folded into gate bias).
                self.w_emb0 = _pack_gate_cols(w_ih_u[:, :e, :], hp).astype(jnp.bfloat16)
                self.w_ctx0 = _pad_rows(_pack_gate_cols(w_ih_u[:, e:, :], hp),
                                        hp).astype(jnp.bfloat16)
                self.w_ih.append(None)
            else:
                self.w_ih.append(_pad_rows(_pack_gate_cols(w_ih_u, hp),
                                           hp).astype(jnp.bfloat16))
            self.w_hh.append(_pad_rows(_pack_gate_cols(w_hh_u, hp),
                                       hp).astype(jnp.bfloat16))
            # Combined biases: r,z -> b_ih+b_hh ; n -> b_ih only (b_hh_n separate).
            comb = jnp.stack([b_ih_u[0] + b_hh_u[0],
                              b_ih_u[1] + b_hh_u[1],
                              b_ih_u[2]], axis=0)
            self.gbias.append(_pack_gate_bias(comb, hp))                     # (3Hp,)
            self.b_hn.append(jnp.pad(b_hh_u[2], (0, hp - h)).reshape(1, hp))  # (1, Hp)

        # Dense: (Hp, V) bf16 (zero rows for padded H) + (V,) f32 bias.
        dense_w_u = scale * jax.random.normal(ks[-2], (h, vocab_size), jnp.float32)
        self.dense_w = _pad_rows(dense_w_u, hp).astype(jnp.bfloat16)
        self.dense_b = scale * jax.random.normal(ks[-1], (vocab_size,), jnp.float32)

    def init_state(self, enc_all_outputs, *args):
        return enc_all_outputs

    @functools.partial(jax.jit, static_argnums=0)
    def forward(self, x, state):
        # x: (B, T) int tokens; state = (enc_output (T_enc,B,H), hidden (L,B,H)).
        enc_output, hidden_state = state
        b, t = x.shape
        h, hp = self.num_hiddens, self.h_pad
        g = 3 * hp
        bp = _round_up(max(b, 1), 8)
        nb = 2 if (bp >= 16 and bp % 16 == 0) else 1   # 2nd TensorCore on v7x
        bb = bp // nb
        chunk = _pick_chunk(t, bb, hp, VMEM_BUDGET_BYTES)
        tp = _round_up(t, chunk)

        # Embedding lookup (plain-JAX gather), batch-major, zero-padded B & T.
        embs = jnp.take(self.embedding, x.astype(jnp.int32), axis=0)    # (B, T, E)
        embs = jnp.pad(embs, ((0, bp - b), (0, tp - t), (0, 0))).astype(jnp.bfloat16)

        # context = enc_output[-1] -> (Bp, Hp) bf16 (zero-padded).
        ctx = jnp.pad(enc_output[-1], ((0, bp - b), (0, hp - h))).astype(jnp.bfloat16)

        # Initial hidden -> (L, Bp, Hp) f32 (zero-padded).
        h0 = jnp.pad(hidden_state,
                     ((0, 0), (0, bp - b), (0, hp - h))).astype(jnp.float32)

        # Layer 0: hoisted input matmul over all timesteps (bf16 gi) + context
        # and constant gate biases folded into one per-batch bias.
        gi = matmul_bias(embs.reshape(bp * tp, self.embed_size), self.w_emb0,
                         jnp.zeros((g,), jnp.float32),
                         out_dtype=jnp.bfloat16).reshape(bp, tp, g)
        gbias0 = matmul_bias(ctx, self.w_ctx0, self.gbias[0])            # (Bp, 3Hp)

        new_hiddens = []
        layer_in = None
        for l in range(self.num_layers):
            if l > 0:
                # Constant gate bias folded into the hoisted matmul -> no
                # per-step bias add inside the recurrence for upper layers.
                gi = matmul_bias(layer_in.reshape(bp * tp, hp), self.w_ih[l],
                                 self.gbias[l],
                                 out_dtype=jnp.bfloat16).reshape(bp, tp, g)
            layer_in, h_t = gru_layer(gi, h0[l], self.w_hh[l], self.b_hn[l],
                                      gbias=gbias0 if l == 0 else None,
                                      chunk=chunk, t_real=t, bb=bb)
            new_hiddens.append(h_t)
        hidden_new = jnp.stack(new_hiddens, axis=0)[:, :b, :h]           # (L, B, H)

        # Dense projection straight off the batch-major activations (no transpose).
        feats = layer_in.reshape(bp * tp, hp)                            # bf16
        logits = matmul_bias(feats, self.dense_w, self.dense_b)          # (Bp*Tp, V) f32
        logits = logits.reshape(bp, tp, self.vocab_size)[:b, :t]         # (B, T, V)

        return logits, [enc_output, hidden_new]


if __name__ == "__main__":
    vocab_size, embed_size, num_hiddens, num_layers = 20, 8, 32, 2
    batch, seq, enc_seq = 2, 8, 6

    key = jax.random.PRNGKey(0)
    k_tok, k_enc, k_hid, k_params = jax.random.split(key, 4)

    dec = Seq2SeqDecoderPallas(vocab_size, embed_size, num_hiddens,
                               num_layers, dropout=0.0, key=k_params)

    x = jax.random.randint(k_tok, (batch, seq), 0, vocab_size, jnp.int32)
    enc_output = 0.1 * jax.random.normal(
        k_enc, (enc_seq, batch, num_hiddens), jnp.float32)
    hidden_state = 0.1 * jax.random.normal(
        k_hid, (num_layers, batch, num_hiddens), jnp.float32)

    state = dec.init_state((enc_output, hidden_state))
    outputs, (enc_out2, hidden_new) = dec.forward(x, state)

    jax.block_until_ready(outputs)
    jax.block_until_ready(hidden_new)

    assert outputs.shape == (batch, seq, vocab_size), outputs.shape
    assert hidden_new.shape == (num_layers, batch, num_hiddens), hidden_new.shape
    assert bool(jnp.all(jnp.isfinite(outputs)))
    assert bool(jnp.all(jnp.isfinite(hidden_new)))
    print("KERNEL_OK")
</pallas_src>

<mosaic_0001>
module attributes {stable_mosaic.version = 11 : i64} {
  func.func @k(%arg0: i32, %arg1: memref<8x128xf32, #tpu.memory_space<vmem>>, %arg2: memref<8x128xf32, #tpu.memory_space<vmem>>) attributes {dimension_semantics = [#tpu.dimension_semantics<arbitrary>], iteration_bounds = array<i64: 2>, scalar_prefetch = 0 : i64, scratch_operands = 0 : i64, tpu.core_type = #tpu.core_type<tc>, window_params = [{pipeline_mode = #tpu.pipeline_mode<synchronous>, transform_indices = @transform_0, window_bounds = array<i64: 8, 128>}, {pipeline_mode = #tpu.pipeline_mode<synchronous>, transform_indices = @transform_1, window_bounds = array<i64: 8, 128>}]} {
    %c0 = arith.constant 0 : index
    %c0_0 = arith.constant 0 : index
    %0 = vector.load %arg1[%c0, %c0_0] : memref<8x128xf32, #tpu.memory_space<vmem>>, vector<8x128xf32>
    %cst = arith.constant 1.000000e+00 : f32
    %1 = vector.broadcast %cst : f32 to vector<8x128xf32>
    %2 = arith.addf %0, %1 : vector<8x128xf32>
    %c0_1 = arith.constant 0 : index
    %c0_2 = arith.constant 0 : index
    %3 = vector.load %arg2[%c0_1, %c0_2] : memref<8x128xf32, #tpu.memory_space<vmem>>, vector<8x128xf32>
    tpu.vector_store %arg2[%c0_1, %c0_2], %2 {strides = array<i32>} : memref<8x128xf32, #tpu.memory_space<vmem>>, vector<8x128xf32>,
    return
  }
  func.func @transform_0(%arg0: i32) -> (i32, i32) {
    %c0_i32 = arith.constant 0 : i32
    %c0_i32_0 = arith.constant 0 : i32
    %c0_i32_1 = arith.constant 0 : i32
    return %c0_i32, %c0_i32_0 : i32, i32
  }
  func.func @transform_1(%arg0: i32) -> (i32, i32) {
    %c0_i32 = arith.constant 0 : i32
    %c0_i32_0 = arith.constant 0 : i32
    %c0_i32_1 = arith.constant 0 : i32
    return %c0_i32, %c0_i32_0 : i32, i32
  }
}

module attributes {stable_mosaic.version = 11 : i64} {
  func.func @_matmul_bias_kernel(%arg0: i32, %arg1: i32, %arg2: memref<8x128xbf16, #tpu.memory_space<vmem>>, %arg3: memref<128x384xbf16, #tpu.memory_space<vmem>>, %arg4: memref<1x384xf32, #tpu.memory_space<vmem>>, %arg5: memref<8x384xf32, #tpu.memory_space<vmem>>) attributes {dimension_semantics = [#tpu.dimension_semantics<parallel>, #tpu.dimension_semantics<parallel>], iteration_bounds = array<i64: 1, 1>, scalar_prefetch = 0 : i64, scratch_operands = 0 : i64, tpu.core_type = #tpu.core_type<tc>, window_params = [{transform_indices = @transform_0, window_bounds = array<i64: 8, 128>}, {transform_indices = @transform_1, window_bounds = array<i64: 128, 384>}, {transform_indices = @transform_2, window_bounds = array<i64: 1, 384>}, {transform_indices = @transform_3, window_bounds = array<i64: 8, 384>}]} {
    %c0 = arith.constant 0 : index
    %c0_0 = arith.constant 0 : index
    %0 = vector.load %arg2[%c0, %c0_0] : memref<8x128xbf16, #tpu.memory_space<vmem>>, vector<8x128xbf16>
    %c0_1 = arith.constant 0 : index
    %c0_2 = arith.constant 0 : index
    %1 = vector.load %arg3[%c0_1, %c0_2] : memref<128x384xbf16, #tpu.memory_space<vmem>>, vector<128x384xbf16>
    %cst = arith.constant dense<0.000000e+00> : vector<8x384xf32>
    %2 = tpu.matmul %0, %1, %cst {dimension_numbers = #tpu.dot_dimension_numbers<[1], [0], [0], [1], [0, 0, 1, 1], [], []>} : vector<8x128xbf16>, vector<128x384xbf16>, vector<8x384xf32> -> vector<8x384xf32>
    %c0_3 = arith.constant 0 : index
    %c0_4 = arith.constant 0 : index
    %3 = vector.load %arg4[%c0_3, %c0_4] : memref<1x384xf32, #tpu.memory_space<vmem>>, vector<1x384xf32>
    %4 = vector.broadcast %3 : vector<1x384xf32> to vector<8x384xf32>
    %5 = arith.addf %2, %4 : vector<8x384xf32>
    %c0_5 = arith.constant 0 : index
    %c0_6 = arith.constant 0 : index
    %6 = vector.load %arg5[%c0_5, %c0_6] : memref<8x384xf32, #tpu.memory_space<vmem>>, vector<8x384xf32>
    tpu.vector_store %arg5[%c0_5, %c0_6], %5 {strides = array<i32>} : memref<8x384xf32, #tpu.memory_space<vmem>>, vector<8x384xf32>,
    return
  }
  func.func @transform_0(%arg0: i32, %arg1: i32) -> (i32, i32) {
    %c0_i32 = arith.constant 0 : i32
    %c0_i32_0 = arith.constant 0 : i32
    return %arg0, %c0_i32 : i32, i32
  }
  func.func @transform_1(%arg0: i32, %arg1: i32) -> (i32, i32) {
    %c0_i32 = arith.constant 0 : i32
    %c0_i32_0 = arith.constant 0 : i32
    return %c0_i32, %arg1 : i32, i32
  }
  func.func @transform_2(%arg0: i32, %arg1: i32) -> (i32, i32) {
    %c0_i32 = arith.constant 0 : i32
    %c0_i32_0 = arith.constant 0 : i32
    return %c0_i32, %arg1 : i32, i32
  }
  func.func @transform_3(%arg0: i32, %arg1: i32) -> (i32, i32) {
    %c0_i32 = arith.constant 0 : i32
    return %arg0, %arg1 : i32, i32
  }
}

module attributes {stable_mosaic.version = 11 : i64} {
  func.func @_gru_layer_kernel(%arg0: i32, %arg1: i32, %arg2: memref<8x8x384xbf16, #tpu.memory_space<vmem>>, %arg3: memref<8x384xf32, #tpu.memory_space<vmem>>, %arg4: memref<8x128xf32, #tpu.memory_space<vmem>>, %arg5: memref<128x384xbf16, #tpu.memory_space<vmem>>, %arg6: memref<1x128xf32, #tpu.memory_space<vmem>>, %arg7: memref<8x8x128xbf16, #tpu.memory_space<vmem>>, %arg8: memref<8x128xf32, #tpu.memory_space<vmem>>, %arg9: memref<8x128xf32, #tpu.memory_space<vmem>>) attributes {dimension_semantics = [#tpu.dimension_semantics<parallel>, #tpu.dimension_semantics<arbitrary>], iteration_bounds = array<i64: 1, 1>, scalar_prefetch = 0 : i64, scratch_operands = 1 : i64, tpu.core_type = #tpu.core_type<tc>, window_params = [{transform_indices = @transform_0, window_bounds = array<i64: 8, 8, 384>}, {transform_indices = @transform_1, window_bounds = array<i64: 8, 384>}, {transform_indices = @transform_2, window_bounds = array<i64: 8, 128>}, {pipeline_mode = #tpu.pipeline_mode<synchronous>, transform_indices = @transform_3, window_bounds = array<i64: 128, 384>}, {pipeline_mode = #tpu.pipeline_mode<synchronous>, transform_indices = @transform_4, window_bounds = array<i64: 1, 128>}, {transform_indices = @transform_5, window_bounds = array<i64: 8, 8, 128>}, {transform_indices = @transform_6, window_bounds = array<i64: 8, 128>}]} {
    %c0_i32 = arith.constant 0 : i32
    %0 = arith.cmpi eq, %arg1, %c0_i32 : i32
    %1 = arith.extui %0 : i1 to i32
    %c0_i32_0 = arith.constant 0 : i32
    %2 = arith.cmpi ne, %1, %c0_i32_0 : i32
    scf.if %2 {
      %c0_84 = arith.constant 0 : index
      %c0_85 = arith.constant 0 : index
      %309 = vector.load %arg4[%c0_84, %c0_85] : memref<8x128xf32, #tpu.memory_space<vmem>>, vector<8x128xf32>
      %c0_86 = arith.constant 0 : index
      %c0_87 = arith.constant 0 : index
      %310 = vector.load %arg9[%c0_86, %c0_87] : memref<8x128xf32, #tpu.memory_space<vmem>>, vector<8x128xf32>
      tpu.vector_store %arg9[%c0_86, %c0_87], %309 {strides = array<i32>} : memref<8x128xf32, #tpu.memory_space<vmem>>, vector<8x128xf32>,
    } else {
    }
    %c0 = arith.constant 0 : index
    %c0_1 = arith.constant 0 : index
    %3 = vector.load %arg5[%c0, %c0_1] : memref<128x384xbf16, #tpu.memory_space<vmem>>, vector<128x384xbf16>
    %c0_2 = arith.constant 0 : index
    %c0_3 = arith.constant 0 : index
    %4 = vector.load %arg6[%c0_2, %c0_3] : memref<1x128xf32, #tpu.memory_space<vmem>>, vector<1x128xf32>
    %5 = vector.shape_cast %4 : vector<1x128xf32> to vector<1x128xf32>
    %6 = vector.broadcast %5 : vector<1x128xf32> to vector<8x128xf32>
    %c0_4 = arith.constant 0 : index
    %c0_5 = arith.constant 0 : index
    %7 = vector.load %arg3[%c0_4, %c0_5] : memref<8x384xf32, #tpu.memory_space<vmem>>, vector<8x384xf32>
    %c0_6 = arith.constant 0 : index
    %c0_7 = arith.constant 0 : index
    %8 = vector.load %arg9[%c0_6, %c0_7] : memref<8x128xf32, #tpu.memory_space<vmem>>, vector<8x128xf32>
    %c0_8 = arith.constant 0 : index
    %c0_9 = arith.constant 0 : index
    %c0_10 = arith.constant 0 : index
    %9 = vector.load %arg2[%c0_8, %c0_9, %c0_10] : memref<8x8x384xbf16, #tpu.memory_space<vmem>>, vector<8x1x384xbf16>
    %10 = vector.shape_cast %9 : vector<8x1x384xbf16> to vector<8x384xbf16>
    %11 = arith.extf %10 : vector<8x384xbf16> to vector<8x384xf32>
    %12 = arith.addf %11, %7 : vector<8x384xf32>
    %13 = arith.truncf %8 : vector<8x128xf32> to vector<8x128xbf16>
    %cst = arith.constant dense<0.000000e+00> : vector<8x384xf32>
    %14 = tpu.matmul %13, %3, %cst {dimension_numbers = #tpu.dot_dimension_numbers<[1], [0], [0], [1], [0, 0, 1, 1], [], []>} : vector<8x128xbf16>, vector<128x384xbf16>, vector<8x384xf32> -> vector<8x384xf32>
    %15 = vector.extract_strided_slice %12 {offsets = [0, 0], sizes = [8, 128], strides = [1, 1]} : vector<8x384xf32> to vector<8x128xf32>
    %16 = vector.extract_strided_slice %14 {offsets = [0, 0], sizes = [8, 128], strides = [1, 1]} : vector<8x384xf32> to vector<8x128xf32>
    %17 = arith.addf %15, %16 : vector<8x128xf32>
    %18 = arith.negf %17 : vector<8x128xf32>
    %19 = math.exp %18 : vector<8x128xf32>
    %cst_11 = arith.constant 1.000000e+00 : f32
    %20 = vector.broadcast %cst_11 : f32 to vector<8x128xf32>
    %21 = arith.addf %20, %19 : vector<8x128xf32>
    %22 = arith.divf %20, %21 : vector<8x128xf32>
    %23 = vector.extract_strided_slice %12 {offsets = [0, 128], sizes = [8, 128], strides = [1, 1]} : vector<8x384xf32> to vector<8x128xf32>
    %24 = vector.extract_strided_slice %14 {offsets = [0, 128], sizes = [8, 128], strides = [1, 1]} : vector<8x384xf32> to vector<8x128xf32>
    %25 = arith.addf %23, %24 : vector<8x128xf32>
    %26 = arith.negf %25 : vector<8x128xf32>
    %27 = math.exp %26 : vector<8x128xf32>
    %cst_12 = arith.constant 1.000000e+00 : f32
    %28 = vector.broadcast %cst_12 : f32 to vector<8x128xf32>
    %29 = arith.addf %28, %27 : vector<8x128xf32>
    %30 = arith.divf %28, %29 : vector<8x128xf32>
    %31 = vector.extract_strided_slice %12 {offsets = [0, 256], sizes = [8, 128], strides = [1, 1]} : vector<8x384xf32> to vector<8x128xf32>
    %32 = vector.extract_strided_slice %14 {offsets = [0, 256], sizes = [8, 128], strides = [1, 1]} : vector<8x384xf32> to vector<8x128xf32>
    %33 = arith.addf %32, %6 : vector<8x128xf32>
    %34 = arith.mulf %22, %33 : vector<8x128xf32>
    %35 = arith.addf %31, %34 : vector<8x128xf32>
    %36 = math.tanh %35 : vector<8x128xf32>
    %cst_13 = arith.constant 1.000000e+00 : f32
    %37 = vector.broadcast %cst_13 : f32 to vector<8x128xf32>
    %38 = arith.subf %37, %30 : vector<8x128xf32>
    %39 = arith.mulf %38, %36 : vector<8x128xf32>
    %40 = arith.mulf %30, %8 : vector<8x128xf32>
    %41 = arith.addf %39, %40 : vector<8x128xf32>
    %42 = arith.truncf %41 : vector<8x128xf32> to vector<8x128xbf16>
    %c0_14 = arith.constant 0 : index
    %c0_15 = arith.constant 0 : index
    %c0_16 = arith.constant 0 : index
    %43 = vector.load %arg7[%c0_14, %c0_15, %c0_16] : memref<8x8x128xbf16, #tpu.memory_space<vmem>>, vector<8x1x128xbf16>
    %44 = vector.shape_cast %43 : vector<8x1x128xbf16> to vector<8x128xbf16>
    %45 = vector.shape_cast %42 : vector<8x128xbf16> to vector<8x1x128xbf16>
    tpu.vector_store %arg7[%c0_14, %c0_15, %c0_16], %45 {strides = array<i32>} : memref<8x8x128xbf16, #tpu.memory_space<vmem>>, vector<8x1x128xbf16>,
    %c0_17 = arith.constant 0 : index
    %c1 = arith.constant 1 : index
    %c0_18 = arith.constant 0 : index
    %46 = vector.load %arg2[%c0_17, %c1, %c0_18] : memref<8x8x384xbf16, #tpu.memory_space<vmem>>, vector<8x1x384xbf16>
    %47 = vector.shape_cast %46 : vector<8x1x384xbf16> to vector<8x384xbf16>
    %48 = arith.extf %47 : vector<8x384xbf16> to vector<8x384xf32>
    %49 = arith.addf %48, %7 : vector<8x384xf32>
    %50 = arith.truncf %41 : vector<8x128xf32> to vector<8x128xbf16>
    %cst_19 = arith.constant dense<0.000000e+00> : vector<8x384xf32>
    %51 = tpu.matmul %50, %3, %cst_19 {dimension_numbers = #tpu.dot_dimension_numbers<[1], [0], [0], [1], [0, 0, 1, 1], [], []>} : vector<8x128xbf16>, vector<128x384xbf16>, vector<8x384xf32> -> vector<8x384xf32>
    %52 = vector.extract_strided_slice %49 {offsets = [0, 0], sizes = [8, 128], strides = [1, 1]} : vector<8x384xf32> to vector<8x128xf32>
    %53 = vector.extract_strided_slice %51 {offsets = [0, 0], sizes = [8, 128], strides = [1, 1]} : vector<8x384xf32> to vector<8x128xf32>
    %54 = arith.addf %52, %53 : vector<8x128xf32>
    %55 = arith.negf %54 : vector<8x128xf32>
    %56 = math.exp %55 : vector<8x128xf32>
    %cst_20 = arith.constant 1.000000e+00 : f32
    %57 = vector.broadcast %cst_20 : f32 to vector<8x128xf32>
    %58 = arith.addf %57, %56 : vector<8x128xf32>
    %59 = arith.divf %57, %58 : vector<8x128xf32>
    %60 = vector.extract_strided_slice %49 {offsets = [0, 128], sizes = [8, 128], strides = [1, 1]} : vector<8x384xf32> to vector<8x128xf32>
    %61 = vector.extract_strided_slice %51 {offsets = [0, 128], sizes = [8, 128], strides = [1, 1]} : vector<8x384xf32> to vector<8x128xf32>
    %62 = arith.addf %60, %61 : vector<8x128xf32>
    %63 = arith.negf %62 : vector<8x128xf32>
    %64 = math.exp %63 : vector<8x128xf32>
    %cst_21 = arith.constant 1.000000e+00 : f32
    %65 = vector.broadcast %cst_21 : f32 to vector<8x128xf32>
    %66 = arith.addf %65, %64 : vector<8x128xf32>
    %67 = arith.divf %65, %66 : vector<8x128xf32>
    %68 = vector.extract_strided_slice %49 {offsets = [0, 256], sizes = [8, 128], strides = [1, 1]} : vector<8x384xf32> to vector<8x128xf32>
    %69 = vector.extract_strided_slice %51 {offsets = [0, 256], sizes = [8, 128], strides = [1, 1]} : vector<8x384xf32> to vector<8x128xf32>
    %70 = arith.addf %69, %6 : vector<8x128xf32>
    %71 = arith.mulf %59, %70 : vector<8x128xf32>
    %72 = arith.addf %68, %71 : vector<8x128xf32>
    %73 = math.tanh %72 : vector<8x128xf32>
    %cst_22 = arith.constant 1.000000e+00 : f32
    %74 = vector.broadcast %cst_22 : f32 to vector<8x128xf32>
    %75 = arith.subf %74, %67 : vector<8x128xf32>
    %76 = arith.mulf %75, %73 : vector<8x128xf32>
    %77 = arith.mulf %67, %41 : vector<8x128xf32>
    %78 = arith.addf %76, %77 : vector<8x128xf32>
    %79 = arith.truncf %78 : vector<8x128xf32> to vector<8x128xbf16>
    %c0_23 = arith.constant 0 : index
    %c1_24 = arith.constant 1 : index
    %c0_25 = arith.constant 0 : index
    %80 = vector.load %arg7[%c0_23, %c1_24, %c0_25] : memref<8x8x128xbf16, #tpu.memory_space<vmem>>, vector<8x1x128xbf16>
    %81 = vector.shape_cast %80 : vector<8x1x128xbf16> to vector<8x128xbf16>
    %82 = vector.shape_cast %79 : vector<8x128xbf16> to vector<8x1x128xbf16>
    tpu.vector_store %arg7[%c0_23, %c1_24, %c0_25], %82 {strides = array<i32>} : memref<8x8x128xbf16, #tpu.memory_space<vmem>>, vector<8x1x128xbf16>,
    %c0_26 = arith.constant 0 : index
    %c2 = arith.constant 2 : index
    %c0_27 = arith.constant 0 : index
    %83 = vector.load %arg2[%c0_26, %c2, %c0_27] : memref<8x8x384xbf16, #tpu.memory_space<vmem>>, vector<8x1x384xbf16>
    %84 = vector.shape_cast %83 : vector<8x1x384xbf16> to vector<8x384xbf16>
    %85 = arith.extf %84 : vector<8x384xbf16> to vector<8x384xf32>
    %86 = arith.addf %85, %7 : vector<8x384xf32>
    %87 = arith.truncf %78 : vector<8x128xf32> to vector<8x128xbf16>
    %cst_28 = arith.constant dense<0.000000e+00> : vector<8x384xf32>
    %88 = tpu.matmul %87, %3, %cst_28 {dimension_numbers = #tpu.dot_dimension_numbers<[1], [0], [0], [1], [0, 0, 1, 1], [], []>} : vector<8x128xbf16>, vector<128x384xbf16>, vector<8x384xf32> -> vector<8x384xf32>
    %89 = vector.extract_strided_slice %86 {offsets = [0, 0], sizes = [8, 128], strides = [1, 1]} : vector<8x384xf32> to vector<8x128xf32>
    %90 = vector.extract_strided_slice %88 {offsets = [0, 0], sizes = [8, 128], strides = [1, 1]} : vector<8x384xf32> to vector<8x128xf32>
    %91 = arith.addf %89, %90 : vector<8x128xf32>
    %92 = arith.negf %91 : vector<8x128xf32>
    %93 = math.exp %92 : vector<8x128xf32>
    %cst_29 = arith.constant 1.000000e+00 : f32
    %94 = vector.broadcast %cst_29 : f32 to vector<8x128xf32>
    %95 = arith.addf %94, %93 : vector<8x128xf32>
    %96 = arith.divf %94, %95 : vector<8x128xf32>
    %97 = vector.extract_strided_slice %86 {offsets = [0, 128], sizes = [8, 128], strides = [1, 1]} : vector<8x384xf32> to vector<8x128xf32>
    %98 = vector.extract_strided_slice %88 {offsets = [0, 128], sizes = [8, 128], strides = [1, 1]} : vector<8x384xf32> to vector<8x128xf32>
    %99 = arith.addf %97, %98 : vector<8x128xf32>
    %100 = arith.negf %99 : vector<8x128xf32>
    %101 = math.exp %100 : vector<8x128xf32>
    %cst_30 = arith.constant 1.000000e+00 : f32
    %102 = vector.broadcast %cst_30 : f32 to vector<8x128xf32>
    %103 = arith.addf %102, %101 : vector<8x128xf32>
    %104 = arith.divf %102, %103 : vector<8x128xf32>
    %105 = vector.extract_strided_slice %86 {offsets = [0, 256], sizes = [8, 128], strides = [1, 1]} : vector<8x384xf32> to vector<8x128xf32>
    %106 = vector.extract_strided_slice %88 {offsets = [0, 256], sizes = [8, 128], strides = [1, 1]} : vector<8x384xf32> to vector<8x128xf32>
    %107 = arith.addf %106, %6 : vector<8x128xf32>
    %108 = arith.mulf %96, %107 : vector<8x128xf32>
    %109 = arith.addf %105, %108 : vector<8x128xf32>
    %110 = math.tanh %109 : vector<8x128xf32>
    %cst_31 = arith.constant 1.000000e+00 : f32
    %111 = vector.broadcast %cst_31 : f32 to vector<8x128xf32>
    %112 = arith.subf %111, %104 : vector<8x128xf32>
    %113 = arith.mulf %112, %110 : vector<8x128xf32>
    %114 = arith.mulf %104, %78 : vector<8x128xf32>
    %115 = arith.addf %113, %114 : vector<8x128xf32>
    %116 = arith.truncf %115 : vector<8x128xf32> to vector<8x128xbf16>
    %c0_32 = arith.constant 0 : index
    %c2_33 = arith.constant 2 : index
    %c0_34 = arith.constant 0 : index
    %117 = vector.load %arg7[%c0_32, %c2_33, %c0_34] : memref<8x8x128xbf16, #tpu.memory_space<vmem>>, vector<8x1x128xbf16>
    %118 = vector.shape_cast %117 : vector<8x1x128xbf16> to vector<8x128xbf16>
    %119 = vector.shape_cast %116 : vector<8x128xbf16> to vector<8x1x128xbf16>
    tpu.vector_store %arg7[%c0_32, %c2_33, %c0_34], %119 {strides = array<i32>} : memref<8x8x128xbf16, #tpu.memory_space<vmem>>, vector<8x1x128xbf16>,
    %c0_35 = arith.constant 0 : index
    %c3 = arith.constant 3 : index
    %c0_36 = arith.constant 0 : index
    %120 = vector.load %arg2[%c0_35, %c3, %c0_36] : memref<8x8x384xbf16, #tpu.memory_space<vmem>>, vector<8x1x384xbf16>
    %121 = vector.shape_cast %120 : vector<8x1x384xbf16> to vector<8x384xbf16>
    %122 = arith.extf %121 : vector<8x384xbf16> to vector<8x384xf32>
    %123 = arith.addf %122, %7 : vector<8x384xf32>
    %124 = arith.truncf %115 : vector<8x128xf32> to vector<8x128xbf16>
    %cst_37 = arith.constant dense<0.000000e+00> : vector<8x384xf32>
    %125 = tpu.matmul %124, %3, %cst_37 {dimension_numbers = #tpu.dot_dimension_numbers<[1], [0], [0], [1], [0, 0, 1, 1], [], []>} : vector<8x128xbf16>, vector<128x384xbf16>, vector<8x384xf32> -> vector<8x384xf32>
    %126 = vector.extract_strided_slice %123 {offsets = [0, 0], sizes = [8, 128], strides = [1, 1]} : vector<8x384xf32> to vector<8x128xf32>
    %127 = vector.extract_strided_slice %125 {offsets = [0, 0], sizes = [8, 128], strides = [1, 1]} : vector<8x384xf32> to vector<8x128xf32>
    %128 = arith.addf %126, %127 : vector<8x128xf32>
    %129 = arith.negf %128 : vector<8x128xf32>
    %130 = math.exp %129 : vector<8x128xf32>
    %cst_38 = arith.constant 1.000000e+00 : f32
    %131 = vector.broadcast %cst_38 : f32 to vector<8x128xf32>
    %132 = arith.addf %131, %130 : vector<8x128xf32>
    %133 = arith.divf %131, %132 : vector<8x128xf32>
    %134 = vector.extract_strided_slice %123 {offsets = [0, 128], sizes = [8, 128], strides = [1, 1]} : vector<8x384xf32> to vector<8x128xf32>
    %135 = vector.extract_strided_slice %125 {offsets = [0, 128], sizes = [8, 128], strides = [1, 1]} : vector<8x384xf32> to vector<8x128xf32>
    %136 = arith.addf %134, %135 : vector<8x128xf32>
    %137 = arith.negf %136 : vector<8x128xf32>
    %138 = math.exp %137 : vector<8x128xf32>
    %cst_39 = arith.constant 1.000000e+00 : f32
    %139 = vector.broadcast %cst_39 : f32 to vector<8x128xf32>
    %140 = arith.addf %139, %138 : vector<8x128xf32>
    %141 = arith.divf %139, %140 : vector<8x128xf32>
    %142 = vector.extract_strided_slice %123 {offsets = [0, 256], sizes = [8, 128], strides = [1, 1]} : vector<8x384xf32> to vector<8x128xf32>
    %143 = vector.extract_strided_slice %125 {offsets = [0, 256], sizes = [8, 128], strides = [1, 1]} : vector<8x384xf32> to vector<8x128xf32>
    %144 = arith.addf %143, %6 : vector<8x128xf32>
    %145 = arith.mulf %133, %144 : vector<8x128xf32>
    %146 = arith.addf %142, %145 : vector<8x128xf32>
    %147 = math.tanh %146 : vector<8x128xf32>
    %cst_40 = arith.constant 1.000000e+00 : f32
    %148 = vector.broadcast %cst_40 : f32 to vector<8x128xf32>
    %149 = arith.subf %148, %141 : vector<8x128xf32>
    %150 = arith.mulf %149, %147 : vector<8x128xf32>
    %151 = arith.mulf %141, %115 : vector<8x128xf32>
    %152 = arith.addf %150, %151 : vector<8x128xf32>
    %153 = arith.truncf %152 : vector<8x128xf32> to vector<8x128xbf16>
    %c0_41 = arith.constant 0 : index
    %c3_42 = arith.constant 3 : index
    %c0_43 = arith.constant 0 : index
    %154 = vector.load %arg7[%c0_41, %c3_42, %c0_43] : memref<8x8x128xbf16, #tpu.memory_space<vmem>>, vector<8x1x128xbf16>
    %155 = vector.shape_cast %154 : vector<8x1x128xbf16> to vector<8x128xbf16>
    %156 = vector.shape_cast %153 : vector<8x128xbf16> to vector<8x1x128xbf16>
    tpu.vector_store %arg7[%c0_41, %c3_42, %c0_43], %156 {strides = array<i32>} : memref<8x8x128xbf16, #tpu.memory_space<vmem>>, vector<8x1x128xbf16>,
    %c0_44 = arith.constant 0 : index
    %c4 = arith.constant 4 : index
    %c0_45 = arith.constant 0 : index
    %157 = vector.load %arg2[%c0_44, %c4, %c0_45] : memref<8x8x384xbf16, #tpu.memory_space<vmem>>, vector<8x1x384xbf16>
    %158 = vector.shape_cast %157 : vector<8x1x384xbf16> to vector<8x384xbf16>
    %159 = arith.extf %158 : vector<8x384xbf16> to vector<8x384xf32>
    %160 = arith.addf %159, %7 : vector<8x384xf32>
    %161 = arith.truncf %152 : vector<8x128xf32> to vector<8x128xbf16>
    %cst_46 = arith.constant dense<0.000000e+00> : vector<8x384xf32>
    %162 = tpu.matmul %161, %3, %cst_46 {dimension_numbers = #tpu.dot_dimension_numbers<[1], [0], [0], [1], [0, 0, 1, 1], [], []>} : vector<8x128xbf16>, vector<128x384xbf16>, vector<8x384xf32> -> vector<8x384xf32>
    %163 = vector.extract_strided_slice %160 {offsets = [0, 0], sizes = [8, 128], strides = [1, 1]} : vector<8x384xf32> to vector<8x128xf32>
    %164 = vector.extract_strided_slice %162 {offsets = [0, 0], sizes = [8, 128], strides = [1, 1]} : vector<8x384xf32> to vector<8x128xf32>
    %165 = arith.addf %163, %164 : vector<8x128xf32>
    %166 = arith.negf %165 : vector<8x128xf32>
    %167 = math.exp %166 : vector<8x128xf32>
    %cst_47 = arith.constant 1.000000e+00 : f32
    %168 = vector.broadcast %cst_47 : f32 to vector<8x128xf32>
    %169 = arith.addf %168, %167 : vector<8x128xf32>
    %170 = arith.divf %168, %169 : vector<8x128xf32>
    %171 = vector.extract_strided_slice %160 {offsets = [0, 128], sizes = [8, 128], strides = [1, 1]} : vector<8x384xf32> to vector<8x128xf32>
    %172 = vector.extract_strided_slice %162 {offsets = [0, 128], sizes = [8, 128], strides = [1, 1]} : vector<8x384xf32> to vector<8x128xf32>
    %173 = arith.addf %171, %172 : vector<8x128xf32>
    %174 = arith.negf %173 : vector<8x128xf32>
    %175 = math.exp %174 : vector<8x128xf32>
    %cst_48 = arith.constant 1.000000e+00 : f32
    %176 = vector.broadcast %cst_48 : f32 to vector<8x128xf32>
    %177 = arith.addf %176, %175 : vector<8x128xf32>
    %178 = arith.divf %176, %177 : vector<8x128xf32>
    %179 = vector.extract_strided_slice %160 {offsets = [0, 256], sizes = [8, 128], strides = [1, 1]} : vector<8x384xf32> to vector<8x128xf32>
    %180 = vector.extract_strided_slice %162 {offsets = [0, 256], sizes = [8, 128], strides = [1, 1]} : vector<8x384xf32> to vector<8x128xf32>
    %181 = arith.addf %180, %6 : vector<8x128xf32>
    %182 = arith.mulf %170, %181 : vector<8x128xf32>
    %183 = arith.addf %179, %182 : vector<8x128xf32>
    %184 = math.tanh %183 : vector<8x128xf32>
    %cst_49 = arith.constant 1.000000e+00 : f32
    %185 = vector.broadcast %cst_49 : f32 to vector<8x128xf32>
    %186 = arith.subf %185, %178 : vector<8x128xf32>
    %187 = arith.mulf %186, %184 : vector<8x128xf32>
    %188 = arith.mulf %178, %152 : vector<8x128xf32>
    %189 = arith.addf %187, %188 : vector<8x128xf32>
    %190 = arith.truncf %189 : vector<8x128xf32> to vector<8x128xbf16>
    %c0_50 = arith.constant 0 : index
    %c4_51 = arith.constant 4 : index
    %c0_52 = arith.constant 0 : index
    %191 = vector.load %arg7[%c0_50, %c4_51, %c0_52] : memref<8x8x128xbf16, #tpu.memory_space<vmem>>, vector<8x1x128xbf16>
    %192 = vector.shape_cast %191 : vector<8x1x128xbf16> to vector<8x128xbf16>
    %193 = vector.shape_cast %190 : vector<8x128xbf16> to vector<8x1x128xbf16>
    tpu.vector_store %arg7[%c0_50, %c4_51, %c0_52], %193 {strides = array<i32>} : memref<8x8x128xbf16, #tpu.memory_space<vmem>>, vector<8x1x128xbf16>,
    %c0_53 = arith.constant 0 : index
    %c5 = arith.constant 5 : index
    %c0_54 = arith.constant 0 : index
    %194 = vector.load %arg2[%c0_53, %c5, %c0_54] : memref<8x8x384xbf16, #tpu.memory_space<vmem>>, vector<8x1x384xbf16>
    %195 = vector.shape_cast %194 : vector<8x1x384xbf16> to vector<8x384xbf16>
    %196 = arith.extf %195 : vector<8x384xbf16> to vector<8x384xf32>
    %197 = arith.addf %196, %7 : vector<8x384xf32>
    %198 = arith.truncf %189 : vector<8x128xf32> to vector<8x128xbf16>
    %cst_55 = arith.constant dense<0.000000e+00> : vector<8x384xf32>
    %199 = tpu.matmul %198, %3, %cst_55 {dimension_numbers = #tpu.dot_dimension_numbers<[1], [0], [0], [1], [0, 0, 1, 1], [], []>} : vector<8x128xbf16>, vector<128x384xbf16>, vector<8x384xf32> -> vector<8x384xf32>
    %200 = vector.extract_strided_slice %197 {offsets = [0, 0], sizes = [8, 128], strides = [1, 1]} : vector<8x384xf32> to vector<8x128xf32>
    %201 = vector.extract_strided_slice %199 {offsets = [0, 0], sizes = [8, 128], strides = [1, 1]} : vector<8x384xf32> to vector<8x128xf32>
    %202 = arith.addf %200, %201 : vector<8x128xf32>
    %203 = arith.negf %202 : vector<8x128xf32>
    %204 = math.exp %203 : vector<8x128xf32>
    %cst_56 = arith.constant 1.000000e+00 : f32
    %205 = vector.broadcast %cst_56 : f32 to vector<8x128xf32>
    %206 = arith.addf %205, %204 : vector<8x128xf32>
    %207 = arith.divf %205, %206 : vector<8x128xf32>
    %208 = vector.extract_strided_slice %197 {offsets = [0, 128], sizes = [8, 128], strides = [1, 1]} : vector<8x384xf32> to vector<8x128xf32>
    %209 = vector.extract_strided_slice %199 {offsets = [0, 128], sizes = [8, 128], strides = [1, 1]} : vector<8x384xf32> to vector<8x128xf32>
    %210 = arith.addf %208, %209 : vector<8x128xf32>
    %211 = arith.negf %210 : vector<8x128xf32>
    %212 = math.exp %211 : vector<8x128xf32>
    %cst_57 = arith.constant 1.000000e+00 : f32
    %213 = vector.broadcast %cst_57 : f32 to vector<8x128xf32>
    %214 = arith.addf %213, %212 : vector<8x128xf32>
    %215 = arith.divf %213, %214 : vector<8x128xf32>
    %216 = vector.extract_strided_slice %197 {offsets = [0, 256], sizes = [8, 128], strides = [1, 1]} : vector<8x384xf32> to vector<8x128xf32>
    %217 = vector.extract_strided_slice %199 {offsets = [0, 256], sizes = [8, 128], strides = [1, 1]} : vector<8x384xf32> to vector<8x128xf32>
    %218 = arith.addf %217, %6 : vector<8x128xf32>
    %219 = arith.mulf %207, %218 : vector<8x128xf32>
    %220 = arith.addf %216, %219 : vector<8x128xf32>
    %221 = math.tanh %220 : vector<8x128xf32>
    %cst_58 = arith.constant 1.000000e+00 : f32
    %222 = vector.broadcast %cst_58 : f32 to vector<8x128xf32>
    %223 = arith.subf %222, %215 : vector<8x128xf32>
    %224 = arith.mulf %223, %221 : vector<8x128xf32>
    %225 = arith.mulf %215, %189 : vector<8x128xf32>
    %226 = arith.addf %224, %225 : vector<8x128xf32>
    %227 = arith.truncf %226 : vector<8x128xf32> to vector<8x128xbf16>
    %c0_59 = arith.constant 0 : index
    %c5_60 = arith.constant 5 : index
    %c0_61 = arith.constant 0 : index
    %228 = vector.load %arg7[%c0_59, %c5_60, %c0_61] : memref<8x8x128xbf16, #tpu.memory_space<vmem>>, vector<8x1x128xbf16>
    %229 = vector.shape_cast %228 : vector<8x1x128xbf16> to vector<8x128xbf16>
    %230 = vector.shape_cast %227 : vector<8x128xbf16> to vector<8x1x128xbf16>
    tpu.vector_store %arg7[%c0_59, %c5_60, %c0_61], %230 {strides = array<i32>} : memref<8x8x128xbf16, #tpu.memory_space<vmem>>, vector<8x1x128xbf16>,
    %c0_62 = arith.constant 0 : index
    %c6 = arith.constant 6 : index
    %c0_63 = arith.constant 0 : index
    %231 = vector.load %arg2[%c0_62, %c6, %c0_63] : memref<8x8x384xbf16, #tpu.memory_space<vmem>>, vector<8x1x384xbf16>
    %232 = vector.shape_cast %231 : vector<8x1x384xbf16> to vector<8x384xbf16>
    %233 = arith.extf %232 : vector<8x384xbf16> to vector<8x384xf32>
    %234 = arith.addf %233, %7 : vector<8x384xf32>
    %235 = arith.truncf %226 : vector<8x128xf32> to vector<8x128xbf16>
    %cst_64 = arith.constant dense<0.000000e+00> : vector<8x384xf32>
    %236 = tpu.matmul %235, %3, %cst_64 {dimension_numbers = #tpu.dot_dimension_numbers<[1], [0], [0], [1], [0, 0, 1, 1], [], []>} : vector<8x128xbf16>, vector<128x384xbf16>, vector<8x384xf32> -> vector<8x384xf32>
    %237 = vector.extract_strided_slice %234 {offsets = [0, 0], sizes = [8, 128], strides = [1, 1]} : vector<8x384xf32> to vector<8x128xf32>
    %238 = vector.extract_strided_slice %236 {offsets = [0, 0], sizes = [8, 128], strides = [1, 1]} : vector<8x384xf32> to vector<8x128xf32>
    %239 = arith.addf %237, %238 : vector<8x128xf32>
    %240 = arith.negf %239 : vector<8x128xf32>
    %241 = math.exp %240 : vector<8x128xf32>
    %cst_65 = arith.constant 1.000000e+00 : f32
    %242 = vector.broadcast %cst_65 : f32 to vector<8x128xf32>
    %243 = arith.addf %242, %241 : vector<8x128xf32>
    %244 = arith.divf %242, %243 : vector<8x128xf32>
    %245 = vector.extract_strided_slice %234 {offsets = [0, 128], sizes = [8, 128], strides = [1, 1]} : vector<8x384xf32> to vector<8x128xf32>
    %246 = vector.extract_strided_slice %236 {offsets = [0, 128], sizes = [8, 128], strides = [1, 1]} : vector<8x384xf32> to vector<8x128xf32>
    %247 = arith.addf %245, %246 : vector<8x128xf32>
    %248 = arith.negf %247 : vector<8x128xf32>
    %249 = math.exp %248 : vector<8x128xf32>
    %cst_66 = arith.constant 1.000000e+00 : f32
    %250 = vector.broadcast %cst_66 : f32 to vector<8x128xf32>
    %251 = arith.addf %250, %249 : vector<8x128xf32>
    %252 = arith.divf %250, %251 : vector<8x128xf32>
    %253 = vector.extract_strided_slice %234 {offsets = [0, 256], sizes = [8, 128], strides = [1, 1]} : vector<8x384xf32> to vector<8x128xf32>
    %254 = vector.extract_strided_slice %236 {offsets = [0, 256], sizes = [8, 128], strides = [1, 1]} : vector<8x384xf32> to vector<8x128xf32>
    %255 = arith.addf %254, %6 : vector<8x128xf32>
    %256 = arith.mulf %244, %255 : vector<8x128xf32>
    %257 = arith.addf %253, %256 : vector<8x128xf32>
    %258 = math.tanh %257 : vector<8x128xf32>
    %cst_67 = arith.constant 1.000000e+00 : f32
    %259 = vector.broadcast %cst_67 : f32 to vector<8x128xf32>
    %260 = arith.subf %259, %252 : vector<8x128xf32>
    %261 = arith.mulf %260, %258 : vector<8x128xf32>
    %262 = arith.mulf %252, %226 : vector<8x128xf32>
    %263 = arith.addf %261, %262 : vector<8x128xf32>
    %264 = arith.truncf %263 : vector<8x128xf32> to vector<8x128xbf16>
    %c0_68 = arith.constant 0 : index
    %c6_69 = arith.constant 6 : index
    %c0_70 = arith.constant 0 : index
    %265 = vector.load %arg7[%c0_68, %c6_69, %c0_70] : memref<8x8x128xbf16, #tpu.memory_space<vmem>>, vector<8x1x128xbf16>
    %266 = vector.shape_cast %265 : vector<8x1x128xbf16> to vector<8x128xbf16>
    %267 = vector.shape_cast %264 : vector<8x128xbf16> to vector<8x1x128xbf16>
    tpu.vector_store %arg7[%c0_68, %c6_69, %c0_70], %267 {strides = array<i32>} : memref<8x8x128xbf16, #tpu.memory_space<vmem>>, vector<8x1x128xbf16>,
    %c0_71 = arith.constant 0 : index
    %c7 = arith.constant 7 : index
    %c0_72 = arith.constant 0 : index
    %268 = vector.load %arg2[%c0_71, %c7, %c0_72] : memref<8x8x384xbf16, #tpu.memory_space<vmem>>, vector<8x1x384xbf16>
    %269 = vector.shape_cast %268 : vector<8x1x384xbf16> to vector<8x384xbf16>
    %270 = arith.extf %269 : vector<8x384xbf16> to vector<8x384xf32>
    %271 = arith.addf %270, %7 : vector<8x384xf32>
    %272 = arith.truncf %263 : vector<8x128xf32> to vector<8x128xbf16>
    %cst_73 = arith.constant dense<0.000000e+00> : vector<8x384xf32>
    %273 = tpu.matmul %272, %3, %cst_73 {dimension_numbers = #tpu.dot_dimension_numbers<[1], [0], [0], [1], [0, 0, 1, 1], [], []>} : vector<8x128xbf16>, vector<128x384xbf16>, vector<8x384xf32> -> vector<8x384xf32>
    %274 = vector.extract_strided_slice %271 {offsets = [0, 0], sizes = [8, 128], strides = [1, 1]} : vector<8x384xf32> to vector<8x128xf32>
    %275 = vector.extract_strided_slice %273 {offsets = [0, 0], sizes = [8, 128], strides = [1, 1]} : vector<8x384xf32> to vector<8x128xf32>
    %276 = arith.addf %274, %275 : vector<8x128xf32>
    %277 = arith.negf %276 : vector<8x128xf32>
    %278 = math.exp %277 : vector<8x128xf32>
    %cst_74 = arith.constant 1.000000e+00 : f32
    %279 = vector.broadcast %cst_74 : f32 to vector<8x128xf32>
    %280 = arith.addf %279, %278 : vector<8x128xf32>
    %281 = arith.divf %279, %280 : vector<8x128xf32>
    %282 = vector.extract_strided_slice %271 {offsets = [0, 128], sizes = [8, 128], strides = [1, 1]} : vector<8x384xf32> to vector<8x128xf32>
    %283 = vector.extract_strided_slice %273 {offsets = [0, 128], sizes = [8, 128], strides = [1, 1]} : vector<8x384xf32> to vector<8x128xf32>
    %284 = arith.addf %282, %283 : vector<8x128xf32>
    %285 = arith.negf %284 : vector<8x128xf32>
    %286 = math.exp %285 : vector<8x128xf32>
    %cst_75 = arith.constant 1.000000e+00 : f32
    %287 = vector.broadcast %cst_75 : f32 to vector<8x128xf32>
    %288 = arith.addf %287, %286 : vector<8x128xf32>
    %289 = arith.divf %287, %288 : vector<8x128xf32>
    %290 = vector.extract_strided_slice %271 {offsets = [0, 256], sizes = [8, 128], strides = [1, 1]} : vector<8x384xf32> to vector<8x128xf32>
    %291 = vector.extract_strided_slice %273 {offsets = [0, 256], sizes = [8, 128], strides = [1, 1]} : vector<8x384xf32> to vector<8x128xf32>
    %292 = arith.addf %291, %6 : vector<8x128xf32>
    %293 = arith.mulf %281, %292 : vector<8x128xf32>
    %294 = arith.addf %290, %293 : vector<8x128xf32>
    %295 = math.tanh %294 : vector<8x128xf32>
    %cst_76 = arith.constant 1.000000e+00 : f32
    %296 = vector.broadcast %cst_76 : f32 to vector<8x128xf32>
    %297 = arith.subf %296, %289 : vector<8x128xf32>
    %298 = arith.mulf %297, %295 : vector<8x128xf32>
    %299 = arith.mulf %289, %263 : vector<8x128xf32>
    %300 = arith.addf %298, %299 : vector<8x128xf32>
    %301 = arith.truncf %300 : vector<8x128xf32> to vector<8x128xbf16>
    %c0_77 = arith.constant 0 : index
    %c7_78 = arith.constant 7 : index
    %c0_79 = arith.constant 0 : index
    %302 = vector.load %arg7[%c0_77, %c7_78, %c0_79] : memref<8x8x128xbf16, #tpu.memory_space<vmem>>, vector<8x1x128xbf16>
    %303 = vector.shape_cast %302 : vector<8x1x128xbf16> to vector<8x128xbf16>
    %304 = vector.shape_cast %301 : vector<8x128xbf16> to vector<8x1x128xbf16>
    tpu.vector_store %arg7[%c0_77, %c7_78, %c0_79], %304 {strides = array<i32>} : memref<8x8x128xbf16, #tpu.memory_space<vmem>>, vector<8x1x128xbf16>,
    %c0_80 = arith.constant 0 : index
    %c0_81 = arith.constant 0 : index
    %305 = vector.load %arg9[%c0_80, %c0_81] : memref<8x128xf32, #tpu.memory_space<vmem>>, vector<8x128xf32>
    tpu.vector_store %arg9[%c0_80, %c0_81], %300 {strides = array<i32>} : memref<8x128xf32, #tpu.memory_space<vmem>>, vector<8x128xf32>,
    %c0_i32_82 = arith.constant 0 : i32
    %306 = arith.cmpi eq, %arg1, %c0_i32_82 : i32
    %307 = arith.extui %306 : i1 to i32
    %c0_i32_83 = arith.constant 0 : i32
    %308 = arith.cmpi ne, %307, %c0_i32_83 : i32
    scf.if %308 {
      %c0_84 = arith.constant 0 : index
      %c0_85 = arith.constant 0 : index
      %309 = vector.load %arg8[%c0_84, %c0_85] : memref<8x128xf32, #tpu.memory_space<vmem>>, vector<8x128xf32>
      tpu.vector_store %arg8[%c0_84, %c0_85], %300 {strides = array<i32>} : memref<8x128xf32, #tpu.memory_space<vmem>>, vector<8x128xf32>,
    } else {
    }
    return
  }
  func.func @transform_0(%arg0: i32, %arg1: i32) -> (i32, i32, i32) {
    %c0_i32 = arith.constant 0 : i32
    %c0_i32_0 = arith.constant 0 : i32
    return %arg0, %arg1, %c0_i32 : i32, i32, i32
  }
  func.func @transform_1(%arg0: i32, %arg1: i32) -> (i32, i32) {
    %c0_i32 = arith.constant 0 : i32
    %c0_i32_0 = arith.constant 0 : i32
    return %arg0, %c0_i32 : i32, i32
  }
  func.func @transform_2(%arg0: i32, %arg1: i32) -> (i32, i32) {
    %c0_i32 = arith.constant 0 : i32
    %c0_i32_0 = arith.constant 0 : i32
    return %arg0, %c0_i32 : i32, i32
  }
  func.func @transform_3(%arg0: i32, %arg1: i32) -> (i32, i32) {
    %c0_i32 = arith.constant 0 : i32
    %c0_i32_0 = arith.constant 0 : i32
    %c0_i32_1 = arith.constant 0 : i32
    return %c0_i32, %c0_i32_0 : i32, i32
  }
  func.func @transform_4(%arg0: i32, %arg1: i32) -> (i32, i32) {
    %c0_i32 = arith.constant 0 : i32
    %c0_i32_0 = arith.constant 0 : i32
    %c0_i32_1 = arith.constant 0 : i32
    return %c0_i32, %c0_i32_0 : i32, i32
  }
  func.func @transform_5(%arg0: i32, %arg1: i32) -> (i32, i32, i32) {
    %c0_i32 = arith.constant 0 : i32
    %c0_i32_0 = arith.constant 0 : i32
    return %arg0, %arg1, %c0_i32 : i32, i32, i32
  }
  func.func @transform_6(%arg0: i32, %arg1: i32) -> (i32, i32) {
    %c0_i32 = arith.constant 0 : i32
    %c0_i32_0 = arith.constant 0 : i32
    return %arg0, %c0_i32 : i32, i32
  }
}

module attributes {stable_mosaic.version = 11 : i64} {
  func.func @_matmul_bias_kernel(%arg0: i32, %arg1: i32, %arg2: memref<64x128xbf16, #tpu.memory_space<vmem>>, %arg3: memref<128x384xbf16, #tpu.memory_space<vmem>>, %arg4: memref<1x384xf32, #tpu.memory_space<vmem>>, %arg5: memref<64x384xbf16, #tpu.memory_space<vmem>>) attributes {dimension_semantics = [#tpu.dimension_semantics<parallel>, #tpu.dimension_semantics<parallel>], iteration_bounds = array<i64: 1, 1>, scalar_prefetch = 0 : i64, scratch_operands = 0 : i64, tpu.core_type = #tpu.core_type<tc>, window_params = [{transform_indices = @transform_0, window_bounds = array<i64: 64, 128>}, {transform_indices = @transform_1, window_bounds = array<i64: 128, 384>}, {transform_indices = @transform_2, window_bounds = array<i64: 1, 384>}, {transform_indices = @transform_3, window_bounds = array<i64: 64, 384>}]} {
    %c0 = arith.constant 0 : index
    %c0_0 = arith.constant 0 : index
    %0 = vector.load %arg2[%c0, %c0_0] : memref<64x128xbf16, #tpu.memory_space<vmem>>, vector<64x128xbf16>
    %c0_1 = arith.constant 0 : index
    %c0_2 = arith.constant 0 : index
    %1 = vector.load %arg3[%c0_1, %c0_2] : memref<128x384xbf16, #tpu.memory_space<vmem>>, vector<128x384xbf16>
    %cst = arith.constant dense<0.000000e+00> : vector<64x384xf32>
    %2 = tpu.matmul %0, %1, %cst {dimension_numbers = #tpu.dot_dimension_numbers<[1], [0], [0], [1], [0, 0, 1, 1], [], []>} : vector<64x128xbf16>, vector<128x384xbf16>, vector<64x384xf32> -> vector<64x384xf32>
    %c0_3 = arith.constant 0 : index
    %c0_4 = arith.constant 0 : index
    %3 = vector.load %arg4[%c0_3, %c0_4] : memref<1x384xf32, #tpu.memory_space<vmem>>, vector<1x384xf32>
    %4 = vector.broadcast %3 : vector<1x384xf32> to vector<64x384xf32>
    %5 = arith.addf %2, %4 : vector<64x384xf32>
    %6 = arith.truncf %5 : vector<64x384xf32> to vector<64x384xbf16>
    %c0_5 = arith.constant 0 : index
    %c0_6 = arith.constant 0 : index
    %7 = vector.load %arg5[%c0_5, %c0_6] : memref<64x384xbf16, #tpu.memory_space<vmem>>, vector<64x384xbf16>
    tpu.vector_store %arg5[%c0_5, %c0_6], %6 {strides = array<i32>} : memref<64x384xbf16, #tpu.memory_space<vmem>>, vector<64x384xbf16>,
    return
  }
  func.func @transform_0(%arg0: i32, %arg1: i32) -> (i32, i32) {
    %c0_i32 = arith.constant 0 : i32
    %c0_i32_0 = arith.constant 0 : i32
    return %arg0, %c0_i32 : i32, i32
  }
  func.func @transform_1(%arg0: i32, %arg1: i32) -> (i32, i32) {
    %c0_i32 = arith.constant 0 : i32
    %c0_i32_0 = arith.constant 0 : i32
    return %c0_i32, %arg1 : i32, i32
  }
  func.func @transform_2(%arg0: i32, %arg1: i32) -> (i32, i32) {
    %c0_i32 = arith.constant 0 : i32
    %c0_i32_0 = arith.constant 0 : i32
    return %c0_i32, %arg1 : i32, i32
  }
  func.func @transform_3(%arg0: i32, %arg1: i32) -> (i32, i32) {
    %c0_i32 = arith.constant 0 : i32
    return %arg0, %arg1 : i32, i32
  }
}

module attributes {stable_mosaic.version = 11 : i64} {
  func.func @_matmul_bias_kernel(%arg0: i32, %arg1: i32, %arg2: memref<64x8xbf16, #tpu.memory_space<vmem>>, %arg3: memref<8x384xbf16, #tpu.memory_space<vmem>>, %arg4: memref<1x384xf32, #tpu.memory_space<vmem>>, %arg5: memref<64x384xbf16, #tpu.memory_space<vmem>>) attributes {dimension_semantics = [#tpu.dimension_semantics<parallel>, #tpu.dimension_semantics<parallel>], iteration_bounds = array<i64: 1, 1>, scalar_prefetch = 0 : i64, scratch_operands = 0 : i64, tpu.core_type = #tpu.core_type<tc>, window_params = [{transform_indices = @transform_0, window_bounds = array<i64: 64, 8>}, {transform_indices = @transform_1, window_bounds = array<i64: 8, 384>}, {transform_indices = @transform_2, window_bounds = array<i64: 1, 384>}, {transform_indices = @transform_3, window_bounds = array<i64: 64, 384>}]} {
    %c0 = arith.constant 0 : index
    %c0_0 = arith.constant 0 : index
    %0 = vector.load %arg2[%c0, %c0_0] : memref<64x8xbf16, #tpu.memory_space<vmem>>, vector<64x8xbf16>
    %c0_1 = arith.constant 0 : index
    %c0_2 = arith.constant 0 : index
    %1 = vector.load %arg3[%c0_1, %c0_2] : memref<8x384xbf16, #tpu.memory_space<vmem>>, vector<8x384xbf16>
    %cst = arith.constant dense<0.000000e+00> : vector<64x384xf32>
    %2 = tpu.matmul %0, %1, %cst {dimension_numbers = #tpu.dot_dimension_numbers<[1], [0], [0], [1], [0, 0, 1, 1], [], []>} : vector<64x8xbf16>, vector<8x384xbf16>, vector<64x384xf32> -> vector<64x384xf32>
    %c0_3 = arith.constant 0 : index
    %c0_4 = arith.constant 0 : index
    %3 = vector.load %arg4[%c0_3, %c0_4] : memref<1x384xf32, #tpu.memory_space<vmem>>, vector<1x384xf32>
    %4 = vector.broadcast %3 : vector<1x384xf32> to vector<64x384xf32>
    %5 = arith.addf %2, %4 : vector<64x384xf32>
    %6 = arith.truncf %5 : vector<64x384xf32> to vector<64x384xbf16>
    %c0_5 = arith.constant 0 : index
    %c0_6 = arith.constant 0 : index
    %7 = vector.load %arg5[%c0_5, %c0_6] : memref<64x384xbf16, #tpu.memory_space<vmem>>, vector<64x384xbf16>
    tpu.vector_store %arg5[%c0_5, %c0_6], %6 {strides = array<i32>} : memref<64x384xbf16, #tpu.memory_space<vmem>>, vector<64x384xbf16>,
    return
  }
  func.func @transform_0(%arg0: i32, %arg1: i32) -> (i32, i32) {
    %c0_i32 = arith.constant 0 : i32
    %c0_i32_0 = arith.constant 0 : i32
    return %arg0, %c0_i32 : i32, i32
  }
  func.func @transform_1(%arg0: i32, %arg1: i32) -> (i32, i32) {
    %c0_i32 = arith.constant 0 : i32
    %c0_i32_0 = arith.constant 0 : i32
    return %c0_i32, %arg1 : i32, i32
  }
  func.func @transform_2(%arg0: i32, %arg1: i32) -> (i32, i32) {
    %c0_i32 = arith.constant 0 : i32
    %c0_i32_0 = arith.constant 0 : i32
    return %c0_i32, %arg1 : i32, i32
  }
  func.func @transform_3(%arg0: i32, %arg1: i32) -> (i32, i32) {
    %c0_i32 = arith.constant 0 : i32
    return %arg0, %arg1 : i32, i32
  }
}

module attributes {stable_mosaic.version = 11 : i64} {
  func.func @_gru_layer_kernel(%arg0: i32, %arg1: i32, %arg2: memref<8x8x384xbf16, #tpu.memory_space<vmem>>, %arg3: memref<8x128xf32, #tpu.memory_space<vmem>>, %arg4: memref<128x384xbf16, #tpu.memory_space<vmem>>, %arg5: memref<1x128xf32, #tpu.memory_space<vmem>>, %arg6: memref<8x8x128xbf16, #tpu.memory_space<vmem>>, %arg7: memref<8x128xf32, #tpu.memory_space<vmem>>, %arg8: memref<8x128xf32, #tpu.memory_space<vmem>>) attributes {dimension_semantics = [#tpu.dimension_semantics<parallel>, #tpu.dimension_semantics<arbitrary>], iteration_bounds = array<i64: 1, 1>, scalar_prefetch = 0 : i64, scratch_operands = 1 : i64, tpu.core_type = #tpu.core_type<tc>, window_params = [{transform_indices = @transform_0, window_bounds = array<i64: 8, 8, 384>}, {transform_indices = @transform_1, window_bounds = array<i64: 8, 128>}, {pipeline_mode = #tpu.pipeline_mode<synchronous>, transform_indices = @transform_2, window_bounds = array<i64: 128, 384>}, {pipeline_mode = #tpu.pipeline_mode<synchronous>, transform_indices = @transform_3, window_bounds = array<i64: 1, 128>}, {transform_indices = @transform_4, window_bounds = array<i64: 8, 8, 128>}, {transform_indices = @transform_5, window_bounds = array<i64: 8, 128>}]} {
    %c0_i32 = arith.constant 0 : i32
    %0 = arith.cmpi eq, %arg1, %c0_i32 : i32
    %1 = arith.extui %0 : i1 to i32
    %c0_i32_0 = arith.constant 0 : i32
    %2 = arith.cmpi ne, %1, %c0_i32_0 : i32
    scf.if %2 {
      %c0_82 = arith.constant 0 : index
      %c0_83 = arith.constant 0 : index
      %300 = vector.load %arg3[%c0_82, %c0_83] : memref<8x128xf32, #tpu.memory_space<vmem>>, vector<8x128xf32>
      %c0_84 = arith.constant 0 : index
      %c0_85 = arith.constant 0 : index
      %301 = vector.load %arg8[%c0_84, %c0_85] : memref<8x128xf32, #tpu.memory_space<vmem>>, vector<8x128xf32>
      tpu.vector_store %arg8[%c0_84, %c0_85], %300 {strides = array<i32>} : memref<8x128xf32, #tpu.memory_space<vmem>>, vector<8x128xf32>,
    } else {
    }
    %c0 = arith.constant 0 : index
    %c0_1 = arith.constant 0 : index
    %3 = vector.load %arg4[%c0, %c0_1] : memref<128x384xbf16, #tpu.memory_space<vmem>>, vector<128x384xbf16>
    %c0_2 = arith.constant 0 : index
    %c0_3 = arith.constant 0 : index
    %4 = vector.load %arg5[%c0_2, %c0_3] : memref<1x128xf32, #tpu.memory_space<vmem>>, vector<1x128xf32>
    %5 = vector.shape_cast %4 : vector<1x128xf32> to vector<1x128xf32>
    %6 = vector.broadcast %5 : vector<1x128xf32> to vector<8x128xf32>
    %c0_4 = arith.constant 0 : index
    %c0_5 = arith.constant 0 : index
    %7 = vector.load %arg8[%c0_4, %c0_5] : memref<8x128xf32, #tpu.memory_space<vmem>>, vector<8x128xf32>
    %c0_6 = arith.constant 0 : index
    %c0_7 = arith.constant 0 : index
    %c0_8 = arith.constant 0 : index
    %8 = vector.load %arg2[%c0_6, %c0_7, %c0_8] : memref<8x8x384xbf16, #tpu.memory_space<vmem>>, vector<8x1x384xbf16>
    %9 = vector.shape_cast %8 : vector<8x1x384xbf16> to vector<8x384xbf16>
    %10 = arith.extf %9 : vector<8x384xbf16> to vector<8x384xf32>
    %11 = arith.truncf %7 : vector<8x128xf32> to vector<8x128xbf16>
    %cst = arith.constant dense<0.000000e+00> : vector<8x384xf32>
    %12 = tpu.matmul %11, %3, %cst {dimension_numbers = #tpu.dot_dimension_numbers<[1], [0], [0], [1], [0, 0, 1, 1], [], []>} : vector<8x128xbf16>, vector<128x384xbf16>, vector<8x384xf32> -> vector<8x384xf32>
    %13 = vector.extract_strided_slice %10 {offsets = [0, 0], sizes = [8, 128], strides = [1, 1]} : vector<8x384xf32> to vector<8x128xf32>
    %14 = vector.extract_strided_slice %12 {offsets = [0, 0], sizes = [8, 128], strides = [1, 1]} : vector<8x384xf32> to vector<8x128xf32>
    %15 = arith.addf %13, %14 : vector<8x128xf32>
    %16 = arith.negf %15 : vector<8x128xf32>
    %17 = math.exp %16 : vector<8x128xf32>
    %cst_9 = arith.constant 1.000000e+00 : f32
    %18 = vector.broadcast %cst_9 : f32 to vector<8x128xf32>
    %19 = arith.addf %18, %17 : vector<8x128xf32>
    %20 = arith.divf %18, %19 : vector<8x128xf32>
    %21 = vector.extract_strided_slice %10 {offsets = [0, 128], sizes = [8, 128], strides = [1, 1]} : vector<8x384xf32> to vector<8x128xf32>
    %22 = vector.extract_strided_slice %12 {offsets = [0, 128], sizes = [8, 128], strides = [1, 1]} : vector<8x384xf32> to vector<8x128xf32>
    %23 = arith.addf %21, %22 : vector<8x128xf32>
    %24 = arith.negf %23 : vector<8x128xf32>
    %25 = math.exp %24 : vector<8x128xf32>
    %cst_10 = arith.constant 1.000000e+00 : f32
    %26 = vector.broadcast %cst_10 : f32 to vector<8x128xf32>
    %27 = arith.addf %26, %25 : vector<8x128xf32>
    %28 = arith.divf %26, %27 : vector<8x128xf32>
    %29 = vector.extract_strided_slice %10 {offsets = [0, 256], sizes = [8, 128], strides = [1, 1]} : vector<8x384xf32> to vector<8x128xf32>
    %30 = vector.extract_strided_slice %12 {offsets = [0, 256], sizes = [8, 128], strides = [1, 1]} : vector<8x384xf32> to vector<8x128xf32>
    %31 = arith.addf %30, %6 : vector<8x128xf32>
    %32 = arith.mulf %20, %31 : vector<8x128xf32>
    %33 = arith.addf %29, %32 : vector<8x128xf32>
    %34 = math.tanh %33 : vector<8x128xf32>
    %cst_11 = arith.constant 1.000000e+00 : f32
    %35 = vector.broadcast %cst_11 : f32 to vector<8x128xf32>
    %36 = arith.subf %35, %28 : vector<8x128xf32>
    %37 = arith.mulf %36, %34 : vector<8x128xf32>
    %38 = arith.mulf %28, %7 : vector<8x128xf32>
    %39 = arith.addf %37, %38 : vector<8x128xf32>
    %40 = arith.truncf %39 : vector<8x128xf32> to vector<8x128xbf16>
    %c0_12 = arith.constant 0 : index
    %c0_13 = arith.constant 0 : index
    %c0_14 = arith.constant 0 : index
    %41 = vector.load %arg6[%c0_12, %c0_13, %c0_14] : memref<8x8x128xbf16, #tpu.memory_space<vmem>>, vector<8x1x128xbf16>
    %42 = vector.shape_cast %41 : vector<8x1x128xbf16> to vector<8x128xbf16>
    %43 = vector.shape_cast %40 : vector<8x128xbf16> to vector<8x1x128xbf16>
    tpu.vector_store %arg6[%c0_12, %c0_13, %c0_14], %43 {strides = array<i32>} : memref<8x8x128xbf16, #tpu.memory_space<vmem>>, vector<8x1x128xbf16>,
    %c0_15 = arith.constant 0 : index
    %c1 = arith.constant 1 : index
    %c0_16 = arith.constant 0 : index
    %44 = vector.load %arg2[%c0_15, %c1, %c0_16] : memref<8x8x384xbf16, #tpu.memory_space<vmem>>, vector<8x1x384xbf16>
    %45 = vector.shape_cast %44 : vector<8x1x384xbf16> to vector<8x384xbf16>
    %46 = arith.extf %45 : vector<8x384xbf16> to vector<8x384xf32>
    %47 = arith.truncf %39 : vector<8x128xf32> to vector<8x128xbf16>
    %cst_17 = arith.constant dense<0.000000e+00> : vector<8x384xf32>
    %48 = tpu.matmul %47, %3, %cst_17 {dimension_numbers = #tpu.dot_dimension_numbers<[1], [0], [0], [1], [0, 0, 1, 1], [], []>} : vector<8x128xbf16>, vector<128x384xbf16>, vector<8x384xf32> -> vector<8x384xf32>
    %49 = vector.extract_strided_slice %46 {offsets = [0, 0], sizes = [8, 128], strides = [1, 1]} : vector<8x384xf32> to vector<8x128xf32>
    %50 = vector.extract_strided_slice %48 {offsets = [0, 0], sizes = [8, 128], strides = [1, 1]} : vector<8x384xf32> to vector<8x128xf32>
    %51 = arith.addf %49, %50 : vector<8x128xf32>
    %52 = arith.negf %51 : vector<8x128xf32>
    %53 = math.exp %52 : vector<8x128xf32>
    %cst_18 = arith.constant 1.000000e+00 : f32
    %54 = vector.broadcast %cst_18 : f32 to vector<8x128xf32>
    %55 = arith.addf %54, %53 : vector<8x128xf32>
    %56 = arith.divf %54, %55 : vector<8x128xf32>
    %57 = vector.extract_strided_slice %46 {offsets = [0, 128], sizes = [8, 128], strides = [1, 1]} : vector<8x384xf32> to vector<8x128xf32>
    %58 = vector.extract_strided_slice %48 {offsets = [0, 128], sizes = [8, 128], strides = [1, 1]} : vector<8x384xf32> to vector<8x128xf32>
    %59 = arith.addf %57, %58 : vector<8x128xf32>
    %60 = arith.negf %59 : vector<8x128xf32>
    %61 = math.exp %60 : vector<8x128xf32>
    %cst_19 = arith.constant 1.000000e+00 : f32
    %62 = vector.broadcast %cst_19 : f32 to vector<8x128xf32>
    %63 = arith.addf %62, %61 : vector<8x128xf32>
    %64 = arith.divf %62, %63 : vector<8x128xf32>
    %65 = vector.extract_strided_slice %46 {offsets = [0, 256], sizes = [8, 128], strides = [1, 1]} : vector<8x384xf32> to vector<8x128xf32>
    %66 = vector.extract_strided_slice %48 {offsets = [0, 256], sizes = [8, 128], strides = [1, 1]} : vector<8x384xf32> to vector<8x128xf32>
    %67 = arith.addf %66, %6 : vector<8x128xf32>
    %68 = arith.mulf %56, %67 : vector<8x128xf32>
    %69 = arith.addf %65, %68 : vector<8x128xf32>
    %70 = math.tanh %69 : vector<8x128xf32>
    %cst_20 = arith.constant 1.000000e+00 : f32
    %71 = vector.broadcast %cst_20 : f32 to vector<8x128xf32>
    %72 = arith.subf %71, %64 : vector<8x128xf32>
    %73 = arith.mulf %72, %70 : vector<8x128xf32>
    %74 = arith.mulf %64, %39 : vector<8x128xf32>
    %75 = arith.addf %73, %74 : vector<8x128xf32>
    %76 = arith.truncf %75 : vector<8x128xf32> to vector<8x128xbf16>
    %c0_21 = arith.constant 0 : index
    %c1_22 = arith.constant 1 : index
    %c0_23 = arith.constant 0 : index
    %77 = vector.load %arg6[%c0_21, %c1_22, %c0_23] : memref<8x8x128xbf16, #tpu.memory_space<vmem>>, vector<8x1x128xbf16>
    %78 = vector.shape_cast %77 : vector<8x1x128xbf16> to vector<8x128xbf16>
    %79 = vector.shape_cast %76 : vector<8x128xbf16> to vector<8x1x128xbf16>
    tpu.vector_store %arg6[%c0_21, %c1_22, %c0_23], %79 {strides = array<i32>} : memref<8x8x128xbf16, #tpu.memory_space<vmem>>, vector<8x1x128xbf16>,
    %c0_24 = arith.constant 0 : index
    %c2 = arith.constant 2 : index
    %c0_25 = arith.constant 0 : index
    %80 = vector.load %arg2[%c0_24, %c2, %c0_25] : memref<8x8x384xbf16, #tpu.memory_space<vmem>>, vector<8x1x384xbf16>
    %81 = vector.shape_cast %80 : vector<8x1x384xbf16> to vector<8x384xbf16>
    %82 = arith.extf %81 : vector<8x384xbf16> to vector<8x384xf32>
    %83 = arith.truncf %75 : vector<8x128xf32> to vector<8x128xbf16>
    %cst_26 = arith.constant dense<0.000000e+00> : vector<8x384xf32>
    %84 = tpu.matmul %83, %3, %cst_26 {dimension_numbers = #tpu.dot_dimension_numbers<[1], [0], [0], [1], [0, 0, 1, 1], [], []>} : vector<8x128xbf16>, vector<128x384xbf16>, vector<8x384xf32> -> vector<8x384xf32>
    %85 = vector.extract_strided_slice %82 {offsets = [0, 0], sizes = [8, 128], strides = [1, 1]} : vector<8x384xf32> to vector<8x128xf32>
    %86 = vector.extract_strided_slice %84 {offsets = [0, 0], sizes = [8, 128], strides = [1, 1]} : vector<8x384xf32> to vector<8x128xf32>
    %87 = arith.addf %85, %86 : vector<8x128xf32>
    %88 = arith.negf %87 : vector<8x128xf32>
    %89 = math.exp %88 : vector<8x128xf32>
    %cst_27 = arith.constant 1.000000e+00 : f32
    %90 = vector.broadcast %cst_27 : f32 to vector<8x128xf32>
    %91 = arith.addf %90, %89 : vector<8x128xf32>
    %92 = arith.divf %90, %91 : vector<8x128xf32>
    %93 = vector.extract_strided_slice %82 {offsets = [0, 128], sizes = [8, 128], strides = [1, 1]} : vector<8x384xf32> to vector<8x128xf32>
    %94 = vector.extract_strided_slice %84 {offsets = [0, 128], sizes = [8, 128], strides = [1, 1]} : vector<8x384xf32> to vector<8x128xf32>
    %95 = arith.addf %93, %94 : vector<8x128xf32>
    %96 = arith.negf %95 : vector<8x128xf32>
    %97 = math.exp %96 : vector<8x128xf32>
    %cst_28 = arith.constant 1.000000e+00 : f32
    %98 = vector.broadcast %cst_28 : f32 to vector<8x128xf32>
    %99 = arith.addf %98, %97 : vector<8x128xf32>
    %100 = arith.divf %98, %99 : vector<8x128xf32>
    %101 = vector.extract_strided_slice %82 {offsets = [0, 256], sizes = [8, 128], strides = [1, 1]} : vector<8x384xf32> to vector<8x128xf32>
    %102 = vector.extract_strided_slice %84 {offsets = [0, 256], sizes = [8, 128], strides = [1, 1]} : vector<8x384xf32> to vector<8x128xf32>
    %103 = arith.addf %102, %6 : vector<8x128xf32>
    %104 = arith.mulf %92, %103 : vector<8x128xf32>
    %105 = arith.addf %101, %104 : vector<8x128xf32>
    %106 = math.tanh %105 : vector<8x128xf32>
    %cst_29 = arith.constant 1.000000e+00 : f32
    %107 = vector.broadcast %cst_29 : f32 to vector<8x128xf32>
    %108 = arith.subf %107, %100 : vector<8x128xf32>
    %109 = arith.mulf %108, %106 : vector<8x128xf32>
    %110 = arith.mulf %100, %75 : vector<8x128xf32>
    %111 = arith.addf %109, %110 : vector<8x128xf32>
    %112 = arith.truncf %111 : vector<8x128xf32> to vector<8x128xbf16>
    %c0_30 = arith.constant 0 : index
    %c2_31 = arith.constant 2 : index
    %c0_32 = arith.constant 0 : index
    %113 = vector.load %arg6[%c0_30, %c2_31, %c0_32] : memref<8x8x128xbf16, #tpu.memory_space<vmem>>, vector<8x1x128xbf16>
    %114 = vector.shape_cast %113 : vector<8x1x128xbf16> to vector<8x128xbf16>
    %115 = vector.shape_cast %112 : vector<8x128xbf16> to vector<8x1x128xbf16>
    tpu.vector_store %arg6[%c0_30, %c2_31, %c0_32], %115 {strides = array<i32>} : memref<8x8x128xbf16, #tpu.memory_space<vmem>>, vector<8x1x128xbf16>,
    %c0_33 = arith.constant 0 : index
    %c3 = arith.constant 3 : index
    %c0_34 = arith.constant 0 : index
    %116 = vector.load %arg2[%c0_33, %c3, %c0_34] : memref<8x8x384xbf16, #tpu.memory_space<vmem>>, vector<8x1x384xbf16>
    %117 = vector.shape_cast %116 : vector<8x1x384xbf16> to vector<8x384xbf16>
    %118 = arith.extf %117 : vector<8x384xbf16> to vector<8x384xf32>
    %119 = arith.truncf %111 : vector<8x128xf32> to vector<8x128xbf16>
    %cst_35 = arith.constant dense<0.000000e+00> : vector<8x384xf32>
    %120 = tpu.matmul %119, %3, %cst_35 {dimension_numbers = #tpu.dot_dimension_numbers<[1], [0], [0], [1], [0, 0, 1, 1], [], []>} : vector<8x128xbf16>, vector<128x384xbf16>, vector<8x384xf32> -> vector<8x384xf32>
    %121 = vector.extract_strided_slice %118 {offsets = [0, 0], sizes = [8, 128], strides = [1, 1]} : vector<8x384xf32> to vector<8x128xf32>
    %122 = vector.extract_strided_slice %120 {offsets = [0, 0], sizes = [8, 128], strides = [1, 1]} : vector<8x384xf32> to vector<8x128xf32>
    %123 = arith.addf %121, %122 : vector<8x128xf32>
    %124 = arith.negf %123 : vector<8x128xf32>
    %125 = math.exp %124 : vector<8x128xf32>
    %cst_36 = arith.constant 1.000000e+00 : f32
    %126 = vector.broadcast %cst_36 : f32 to vector<8x128xf32>
    %127 = arith.addf %126, %125 : vector<8x128xf32>
    %128 = arith.divf %126, %127 : vector<8x128xf32>
    %129 = vector.extract_strided_slice %118 {offsets = [0, 128], sizes = [8, 128], strides = [1, 1]} : vector<8x384xf32> to vector<8x128xf32>
    %130 = vector.extract_strided_slice %120 {offsets = [0, 128], sizes = [8, 128], strides = [1, 1]} : vector<8x384xf32> to vector<8x128xf32>
    %131 = arith.addf %129, %130 : vector<8x128xf32>
    %132 = arith.negf %131 : vector<8x128xf32>
    %133 = math.exp %132 : vector<8x128xf32>
    %cst_37 = arith.constant 1.000000e+00 : f32
    %134 = vector.broadcast %cst_37 : f32 to vector<8x128xf32>
    %135 = arith.addf %134, %133 : vector<8x128xf32>
    %136 = arith.divf %134, %135 : vector<8x128xf32>
    %137 = vector.extract_strided_slice %118 {offsets = [0, 256], sizes = [8, 128], strides = [1, 1]} : vector<8x384xf32> to vector<8x128xf32>
    %138 = vector.extract_strided_slice %120 {offsets = [0, 256], sizes = [8, 128], strides = [1, 1]} : vector<8x384xf32> to vector<8x128xf32>
    %139 = arith.addf %138, %6 : vector<8x128xf32>
    %140 = arith.mulf %128, %139 : vector<8x128xf32>
    %141 = arith.addf %137, %140 : vector<8x128xf32>
    %142 = math.tanh %141 : vector<8x128xf32>
    %cst_38 = arith.constant 1.000000e+00 : f32
    %143 = vector.broadcast %cst_38 : f32 to vector<8x128xf32>
    %144 = arith.subf %143, %136 : vector<8x128xf32>
    %145 = arith.mulf %144, %142 : vector<8x128xf32>
    %146 = arith.mulf %136, %111 : vector<8x128xf32>
    %147 = arith.addf %145, %146 : vector<8x128xf32>
    %148 = arith.truncf %147 : vector<8x128xf32> to vector<8x128xbf16>
    %c0_39 = arith.constant 0 : index
    %c3_40 = arith.constant 3 : index
    %c0_41 = arith.constant 0 : index
    %149 = vector.load %arg6[%c0_39, %c3_40, %c0_41] : memref<8x8x128xbf16, #tpu.memory_space<vmem>>, vector<8x1x128xbf16>
    %150 = vector.shape_cast %149 : vector<8x1x128xbf16> to vector<8x128xbf16>
    %151 = vector.shape_cast %148 : vector<8x128xbf16> to vector<8x1x128xbf16>
    tpu.vector_store %arg6[%c0_39, %c3_40, %c0_41], %151 {strides = array<i32>} : memref<8x8x128xbf16, #tpu.memory_space<vmem>>, vector<8x1x128xbf16>,
    %c0_42 = arith.constant 0 : index
    %c4 = arith.constant 4 : index
    %c0_43 = arith.constant 0 : index
    %152 = vector.load %arg2[%c0_42, %c4, %c0_43] : memref<8x8x384xbf16, #tpu.memory_space<vmem>>, vector<8x1x384xbf16>
    %153 = vector.shape_cast %152 : vector<8x1x384xbf16> to vector<8x384xbf16>
    %154 = arith.extf %153 : vector<8x384xbf16> to vector<8x384xf32>
    %155 = arith.truncf %147 : vector<8x128xf32> to vector<8x128xbf16>
    %cst_44 = arith.constant dense<0.000000e+00> : vector<8x384xf32>
    %156 = tpu.matmul %155, %3, %cst_44 {dimension_numbers = #tpu.dot_dimension_numbers<[1], [0], [0], [1], [0, 0, 1, 1], [], []>} : vector<8x128xbf16>, vector<128x384xbf16>, vector<8x384xf32> -> vector<8x384xf32>
    %157 = vector.extract_strided_slice %154 {offsets = [0, 0], sizes = [8, 128], strides = [1, 1]} : vector<8x384xf32> to vector<8x128xf32>
    %158 = vector.extract_strided_slice %156 {offsets = [0, 0], sizes = [8, 128], strides = [1, 1]} : vector<8x384xf32> to vector<8x128xf32>
    %159 = arith.addf %157, %158 : vector<8x128xf32>
    %160 = arith.negf %159 : vector<8x128xf32>
    %161 = math.exp %160 : vector<8x128xf32>
    %cst_45 = arith.constant 1.000000e+00 : f32
    %162 = vector.broadcast %cst_45 : f32 to vector<8x128xf32>
    %163 = arith.addf %162, %161 : vector<8x128xf32>
    %164 = arith.divf %162, %163 : vector<8x128xf32>
    %165 = vector.extract_strided_slice %154 {offsets = [0, 128], sizes = [8, 128], strides = [1, 1]} : vector<8x384xf32> to vector<8x128xf32>
    %166 = vector.extract_strided_slice %156 {offsets = [0, 128], sizes = [8, 128], strides = [1, 1]} : vector<8x384xf32> to vector<8x128xf32>
    %167 = arith.addf %165, %166 : vector<8x128xf32>
    %168 = arith.negf %167 : vector<8x128xf32>
    %169 = math.exp %168 : vector<8x128xf32>
    %cst_46 = arith.constant 1.000000e+00 : f32
    %170 = vector.broadcast %cst_46 : f32 to vector<8x128xf32>
    %171 = arith.addf %170, %169 : vector<8x128xf32>
    %172 = arith.divf %170, %171 : vector<8x128xf32>
    %173 = vector.extract_strided_slice %154 {offsets = [0, 256], sizes = [8, 128], strides = [1, 1]} : vector<8x384xf32> to vector<8x128xf32>
    %174 = vector.extract_strided_slice %156 {offsets = [0, 256], sizes = [8, 128], strides = [1, 1]} : vector<8x384xf32> to vector<8x128xf32>
    %175 = arith.addf %174, %6 : vector<8x128xf32>
    %176 = arith.mulf %164, %175 : vector<8x128xf32>
    %177 = arith.addf %173, %176 : vector<8x128xf32>
    %178 = math.tanh %177 : vector<8x128xf32>
    %cst_47 = arith.constant 1.000000e+00 : f32
    %179 = vector.broadcast %cst_47 : f32 to vector<8x128xf32>
    %180 = arith.subf %179, %172 : vector<8x128xf32>
    %181 = arith.mulf %180, %178 : vector<8x128xf32>
    %182 = arith.mulf %172, %147 : vector<8x128xf32>
    %183 = arith.addf %181, %182 : vector<8x128xf32>
    %184 = arith.truncf %183 : vector<8x128xf32> to vector<8x128xbf16>
    %c0_48 = arith.constant 0 : index
    %c4_49 = arith.constant 4 : index
    %c0_50 = arith.constant 0 : index
    %185 = vector.load %arg6[%c0_48, %c4_49, %c0_50] : memref<8x8x128xbf16, #tpu.memory_space<vmem>>, vector<8x1x128xbf16>
    %186 = vector.shape_cast %185 : vector<8x1x128xbf16> to vector<8x128xbf16>
    %187 = vector.shape_cast %184 : vector<8x128xbf16> to vector<8x1x128xbf16>
    tpu.vector_store %arg6[%c0_48, %c4_49, %c0_50], %187 {strides = array<i32>} : memref<8x8x128xbf16, #tpu.memory_space<vmem>>, vector<8x1x128xbf16>,
    %c0_51 = arith.constant 0 : index
    %c5 = arith.constant 5 : index
    %c0_52 = arith.constant 0 : index
    %188 = vector.load %arg2[%c0_51, %c5, %c0_52] : memref<8x8x384xbf16, #tpu.memory_space<vmem>>, vector<8x1x384xbf16>
    %189 = vector.shape_cast %188 : vector<8x1x384xbf16> to vector<8x384xbf16>
    %190 = arith.extf %189 : vector<8x384xbf16> to vector<8x384xf32>
    %191 = arith.truncf %183 : vector<8x128xf32> to vector<8x128xbf16>
    %cst_53 = arith.constant dense<0.000000e+00> : vector<8x384xf32>
    %192 = tpu.matmul %191, %3, %cst_53 {dimension_numbers = #tpu.dot_dimension_numbers<[1], [0], [0], [1], [0, 0, 1, 1], [], []>} : vector<8x128xbf16>, vector<128x384xbf16>, vector<8x384xf32> -> vector<8x384xf32>
    %193 = vector.extract_strided_slice %190 {offsets = [0, 0], sizes = [8, 128], strides = [1, 1]} : vector<8x384xf32> to vector<8x128xf32>
    %194 = vector.extract_strided_slice %192 {offsets = [0, 0], sizes = [8, 128], strides = [1, 1]} : vector<8x384xf32> to vector<8x128xf32>
    %195 = arith.addf %193, %194 : vector<8x128xf32>
    %196 = arith.negf %195 : vector<8x128xf32>
    %197 = math.exp %196 : vector<8x128xf32>
    %cst_54 = arith.constant 1.000000e+00 : f32
    %198 = vector.broadcast %cst_54 : f32 to vector<8x128xf32>
    %199 = arith.addf %198, %197 : vector<8x128xf32>
    %200 = arith.divf %198, %199 : vector<8x128xf32>
    %201 = vector.extract_strided_slice %190 {offsets = [0, 128], sizes = [8, 128], strides = [1, 1]} : vector<8x384xf32> to vector<8x128xf32>
    %202 = vector.extract_strided_slice %192 {offsets = [0, 128], sizes = [8, 128], strides = [1, 1]} : vector<8x384xf32> to vector<8x128xf32>
    %203 = arith.addf %201, %202 : vector<8x128xf32>
    %204 = arith.negf %203 : vector<8x128xf32>
    %205 = math.exp %204 : vector<8x128xf32>
    %cst_55 = arith.constant 1.000000e+00 : f32
    %206 = vector.broadcast %cst_55 : f32 to vector<8x128xf32>
    %207 = arith.addf %206, %205 : vector<8x128xf32>
    %208 = arith.divf %206, %207 : vector<8x128xf32>
    %209 = vector.extract_strided_slice %190 {offsets = [0, 256], sizes = [8, 128], strides = [1, 1]} : vector<8x384xf32> to vector<8x128xf32>
    %210 = vector.extract_strided_slice %192 {offsets = [0, 256], sizes = [8, 128], strides = [1, 1]} : vector<8x384xf32> to vector<8x128xf32>
    %211 = arith.addf %210, %6 : vector<8x128xf32>
    %212 = arith.mulf %200, %211 : vector<8x128xf32>
    %213 = arith.addf %209, %212 : vector<8x128xf32>
    %214 = math.tanh %213 : vector<8x128xf32>
    %cst_56 = arith.constant 1.000000e+00 : f32
    %215 = vector.broadcast %cst_56 : f32 to vector<8x128xf32>
    %216 = arith.subf %215, %208 : vector<8x128xf32>
    %217 = arith.mulf %216, %214 : vector<8x128xf32>
    %218 = arith.mulf %208, %183 : vector<8x128xf32>
    %219 = arith.addf %217, %218 : vector<8x128xf32>
    %220 = arith.truncf %219 : vector<8x128xf32> to vector<8x128xbf16>
    %c0_57 = arith.constant 0 : index
    %c5_58 = arith.constant 5 : index
    %c0_59 = arith.constant 0 : index
    %221 = vector.load %arg6[%c0_57, %c5_58, %c0_59] : memref<8x8x128xbf16, #tpu.memory_space<vmem>>, vector<8x1x128xbf16>
    %222 = vector.shape_cast %221 : vector<8x1x128xbf16> to vector<8x128xbf16>
    %223 = vector.shape_cast %220 : vector<8x128xbf16> to vector<8x1x128xbf16>
    tpu.vector_store %arg6[%c0_57, %c5_58, %c0_59], %223 {strides = array<i32>} : memref<8x8x128xbf16, #tpu.memory_space<vmem>>, vector<8x1x128xbf16>,
    %c0_60 = arith.constant 0 : index
    %c6 = arith.constant 6 : index
    %c0_61 = arith.constant 0 : index
    %224 = vector.load %arg2[%c0_60, %c6, %c0_61] : memref<8x8x384xbf16, #tpu.memory_space<vmem>>, vector<8x1x384xbf16>
    %225 = vector.shape_cast %224 : vector<8x1x384xbf16> to vector<8x384xbf16>
    %226 = arith.extf %225 : vector<8x384xbf16> to vector<8x384xf32>
    %227 = arith.truncf %219 : vector<8x128xf32> to vector<8x128xbf16>
    %cst_62 = arith.constant dense<0.000000e+00> : vector<8x384xf32>
    %228 = tpu.matmul %227, %3, %cst_62 {dimension_numbers = #tpu.dot_dimension_numbers<[1], [0], [0], [1], [0, 0, 1, 1], [], []>} : vector<8x128xbf16>, vector<128x384xbf16>, vector<8x384xf32> -> vector<8x384xf32>
    %229 = vector.extract_strided_slice %226 {offsets = [0, 0], sizes = [8, 128], strides = [1, 1]} : vector<8x384xf32> to vector<8x128xf32>
    %230 = vector.extract_strided_slice %228 {offsets = [0, 0], sizes = [8, 128], strides = [1, 1]} : vector<8x384xf32> to vector<8x128xf32>
    %231 = arith.addf %229, %230 : vector<8x128xf32>
    %232 = arith.negf %231 : vector<8x128xf32>
    %233 = math.exp %232 : vector<8x128xf32>
    %cst_63 = arith.constant 1.000000e+00 : f32
    %234 = vector.broadcast %cst_63 : f32 to vector<8x128xf32>
    %235 = arith.addf %234, %233 : vector<8x128xf32>
    %236 = arith.divf %234, %235 : vector<8x128xf32>
    %237 = vector.extract_strided_slice %226 {offsets = [0, 128], sizes = [8, 128], strides = [1, 1]} : vector<8x384xf32> to vector<8x128xf32>
    %238 = vector.extract_strided_slice %228 {offsets = [0, 128], sizes = [8, 128], strides = [1, 1]} : vector<8x384xf32> to vector<8x128xf32>
    %239 = arith.addf %237, %238 : vector<8x128xf32>
    %240 = arith.negf %239 : vector<8x128xf32>
    %241 = math.exp %240 : vector<8x128xf32>
    %cst_64 = arith.constant 1.000000e+00 : f32
    %242 = vector.broadcast %cst_64 : f32 to vector<8x128xf32>
    %243 = arith.addf %242, %241 : vector<8x128xf32>
    %244 = arith.divf %242, %243 : vector<8x128xf32>
    %245 = vector.extract_strided_slice %226 {offsets = [0, 256], sizes = [8, 128], strides = [1, 1]} : vector<8x384xf32> to vector<8x128xf32>
    %246 = vector.extract_strided_slice %228 {offsets = [0, 256], sizes = [8, 128], strides = [1, 1]} : vector<8x384xf32> to vector<8x128xf32>
    %247 = arith.addf %246, %6 : vector<8x128xf32>
    %248 = arith.mulf %236, %247 : vector<8x128xf32>
    %249 = arith.addf %245, %248 : vector<8x128xf32>
    %250 = math.tanh %249 : vector<8x128xf32>
    %cst_65 = arith.constant 1.000000e+00 : f32
    %251 = vector.broadcast %cst_65 : f32 to vector<8x128xf32>
    %252 = arith.subf %251, %244 : vector<8x128xf32>
    %253 = arith.mulf %252, %250 : vector<8x128xf32>
    %254 = arith.mulf %244, %219 : vector<8x128xf32>
    %255 = arith.addf %253, %254 : vector<8x128xf32>
    %256 = arith.truncf %255 : vector<8x128xf32> to vector<8x128xbf16>
    %c0_66 = arith.constant 0 : index
    %c6_67 = arith.constant 6 : index
    %c0_68 = arith.constant 0 : index
    %257 = vector.load %arg6[%c0_66, %c6_67, %c0_68] : memref<8x8x128xbf16, #tpu.memory_space<vmem>>, vector<8x1x128xbf16>
    %258 = vector.shape_cast %257 : vector<8x1x128xbf16> to vector<8x128xbf16>
    %259 = vector.shape_cast %256 : vector<8x128xbf16> to vector<8x1x128xbf16>
    tpu.vector_store %arg6[%c0_66, %c6_67, %c0_68], %259 {strides = array<i32>} : memref<8x8x128xbf16, #tpu.memory_space<vmem>>, vector<8x1x128xbf16>,
    %c0_69 = arith.constant 0 : index
    %c7 = arith.constant 7 : index
    %c0_70 = arith.constant 0 : index
    %260 = vector.load %arg2[%c0_69, %c7, %c0_70] : memref<8x8x384xbf16, #tpu.memory_space<vmem>>, vector<8x1x384xbf16>
    %261 = vector.shape_cast %260 : vector<8x1x384xbf16> to vector<8x384xbf16>
    %262 = arith.extf %261 : vector<8x384xbf16> to vector<8x384xf32>
    %263 = arith.truncf %255 : vector<8x128xf32> to vector<8x128xbf16>
    %cst_71 = arith.constant dense<0.000000e+00> : vector<8x384xf32>
    %264 = tpu.matmul %263, %3, %cst_71 {dimension_numbers = #tpu.dot_dimension_numbers<[1], [0], [0], [1], [0, 0, 1, 1], [], []>} : vector<8x128xbf16>, vector<128x384xbf16>, vector<8x384xf32> -> vector<8x384xf32>
    %265 = vector.extract_strided_slice %262 {offsets = [0, 0], sizes = [8, 128], strides = [1, 1]} : vector<8x384xf32> to vector<8x128xf32>
    %266 = vector.extract_strided_slice %264 {offsets = [0, 0], sizes = [8, 128], strides = [1, 1]} : vector<8x384xf32> to vector<8x128xf32>
    %267 = arith.addf %265, %266 : vector<8x128xf32>
    %268 = arith.negf %267 : vector<8x128xf32>
    %269 = math.exp %268 : vector<8x128xf32>
    %cst_72 = arith.constant 1.000000e+00 : f32
    %270 = vector.broadcast %cst_72 : f32 to vector<8x128xf32>
    %271 = arith.addf %270, %269 : vector<8x128xf32>
    %272 = arith.divf %270, %271 : vector<8x128xf32>
    %273 = vector.extract_strided_slice %262 {offsets = [0, 128], sizes = [8, 128], strides = [1, 1]} : vector<8x384xf32> to vector<8x128xf32>
    %274 = vector.extract_strided_slice %264 {offsets = [0, 128], sizes = [8, 128], strides = [1, 1]} : vector<8x384xf32> to vector<8x128xf32>
    %275 = arith.addf %273, %274 : vector<8x128xf32>
    %276 = arith.negf %275 : vector<8x128xf32>
    %277 = math.exp %276 : vector<8x128xf32>
    %cst_73 = arith.constant 1.000000e+00 : f32
    %278 = vector.broadcast %cst_73 : f32 to vector<8x128xf32>
    %279 = arith.addf %278, %277 : vector<8x128xf32>
    %280 = arith.divf %278, %279 : vector<8x128xf32>
    %281 = vector.extract_strided_slice %262 {offsets = [0, 256], sizes = [8, 128], strides = [1, 1]} : vector<8x384xf32> to vector<8x128xf32>
    %282 = vector.extract_strided_slice %264 {offsets = [0, 256], sizes = [8, 128], strides = [1, 1]} : vector<8x384xf32> to vector<8x128xf32>
    %283 = arith.addf %282, %6 : vector<8x128xf32>
    %284 = arith.mulf %272, %283 : vector<8x128xf32>
    %285 = arith.addf %281, %284 : vector<8x128xf32>
    %286 = math.tanh %285 : vector<8x128xf32>
    %cst_74 = arith.constant 1.000000e+00 : f32
    %287 = vector.broadcast %cst_74 : f32 to vector<8x128xf32>
    %288 = arith.subf %287, %280 : vector<8x128xf32>
    %289 = arith.mulf %288, %286 : vector<8x128xf32>
    %290 = arith.mulf %280, %255 : vector<8x128xf32>
    %291 = arith.addf %289, %290 : vector<8x128xf32>
    %292 = arith.truncf %291 : vector<8x128xf32> to vector<8x128xbf16>
    %c0_75 = arith.constant 0 : index
    %c7_76 = arith.constant 7 : index
    %c0_77 = arith.constant 0 : index
    %293 = vector.load %arg6[%c0_75, %c7_76, %c0_77] : memref<8x8x128xbf16, #tpu.memory_space<vmem>>, vector<8x1x128xbf16>
    %294 = vector.shape_cast %293 : vector<8x1x128xbf16> to vector<8x128xbf16>
    %295 = vector.shape_cast %292 : vector<8x128xbf16> to vector<8x1x128xbf16>
    tpu.vector_store %arg6[%c0_75, %c7_76, %c0_77], %295 {strides = array<i32>} : memref<8x8x128xbf16, #tpu.memory_space<vmem>>, vector<8x1x128xbf16>,
    %c0_78 = arith.constant 0 : index
    %c0_79 = arith.constant 0 : index
    %296 = vector.load %arg8[%c0_78, %c0_79] : memref<8x128xf32, #tpu.memory_space<vmem>>, vector<8x128xf32>
    tpu.vector_store %arg8[%c0_78, %c0_79], %291 {strides = array<i32>} : memref<8x128xf32, #tpu.memory_space<vmem>>, vector<8x128xf32>,
    %c0_i32_80 = arith.constant 0 : i32
    %297 = arith.cmpi eq, %arg1, %c0_i32_80 : i32
    %298 = arith.extui %297 : i1 to i32
    %c0_i32_81 = arith.constant 0 : i32
    %299 = arith.cmpi ne, %298, %c0_i32_81 : i32
    scf.if %299 {
      %c0_82 = arith.constant 0 : index
      %c0_83 = arith.constant 0 : index
      %300 = vector.load %arg7[%c0_82, %c0_83] : memref<8x128xf32, #tpu.memory_space<vmem>>, vector<8x128xf32>
      tpu.vector_store %arg7[%c0_82, %c0_83], %291 {strides = array<i32>} : memref<8x128xf32, #tpu.memory_space<vmem>>, vector<8x128xf32>,
    } else {
    }
    return
  }
  func.func @transform_0(%arg0: i32, %arg1: i32) -> (i32, i32, i32) {
    %c0_i32 = arith.constant 0 : i32
    %c0_i32_0 = arith.constant 0 : i32
    return %arg0, %arg1, %c0_i32 : i32, i32, i32
  }
  func.func @transform_1(%arg0: i32, %arg1: i32) -> (i32, i32) {
    %c0_i32 = arith.constant 0 : i32
    %c0_i32_0 = arith.constant 0 : i32
    return %arg0, %c0_i32 : i32, i32
  }
  func.func @transform_2(%arg0: i32, %arg1: i32) -> (i32, i32) {
    %c0_i32 = arith.constant 0 : i32
    %c0_i32_0 = arith.constant 0 : i32
    %c0_i32_1 = arith.constant 0 : i32
    return %c0_i32, %c0_i32_0 : i32, i32
  }
  func.func @transform_3(%arg0: i32, %arg1: i32) -> (i32, i32) {
    %c0_i32 = arith.constant 0 : i32
    %c0_i32_0 = arith.constant 0 : i32
    %c0_i32_1 = arith.constant 0 : i32
    return %c0_i32, %c0_i32_0 : i32, i32
  }
  func.func @transform_4(%arg0: i32, %arg1: i32) -> (i32, i32, i32) {
    %c0_i32 = arith.constant 0 : i32
    %c0_i32_0 = arith.constant 0 : i32
    return %arg0, %arg1, %c0_i32 : i32, i32, i32
  }
  func.func @transform_5(%arg0: i32, %arg1: i32) -> (i32, i32) {
    %c0_i32 = arith.constant 0 : i32
    %c0_i32_0 = arith.constant 0 : i32
    return %arg0, %c0_i32 : i32, i32
  }
}

module attributes {stable_mosaic.version = 11 : i64} {
  func.func @_matmul_bias_kernel(%arg0: i32, %arg1: i32, %arg2: memref<64x128xbf16, #tpu.memory_space<vmem>>, %arg3: memref<128x128xbf16, #tpu.memory_space<vmem>>, %arg4: memref<1x128xf32, #tpu.memory_space<vmem>>, %arg5: memref<64x128xf32, #tpu.memory_space<vmem>>) attributes {dimension_semantics = [#tpu.dimension_semantics<parallel>, #tpu.dimension_semantics<parallel>], iteration_bounds = array<i64: 1, 1>, scalar_prefetch = 0 : i64, scratch_operands = 0 : i64, tpu.core_type = #tpu.core_type<tc>, window_params = [{transform_indices = @transform_0, window_bounds = array<i64: 64, 128>}, {transform_indices = @transform_1, window_bounds = array<i64: 128, 128>}, {transform_indices = @transform_2, window_bounds = array<i64: 1, 128>}, {transform_indices = @transform_3, window_bounds = array<i64: 64, 128>}]} {
    %c0 = arith.constant 0 : index
    %c0_0 = arith.constant 0 : index
    %0 = vector.load %arg2[%c0, %c0_0] : memref<64x128xbf16, #tpu.memory_space<vmem>>, vector<64x128xbf16>
    %c0_1 = arith.constant 0 : index
    %c0_2 = arith.constant 0 : index
    %1 = vector.load %arg3[%c0_1, %c0_2] : memref<128x128xbf16, #tpu.memory_space<vmem>>, vector<128x128xbf16>
    %cst = arith.constant dense<0.000000e+00> : vector<64x128xf32>
    %2 = tpu.matmul %0, %1, %cst {dimension_numbers = #tpu.dot_dimension_numbers<[1], [0], [0], [1], [0, 0, 1, 1], [], []>} : vector<64x128xbf16>, vector<128x128xbf16>, vector<64x128xf32> -> vector<64x128xf32>
    %c0_3 = arith.constant 0 : index
    %c0_4 = arith.constant 0 : index
    %3 = vector.load %arg4[%c0_3, %c0_4] : memref<1x128xf32, #tpu.memory_space<vmem>>, vector<1x128xf32>
    %4 = vector.broadcast %3 : vector<1x128xf32> to vector<64x128xf32>
    %5 = arith.addf %2, %4 : vector<64x128xf32>
    %c0_5 = arith.constant 0 : index
    %c0_6 = arith.constant 0 : index
    %6 = vector.load %arg5[%c0_5, %c0_6] : memref<64x128xf32, #tpu.memory_space<vmem>>, vector<64x128xf32>
    tpu.vector_store %arg5[%c0_5, %c0_6], %5 {strides = array<i32>} : memref<64x128xf32, #tpu.memory_space<vmem>>, vector<64x128xf32>,
    return
  }
  func.func @transform_0(%arg0: i32, %arg1: i32) -> (i32, i32) {
    %c0_i32 = arith.constant 0 : i32
    %c0_i32_0 = arith.constant 0 : i32
    return %arg0, %c0_i32 : i32, i32
  }
  func.func @transform_1(%arg0: i32, %arg1: i32) -> (i32, i32) {
    %c0_i32 = arith.constant 0 : i32
    %c0_i32_0 = arith.constant 0 : i32
    return %c0_i32, %arg1 : i32, i32
  }
  func.func @transform_2(%arg0: i32, %arg1: i32) -> (i32, i32) {
    %c0_i32 = arith.constant 0 : i32
    %c0_i32_0 = arith.constant 0 : i32
    return %c0_i32, %arg1 : i32, i32
  }
  func.func @transform_3(%arg0: i32, %arg1: i32) -> (i32, i32) {
    %c0_i32 = arith.constant 0 : i32
    return %arg0, %arg1 : i32, i32
  }
}

</mosaic_0001>

<llo_original>
// kernel: tpu_custom_call.1
$region0: #{tpu_custom_call.1}
  #allocation0 [shape = 'u32[]', space=smem, size = 0x4, offset = 0x4, fixed_abs, tag = 'smem constant byte address 0x4 - core index']
  #allocation1 [shape = 'u32[144,128]{1,0:T(1,128)}', space=vmem, size = 0x12000, scoped, tag = 'internal scratch']
  %s0 = inlined_call_operand.hbm [shape: f32[8,128], index: 0, kind: input, shape index: {}]
  %s1 = inlined_call_operand.hbm [shape: f32[8,128], index: 1, kind: output, shape index: {}]
  %s2 = sld [smem:[#allocation0]]
  $region41: #{tpu_custom_call.1} parent=0
    _
  %s4 = ssub.s32 1, %s2
  %s5 = scalar_select 0, %s4, %s2
  $region1: #{tpu_custom_call.1} parent=0
    #allocation2 [shape = 'u8[4096]{0}', space=vmem, size = 0x1000, scoped, tag = 'input window, operand 0, single buffered']
    #allocation3 [shape = 's32[2]{0}', space=sflag, size = 0x8, scoped, tag = 'scoped memory for tpu_custom_call.1']
    #allocation4 [shape = 's32[2]{0}', space=sflag, size = 0x8, scoped, tag = 'scoped memory for tpu_custom_call.1']
    #allocation5 [shape = 'u8[4096]{0}', space=vmem, size = 0x1000, scoped, tag = 'output window, operand 0, single buffered']
    %6 = vsyncpa [#allocation3], 0
    %7 = vsyncpa [#allocation4], 0
    loop: start=0, step=1, limit=4
    $region2: #{tpu_custom_call.1} parent=1 // loop_pre_header
      _
    $region3: #{tpu_custom_call.1} parent=1 // loop_header
      %s9 = sphi 0, %s13
      %p10 = scmp.ge.s32.totalorder %s9, 4
      %s17 = sphi 0, %s17
      %s19 = sphi 0, %s17
      %s20 = sphi 0, %s19
      %s34 = sphi 0, %s20
      %s38 = sphi 0, %s38
      %s40 = sphi 0, %s38
      %s41 = sphi 0, %s40
      %s55 = sphi 0, %s41
    $region4: #{tpu_custom_call.1} parent=1 // loop_header_branch
      %12 = sbr.rel (%p10) target = $region8
    $region5: #{tpu_custom_call.1} parent=1 // loop_body
      %s14 = ssub.s32 %s9, 1
      %s15 = ssub.s32 %s9, 2
      %s16 = sadd.s32 %s9, 1
      %s18 = sadd.s32 %s17, 1
      %p21 = scmp.eq.s32.totalorder %s9, 1
      %p22 = scmp.ne.s32.totalorder %s17, %s19
      %p23 = scmp.eq.s32.totalorder %s9, 0
      %p24 = por %p22, %p23
      %p25 = scmp.ne.s32.totalorder %s17, %s19
      %p26 = scmp.eq.s32.totalorder %s14, 1
      %p27 = por %p25, %p26
      %p28 = scmp.ne.s32.totalorder %s19, %s20
      %p29 = scmp.eq.s32.totalorder %s14, 0
      %p30 = por %p28, %p29
      %p31 = scmp.ne.s32.totalorder %s19, %s20
      %p32 = scmp.eq.s32.totalorder %s15, 1
      %p33 = por %p31, %p32
      %p35 = scmp.ne.s32.totalorder %s20, %s34
      %p36 = scmp.eq.s32.totalorder %s15, 0
      %p37 = por %p35, %p36
      %s39 = sadd.s32 %s38, 1
      %p42 = scmp.eq.s32.totalorder %s9, 1
      %p43 = scmp.ne.s32.totalorder %s38, %s40
      %p44 = scmp.eq.s32.totalorder %s9, 0
      %p45 = por %p43, %p44
      %p46 = scmp.ne.s32.totalorder %s38, %s40
      %p47 = scmp.eq.s32.totalorder %s14, 1
      %p48 = por %p46, %p47
      %p49 = scmp.ne.s32.totalorder %s40, %s41
      %p50 = scmp.eq.s32.totalorder %s14, 0
      %p51 = por %p49, %p50
      %p52 = scmp.ne.s32.totalorder %s40, %s41
      %p53 = scmp.eq.s32.totalorder %s15, 1
      %p54 = por %p52, %p53
      %p56 = scmp.ne.s32.totalorder %s41, %s55
      %p57 = scmp.eq.s32.totalorder %s15, 0
      %p58 = por %p56, %p57
      %p59 = scmp.le.s32.totalorder 1, %s9
      %p60 = scmp.lt.s32.totalorder %s9, 3
      %p61 = pnand %p59, %p60
      %p62 = pneg %p61
      // Predicated region
      $region9: #{tpu_custom_call.1} parent=5 // pred_check
        _
      $region10: #{tpu_custom_call.1} parent=5 // pred_check_branch
        %64 = sbr.rel (%p61) target = $region12
      $region11: #{tpu_custom_call.1} parent=5 // pred_region
        %s65 = ssub.s32 %s9, 1
        // Predicated region
        $region13: #{tpu_custom_call.1} parent=11 // pred_check
          %p66 = pneg %p30
        $region14: #{tpu_custom_call.1} parent=11 // pred_check_branch
          %68 = sbr.rel (%p66) target = $region16
        $region15: #{tpu_custom_call.1} parent=11 // pred_region
          %s70 = ssub.s32 128, 128
          %71 = vsyncadd [#allocation3], %s70
          %s73 = sshll.u32 [#allocation2], 4
          %s74 = int_to_ptr.vmem [resolvable:$true] %s73
          %76 = dma.hbm_to_vmem [thread:$0]  %s0, 128, %s74, [#allocation3]
        $region16: #{tpu_custom_call.1} parent=11 // pred_fallthru
          _
      $region12: #{tpu_custom_call.1} parent=5 // pred_fallthru
        _
      %p77 = scmp.lt.s32.totalorder %s9, 2
      // Predicated region
      $region17: #{tpu_custom_call.1} parent=5 // pred_check
        %p78 = pneg %p77
      $region18: #{tpu_custom_call.1} parent=5 // pred_check_branch
        %80 = sbr.rel (%p78) target = $region20
      $region19: #{tpu_custom_call.1} parent=5 // pred_region
        _
      $region20: #{tpu_custom_call.1} parent=5 // pred_fallthru
        _
      %p81 = scmp.le.s32.totalorder 1, %s9
      %p82 = scmp.lt.s32.totalorder %s9, 3
      %p83 = pnand %p81, %p82
      %p84 = pneg %p83
      // Predicated region
      $region21: #{tpu_custom_call.1} parent=5 // pred_check
        _
      $region22: #{tpu_custom_call.1} parent=5 // pred_check_branch
        %86 = sbr.rel (%p83) target = $region24
      $region23: #{tpu_custom_call.1} parent=5 // pred_region
        %s87 = ssub.s32 %s9, 1
        // Predicated region
        $region25: #{tpu_custom_call.1} parent=23 // pred_check
          %p88 = pneg %p30
        $region26: #{tpu_custom_call.1} parent=23 // pred_check_branch
          %90 = sbr.rel (%p88) target = $region28
        $region27: #{tpu_custom_call.1} parent=23 // pred_region
          %91 = dma.done [#allocation3], 128
        $region28: #{tpu_custom_call.1} parent=23 // pred_fallthru
          _
        %p92 = pneg %p30
        %p93 = pneg %p27
        %p94 = pneg %p51
        %p95 = pneg %p48
        %v96 = vld [vmem:[#allocation2] sm:$0xff]
        %v97 = vadd.f32 %v96, 1.0
        %98 = vst [vmem:[#allocation5] sm:$0xff] %v97
        // Predicated region
        $region29: #{tpu_custom_call.1} parent=23 // pred_check
          %p99 = pneg %p48
        $region30: #{tpu_custom_call.1} parent=23 // pred_check_branch
          %101 = sbr.rel (%p99) target = $region32
        $region31: #{tpu_custom_call.1} parent=23 // pred_region
          %s103 = ssub.s32 128, 128
          %104 = vsyncadd [#allocation4], %s103
          %s106 = sshll.u32 [#allocation5], 4
          %s107 = int_to_ptr.vmem [resolvable:$true] %s106
          %109 = dma.vmem_to_hbm [thread:$0]  %s107, 128, %s1, [#allocation4]
        $region32: #{tpu_custom_call.1} parent=23 // pred_fallthru
          _
        // Predicated region
        $region33: #{tpu_custom_call.1} parent=23 // pred_check
          %p110 = pneg %p48
        $region34: #{tpu_custom_call.1} parent=23 // pred_check_branch
          %112 = sbr.rel (%p110) target = $region36
        $region35: #{tpu_custom_call.1} parent=23 // pred_region
          %113 = dma.done [#allocation4], 128
        $region36: #{tpu_custom_call.1} parent=23 // pred_fallthru
          _
      $region24: #{tpu_custom_call.1} parent=5 // pred_fallthru
        _
      %p114 = scmp.le.s32.totalorder 2, %s9
      // Predicated region
      $region37: #{tpu_custom_call.1} parent=5 // pred_check
        %p115 = pneg %p114
      $region38: #{tpu_custom_call.1} parent=5 // pred_check_branch
        %117 = sbr.rel (%p115) target = $region40
      $region39: #{tpu_custom_call.1} parent=5 // pred_region
        %s118 = ssub.s32 %s9, 2
      $region40: #{tpu_custom_call.1} parent=5 // pred_fallthru
        _
    $region6: #{tpu_custom_call.1} parent=1 // loop_footer
      %s13 = sadd.s32 1, %s9
    $region7: #{tpu_custom_call.1} parent=1 // loop_footer_branch
      %8 = sbr.rel target = $region3
    $region8: #{tpu_custom_call.1} parent=1 // loop_exit
      _
    %119 = vsyncpa [#allocation3], 1
    %s120 = scalar_lea.sflag [#allocation3], 1
    %121 = vsyncpa %s120, 1
    %122 = vsyncpa [#allocation4], 1
    %s123 = scalar_lea.sflag [#allocation4], 1
    %124 = vsyncpa %s123, 1

// kernel: forward.7
$region0: #{forward.7}
  #allocation0 [shape = 'u32[]', space=smem, size = 0x4, offset = 0x4, fixed_abs, tag = 'smem constant byte address 0x4 - core index']
  #allocation1 [shape = 'u32[144,128]{1,0:T(1,128)}', space=vmem, size = 0x12000, scoped, tag = 'internal scratch']
  %s0 = inlined_call_operand.vmem [shape: bf16[8,128], index: 0, kind: input, shape index: {}]
  %s1 = inlined_call_operand.vmem [shape: bf16[128,384], index: 1, kind: input, shape index: {}]
  %s2 = inlined_call_operand.vmem [shape: f32[1,384], index: 2, kind: input, shape index: {}]
  %s3 = inlined_call_operand.vmem [shape: f32[8,384], index: 3, kind: output, shape index: {}]
  %s4 = sld [smem:[#allocation0]]
  $region22: #{forward.7} parent=0
    _
  %s6 = ssub.s32 1, %s4
  %s7 = scalar_select 0, %s6, %s4
  // Predicated region
  $region2: #{forward.7} parent=0 // pred_check
    _
  $region3: #{forward.7} parent=0 // pred_check_branch
    %9 = sbr.rel (0) target = $region5
  $region4: #{forward.7} parent=0 // pred_region
    _
  $region5: #{forward.7} parent=0 // pred_fallthru
    _
  // Predicated region
  $region6: #{forward.7} parent=0 // pred_check
    _
  $region7: #{forward.7} parent=0 // pred_check_branch
    %11 = sbr.rel (0) target = $region9
  $region8: #{forward.7} parent=0 // pred_region
    _
  $region9: #{forward.7} parent=0 // pred_fallthru
    _
  // Predicated region
  $region10: #{forward.7} parent=0 // pred_check
    _
  $region11: #{forward.7} parent=0 // pred_check_branch
    %13 = sbr.rel (0) target = $region13
  $region12: #{forward.7} parent=0 // pred_region
    _
  $region13: #{forward.7} parent=0 // pred_fallthru
    _
  %v15 = vld [vmem:[%s0] sm:$0xf]
  %v16 = vld [vmem:[%s1] sm:$0xff]
  %v17 = vld [vmem:[%s1 + $0x8] sm:$0xf]
  %v18 = vld [vmem:[%s1 + $0xc] sm:$0xff]
  %v19 = vld [vmem:[%s1 + $0x14] sm:$0xf]
  %v20 = vld [vmem:[%s1 + $0x18] sm:$0xff]
  %v21 = vld [vmem:[%s1 + $0x20] sm:$0xf]
  %v22 = vld [vmem:[%s1 + $0x24] sm:$0xff]
  %v23 = vld [vmem:[%s1 + $0x2c] sm:$0xf]
  %v24 = vld [vmem:[%s1 + $0x30] sm:$0xff]
  %v25 = vld [vmem:[%s1 + $0x38] sm:$0xf]
  %v26 = vld [vmem:[%s1 + $0x3c] sm:$0xff]
  %v27 = vld [vmem:[%s1 + $0x44] sm:$0xf]
  %v28 = vld [vmem:[%s1 + $0x48] sm:$0xff]
  %v29 = vld [vmem:[%s1 + $0x50] sm:$0xf]
  %v30 = vld [vmem:[%s1 + $0x54] sm:$0xff]
  %v31 = vld [vmem:[%s1 + $0x5c] sm:$0xf]
  %v32 = vld [vmem:[%s1 + $0x60] sm:$0xff]
  %v33 = vld [vmem:[%s1 + $0x68] sm:$0xf]
  %v34 = vld [vmem:[%s1 + $0x6c] sm:$0xff]
  %v35 = vld [vmem:[%s1 + $0x74] sm:$0xf]
  %v36 = vld [vmem:[%s1 + $0x78] sm:$0xff]
  %v37 = vld [vmem:[%s1 + $0x80] sm:$0xf]
  %v38 = vld [vmem:[%s1 + $0x84] sm:$0xff]
  %v39 = vld [vmem:[%s1 + $0x8c] sm:$0xf]
  %v40 = vld [vmem:[%s1 + $0x90] sm:$0xff]
  %v41 = vld [vmem:[%s1 + $0x98] sm:$0xf]
  %v42 = vld [vmem:[%s1 + $0x9c] sm:$0xff]
  %v43 = vld [vmem:[%s1 + $0xa4] sm:$0xf]
  %v44 = vld [vmem:[%s1 + $0xa8] sm:$0xff]
  %v45 = vld [vmem:[%s1 + $0xb0] sm:$0xf]
  %v46 = vld [vmem:[%s1 + $0xb4] sm:$0xff]
  %v47 = vld [vmem:[%s1 + $0xbc] sm:$0xf]
  %v48 = vld [vmem:[%s2] sm:$0x7]
  %v50 = vlaneseq
  %v51 = vshrl.u32 %v50, 7
  %v52 = vsub.s32 0, %v51
  %v53 = vrot.slane %v48, %v52
  %v54 = vlaneseq
  %v55 = vshrl.u32 %v54, 7
  %v56 = vsub.s32 1, %v55
  %v57 = vrot.slane %v48, %v56
  %v58 = vlaneseq
  %v59 = vshrl.u32 %v58, 7
  %v60 = vsub.s32 2, %v59
  %v61 = vrot.slane %v48, %v60
  %v97 = vunpack.c.l.b16 %v16
  %v98 = vunpack.c.h.b16 %v16
  %v99 = vunpack.c.l.b16 %v17
  %v100 = vunpack.c.l.b16 %v18
  %v101 = vunpack.c.h.b16 %v18
  %v102 = vunpack.c.l.b16 %v19
  %v103 = vunpack.c.l.b16 %v20
  %v104 = vunpack.c.h.b16 %v20
  %v105 = vunpack.c.l.b16 %v21
  %v106 = vunpack.c.l.b16 %v22
  %v107 = vunpack.c.h.b16 %v22
  %v108 = vunpack.c.l.b16 %v23
  %v109 = vunpack.c.l.b16 %v24
  %v110 = vunpack.c.h.b16 %v24
  %v111 = vunpack.c.l.b16 %v25
  %v112 = vunpack.c.l.b16 %v26
  %v113 = vunpack.c.h.b16 %v26
  %v114 = vunpack.c.l.b16 %v27
  %v115 = vunpack.c.l.b16 %v28
  %v116 = vunpack.c.h.b16 %v28
  %v117 = vunpack.c.l.b16 %v29
  %v118 = vunpack.c.l.b16 %v30
  %v119 = vunpack.c.h.b16 %v30
  %v120 = vunpack.c.l.b16 %v31
  %v121 = vunpack.c.l.b16 %v32
  %v122 = vunpack.c.h.b16 %v32
  %v123 = vunpack.c.l.b16 %v33
  %v124 = vunpack.c.l.b16 %v34
  %v125 = vunpack.c.h.b16 %v34
  %v126 = vunpack.c.l.b16 %v35
  %v127 = vunpack.c.l.b16 %v36
  %v128 = vunpack.c.h.b16 %v36
  %v129 = vunpack.c.l.b16 %v37
  %v130 = vunpack.c.l.b16 %v38
  %v131 = vunpack.c.h.b16 %v38
  %v132 = vunpack.c.l.b16 %v39
  %v133 = vunpack.c.l.b16 %v40
  %v134 = vunpack.c.h.b16 %v40
  %v135 = vunpack.c.l.b16 %v41
  %v136 = vunpack.c.l.b16 %v42
  %v137 = vunpack.c.h.b16 %v42
  %v138 = vunpack.c.l.b16 %v43
  %v139 = vunpack.c.l.b16 %v44
  %v140 = vunpack.c.h.b16 %v44
  %v141 = vunpack.c.l.b16 %v45
  %v142 = vunpack.c.l.b16 %v46
  %v143 = vunpack.c.h.b16 %v46
  %v144 = vunpack.c.l.b16 %v47
  %v145 = vpack.c.b16 %v100, %v97
  %v146 = vpack.c.b16 %v101, %v98
  %v147 = vpack.c.b16 %v102, %v99
  %v148 = vpack.c.b16 %v106, %v103
  %v149 = vpack.c.b16 %v107, %v104
  %v150 = vpack.c.b16 %v108, %v105
  %v151 = vpack.c.b16 %v112, %v109
  %v152 = vpack.c.b16 %v113, %v110
  %v153 = vpack.c.b16 %v114, %v111
  %v154 = vpack.c.b16 %v118, %v115
  %v155 = vpack.c.b16 %v119, %v116
  %v156 = vpack.c.b16 %v120, %v117
  %v157 = vpack.c.b16 %v124, %v121
  %v158 = vpack.c.b16 %v125, %v122
  %v159 = vpack.c.b16 %v126, %v123
  %v160 = vpack.c.b16 %v130, %v127
  %v161 = vpack.c.b16 %v131, %v128
  %v162 = vpack.c.b16 %v132, %v129
  %v163 = vpack.c.b16 %v136, %v133
  %v164 = vpack.c.b16 %v137, %v134
  %v165 = vpack.c.b16 %v138, %v135
  %v166 = vpack.c.b16 %v142, %v139
  %v167 = vpack.c.b16 %v143, %v140
  %v168 = vpack.c.b16 %v144, %v141
  %193 = vmatprep.subr.bf16.mxu0 %v146
  %194 = vmatpush1.bf16.msra.mxu0 %v145
  %195 = vmatprep.subr.bf16.mxu0 %v149
  %196 = vmatpush1.bf16.msra.mxu0 %v148
  %197 = vmatprep.subr.bf16.mxu0 %v152
  %198 = vmatpush1.bf16.msra.mxu0 %v151
  %199 = vmatprep.subr.bf16.mxu0 %v155
  %200 = vmatpush1.bf16.msra.mxu0 %v154
  %201 = vmatprep.subr.bf16.mxu0 %v158
  %202 = vmatpush1.bf16.msra.mxu0 %v157
  %203 = vmatprep.subr.bf16.mxu0 %v161
  %204 = vmatpush1.bf16.msra.mxu0 %v160
  %205 = vmatprep.subr.bf16.mxu0 %v164
  %206 = vmatpush1.bf16.msra.mxu0 %v163
  %207 = vmatprep.subr.bf16.mxu0 %v167
  %208 = vmatpush1.bf16.msra.mxu0 %v166
  %209 = vmatprep.subr.bf16.mxu0 0
  %210 = vmatpush1.bf16.msra.mxu0 0
  %211 = vmatprep.subr.bf16.mxu0 0
  %212 = vmatpush1.bf16.msra.mxu0 0
  %213 = vmatprep.subr.bf16.mxu0 0
  %214 = vmatpush1.bf16.msra.mxu0 0
  %215 = vmatprep.subr.bf16.mxu0 0
  %216 = vmatpush1.bf16.msra.mxu0 0
  %217 = vmatprep.subr.bf16.mxu0 0
  %218 = vmatpush1.bf16.msra.mxu0 0
  %219 = vmatprep.subr.bf16.mxu0 0
  %220 = vmatpush1.bf16.msra.mxu0 0
  %221 = vmatprep.subr.bf16.mxu0 0
  %222 = vmatpush1.bf16.msra.mxu0 0
  %223 = vmatprep.subr.bf16.mxu0 0
  %224 = vmatpush1.bf16.msra.mxu0 0
  %225 = vmatprep.mubr.bf16.mxu0 0
  %226 = vmatmul.mubr.bf16.gmra.mrb[0].mxu0 %v15
  %v227 = vpop.f32.mrb[0].mxu0
  %v228 = vadd.f32 %v53, %v227
  %v229 = vpop.f32.mrb[0].mxu0
  %v230 = vadd.f32 %v57, %v229
  %v231 = vpop.f32.mrb[0].mxu0
  %v232 = vpop.f32.mrb[0].mxu0
  %233 = vdwg.mxu0
  %234 = vmatprep.subr.bf16.mxu0 0
  %235 = vmatpush1.bf16.msra.mxu0 %v147
  %236 = vmatprep.subr.bf16.mxu0 0
  %237 = vmatpush1.bf16.msra.mxu0 %v150
  %238 = vmatprep.subr.bf16.mxu0 0
  %239 = vmatpush1.bf16.msra.mxu0 %v153
  %240 = vmatprep.subr.bf16.mxu0 0
  %241 = vmatpush1.bf16.msra.mxu0 %v156
  %242 = vmatprep.subr.bf16.mxu0 0
  %243 = vmatpush1.bf16.msra.mxu0 %v159
  %244 = vmatprep.subr.bf16.mxu0 0
  %245 = vmatpush1.bf16.msra.mxu0 %v162
  %246 = vmatprep.subr.bf16.mxu0 0
  %247 = vmatpush1.bf16.msra.mxu0 %v165
  %248 = vmatprep.subr.bf16.mxu0 0
  %249 = vmatpush1.bf16.msra.mxu0 %v168
  %250 = vmatprep.subr.bf16.mxu0 0
  %251 = vmatpush1.bf16.msra.mxu0 0
  %252 = vmatprep.subr.bf16.mxu0 0
  %253 = vmatpush1.bf16.msra.mxu0 0
  %254 = vmatprep.subr.bf16.mxu0 0
  %255 = vmatpush1.bf16.msra.mxu0 0
  %256 = vmatprep.subr.bf16.mxu0 0
  %257 = vmatpush1.bf16.msra.mxu0 0
  %258 = vmatprep.subr.bf16.mxu0 0
  %259 = vmatpush1.bf16.msra.mxu0 0
  %260 = vmatprep.subr.bf16.mxu0 0
  %261 = vmatpush1.bf16.msra.mxu0 0
  %262 = vmatprep.subr.bf16.mxu0 0
  %263 = vmatpush1.bf16.msra.mxu0 0
  %264 = vmatprep.subr.bf16.mxu0 0
  %265 = vmatpush1.bf16.msra.mxu0 0
  %266 = vmatprep.mubr.bf16.mxu0 0
  %267 = vmatmul.mubr.bf16.gmra.mrb[0].mxu0 %v15
  %v268 = vpop.f32.mrb[0].mxu0
  %v269 = vadd.f32 %v61, %v268
  %v270 = vpop.f32.mrb[0].mxu0
  %v271 = vpop.f32.mrb[0].mxu0
  %v272 = vpop.f32.mrb[0].mxu0
  %273 = vdwg.mxu0
  %274 = vst [vmem:[%s3] sm:$0xff] %v228
  %275 = vst [vmem:[%s3 + $0x8] sm:$0xff] %v230
  %276 = vst [vmem:[%s3 + $0x10] sm:$0xff] %v269
  // Predicated region
  $region14: #{forward.7} parent=0 // pred_check
    _
  $region15: #{forward.7} parent=0 // pred_check_branch
    %278 = sbr.rel (0) target = $region17
  $region16: #{forward.7} parent=0 // pred_region
    _
  $region17: #{forward.7} parent=0 // pred_fallthru
    _
  // Predicated region
  $region18: #{forward.7} parent=0 // pred_check
    _
  $region19: #{forward.7} parent=0 // pred_check_branch
    %280 = sbr.rel (0) target = $region21
  $region20: #{forward.7} parent=0 // pred_region
    _
  $region21: #{forward.7} parent=0 // pred_fallthru
    _

// kernel: forward.6
$region0: #{forward.6}
  #allocation0 [shape = 'u32[]', space=smem, size = 0x4, offset = 0x4, fixed_abs, tag = 'smem constant byte address 0x4 - core index']
  #allocation1 [shape = 'u32[144,128]{1,0:T(1,128)}', space=vmem, size = 0x12000, scoped, tag = 'internal scratch']
  %s0 = inlined_call_operand.vmem [shape: bf16[64,8], index: 0, kind: input, shape index: {}]
  %s1 = inlined_call_operand.vmem [shape: bf16[8,384], index: 1, kind: input, shape index: {}]
  %s2 = inlined_call_operand.vmem [shape: f32[1,384], index: 2, kind: input, shape index: {}]
  %s3 = inlined_call_operand.vmem [shape: bf16[64,384], index: 3, kind: output, shape index: {}]
  %s4 = sld [smem:[#allocation0]]
  $region22: #{forward.6} parent=0
    _
  %s6 = ssub.s32 1, %s4
  %s7 = scalar_select 0, %s6, %s4
  // Predicated region
  $region2: #{forward.6} parent=0 // pred_check
    _
  $region3: #{forward.6} parent=0 // pred_check_branch
    %9 = sbr.rel (0) target = $region5
  $region4: #{forward.6} parent=0 // pred_region
    _
  $region5: #{forward.6} parent=0 // pred_fallthru
    _
  // Predicated region
  $region6: #{forward.6} parent=0 // pred_check
    _
  $region7: #{forward.6} parent=0 // pred_check_branch
    %11 = sbr.rel (0) target = $region9
  $region8: #{forward.6} parent=0 // pred_region
    _
  $region9: #{forward.6} parent=0 // pred_fallthru
    _
  // Predicated region
  $region10: #{forward.6} parent=0 // pred_check
    _
  $region11: #{forward.6} parent=0 // pred_check_branch
    %13 = sbr.rel (0) target = $region13
  $region12: #{forward.6} parent=0 // pred_region
    _
  $region13: #{forward.6} parent=0 // pred_fallthru
    _
  %v15 = vld [vmem:[%s0] sm:$0xf]
  %v16 = vld [vmem:[%s0 + $0x4] sm:$0xf]
  %v17 = vld [vmem:[%s0 + $0x8] sm:$0xf]
  %v18 = vld [vmem:[%s0 + $0xc] sm:$0xf]
  %v19 = vld [vmem:[%s0 + $0x10] sm:$0xf]
  %v20 = vld [vmem:[%s0 + $0x14] sm:$0xf]
  %v21 = vld [vmem:[%s0 + $0x18] sm:$0xf]
  %v22 = vld [vmem:[%s0 + $0x1c] sm:$0xf]
  %v23 = vld [vmem:[%s1] sm:$0xff]
  %v24 = vld [vmem:[%s1 + $0x8] sm:$0xf]
  %v25 = vld [vmem:[%s2] sm:$0x7]
  %v27 = vlaneseq
  %v28 = vshrl.u32 %v27, 7
  %v29 = vsub.s32 0, %v28
  %v30 = vrot.slane %v25, %v29
  %v31 = vlaneseq
  %v32 = vshrl.u32 %v31, 7
  %v33 = vsub.s32 1, %v32
  %v34 = vrot.slane %v25, %v33
  %v35 = vlaneseq
  %v36 = vshrl.u32 %v35, 7
  %v37 = vsub.s32 2, %v36
  %v38 = vrot.slane %v25, %v37
  %v50 = vunpack.c.l.b16 %v15
  %v51 = vunpack.c.l.b16 %v16
  %v52 = vunpack.c.l.b16 %v17
  %v53 = vunpack.c.l.b16 %v18
  %v54 = vunpack.c.l.b16 %v19
  %v55 = vunpack.c.l.b16 %v20
  %v56 = vunpack.c.l.b16 %v21
  %v57 = vunpack.c.l.b16 %v22
  %v58 = vpack.c.b16 %v51, %v50
  %v59 = vpack.c.b16 %v53, %v52
  %v60 = vpack.c.b16 %v55, %v54
  %v61 = vpack.c.b16 %v57, %v56
  %v64 = vunpack.c.l.b16 %v23
  %v65 = vunpack.c.h.b16 %v23
  %v66 = vunpack.c.l.b16 %v24
  %v67 = vpack.c.b16 %v64, %v64
  %v68 = vpack.c.b16 %v65, %v65
  %v69 = vpack.c.b16 %v66, %v66
  %vm70 = vcmask 64512
  %v72 = vsel %vm70, %v58, 0
  %v75 = vsel %vm70, %v59, 0
  %v78 = vsel %vm70, %v60, 0
  %v81 = vsel %vm70, %v61, 0
  %vm83 = vcmask 1043456
  %v85 = vsel %vm83, %v67, 0
  %v88 = vsel %vm83, %v68, 0
  %v91 = vsel %vm83, %v69, 0
  %93 = vmatprep.subr.bf16.mxu0 %v88
  %94 = vmatpush1.bf16.msra.mxu0 %v85
  %95 = vmatprep.subr.bf16.mxu0 0
  %96 = vmatpush1.bf16.msra.mxu0 0
  %97 = vmatprep.subr.bf16.mxu0 0
  %98 = vmatpush1.bf16.msra.mxu0 0
  %99 = vmatprep.subr.bf16.mxu0 0
  %100 = vmatpush1.bf16.msra.mxu0 0
  %101 = vmatprep.subr.bf16.mxu0 0
  %102 = vmatpush1.bf16.msra.mxu0 0
  %103 = vmatprep.subr.bf16.mxu0 0
  %104 = vmatpush1.bf16.msra.mxu0 0
  %105 = vmatprep.subr.bf16.mxu0 0
  %106 = vmatpush1.bf16.msra.mxu0 0
  %107 = vmatprep.subr.bf16.mxu0 0
  %108 = vmatpush1.bf16.msra.mxu0 0
  %109 = vmatprep.subr.bf16.mxu0 0
  %110 = vmatpush1.bf16.msra.mxu0 0
  %111 = vmatprep.subr.bf16.mxu0 0
  %112 = vmatpush1.bf16.msra.mxu0 0
  %113 = vmatprep.subr.bf16.mxu0 0
  %114 = vmatpush1.bf16.msra.mxu0 0
  %115 = vmatprep.subr.bf16.mxu0 0
  %116 = vmatpush1.bf16.msra.mxu0 0
  %117 = vmatprep.subr.bf16.mxu0 0
  %118 = vmatpush1.bf16.msra.mxu0 0
  %119 = vmatprep.subr.bf16.mxu0 0
  %120 = vmatpush1.bf16.msra.mxu0 0
  %121 = vmatprep.subr.bf16.mxu0 0
  %122 = vmatpush1.bf16.msra.mxu0 0
  %123 = vmatprep.subr.bf16.mxu0 0
  %124 = vmatpush1.bf16.msra.mxu0 0
  %125 = vmatprep.mubr.bf16.mxu0 0
  %126 = vmatmul.mubr.bf16.gmra.mrb[0].mxu0 %v72
  %v127 = vpop.f32.mrb[0].mxu0
  %v128 = vadd.f32 %v30, %v127
  %v129 = vpop.f32.mrb[0].mxu0
  %v130 = vadd.f32 %v34, %v129
  %v131 = vpop.f32.mrb[0].mxu0
  %v132 = vadd.f32 %v30, %v131
  %v133 = vpop.f32.mrb[0].mxu0
  %v134 = vadd.f32 %v34, %v133
  %135 = vmatprep.mubr.bf16.mxu0 0
  %136 = vmatmul.mubr.bf16.gmra.mrb[0].mxu0 %v75
  %v137 = vpop.f32.mrb[0].mxu0
  %v138 = vadd.f32 %v30, %v137
  %v139 = vpop.f32.mrb[0].mxu0
  %v140 = vadd.f32 %v34, %v139
  %v141 = vpop.f32.mrb[0].mxu0
  %v142 = vadd.f32 %v30, %v141
  %v143 = vpop.f32.mrb[0].mxu0
  %v144 = vadd.f32 %v34, %v143
  %145 = vmatprep.mubr.bf16.mxu0 0
  %146 = vmatmul.mubr.bf16.gmra.mrb[0].mxu0 %v78
  %v147 = vpop.f32.mrb[0].mxu0
  %v148 = vadd.f32 %v30, %v147
  %v149 = vpop.f32.mrb[0].mxu0
  %v150 = vadd.f32 %v34, %v149
  %v151 = vpop.f32.mrb[0].mxu0
  %v152 = vadd.f32 %v30, %v151
  %v153 = vpop.f32.mrb[0].mxu0
  %v154 = vadd.f32 %v34, %v153
  %155 = vmatprep.mubr.bf16.mxu0 0
  %156 = vmatmul.mubr.bf16.gmra.mrb[0].mxu0 %v81
  %v157 = vpop.f32.mrb[0].mxu0
  %v158 = vadd.f32 %v30, %v157
  %v159 = vpop.f32.mrb[0].mxu0
  %v160 = vadd.f32 %v34, %v159
  %v161 = vpop.f32.mrb[0].mxu0
  %v162 = vadd.f32 %v30, %v161
  %v163 = vpop.f32.mrb[0].mxu0
  %v164 = vadd.f32 %v34, %v163
  %165 = vdwg.mxu0
  %166 = vmatprep.subr.bf16.mxu0 0
  %167 = vmatpush1.bf16.msra.mxu0 %v91
  %168 = vmatprep.subr.bf16.mxu0 0
  %169 = vmatpush1.bf16.msra.mxu0 0
  %170 = vmatprep.subr.bf16.mxu0 0
  %171 = vmatpush1.bf16.msra.mxu0 0
  %172 = vmatprep.subr.bf16.mxu0 0
  %173 = vmatpush1.bf16.msra.mxu0 0
  %174 = vmatprep.subr.bf16.mxu0 0
  %175 = vmatpush1.bf16.msra.mxu0 0
  %176 = vmatprep.subr.bf16.mxu0 0
  %177 = vmatpush1.bf16.msra.mxu0 0
  %178 = vmatprep.subr.bf16.mxu0 0
  %179 = vmatpush1.bf16.msra.mxu0 0
  %180 = vmatprep.subr.bf16.mxu0 0
  %181 = vmatpush1.bf16.msra.mxu0 0
  %182 = vmatprep.subr.bf16.mxu0 0
  %183 = vmatpush1.bf16.msra.mxu0 0
  %184 = vmatprep.subr.bf16.mxu0 0
  %185 = vmatpush1.bf16.msra.mxu0 0
  %186 = vmatprep.subr.bf16.mxu0 0
  %187 = vmatpush1.bf16.msra.mxu0 0
  %188 = vmatprep.subr.bf16.mxu0 0
  %189 = vmatpush1.bf16.msra.mxu0 0
  %190 = vmatprep.subr.bf16.mxu0 0
  %191 = vmatpush1.bf16.msra.mxu0 0
  %192 = vmatprep.subr.bf16.mxu0 0
  %193 = vmatpush1.bf16.msra.mxu0 0
  %194 = vmatprep.subr.bf16.mxu0 0
  %195 = vmatpush1.bf16.msra.mxu0 0
  %196 = vmatprep.subr.bf16.mxu0 0
  %197 = vmatpush1.bf16.msra.mxu0 0
  %198 = vmatprep.mubr.bf16.mxu0 0
  %199 = vmatmul.mubr.bf16.gmra.mrb[0].mxu0 %v72
  %v200 = vpop.f32.mrb[0].mxu0
  %v201 = vadd.f32 %v38, %v200
  %v202 = vpop.f32.mrb[0].mxu0
  %v203 = vpop.f32.mrb[0].mxu0
  %v204 = vadd.f32 %v38, %v203
  %v205 = vpop.f32.mrb[0].mxu0
  %206 = vmatprep.mubr.bf16.mxu0 0
  %207 = vmatmul.mubr.bf16.gmra.mrb[0].mxu0 %v75
  %v208 = vpop.f32.mrb[0].mxu0
  %v209 = vadd.f32 %v38, %v208
  %v210 = vpop.f32.mrb[0].mxu0
  %v211 = vpop.f32.mrb[0].mxu0
  %v212 = vadd.f32 %v38, %v211
  %v213 = vpop.f32.mrb[0].mxu0
  %214 = vmatprep.mubr.bf16.mxu0 0
  %215 = vmatmul.mubr.bf16.gmra.mrb[0].mxu0 %v78
  %v216 = vpop.f32.mrb[0].mxu0
  %v217 = vadd.f32 %v38, %v216
  %v218 = vpop.f32.mrb[0].mxu0
  %v219 = vpop.f32.mrb[0].mxu0
  %v220 = vadd.f32 %v38, %v219
  %v221 = vpop.f32.mrb[0].mxu0
  %222 = vmatprep.mubr.bf16.mxu0 0
  %223 = vmatmul.mubr.bf16.gmra.mrb[0].mxu0 %v81
  %v224 = vpop.f32.mrb[0].mxu0
  %v225 = vadd.f32 %v38, %v224
  %v226 = vpop.f32.mrb[0].mxu0
  %v227 = vpop.f32.mrb[0].mxu0
  %v228 = vadd.f32 %v38, %v227
  %v229 = vpop.f32.mrb[0].mxu0
  %230 = vdwg.mxu0
  %v231 = vpack.c.bf16 %v132, %v128
  %v232 = vpack.c.bf16 %v134, %v130
  %v233 = vpack.c.bf16 %v204, %v201
  %v234 = vpack.c.bf16 %v142, %v138
  %v235 = vpack.c.bf16 %v144, %v140
  %v236 = vpack.c.bf16 %v212, %v209
  %v237 = vpack.c.bf16 %v152, %v148
  %v238 = vpack.c.bf16 %v154, %v150
  %v239 = vpack.c.bf16 %v220, %v217
  %v240 = vpack.c.bf16 %v162, %v158
  %v241 = vpack.c.bf16 %v164, %v160
  %v242 = vpack.c.bf16 %v228, %v225
  %v255 = vunpack.c.l.b16 %v231
  %v256 = vunpack.c.l.b16 %v232
  %v257 = vunpack.c.l.b16 %v233
  %v258 = vunpack.c.h.b16 %v231
  %v259 = vunpack.c.h.b16 %v232
  %v260 = vunpack.c.h.b16 %v233
  %v261 = vunpack.c.l.b16 %v234
  %v262 = vunpack.c.l.b16 %v235
  %v263 = vunpack.c.l.b16 %v236
  %v264 = vunpack.c.h.b16 %v234
  %v265 = vunpack.c.h.b16 %v235
  %v266 = vunpack.c.h.b16 %v236
  %v267 = vunpack.c.l.b16 %v237
  %v268 = vunpack.c.l.b16 %v238
  %v269 = vunpack.c.l.b16 %v239
  %v270 = vunpack.c.h.b16 %v237
  %v271 = vunpack.c.h.b16 %v238
  %v272 = vunpack.c.h.b16 %v239
  %v273 = vunpack.c.l.b16 %v240
  %v274 = vunpack.c.l.b16 %v241
  %v275 = vunpack.c.l.b16 %v242
  %v276 = vunpack.c.h.b16 %v240
  %v277 = vunpack.c.h.b16 %v241
  %v278 = vunpack.c.h.b16 %v242
  %v279 = vpack.c.b16 %v256, %v255
  %v280 = vpack.c.b16 %v257, %v257
  %v281 = vpack.c.b16 %v259, %v258
  %v282 = vpack.c.b16 %v260, %v260
  %v283 = vpack.c.b16 %v262, %v261
  %v284 = vpack.c.b16 %v263, %v263
  %v285 = vpack.c.b16 %v265, %v264
  %v286 = vpack.c.b16 %v266, %v266
  %v287 = vpack.c.b16 %v268, %v267
  %v288 = vpack.c.b16 %v269, %v269
  %v289 = vpack.c.b16 %v271, %v270
  %v290 = vpack.c.b16 %v272, %v272
  %v291 = vpack.c.b16 %v274, %v273
  %v292 = vpack.c.b16 %v275, %v275
  %v293 = vpack.c.b16 %v277, %v276
  %v294 = vpack.c.b16 %v278, %v278
  %311 = vst [vmem:[%s3] sm:$0xff] %v279
  %312 = vst [vmem:[%s3 + $0x8] sm:$0xf] %v280
  %313 = vst [vmem:[%s3 + $0xc] sm:$0xff] %v281
  %314 = vst [vmem:[%s3 + $0x14] sm:$0xf] %v282
  %315 = vst [vmem:[%s3 + $0x18] sm:$0xff] %v283
  %316 = vst [vmem:[%s3 + $0x20] sm:$0xf] %v284
  %317 = vst [vmem:[%s3 + $0x24] sm:$0xff] %v285
  %318 = vst [vmem:[%s3 + $0x2c] sm:$0xf] %v286
  %319 = vst [vmem:[%s3 + $0x30] sm:$0xff] %v287
  %320 = vst [vmem:[%s3 + $0x38] sm:$0xf] %v288
  %321 = vst [vmem:[%s3 + $0x3c] sm:$0xff] %v289
  %322 = vst [vmem:[%s3 + $0x44] sm:$0xf] %v290
  %323 = vst [vmem:[%s3 + $0x48] sm:$0xff] %v291
  %324 = vst [vmem:[%s3 + $0x50] sm:$0xf] %v292
  %325 = vst [vmem:[%s3 + $0x54] sm:$0xff] %v293
  %326 = vst [vmem:[%s3 + $0x5c] sm:$0xf] %v294
  // Predicated region
  $region14: #{forward.6} parent=0 // pred_check
    _
  $region15: #{forward.6} parent=0 // pred_check_branch
    %328 = sbr.rel (0) target = $region17
  $region16: #{forward.6} parent=0 // pred_region
    _
  $region17: #{forward.6} parent=0 // pred_fallthru
    _
  // Predicated region
  $region18: #{forward.6} parent=0 // pred_check
    _
  $region19: #{forward.6} parent=0 // pred_check_branch
    %330 = sbr.rel (0) target = $region21
  $region20: #{forward.6} parent=0 // pred_region
    _
  $region21: #{forward.6} parent=0 // pred_fallthru
    _

// kernel: forward.9
$region0: #{forward.9}
  #allocation0 [shape = 'u32[]', space=smem, size = 0x4, offset = 0x4, fixed_abs, tag = 'smem constant byte address 0x4 - core index']
  #allocation1 [shape = 'u32[144,128]{1,0:T(1,128)}', space=vmem, size = 0x12000, scoped, tag = 'internal scratch']
  %s0 = inlined_call_operand.vmem [shape: bf16[64,128], index: 0, kind: input, shape index: {}]
  %s1 = inlined_call_operand.vmem [shape: bf16[128,384], index: 1, kind: input, shape index: {}]
  %s2 = inlined_call_operand.vmem [shape: f32[1,384], index: 2, kind: input, shape index: {}]
  %s3 = inlined_call_operand.vmem [shape: bf16[64,384], index: 3, kind: output, shape index: {}]
  %s4 = sld [smem:[#allocation0]]
  $region22: #{forward.9} parent=0
    _
  %s6 = ssub.s32 1, %s4
  %s7 = scalar_select 0, %s6, %s4
  // Predicated region
  $region2: #{forward.9} parent=0 // pred_check
    _
  $region3: #{forward.9} parent=0 // pred_check_branch
    %9 = sbr.rel (0) target = $region5
  $region4: #{forward.9} parent=0 // pred_region
    _
  $region5: #{forward.9} parent=0 // pred_fallthru
    _
  // Predicated region
  $region6: #{forward.9} parent=0 // pred_check
    _
  $region7: #{forward.9} parent=0 // pred_check_branch
    %11 = sbr.rel (0) target = $region9
  $region8: #{forward.9} parent=0 // pred_region
    _
  $region9: #{forward.9} parent=0 // pred_fallthru
    _
  // Predicated region
  $region10: #{forward.9} parent=0 // pred_check
    _
  $region11: #{forward.9} parent=0 // pred_check_branch
    %13 = sbr.rel (0) target = $region13
  $region12: #{forward.9} parent=0 // pred_region
    _
  $region13: #{forward.9} parent=0 // pred_fallthru
    _
  %v15 = vld [vmem:[%s0] sm:$0xf]
  %v16 = vld [vmem:[%s0 + $0x4] sm:$0xf]
  %v17 = vld [vmem:[%s0 + $0x8] sm:$0xf]
  %v18 = vld [vmem:[%s0 + $0xc] sm:$0xf]
  %v19 = vld [vmem:[%s0 + $0x10] sm:$0xf]
  %v20 = vld [vmem:[%s0 + $0x14] sm:$0xf]
  %v21 = vld [vmem:[%s0 + $0x18] sm:$0xf]
  %v22 = vld [vmem:[%s0 + $0x1c] sm:$0xf]
  %v23 = vld [vmem:[%s1] sm:$0xff]
  %v24 = vld [vmem:[%s1 + $0x8] sm:$0xf]
  %v25 = vld [vmem:[%s1 + $0xc] sm:$0xff]
  %v26 = vld [vmem:[%s1 + $0x14] sm:$0xf]
  %v27 = vld [vmem:[%s1 + $0x18] sm:$0xff]
  %v28 = vld [vmem:[%s1 + $0x20] sm:$0xf]
  %v29 = vld [vmem:[%s1 + $0x24] sm:$0xff]
  %v30 = vld [vmem:[%s1 + $0x2c] sm:$0xf]
  %v31 = vld [vmem:[%s1 + $0x30] sm:$0xff]
  %v32 = vld [vmem:[%s1 + $0x38] sm:$0xf]
  %v33 = vld [vmem:[%s1 + $0x3c] sm:$0xff]
  %v34 = vld [vmem:[%s1 + $0x44] sm:$0xf]
  %v35 = vld [vmem:[%s1 + $0x48] sm:$0xff]
  %v36 = vld [vmem:[%s1 + $0x50] sm:$0xf]
  %v37 = vld [vmem:[%s1 + $0x54] sm:$0xff]
  %v38 = vld [vmem:[%s1 + $0x5c] sm:$0xf]
  %v39 = vld [vmem:[%s1 + $0x60] sm:$0xff]
  %v40 = vld [vmem:[%s1 + $0x68] sm:$0xf]
  %v41 = vld [vmem:[%s1 + $0x6c] sm:$0xff]
  %v42 = vld [vmem:[%s1 + $0x74] sm:$0xf]
  %v43 = vld [vmem:[%s1 + $0x78] sm:$0xff]
  %v44 = vld [vmem:[%s1 + $0x80] sm:$0xf]
  %v45 = vld [vmem:[%s1 + $0x84] sm:$0xff]
  %v46 = vld [vmem:[%s1 + $0x8c] sm:$0xf]
  %v47 = vld [vmem:[%s1 + $0x90] sm:$0xff]
  %v48 = vld [vmem:[%s1 + $0x98] sm:$0xf]
  %v49 = vld [vmem:[%s1 + $0x9c] sm:$0xff]
  %v50 = vld [vmem:[%s1 + $0xa4] sm:$0xf]
  %v51 = vld [vmem:[%s1 + $0xa8] sm:$0xff]
  %v52 = vld [vmem:[%s1 + $0xb0] sm:$0xf]
  %v53 = vld [vmem:[%s1 + $0xb4] sm:$0xff]
  %v54 = vld [vmem:[%s1 + $0xbc] sm:$0xf]
  %v55 = vld [vmem:[%s2] sm:$0x7]
  %v57 = vlaneseq
  %v58 = vshrl.u32 %v57, 7
  %v59 = vsub.s32 0, %v58
  %v60 = vrot.slane %v55, %v59
  %v61 = vlaneseq
  %v62 = vshrl.u32 %v61, 7
  %v63 = vsub.s32 1, %v62
  %v64 = vrot.slane %v55, %v63
  %v65 = vlaneseq
  %v66 = vshrl.u32 %v65, 7
  %v67 = vsub.s32 2, %v66
  %v68 = vrot.slane %v55, %v67
  %v80 = vunpack.c.l.b16 %v15
  %v81 = vunpack.c.l.b16 %v16
  %v82 = vunpack.c.l.b16 %v17
  %v83 = vunpack.c.l.b16 %v18
  %v84 = vunpack.c.l.b16 %v19
  %v85 = vunpack.c.l.b16 %v20
  %v86 = vunpack.c.l.b16 %v21
  %v87 = vunpack.c.l.b16 %v22
  %v88 = vpack.c.b16 %v81, %v80
  %v89 = vpack.c.b16 %v83, %v82
  %v90 = vpack.c.b16 %v85, %v84
  %v91 = vpack.c.b16 %v87, %v86
  %v128 = vunpack.c.l.b16 %v23
  %v129 = vunpack.c.h.b16 %v23
  %v130 = vunpack.c.l.b16 %v24
  %v131 = vunpack.c.l.b16 %v25
  %v132 = vunpack.c.h.b16 %v25
  %v133 = vunpack.c.l.b16 %v26
  %v134 = vunpack.c.l.b16 %v27
  %v135 = vunpack.c.h.b16 %v27
  %v136 = vunpack.c.l.b16 %v28
  %v137 = vunpack.c.l.b16 %v29
  %v138 = vunpack.c.h.b16 %v29
  %v139 = vunpack.c.l.b16 %v30
  %v140 = vunpack.c.l.b16 %v31
  %v141 = vunpack.c.h.b16 %v31
  %v142 = vunpack.c.l.b16 %v32
  %v143 = vunpack.c.l.b16 %v33
  %v144 = vunpack.c.h.b16 %v33
  %v145 = vunpack.c.l.b16 %v34
  %v146 = vunpack.c.l.b16 %v35
  %v147 = vunpack.c.h.b16 %v35
  %v148 = vunpack.c.l.b16 %v36
  %v149 = vunpack.c.l.b16 %v37
  %v150 = vunpack.c.h.b16 %v37
  %v151 = vunpack.c.l.b16 %v38
  %v152 = vunpack.c.l.b16 %v39
  %v153 = vunpack.c.h.b16 %v39
  %v154 = vunpack.c.l.b16 %v40
  %v155 = vunpack.c.l.b16 %v41
  %v156 = vunpack.c.h.b16 %v41
  %v157 = vunpack.c.l.b16 %v42
  %v158 = vunpack.c.l.b16 %v43
  %v159 = vunpack.c.h.b16 %v43
  %v160 = vunpack.c.l.b16 %v44
  %v161 = vunpack.c.l.b16 %v45
  %v162 = vunpack.c.h.b16 %v45
  %v163 = vunpack.c.l.b16 %v46
  %v164 = vunpack.c.l.b16 %v47
  %v165 = vunpack.c.h.b16 %v47
  %v166 = vunpack.c.l.b16 %v48
  %v167 = vunpack.c.l.b16 %v49
  %v168 = vunpack.c.h.b16 %v49
  %v169 = vunpack.c.l.b16 %v50
  %v170 = vunpack.c.l.b16 %v51
  %v171 = vunpack.c.h.b16 %v51
  %v172 = vunpack.c.l.b16 %v52
  %v173 = vunpack.c.l.b16 %v53
  %v174 = vunpack.c.h.b16 %v53
  %v175 = vunpack.c.l.b16 %v54
  %v176 = vpack.c.b16 %v131, %v128
  %v177 = vpack.c.b16 %v132, %v129
  %v178 = vpack.c.b16 %v133, %v130
  %v179 = vpack.c.b16 %v137, %v134
  %v180 = vpack.c.b16 %v138, %v135
  %v181 = vpack.c.b16 %v139, %v136
  %v182 = vpack.c.b16 %v143, %v140
  %v183 = vpack.c.b16 %v144, %v141
  %v184 = vpack.c.b16 %v145, %v142
  %v185 = vpack.c.b16 %v149, %v146
  %v186 = vpack.c.b16 %v150, %v147
  %v187 = vpack.c.b16 %v151, %v148
  %v188 = vpack.c.b16 %v155, %v152
  %v189 = vpack.c.b16 %v156, %v153
  %v190 = vpack.c.b16 %v157, %v154
  %v191 = vpack.c.b16 %v161, %v158
  %v192 = vpack.c.b16 %v162, %v159
  %v193 = vpack.c.b16 %v163, %v160
  %v194 = vpack.c.b16 %v167, %v164
  %v195 = vpack.c.b16 %v168, %v165
  %v196 = vpack.c.b16 %v169, %v166
  %v197 = vpack.c.b16 %v173, %v170
  %v198 = vpack.c.b16 %v174, %v171
  %v199 = vpack.c.b16 %v175, %v172
  %224 = vmatprep.subr.bf16.mxu0 %v177
  %225 = vmatpush1.bf16.msra.mxu0 %v176
  %226 = vmatprep.subr.bf16.mxu0 %v180
  %227 = vmatpush1.bf16.msra.mxu0 %v179
  %228 = vmatprep.subr.bf16.mxu0 %v183
  %229 = vmatpush1.bf16.msra.mxu0 %v182
  %230 = vmatprep.subr.bf16.mxu0 %v186
  %231 = vmatpush1.bf16.msra.mxu0 %v185
  %232 = vmatprep.subr.bf16.mxu0 %v189
  %233 = vmatpush1.bf16.msra.mxu0 %v188
  %234 = vmatprep.subr.bf16.mxu0 %v192
  %235 = vmatpush1.bf16.msra.mxu0 %v191
  %236 = vmatprep.subr.bf16.mxu0 %v195
  %237 = vmatpush1.bf16.msra.mxu0 %v194
  %238 = vmatprep.subr.bf16.mxu0 %v198
  %239 = vmatpush1.bf16.msra.mxu0 %v197
  %240 = vmatprep.subr.bf16.mxu0 0
  %241 = vmatpush1.bf16.msra.mxu0 0
  %242 = vmatprep.subr.bf16.mxu0 0
  %243 = vmatpush1.bf16.msra.mxu0 0
  %244 = vmatprep.subr.bf16.mxu0 0
  %245 = vmatpush1.bf16.msra.mxu0 0
  %246 = vmatprep.subr.bf16.mxu0 0
  %247 = vmatpush1.bf16.msra.mxu0 0
  %248 = vmatprep.subr.bf16.mxu0 0
  %249 = vmatpush1.bf16.msra.mxu0 0
  %250 = vmatprep.subr.bf16.mxu0 0
  %251 = vmatpush1.bf16.msra.mxu0 0
  %252 = vmatprep.subr.bf16.mxu0 0
  %253 = vmatpush1.bf16.msra.mxu0 0
  %254 = vmatprep.subr.bf16.mxu0 0
  %255 = vmatpush1.bf16.msra.mxu0 0
  %256 = vmatprep.mubr.bf16.mxu0 0
  %257 = vmatmul.mubr.bf16.gmra.mrb[0].mxu0 %v88
  %v258 = vpop.f32.mrb[0].mxu0
  %v259 = vadd.f32 %v60, %v258
  %v260 = vpop.f32.mrb[0].mxu0
  %v261 = vadd.f32 %v64, %v260
  %v262 = vpop.f32.mrb[0].mxu0
  %v263 = vadd.f32 %v60, %v262
  %v264 = vpop.f32.mrb[0].mxu0
  %v265 = vadd.f32 %v64, %v264
  %266 = vmatprep.mubr.bf16.mxu0 0
  %267 = vmatmul.mubr.bf16.gmra.mrb[0].mxu0 %v89
  %v268 = vpop.f32.mrb[0].mxu0
  %v269 = vadd.f32 %v60, %v268
  %v270 = vpop.f32.mrb[0].mxu0
  %v271 = vadd.f32 %v64, %v270
  %v272 = vpop.f32.mrb[0].mxu0
  %v273 = vadd.f32 %v60, %v272
  %v274 = vpop.f32.mrb[0].mxu0
  %v275 = vadd.f32 %v64, %v274
  %276 = vmatprep.mubr.bf16.mxu0 0
  %277 = vmatmul.mubr.bf16.gmra.mrb[0].mxu0 %v90
  %v278 = vpop.f32.mrb[0].mxu0
  %v279 = vadd.f32 %v60, %v278
  %v280 = vpop.f32.mrb[0].mxu0
  %v281 = vadd.f32 %v64, %v280
  %v282 = vpop.f32.mrb[0].mxu0
  %v283 = vadd.f32 %v60, %v282
  %v284 = vpop.f32.mrb[0].mxu0
  %v285 = vadd.f32 %v64, %v284
  %286 = vmatprep.mubr.bf16.mxu0 0
  %287 = vmatmul.mubr.bf16.gmra.mrb[0].mxu0 %v91
  %v288 = vpop.f32.mrb[0].mxu0
  %v289 = vadd.f32 %v60, %v288
  %v290 = vpop.f32.mrb[0].mxu0
  %v291 = vadd.f32 %v64, %v290
  %v292 = vpop.f32.mrb[0].mxu0
  %v293 = vadd.f32 %v60, %v292
  %v294 = vpop.f32.mrb[0].mxu0
  %v295 = vadd.f32 %v64, %v294
  %296 = vdwg.mxu0
  %297 = vmatprep.subr.bf16.mxu0 0
  %298 = vmatpush1.bf16.msra.mxu0 %v178
  %299 = vmatprep.subr.bf16.mxu0 0
  %300 = vmatpush1.bf16.msra.mxu0 %v181
  %301 = vmatprep.subr.bf16.mxu0 0
  %302 = vmatpush1.bf16.msra.mxu0 %v184
  %303 = vmatprep.subr.bf16.mxu0 0
  %304 = vmatpush1.bf16.msra.mxu0 %v187
  %305 = vmatprep.subr.bf16.mxu0 0
  %306 = vmatpush1.bf16.msra.mxu0 %v190
  %307 = vmatprep.subr.bf16.mxu0 0
  %308 = vmatpush1.bf16.msra.mxu0 %v193
  %309 = vmatprep.subr.bf16.mxu0 0
  %310 = vmatpush1.bf16.msra.mxu0 %v196
  %311 = vmatprep.subr.bf16.mxu0 0
  %312 = vmatpush1.bf16.msra.mxu0 %v199
  %313 = vmatprep.subr.bf16.mxu0 0
  %314 = vmatpush1.bf16.msra.mxu0 0
  %315 = vmatprep.subr.bf16.mxu0 0
  %316 = vmatpush1.bf16.msra.mxu0 0
  %317 = vmatprep.subr.bf16.mxu0 0
  %318 = vmatpush1.bf16.msra.mxu0 0
  %319 = vmatprep.subr.bf16.mxu0 0
  %320 = vmatpush1.bf16.msra.mxu0 0
  %321 = vmatprep.subr.bf16.mxu0 0
  %322 = vmatpush1.bf16.msra.mxu0 0
  %323 = vmatprep.subr.bf16.mxu0 0
  %324 = vmatpush1.bf16.msra.mxu0 0
  %325 = vmatprep.subr.bf16.mxu0 0
  %326 = vmatpush1.bf16.msra.mxu0 0
  %327 = vmatprep.subr.bf16.mxu0 0
  %328 = vmatpush1.bf16.msra.mxu0 0
  %329 = vmatprep.mubr.bf16.mxu0 0
  %330 = vmatmul.mubr.bf16.gmra.mrb[0].mxu0 %v88
  %v331 = vpop.f32.mrb[0].mxu0
  %v332 = vadd.f32 %v68, %v331
  %v333 = vpop.f32.mrb[0].mxu0
  %v334 = vpop.f32.mrb[0].mxu0
  %v335 = vadd.f32 %v68, %v334
  %v336 = vpop.f32.mrb[0].mxu0
  %337 = vmatprep.mubr.bf16.mxu0 0
  %338 = vmatmul.mubr.bf16.gmra.mrb[0].mxu0 %v89
  %v339 = vpop.f32.mrb[0].mxu0
  %v340 = vadd.f32 %v68, %v339
  %v341 = vpop.f32.mrb[0].mxu0
  %v342 = vpop.f32.mrb[0].mxu0
  %v343 = vadd.f32 %v68, %v342
  %v344 = vpop.f32.mrb[0].mxu0
  %345 = vmatprep.mubr.bf16.mxu0 0
  %346 = vmatmul.mubr.bf16.gmra.mrb[0].mxu0 %v90
  %v347 = vpop.f32.mrb[0].mxu0
  %v348 = vadd.f32 %v68, %v347
  %v349 = vpop.f32.mrb[0].mxu0
  %v350 = vpop.f32.mrb[0].mxu0
  %v351 = vadd.f32 %v68, %v350
  %v352 = vpop.f32.mrb[0].mxu0
  %353 = vmatprep.mubr.bf16.mxu0 0
  %354 = vmatmul.mubr.bf16.gmra.mrb[0].mxu0 %v91
  %v355 = vpop.f32.mrb[0].mxu0
  %v356 = vadd.f32 %v68, %v355
  %v357 = vpop.f32.mrb[0].mxu0
  %v358 = vpop.f32.mrb[0].mxu0
  %v359 = vadd.f32 %v68, %v358
  %v360 = vpop.f32.mrb[0].mxu0
  %361 = vdwg.mxu0
  %v362 = vpack.c.bf16 %v263, %v259
  %v363 = vpack.c.bf16 %v265, %v261
  %v364 = vpack.c.bf16 %v335, %v332
  %v365 = vpack.c.bf16 %v273, %v269
  %v366 = vpack.c.bf16 %v275, %v271
  %v367 = vpack.c.bf16 %v343, %v340
  %v368 = vpack.c.bf16 %v283, %v279
  %v369 = vpack.c.bf16 %v285, %v281
  %v370 = vpack.c.bf16 %v351, %v348
  %v371 = vpack.c.bf16 %v293, %v289
  %v372 = vpack.c.bf16 %v295, %v291
  %v373 = vpack.c.bf16 %v359, %v356
  %v386 = vunpack.c.l.b16 %v362
  %v387 = vunpack.c.l.b16 %v363
  %v388 = vunpack.c.l.b16 %v364
  %v389 = vunpack.c.h.b16 %v362
  %v390 = vunpack.c.h.b16 %v363
  %v391 = vunpack.c.h.b16 %v364
  %v392 = vunpack.c.l.b16 %v365
  %v393 = vunpack.c.l.b16 %v366
  %v394 = vunpack.c.l.b16 %v367
  %v395 = vunpack.c.h.b16 %v365
  %v396 = vunpack.c.h.b16 %v366
  %v397 = vunpack.c.h.b16 %v367
  %v398 = vunpack.c.l.b16 %v368
  %v399 = vunpack.c.l.b16 %v369
  %v400 = vunpack.c.l.b16 %v370
  %v401 = vunpack.c.h.b16 %v368
  %v402 = vunpack.c.h.b16 %v369
  %v403 = vunpack.c.h.b16 %v370
  %v404 = vunpack.c.l.b16 %v371
  %v405 = vunpack.c.l.b16 %v372
  %v406 = vunpack.c.l.b16 %v373
  %v407 = vunpack.c.h.b16 %v371
  %v408 = vunpack.c.h.b16 %v372
  %v409 = vunpack.c.h.b16 %v373
  %v410 = vpack.c.b16 %v387, %v386
  %v411 = vpack.c.b16 %v388, %v388
  %v412 = vpack.c.b16 %v390, %v389
  %v413 = vpack.c.b16 %v391, %v391
  %v414 = vpack.c.b16 %v393, %v392
  %v415 = vpack.c.b16 %v394, %v394
  %v416 = vpack.c.b16 %v396, %v395
  %v417 = vpack.c.b16 %v397, %v397
  %v418 = vpack.c.b16 %v399, %v398
  %v419 = vpack.c.b16 %v400, %v400
  %v420 = vpack.c.b16 %v402, %v401
  %v421 = vpack.c.b16 %v403, %v403
  %v422 = vpack.c.b16 %v405, %v404
  %v423 = vpack.c.b16 %v406, %v406
  %v424 = vpack.c.b16 %v408, %v407
  %v425 = vpack.c.b16 %v409, %v409
  %442 = vst [vmem:[%s3] sm:$0xff] %v410
  %443 = vst [vmem:[%s3 + $0x8] sm:$0xf] %v411
  %444 = vst [vmem:[%s3 + $0xc] sm:$0xff] %v412
  %445 = vst [vmem:[%s3 + $0x14] sm:$0xf] %v413
  %446 = vst [vmem:[%s3 + $0x18] sm:$0xff] %v414
  %447 = vst [vmem:[%s3 + $0x20] sm:$0xf] %v415
  %448 = vst [vmem:[%s3 + $0x24] sm:$0xff] %v416
  %449 = vst [vmem:[%s3 + $0x2c] sm:$0xf] %v417
  %450 = vst [vmem:[%s3 + $0x30] sm:$0xff] %v418
  %451 = vst [vmem:[%s3 + $0x38] sm:$0xf] %v419
  %452 = vst [vmem:[%s3 + $0x3c] sm:$0xff] %v420
  %453 = vst [vmem:[%s3 + $0x44] sm:$0xf] %v421
  %454 = vst [vmem:[%s3 + $0x48] sm:$0xff] %v422
  %455 = vst [vmem:[%s3 + $0x50] sm:$0xf] %v423
  %456 = vst [vmem:[%s3 + $0x54] sm:$0xff] %v424
  %457 = vst [vmem:[%s3 + $0x5c] sm:$0xf] %v425
  // Predicated region
  $region14: #{forward.9} parent=0 // pred_check
    _
  $region15: #{forward.9} parent=0 // pred_check_branch
    %459 = sbr.rel (0) target = $region17
  $region16: #{forward.9} parent=0 // pred_region
    _
  $region17: #{forward.9} parent=0 // pred_fallthru
    _
  // Predicated region
  $region18: #{forward.9} parent=0 // pred_check
    _
  $region19: #{forward.9} parent=0 // pred_check_branch
    %461 = sbr.rel (0) target = $region21
  $region20: #{forward.9} parent=0 // pred_region
    _
  $region21: #{forward.9} parent=0 // pred_fallthru
    _

// kernel: forward.11
$region0: #{forward.11}
  #allocation0 [shape = 'u32[]', space=smem, size = 0x4, offset = 0x4, fixed_abs, tag = 'smem constant byte address 0x4 - core index']
  #allocation1 [shape = 'u32[144,128]{1,0:T(1,128)}', space=vmem, size = 0x12000, scoped, tag = 'internal scratch']
  %s0 = inlined_call_operand.vmem [shape: bf16[64,128], index: 0, kind: input, shape index: {}]
  %s1 = inlined_call_operand.vmem [shape: bf16[128,128], index: 1, kind: input, shape index: {}]
  %s2 = inlined_call_operand.vmem [shape: f32[1,128], index: 2, kind: input, shape index: {}]
  %s3 = inlined_call_operand.vmem [shape: f32[64,128], index: 3, kind: output, shape index: {}]
  %s4 = sld [smem:[#allocation0]]
  $region22: #{forward.11} parent=0
    _
  %s6 = ssub.s32 1, %s4
  %s7 = scalar_select 0, %s6, %s4
  // Predicated region
  $region2: #{forward.11} parent=0 // pred_check
    _
  $region3: #{forward.11} parent=0 // pred_check_branch
    %9 = sbr.rel (0) target = $region5
  $region4: #{forward.11} parent=0 // pred_region
    _
  $region5: #{forward.11} parent=0 // pred_fallthru
    _
  // Predicated region
  $region6: #{forward.11} parent=0 // pred_check
    _
  $region7: #{forward.11} parent=0 // pred_check_branch
    %11 = sbr.rel (0) target = $region9
  $region8: #{forward.11} parent=0 // pred_region
    _
  $region9: #{forward.11} parent=0 // pred_fallthru
    _
  // Predicated region
  $region10: #{forward.11} parent=0 // pred_check
    _
  $region11: #{forward.11} parent=0 // pred_check_branch
    %13 = sbr.rel (0) target = $region13
  $region12: #{forward.11} parent=0 // pred_region
    _
  $region13: #{forward.11} parent=0 // pred_fallthru
    _
  %v15 = vld [vmem:[%s0] sm:$0xf]
  %v16 = vld [vmem:[%s0 + $0x4] sm:$0xf]
  %v17 = vld [vmem:[%s0 + $0x8] sm:$0xf]
  %v18 = vld [vmem:[%s0 + $0xc] sm:$0xf]
  %v19 = vld [vmem:[%s0 + $0x10] sm:$0xf]
  %v20 = vld [vmem:[%s0 + $0x14] sm:$0xf]
  %v21 = vld [vmem:[%s0 + $0x18] sm:$0xf]
  %v22 = vld [vmem:[%s0 + $0x1c] sm:$0xf]
  %v23 = vld [vmem:[%s1] sm:$0xf]
  %v24 = vld [vmem:[%s1 + $0x4] sm:$0xf]
  %v25 = vld [vmem:[%s1 + $0x8] sm:$0xf]
  %v26 = vld [vmem:[%s1 + $0xc] sm:$0xf]
  %v27 = vld [vmem:[%s1 + $0x10] sm:$0xf]
  %v28 = vld [vmem:[%s1 + $0x14] sm:$0xf]
  %v29 = vld [vmem:[%s1 + $0x18] sm:$0xf]
  %v30 = vld [vmem:[%s1 + $0x1c] sm:$0xf]
  %v31 = vld [vmem:[%s1 + $0x20] sm:$0xf]
  %v32 = vld [vmem:[%s1 + $0x24] sm:$0xf]
  %v33 = vld [vmem:[%s1 + $0x28] sm:$0xf]
  %v34 = vld [vmem:[%s1 + $0x2c] sm:$0xf]
  %v35 = vld [vmem:[%s1 + $0x30] sm:$0xf]
  %v36 = vld [vmem:[%s1 + $0x34] sm:$0xf]
  %v37 = vld [vmem:[%s1 + $0x38] sm:$0xf]
  %v38 = vld [vmem:[%s1 + $0x3c] sm:$0xf]
  %v39 = vld [vmem:[%s2] sm:$0x1]
  %v41 = vlaneseq
  %v42 = vshrl.u32 %v41, 7
  %v43 = vsub.s32 0, %v42
  %v44 = vrot.slane %v39, %v43
  %v54 = vunpack.c.l.b16 %v15
  %v55 = vunpack.c.l.b16 %v16
  %v56 = vunpack.c.l.b16 %v17
  %v57 = vunpack.c.l.b16 %v18
  %v58 = vunpack.c.l.b16 %v19
  %v59 = vunpack.c.l.b16 %v20
  %v60 = vunpack.c.l.b16 %v21
  %v61 = vunpack.c.l.b16 %v22
  %v62 = vpack.c.b16 %v55, %v54
  %v63 = vpack.c.b16 %v57, %v56
  %v64 = vpack.c.b16 %v59, %v58
  %v65 = vpack.c.b16 %v61, %v60
  %v86 = vunpack.c.l.b16 %v23
  %v87 = vunpack.c.l.b16 %v24
  %v88 = vunpack.c.l.b16 %v25
  %v89 = vunpack.c.l.b16 %v26
  %v90 = vunpack.c.l.b16 %v27
  %v91 = vunpack.c.l.b16 %v28
  %v92 = vunpack.c.l.b16 %v29
  %v93 = vunpack.c.l.b16 %v30
  %v94 = vunpack.c.l.b16 %v31
  %v95 = vunpack.c.l.b16 %v32
  %v96 = vunpack.c.l.b16 %v33
  %v97 = vunpack.c.l.b16 %v34
  %v98 = vunpack.c.l.b16 %v35
  %v99 = vunpack.c.l.b16 %v36
  %v100 = vunpack.c.l.b16 %v37
  %v101 = vunpack.c.l.b16 %v38
  %v102 = vpack.c.b16 %v87, %v86
  %v103 = vpack.c.b16 %v89, %v88
  %v104 = vpack.c.b16 %v91, %v90
  %v105 = vpack.c.b16 %v93, %v92
  %v106 = vpack.c.b16 %v95, %v94
  %v107 = vpack.c.b16 %v97, %v96
  %v108 = vpack.c.b16 %v99, %v98
  %v109 = vpack.c.b16 %v101, %v100
  %118 = vmatprep.subr.bf16.mxu0 0
  %119 = vmatpush1.bf16.msra.mxu0 %v102
  %120 = vmatprep.subr.bf16.mxu0 0
  %121 = vmatpush1.bf16.msra.mxu0 %v103
  %122 = vmatprep.subr.bf16.mxu0 0
  %123 = vmatpush1.bf16.msra.mxu0 %v104
  %124 = vmatprep.subr.bf16.mxu0 0
  %125 = vmatpush1.bf16.msra.mxu0 %v105
  %126 = vmatprep.subr.bf16.mxu0 0
  %127 = vmatpush1.bf16.msra.mxu0 %v106
  %128 = vmatprep.subr.bf16.mxu0 0
  %129 = vmatpush1.bf16.msra.mxu0 %v107
  %130 = vmatprep.subr.bf16.mxu0 0
  %131 = vmatpush1.bf16.msra.mxu0 %v108
  %132 = vmatprep.subr.bf16.mxu0 0
  %133 = vmatpush1.bf16.msra.mxu0 %v109
  %134 = vmatprep.subr.bf16.mxu0 0
  %135 = vmatpush1.bf16.msra.mxu0 0
  %136 = vmatprep.subr.bf16.mxu0 0
  %137 = vmatpush1.bf16.msra.mxu0 0
  %138 = vmatprep.subr.bf16.mxu0 0
  %139 = vmatpush1.bf16.msra.mxu0 0
  %140 = vmatprep.subr.bf16.mxu0 0
  %141 = vmatpush1.bf16.msra.mxu0 0
  %142 = vmatprep.subr.bf16.mxu0 0
  %143 = vmatpush1.bf16.msra.mxu0 0
  %144 = vmatprep.subr.bf16.mxu0 0
  %145 = vmatpush1.bf16.msra.mxu0 0
  %146 = vmatprep.subr.bf16.mxu0 0
  %147 = vmatpush1.bf16.msra.mxu0 0
  %148 = vmatprep.subr.bf16.mxu0 0
  %149 = vmatpush1.bf16.msra.mxu0 0
  %150 = vmatprep.mubr.bf16.mxu0 0
  %151 = vmatmul.mubr.bf16.gmra.mrb[0].mxu0 %v62
  %v152 = vpop.f32.mrb[0].mxu0
  %v153 = vadd.f32 %v44, %v152
  %v154 = vpop.f32.mrb[0].mxu0
  %v155 = vpop.f32.mrb[0].mxu0
  %v156 = vadd.f32 %v44, %v155
  %v157 = vpop.f32.mrb[0].mxu0
  %158 = vmatprep.mubr.bf16.mxu0 0
  %159 = vmatmul.mubr.bf16.gmra.mrb[0].mxu0 %v63
  %v160 = vpop.f32.mrb[0].mxu0
  %v161 = vadd.f32 %v44, %v160
  %v162 = vpop.f32.mrb[0].mxu0
  %v163 = vpop.f32.mrb[0].mxu0
  %v164 = vadd.f32 %v44, %v163
  %v165 = vpop.f32.mrb[0].mxu0
  %166 = vmatprep.mubr.bf16.mxu0 0
  %167 = vmatmul.mubr.bf16.gmra.mrb[0].mxu0 %v64
  %v168 = vpop.f32.mrb[0].mxu0
  %v169 = vadd.f32 %v44, %v168
  %v170 = vpop.f32.mrb[0].mxu0
  %v171 = vpop.f32.mrb[0].mxu0
  %v172 = vadd.f32 %v44, %v171
  %v173 = vpop.f32.mrb[0].mxu0
  %174 = vmatprep.mubr.bf16.mxu0 0
  %175 = vmatmul.mubr.bf16.gmra.mrb[0].mxu0 %v65
  %v176 = vpop.f32.mrb[0].mxu0
  %v177 = vadd.f32 %v44, %v176
  %v178 = vpop.f32.mrb[0].mxu0
  %v179 = vpop.f32.mrb[0].mxu0
  %v180 = vadd.f32 %v44, %v179
  %v181 = vpop.f32.mrb[0].mxu0
  %182 = vdwg.mxu0
  %183 = vst [vmem:[%s3] sm:$0xff] %v153
  %184 = vst [vmem:[%s3 + $0x8] sm:$0xff] %v156
  %185 = vst [vmem:[%s3 + $0x10] sm:$0xff] %v161
  %186 = vst [vmem:[%s3 + $0x18] sm:$0xff] %v164
  %187 = vst [vmem:[%s3 + $0x20] sm:$0xff] %v169
  %188 = vst [vmem:[%s3 + $0x28] sm:$0xff] %v172
  %189 = vst [vmem:[%s3 + $0x30] sm:$0xff] %v177
  %190 = vst [vmem:[%s3 + $0x38] sm:$0xff] %v180
  // Predicated region
  $region14: #{forward.11} parent=0 // pred_check
    _
  $region15: #{forward.11} parent=0 // pred_check_branch
    %192 = sbr.rel (0) target = $region17
  $region16: #{forward.11} parent=0 // pred_region
    _
  $region17: #{forward.11} parent=0 // pred_fallthru
    _
  // Predicated region
  $region18: #{forward.11} parent=0 // pred_check
    _
  $region19: #{forward.11} parent=0 // pred_check_branch
    %194 = sbr.rel (0) target = $region21
  $region20: #{forward.11} parent=0 // pred_region
    _
  $region21: #{forward.11} parent=0 // pred_fallthru
    _

// kernel: forward.8
$region0: #{forward.8}
  #allocation0 [shape = 'u32[]', space=smem, size = 0x4, offset = 0x4, fixed_abs, tag = 'smem constant byte address 0x4 - core index']
  #allocation1 [shape = 'u32[144,128]{1,0:T(1,128)}', space=vmem, size = 0x12000, scoped, tag = 'internal scratch']
  #allocation2 [shape = 'f32[8,128]{1,0:T(8,128)}', space=vmem, size = 0x1000, scoped, tag = 'scratch operand']
  %s0 = inlined_call_operand.vmem [shape: bf16[8,8,384], index: 0, kind: input, shape index: {}]
  %s1 = inlined_call_operand.vmem [shape: f32[8,384], index: 1, kind: input, shape index: {}]
  %s2 = inlined_call_operand.vmem [shape: f32[8,128], index: 2, kind: input, shape index: {}]
  %s3 = inlined_call_operand.vmem [shape: bf16[128,384], index: 3, kind: input, shape index: {}]
  %s4 = inlined_call_operand.vmem [shape: f32[1,128], index: 4, kind: input, shape index: {}]
  %s5 = inlined_call_operand.vmem [shape: bf16[8,8,128], index: 5, kind: output, shape index: {0}]
  %s6 = inlined_call_operand.vmem [shape: f32[8,128], index: 6, kind: output, shape index: {1}]
  %7 = xla_tuple %s5, %s6
  %s8 = sld [smem:[#allocation0]]
  $region46: #{forward.8} parent=0
    _
  %s10 = ssub.s32 1, %s8
  %s11 = scalar_select 0, %s10, %s8
  // Predicated region
  $region2: #{forward.8} parent=0 // pred_check
    _
  $region3: #{forward.8} parent=0 // pred_check_branch
    %13 = sbr.rel (0) target = $region5
  $region4: #{forward.8} parent=0 // pred_region
    _
  $region5: #{forward.8} parent=0 // pred_fallthru
    _
  // Predicated region
  $region6: #{forward.8} parent=0 // pred_check
    _
  $region7: #{forward.8} parent=0 // pred_check_branch
    %15 = sbr.rel (0) target = $region9
  $region8: #{forward.8} parent=0 // pred_region
    _
  $region9: #{forward.8} parent=0 // pred_fallthru
    _
  // Predicated region
  $region10: #{forward.8} parent=0 // pred_check
    _
  $region11: #{forward.8} parent=0 // pred_check_branch
    %17 = sbr.rel (0) target = $region13
  $region12: #{forward.8} parent=0 // pred_region
    _
  $region13: #{forward.8} parent=0 // pred_fallthru
    _
  // Predicated region
  $region14: #{forward.8} parent=0 // pred_check
    _
  $region15: #{forward.8} parent=0 // pred_check_branch
    %19 = sbr.rel (0) target = $region17
  $region16: #{forward.8} parent=0 // pred_region
    _
  $region17: #{forward.8} parent=0 // pred_fallthru
    _
  // Predicated region
  $region18: #{forward.8} parent=0 // pred_check
    _
  $region19: #{forward.8} parent=0 // pred_check_branch
    %21 = sbr.rel (0) target = $region21
  $region20: #{forward.8} parent=0 // pred_region
    _
  $region21: #{forward.8} parent=0 // pred_fallthru
    _
  %p23 = scmp.eq.s32.totalorder 0, 0
  // Predicated region
  $region22: #{forward.8} parent=0 // pred_check
    %p24 = pneg %p23
  $region23: #{forward.8} parent=0 // pred_check_branch
    %26 = sbr.rel (%p24) target = $region25
  $region24: #{forward.8} parent=0 // pred_region
    %v27 = vld [vmem:[%s2] sm:$0xff]
    %28 = vst [vmem:[#allocation2] sm:$0xff] %v27
  $region25: #{forward.8} parent=0 // pred_fallthru
    _
  %v29 = vld [vmem:[%s3] sm:$0xff]
  %v30 = vld [vmem:[%s3 + $0x8] sm:$0xf]
  %v31 = vld [vmem:[%s3 + $0xc] sm:$0xff]
  %v32 = vld [vmem:[%s3 + $0x14] sm:$0xf]
  %v33 = vld [vmem:[%s3 + $0x18] sm:$0xff]
  %v34 = vld [vmem:[%s3 + $0x20] sm:$0xf]
  %v35 = vld [vmem:[%s3 + $0x24] sm:$0xff]
  %v36 = vld [vmem:[%s3 + $0x2c] sm:$0xf]
  %v37 = vld [vmem:[%s3 + $0x30] sm:$0xff]
  %v38 = vld [vmem:[%s3 + $0x38] sm:$0xf]
  %v39 = vld [vmem:[%s3 + $0x3c] sm:$0xff]
  %v40 = vld [vmem:[%s3 + $0x44] sm:$0xf]
  %v41 = vld [vmem:[%s3 + $0x48] sm:$0xff]
  %v42 = vld [vmem:[%s3 + $0x50] sm:$0xf]
  %v43 = vld [vmem:[%s3 + $0x54] sm:$0xff]
  %v44 = vld [vmem:[%s3 + $0x5c] sm:$0xf]
  %v45 = vld [vmem:[%s3 + $0x60] sm:$0xff]
  %v46 = vld [vmem:[%s3 + $0x68] sm:$0xf]
  %v47 = vld [vmem:[%s3 + $0x6c] sm:$0xff]
  %v48 = vld [vmem:[%s3 + $0x74] sm:$0xf]
  %v49 = vld [vmem:[%s3 + $0x78] sm:$0xff]
  %v50 = vld [vmem:[%s3 + $0x80] sm:$0xf]
  %v51 = vld [vmem:[%s3 + $0x84] sm:$0xff]
  %v52 = vld [vmem:[%s3 + $0x8c] sm:$0xf]
  %v53 = vld [vmem:[%s3 + $0x90] sm:$0xff]
  %v54 = vld [vmem:[%s3 + $0x98] sm:$0xf]
  %v55 = vld [vmem:[%s3 + $0x9c] sm:$0xff]
  %v56 = vld [vmem:[%s3 + $0xa4] sm:$0xf]
  %v57 = vld [vmem:[%s3 + $0xa8] sm:$0xff]
  %v58 = vld [vmem:[%s3 + $0xb0] sm:$0xf]
  %v59 = vld [vmem:[%s3 + $0xb4] sm:$0xff]
  %v60 = vld [vmem:[%s3 + $0xbc] sm:$0xf]
  %v61 = vld [vmem:[%s4] sm:$0x1]
  %v63 = vlaneseq
  %v64 = vshrl.u32 %v63, 7
  %v65 = vsub.s32 0, %v64
  %v66 = vrot.slane %v61, %v65
  %v68 = vld [vmem:[%s1] sm:$0xff]
  %v69 = vld [vmem:[%s1 + $0x8] sm:$0xff]
  %v70 = vld [vmem:[%s1 + $0x10] sm:$0xff]
  %v71 = vld [vmem:[#allocation2] sm:$0xff]
  %v72 = vld [vmem:[%s0] sm:$0x11]
  %v73 = vld [vmem:[%s0 + $0x8] sm:$0x1]
  %v74 = vld [vmem:[%s0 + $0xc] sm:$0x11]
  %v75 = vld [vmem:[%s0 + $0x14] sm:$0x1]
  %v76 = vld [vmem:[%s0 + $0x18] sm:$0x11]
  %v77 = vld [vmem:[%s0 + $0x20] sm:$0x1]
  %v78 = vld [vmem:[%s0 + $0x24] sm:$0x11]
  %v79 = vld [vmem:[%s0 + $0x2c] sm:$0x1]
  %v80 = vld [vmem:[%s0 + $0x30] sm:$0x11]
  %v81 = vld [vmem:[%s0 + $0x38] sm:$0x1]
  %v82 = vld [vmem:[%s0 + $0x3c] sm:$0x11]
  %v83 = vld [vmem:[%s0 + $0x44] sm:$0x1]
  %v84 = vld [vmem:[%s0 + $0x48] sm:$0x11]
  %v85 = vld [vmem:[%s0 + $0x50] sm:$0x1]
  %v86 = vld [vmem:[%s0 + $0x54] sm:$0x11]
  %v87 = vld [vmem:[%s0 + $0x5c] sm:$0x1]
  %v88 = vunpack.c.l.bf16 %v72
  %v89 = vunpack.c.h.bf16 %v72
  %v90 = vunpack.c.l.bf16 %v73
  %v91 = vunpack.c.l.bf16 %v74
  %v92 = vunpack.c.h.bf16 %v74
  %v93 = vunpack.c.l.bf16 %v75
  %v94 = vunpack.c.l.bf16 %v76
  %v95 = vunpack.c.h.bf16 %v76
  %v96 = vunpack.c.l.bf16 %v77
  %v97 = vunpack.c.l.bf16 %v78
  %v98 = vunpack.c.h.bf16 %v78
  %v99 = vunpack.c.l.bf16 %v79
  %v100 = vunpack.c.l.bf16 %v80
  %v101 = vunpack.c.h.bf16 %v80
  %v102 = vunpack.c.l.bf16 %v81
  %v103 = vunpack.c.l.bf16 %v82
  %v104 = vunpack.c.h.bf16 %v82
  %v105 = vunpack.c.l.bf16 %v83
  %v106 = vunpack.c.l.bf16 %v84
  %v107 = vunpack.c.h.bf16 %v84
  %v108 = vunpack.c.l.bf16 %v85
  %v109 = vunpack.c.l.bf16 %v86
  %v110 = vunpack.c.h.bf16 %v86
  %v111 = vunpack.c.l.bf16 %v87
  %v115 = vrot.slane %v68, 1
  %v116 = vrot.slane %v69, 1
  %v117 = vrot.slane %v70, 1
  %v118 = vrot.slane %v68, 2
  %v119 = vrot.slane %v69, 2
  %v120 = vrot.slane %v70, 2
  %v121 = vrot.slane %v68, 3
  %v122 = vrot.slane %v69, 3
  %v123 = vrot.slane %v70, 3
  %v124 = vrot.slane %v68, 4
  %v125 = vrot.slane %v69, 4
  %v126 = vrot.slane %v70, 4
  %v127 = vrot.slane %v68, 5
  %v128 = vrot.slane %v69, 5
  %v129 = vrot.slane %v70, 5
  %v130 = vrot.slane %v68, 6
  %v131 = vrot.slane %v69, 6
  %v132 = vrot.slane %v70, 6
  %v133 = vrot.slane %v68, 7
  %v134 = vrot.slane %v69, 7
  %v135 = vrot.slane %v70, 7
  %v160 = vadd.f32 %v88, %v68
  %v161 = vadd.f32 %v89, %v69
  %v162 = vadd.f32 %v90, %v70
  %v163 = vadd.f32 %v91, %v115
  %v164 = vadd.f32 %v92, %v116
  %v165 = vadd.f32 %v93, %v117
  %v166 = vadd.f32 %v94, %v118
  %v167 = vadd.f32 %v95, %v119
  %v168 = vadd.f32 %v96, %v120
  %v169 = vadd.f32 %v97, %v121
  %v170 = vadd.f32 %v98, %v122
  %v171 = vadd.f32 %v99, %v123
  %v172 = vadd.f32 %v100, %v124
  %v173 = vadd.f32 %v101, %v125
  %v174 = vadd.f32 %v102, %v126
  %v175 = vadd.f32 %v103, %v127
  %v176 = vadd.f32 %v104, %v128
  %v177 = vadd.f32 %v105, %v129
  %v178 = vadd.f32 %v106, %v130
  %v179 = vadd.f32 %v107, %v131
  %v180 = vadd.f32 %v108, %v132
  %v181 = vadd.f32 %v109, %v133
  %v182 = vadd.f32 %v110, %v134
  %v183 = vadd.f32 %v111, %v135
  %v184 = vpack.c.bf16 %v71, %v71
  %v217 = vunpack.c.l.b16 %v29
  %v218 = vunpack.c.h.b16 %v29
  %v219 = vunpack.c.l.b16 %v30
  %v220 = vunpack.c.l.b16 %v31
  %v221 = vunpack.c.h.b16 %v31
  %v222 = vunpack.c.l.b16 %v32
  %v223 = vunpack.c.l.b16 %v33
  %v224 = vunpack.c.h.b16 %v33
  %v225 = vunpack.c.l.b16 %v34
  %v226 = vunpack.c.l.b16 %v35
  %v227 = vunpack.c.h.b16 %v35
  %v228 = vunpack.c.l.b16 %v36
  %v229 = vunpack.c.l.b16 %v37
  %v230 = vunpack.c.h.b16 %v37
  %v231 = vunpack.c.l.b16 %v38
  %v232 = vunpack.c.l.b16 %v39
  %v233 = vunpack.c.h.b16 %v39
  %v234 = vunpack.c.l.b16 %v40
  %v235 = vunpack.c.l.b16 %v41
  %v236 = vunpack.c.h.b16 %v41
  %v237 = vunpack.c.l.b16 %v42
  %v238 = vunpack.c.l.b16 %v43
  %v239 = vunpack.c.h.b16 %v43
  %v240 = vunpack.c.l.b16 %v44
  %v241 = vunpack.c.l.b16 %v45
  %v242 = vunpack.c.h.b16 %v45
  %v243 = vunpack.c.l.b16 %v46
  %v244 = vunpack.c.l.b16 %v47
  %v245 = vunpack.c.h.b16 %v47
  %v246 = vunpack.c.l.b16 %v48
  %v247 = vunpack.c.l.b16 %v49
  %v248 = vunpack.c.h.b16 %v49
  %v249 = vunpack.c.l.b16 %v50
  %v250 = vunpack.c.l.b16 %v51
  %v251 = vunpack.c.h.b16 %v51
  %v252 = vunpack.c.l.b16 %v52
  %v253 = vunpack.c.l.b16 %v53
  %v254 = vunpack.c.h.b16 %v53
  %v255 = vunpack.c.l.b16 %v54
  %v256 = vunpack.c.l.b16 %v55
  %v257 = vunpack.c.h.b16 %v55
  %v258 = vunpack.c.l.b16 %v56
  %v259 = vunpack.c.l.b16 %v57
  %v260 = vunpack.c.h.b16 %v57
  %v261 = vunpack.c.l.b16 %v58
  %v262 = vunpack.c.l.b16 %v59
  %v263 = vunpack.c.h.b16 %v59
  %v264 = vunpack.c.l.b16 %v60
  %v265 = vpack.c.b16 %v220, %v217
  %v266 = vpack.c.b16 %v221, %v218
  %v267 = vpack.c.b16 %v222, %v219
  %v268 = vpack.c.b16 %v226, %v223
  %v269 = vpack.c.b16 %v227, %v224
  %v270 = vpack.c.b16 %v228, %v225
  %v271 = vpack.c.b16 %v232, %v229
  %v272 = vpack.c.b16 %v233, %v230
  %v273 = vpack.c.b16 %v234, %v231
  %v274 = vpack.c.b16 %v238, %v235
  %v275 = vpack.c.b16 %v239, %v236
  %v276 = vpack.c.b16 %v240, %v237
  %v277 = vpack.c.b16 %v244, %v241
  %v278 = vpack.c.b16 %v245, %v242
  %v279 = vpack.c.b16 %v246, %v243
  %v280 = vpack.c.b16 %v250, %v247
  %v281 = vpack.c.b16 %v251, %v248
  %v282 = vpack.c.b16 %v252, %v249
  %v283 = vpack.c.b16 %v256, %v253
  %v284 = vpack.c.b16 %v257, %v254
  %v285 = vpack.c.b16 %v258, %v255
  %v286 = vpack.c.b16 %v262, %v259
  %v287 = vpack.c.b16 %v263, %v260
  %v288 = vpack.c.b16 %v264, %v261
  %313 = vmatprep.subr.bf16.mxu0 %v266
  %314 = vmatpush1.bf16.msra.mxu0 %v265
  %315 = vmatprep.subr.bf16.mxu0 %v269
  %316 = vmatpush1.bf16.msra.mxu0 %v268
  %317 = vmatprep.subr.bf16.mxu0 %v272
  %318 = vmatpush1.bf16.msra.mxu0 %v271
  %319 = vmatprep.subr.bf16.mxu0 %v275
  %320 = vmatpush1.bf16.msra.mxu0 %v274
  %321 = vmatprep.subr.bf16.mxu0 %v278
  %322 = vmatpush1.bf16.msra.mxu0 %v277
  %323 = vmatprep.subr.bf16.mxu0 %v281
  %324 = vmatpush1.bf16.msra.mxu0 %v280
  %325 = vmatprep.subr.bf16.mxu0 %v284
  %326 = vmatpush1.bf16.msra.mxu0 %v283
  %327 = vmatprep.subr.bf16.mxu0 %v287
  %328 = vmatpush1.bf16.msra.mxu0 %v286
  %329 = vmatprep.subr.bf16.mxu0 0
  %330 = vmatpush1.bf16.msra.mxu0 0
  %331 = vmatprep.subr.bf16.mxu0 0
  %332 = vmatpush1.bf16.msra.mxu0 0
  %333 = vmatprep.subr.bf16.mxu0 0
  %334 = vmatpush1.bf16.msra.mxu0 0
  %335 = vmatprep.subr.bf16.mxu0 0
  %336 = vmatpush1.bf16.msra.mxu0 0
  %337 = vmatprep.subr.bf16.mxu0 0
  %338 = vmatpush1.bf16.msra.mxu0 0
  %339 = vmatprep.subr.bf16.mxu0 0
  %340 = vmatpush1.bf16.msra.mxu0 0
  %341 = vmatprep.subr.bf16.mxu0 0
  %342 = vmatpush1.bf16.msra.mxu0 0
  %343 = vmatprep.subr.bf16.mxu0 0
  %344 = vmatpush1.bf16.msra.mxu0 0
  %345 = vmatprep.mubr.bf16.mxu0 0
  %346 = vmatmul.mubr.bf16.gmra.mrb[0].mxu0 %v184
  %v347 = vpop.f32.mrb[0].mxu0
  %v348 = vadd.f32 0.0, %v347
  %v349 = vpop.f32.mrb[0].mxu0
  %v350 = vadd.f32 0.0, %v349
  %v351 = vpop.f32.mrb[0].mxu0
  %v352 = vpop.f32.mrb[0].mxu0
  %353 = vdwg.mxu0
  %354 = vmatprep.subr.bf16.mxu0 0
  %355 = vmatpush1.bf16.msra.mxu0 %v267
  %356 = vmatprep.subr.bf16.mxu0 0
  %357 = vmatpush1.bf16.msra.mxu0 %v270
  %358 = vmatprep.subr.bf16.mxu0 0
  %359 = vmatpush1.bf16.msra.mxu0 %v273
  %360 = vmatprep.subr.bf16.mxu0 0
  %361 = vmatpush1.bf16.msra.mxu0 %v276
  %362 = vmatprep.subr.bf16.mxu0 0
  %363 = vmatpush1.bf16.msra.mxu0 %v279
  %364 = vmatprep.subr.bf16.mxu0 0
  %365 = vmatpush1.bf16.msra.mxu0 %v282
  %366 = vmatprep.subr.bf16.mxu0 0
  %367 = vmatpush1.bf16.msra.mxu0 %v285
  %368 = vmatprep.subr.bf16.mxu0 0
  %369 = vmatpush1.bf16.msra.mxu0 %v288
  %370 = vmatprep.subr.bf16.mxu0 0
  %371 = vmatpush1.bf16.msra.mxu0 0
  %372 = vmatprep.subr.bf16.mxu0 0
  %373 = vmatpush1.bf16.msra.mxu0 0
  %374 = vmatprep.subr.bf16.mxu0 0
  %375 = vmatpush1.bf16.msra.mxu0 0
  %376 = vmatprep.subr.bf16.mxu0 0
  %377 = vmatpush1.bf16.msra.mxu0 0
  %378 = vmatprep.subr.bf16.mxu0 0
  %379 = vmatpush1.bf16.msra.mxu0 0
  %380 = vmatprep.subr.bf16.mxu0 0
  %381 = vmatpush1.bf16.msra.mxu0 0
  %382 = vmatprep.subr.bf16.mxu0 0
  %383 = vmatpush1.bf16.msra.mxu0 0
  %384 = vmatprep.subr.bf16.mxu0 0
  %385 = vmatpush1.bf16.msra.mxu0 0
  %386 = vmatprep.mubr.bf16.mxu0 0
  %387 = vmatmul.mubr.bf16.gmra.mrb[0].mxu0 %v184
  %v388 = vpop.f32.mrb[0].mxu0
  %v389 = vadd.f32 0.0, %v388
  %v390 = vpop.f32.mrb[0].mxu0
  %v391 = vpop.f32.mrb[0].mxu0
  %v392 = vpop.f32.mrb[0].mxu0
  %393 = vdwg.mxu0
  %v395 = vrot.slane %v348, 1
  %v396 = vrot.slane %v348, 2
  %v397 = vrot.slane %v348, 3
  %v398 = vrot.slane %v348, 4
  %v399 = vrot.slane %v348, 5
  %v400 = vrot.slane %v348, 6
  %v401 = vrot.slane %v348, 7
  %v410 = vadd.f32 %v160, %v348
  %v411 = vadd.f32 %v163, %v395
  %v412 = vadd.f32 %v166, %v396
  %v413 = vadd.f32 %v169, %v397
  %v414 = vadd.f32 %v172, %v398
  %v415 = vadd.f32 %v175, %v399
  %v416 = vadd.f32 %v178, %v400
  %v417 = vadd.f32 %v181, %v401
  %v418 = vxor.u32 %v410, 2147483648
  %v419 = vxor.u32 %v411, 2147483648
  %v420 = vxor.u32 %v412, 2147483648
  %v421 = vxor.u32 %v413, 2147483648
  %v422 = vxor.u32 %v414, 2147483648
  %v423 = vxor.u32 %v415, 2147483648
  %v424 = vxor.u32 %v416, 2147483648
  %v425 = vxor.u32 %v417, 2147483648
  %v426 = vmul.f32 %v418, 1.442695
  %v427 = vpow.pop %v426
  %v428 = vmul.f32 %v419, 1.442695
  %v429 = vpow.pop %v428
  %v430 = vmul.f32 %v420, 1.442695
  %v431 = vpow.pop %v430
  %v432 = vmul.f32 %v421, 1.442695
  %v433 = vpow.pop %v432
  %v434 = vmul.f32 %v422, 1.442695
  %v435 = vpow.pop %v434
  %v436 = vmul.f32 %v423, 1.442695
  %v437 = vpow.pop %v436
  %v438 = vmul.f32 %v424, 1.442695
  %v439 = vpow.pop %v438
  %v440 = vmul.f32 %v425, 1.442695
  %v441 = vpow.pop %v440
  %v442 = vadd.f32 %v427, 1.0
  %v443 = vadd.f32 %v429, 1.0
  %v444 = vadd.f32 %v431, 1.0
  %v445 = vadd.f32 %v433, 1.0
  %v446 = vadd.f32 %v435, 1.0
  %v447 = vadd.f32 %v437, 1.0
  %v448 = vadd.f32 %v439, 1.0
  %v449 = vadd.f32 %v441, 1.0
  %v450 = vrcp.pop %v442
  %v451 = vmul.f32 1.0, %v450
  %v452 = vrcp.pop %v443
  %v453 = vmul.f32 1.0, %v452
  %v454 = vrcp.pop %v444
  %v455 = vmul.f32 1.0, %v454
  %v456 = vrcp.pop %v445
  %v457 = vmul.f32 1.0, %v456
  %v458 = vrcp.pop %v446
  %v459 = vmul.f32 1.0, %v458
  %v460 = vrcp.pop %v447
  %v461 = vmul.f32 1.0, %v460
  %v462 = vrcp.pop %v448
  %v463 = vmul.f32 1.0, %v462
  %v464 = vrcp.pop %v449
  %v465 = vmul.f32 1.0, %v464
  %v467 = vrot.slane %v350, 1
  %v468 = vrot.slane %v350, 2
  %v469 = vrot.slane %v350, 3
  %v470 = vrot.slane %v350, 4
  %v471 = vrot.slane %v350, 5
  %v472 = vrot.slane %v350, 6
  %v473 = vrot.slane %v350, 7
  %v482 = vadd.f32 %v161, %v350
  %v483 = vadd.f32 %v164, %v467
  %v484 = vadd.f32 %v167, %v468
  %v485 = vadd.f32 %v170, %v469
  %v486 = vadd.f32 %v173, %v470
  %v487 = vadd.f32 %v176, %v471
  %v488 = vadd.f32 %v179, %v472
  %v489 = vadd.f32 %v182, %v473
  %v490 = vxor.u32 %v482, 2147483648
  %v491 = vxor.u32 %v483, 2147483648
  %v492 = vxor.u32 %v484, 2147483648
  %v493 = vxor.u32 %v485, 2147483648
  %v494 = vxor.u32 %v486, 2147483648
  %v495 = vxor.u32 %v487, 2147483648
  %v496 = vxor.u32 %v488, 2147483648
  %v497 = vxor.u32 %v489, 2147483648
  %v498 = vmul.f32 %v490, 1.442695
  %v499 = vpow.pop %v498
  %v500 = vmul.f32 %v491, 1.442695
  %v501 = vpow.pop %v500
  %v502 = vmul.f32 %v492, 1.442695
  %v503 = vpow.pop %v502
  %v504 = vmul.f32 %v493, 1.442695
  %v505 = vpow.pop %v504
  %v506 = vmul.f32 %v494, 1.442695
  %v507 = vpow.pop %v506
  %v508 = vmul.f32 %v495, 1.442695
  %v509 = vpow.pop %v508
  %v510 = vmul.f32 %v496, 1.442695
  %v511 = vpow.pop %v510
  %v512 = vmul.f32 %v497, 1.442695
  %v513 = vpow.pop %v512
  %v514 = vadd.f32 %v499, 1.0
  %v515 = vadd.f32 %v501, 1.0
  %v516 = vadd.f32 %v503, 1.0
  %v517 = vadd.f32 %v505, 1.0
  %v518 = vadd.f32 %v507, 1.0
  %v519 = vadd.f32 %v509, 1.0
  %v520 = vadd.f32 %v511, 1.0
  %v521 = vadd.f32 %v513, 1.0
  %v522 = vrcp.pop %v514
  %v523 = vmul.f32 1.0, %v522
  %v524 = vrcp.pop %v515
  %v525 = vmul.f32 1.0, %v524
  %v526 = vrcp.pop %v516
  %v527 = vmul.f32 1.0, %v526
  %v528 = vrcp.pop %v517
  %v529 = vmul.f32 1.0, %v528
  %v530 = vrcp.pop %v518
  %v531 = vmul.f32 1.0, %v530
  %v532 = vrcp.pop %v519
  %v533 = vmul.f32 1.0, %v532
  %v534 = vrcp.pop %v520
  %v535 = vmul.f32 1.0, %v534
  %v536 = vrcp.pop %v521
  %v537 = vmul.f32 1.0, %v536
  %v538 = vadd.f32 %v389, %v66
  %v540 = vrot.slane %v538, 1
  %v541 = vrot.slane %v538, 2
  %v542 = vrot.slane %v538, 3
  %v543 = vrot.slane %v538, 4
  %v544 = vrot.slane %v538, 5
  %v545 = vrot.slane %v538, 6
  %v546 = vrot.slane %v538, 7
  %v555 = vmul.f32 %v451, %v538
  %v556 = vmul.f32 %v453, %v540
  %v557 = vmul.f32 %v455, %v541
  %v558 = vmul.f32 %v457, %v542
  %v559 = vmul.f32 %v459, %v543
  %v560 = vmul.f32 %v461, %v544
  %v561 = vmul.f32 %v463, %v545
  %v562 = vmul.f32 %v465, %v546
  %v563 = vadd.f32 %v162, %v555
  %v564 = vadd.f32 %v165, %v556
  %v565 = vadd.f32 %v168, %v557
  %v566 = vadd.f32 %v171, %v558
  %v567 = vadd.f32 %v174, %v559
  %v568 = vadd.f32 %v177, %v560
  %v569 = vadd.f32 %v180, %v561
  %v570 = vadd.f32 %v183, %v562
  %v571 = vtanh.pop %v563
  %v572 = vtanh.pop %v564
  %v573 = vtanh.pop %v565
  %v574 = vtanh.pop %v566
  %v575 = vtanh.pop %v567
  %v576 = vtanh.pop %v568
  %v577 = vtanh.pop %v569
  %v578 = vtanh.pop %v570
  %v579 = vsub.f32 1.0, %v523
  %v580 = vsub.f32 1.0, %v525
  %v581 = vsub.f32 1.0, %v527
  %v582 = vsub.f32 1.0, %v529
  %v583 = vsub.f32 1.0, %v531
  %v584 = vsub.f32 1.0, %v533
  %v585 = vsub.f32 1.0, %v535
  %v586 = vsub.f32 1.0, %v537
  %v587 = vmul.f32 %v579, %v571
  %v588 = vmul.f32 %v580, %v572
  %v589 = vmul.f32 %v581, %v573
  %v590 = vmul.f32 %v582, %v574
  %v591 = vmul.f32 %v583, %v575
  %v592 = vmul.f32 %v584, %v576
  %v593 = vmul.f32 %v585, %v577
  %v594 = vmul.f32 %v586, %v578
  %v596 = vrot.slane %v71, 1
  %v597 = vrot.slane %v71, 2
  %v598 = vrot.slane %v71, 3
  %v599 = vrot.slane %v71, 4
  %v600 = vrot.slane %v71, 5
  %v601 = vrot.slane %v71, 6
  %v602 = vrot.slane %v71, 7
  %v611 = vmul.f32 %v523, %v71
  %v612 = vmul.f32 %v525, %v596
  %v613 = vmul.f32 %v527, %v597
  %v614 = vmul.f32 %v529, %v598
  %v615 = vmul.f32 %v531, %v599
  %v616 = vmul.f32 %v533, %v600
  %v617 = vmul.f32 %v535, %v601
  %v618 = vmul.f32 %v537, %v602
  %v619 = vadd.f32 %v587, %v611
  %v620 = vadd.f32 %v588, %v612
  %v621 = vadd.f32 %v589, %v613
  %v622 = vadd.f32 %v590, %v614
  %v623 = vadd.f32 %v591, %v615
  %v624 = vadd.f32 %v592, %v616
  %v625 = vadd.f32 %v593, %v617
  %v626 = vadd.f32 %v594, %v618
  %v627 = vpack.c.bf16 %v619, %v619
  %v628 = vpack.c.bf16 %v620, %v620
  %v629 = vpack.c.bf16 %v621, %v621
  %v630 = vpack.c.bf16 %v622, %v622
  %v631 = vpack.c.bf16 %v623, %v623
  %v632 = vpack.c.bf16 %v624, %v624
  %v633 = vpack.c.bf16 %v625, %v625
  %v634 = vpack.c.bf16 %v626, %v626
  %vm635 = vcmask 1040384
  %vm636 = vsmask.f32 256
  %vm637 = vmand %vm635, %vm636
  %v638 = vld [vmem:[%s5] sm:$0x1]
  %v639 = vsel %vm637, %v627, %v638
  %640 = vst [vmem:[%s5] sm:$0x1] %v639
  %v641 = vld [vmem:[%s5 + $0x4] sm:$0x1]
  %v642 = vsel %vm637, %v628, %v641
  %643 = vst [vmem:[%s5 + $0x4] sm:$0x1] %v642
  %v644 = vld [vmem:[%s5 + $0x8] sm:$0x1]
  %v645 = vsel %vm637, %v629, %v644
  %646 = vst [vmem:[%s5 + $0x8] sm:$0x1] %v645
  %v647 = vld [vmem:[%s5 + $0xc] sm:$0x1]
  %v648 = vsel %vm637, %v630, %v647
  %649 = vst [vmem:[%s5 + $0xc] sm:$0x1] %v648
  %v650 = vld [vmem:[%s5 + $0x10] sm:$0x1]
  %v651 = vsel %vm637, %v631, %v650
  %652 = vst [vmem:[%s5 + $0x10] sm:$0x1] %v651
  %v653 = vld [vmem:[%s5 + $0x14] sm:$0x1]
  %v654 = vsel %vm637, %v632, %v653
  %655 = vst [vmem:[%s5 + $0x14] sm:$0x1] %v654
  %v656 = vld [vmem:[%s5 + $0x18] sm:$0x1]
  %v657 = vsel %vm637, %v633, %v656
  %658 = vst [vmem:[%s5 + $0x18] sm:$0x1] %v657
  %v659 = vld [vmem:[%s5 + $0x1c] sm:$0x1]
  %v660 = vsel %vm637, %v634, %v659
  %661 = vst [vmem:[%s5 + $0x1c] sm:$0x1] %v660
  %v662 = vld [vmem:[%s0] sm:$0x11]
  %v663 = vld [vmem:[%s0 + $0x8] sm:$0x1]
  %v664 = vld [vmem:[%s0 + $0xc] sm:$0x11]
  %v665 = vld [vmem:[%s0 + $0x14] sm:$0x1]
  %v666 = vld [vmem:[%s0 + $0x18] sm:$0x11]
  %v667 = vld [vmem:[%s0 + $0x20] sm:$0x1]
  %v668 = vld [vmem:[%s0 + $0x24] sm:$0x11]
  %v669 = vld [vmem:[%s0 + $0x2c] sm:$0x1]
  %v670 = vld [vmem:[%s0 + $0x30] sm:$0x11]
  %v671 = vld [vmem:[%s0 + $0x38] sm:$0x1]
  %v672 = vld [vmem:[%s0 + $0x3c] sm:$0x11]
  %v673 = vld [vmem:[%s0 + $0x44] sm:$0x1]
  %v674 = vld [vmem:[%s0 + $0x48] sm:$0x11]
  %v675 = vld [vmem:[%s0 + $0x50] sm:$0x1]
  %v676 = vld [vmem:[%s0 + $0x54] sm:$0x11]
  %v677 = vld [vmem:[%s0 + $0x5c] sm:$0x1]
  %v678 = vunpack.c.l.bf16 %v662
  %v679 = vunpack.c.h.bf16 %v662
  %v680 = vunpack.c.l.bf16 %v663
  %v681 = vunpack.c.l.bf16 %v664
  %v682 = vunpack.c.h.bf16 %v664
  %v683 = vunpack.c.l.bf16 %v665
  %v684 = vunpack.c.l.bf16 %v666
  %v685 = vunpack.c.h.bf16 %v666
  %v686 = vunpack.c.l.bf16 %v667
  %v687 = vunpack.c.l.bf16 %v668
  %v688 = vunpack.c.h.bf16 %v668
  %v689 = vunpack.c.l.bf16 %v669
  %v690 = vunpack.c.l.bf16 %v670
  %v691 = vunpack.c.h.bf16 %v670
  %v692 = vunpack.c.l.bf16 %v671
  %v693 = vunpack.c.l.bf16 %v672
  %v694 = vunpack.c.h.bf16 %v672
  %v695 = vunpack.c.l.bf16 %v673
  %v696 = vunpack.c.l.bf16 %v674
  %v697 = vunpack.c.h.bf16 %v674
  %v698 = vunpack.c.l.bf16 %v675
  %v699 = vunpack.c.l.bf16 %v676
  %v700 = vunpack.c.h.bf16 %v676
  %v701 = vunpack.c.l.bf16 %v677
  %v702 = vadd.f32 %v678, %v133
  %v703 = vadd.f32 %v679, %v134
  %v704 = vadd.f32 %v680, %v135
  %v705 = vadd.f32 %v681, %v68
  %v706 = vadd.f32 %v682, %v69
  %v707 = vadd.f32 %v683, %v70
  %v708 = vadd.f32 %v684, %v115
  %v709 = vadd.f32 %v685, %v116
  %v710 = vadd.f32 %v686, %v117
  %v711 = vadd.f32 %v687, %v118
  %v712 = vadd.f32 %v688, %v119
  %v713 = vadd.f32 %v689, %v120
  %v714 = vadd.f32 %v690, %v121
  %v715 = vadd.f32 %v691, %v122
  %v716 = vadd.f32 %v692, %v123
  %v717 = vadd.f32 %v693, %v124
  %v718 = vadd.f32 %v694, %v125
  %v719 = vadd.f32 %v695, %v126
  %v720 = vadd.f32 %v696, %v127
  %v721 = vadd.f32 %v697, %v128
  %v722 = vadd.f32 %v698, %v129
  %v723 = vadd.f32 %v699, %v130
  %v724 = vadd.f32 %v700, %v131
  %v725 = vadd.f32 %v701, %v132
  %v734 = vunpack.c.l.b16 %v627
  %v735 = vunpack.c.l.b16 %v628
  %v736 = vunpack.c.l.b16 %v629
  %v737 = vunpack.c.l.b16 %v630
  %v738 = vunpack.c.l.b16 %v631
  %v739 = vunpack.c.l.b16 %v632
  %v740 = vunpack.c.l.b16 %v633
  %v741 = vunpack.c.l.b16 %v634
  %v742 = vrot.slane %v735, 7
  %vm743 = vcmask 1041409
  %v744 = vsel %vm743, %v742, %v734
  %v745 = vrot.slane %v736, 6
  %vm746 = vcmask 1042434
  %v747 = vsel %vm746, %v745, %v744
  %v748 = vrot.slane %v737, 5
  %vm749 = vcmask 1043459
  %v750 = vsel %vm749, %v748, %v747
  %v751 = vrot.slane %v738, 4
  %vm752 = vcmask 1044484
  %v753 = vsel %vm752, %v751, %v750
  %v754 = vrot.slane %v739, 3
  %vm755 = vcmask 1045509
  %v756 = vsel %vm755, %v754, %v753
  %v757 = vrot.slane %v740, 2
  %vm758 = vcmask 1046534
  %v759 = vsel %vm758, %v757, %v756
  %v760 = vrot.slane %v741, 1
  %vm761 = vcmask 1047559
  %v762 = vsel %vm761, %v760, %v759
  %v763 = vpack.c.b16 %v762, %v762
  %765 = vmatprep.subr.bf16.mxu0 %v266
  %766 = vmatpush1.bf16.msra.mxu0 %v265
  %767 = vmatprep.subr.bf16.mxu0 %v269
  %768 = vmatpush1.bf16.msra.mxu0 %v268
  %769 = vmatprep.subr.bf16.mxu0 %v272
  %770 = vmatpush1.bf16.msra.mxu0 %v271
  %771 = vmatprep.subr.bf16.mxu0 %v275
  %772 = vmatpush1.bf16.msra.mxu0 %v274
  %773 = vmatprep.subr.bf16.mxu0 %v278
  %774 = vmatpush1.bf16.msra.mxu0 %v277
  %775 = vmatprep.subr.bf16.mxu0 %v281
  %776 = vmatpush1.bf16.msra.mxu0 %v280
  %777 = vmatprep.subr.bf16.mxu0 %v284
  %778 = vmatpush1.bf16.msra.mxu0 %v283
  %779 = vmatprep.subr.bf16.mxu0 %v287
  %780 = vmatpush1.bf16.msra.mxu0 %v286
  %781 = vmatprep.subr.bf16.mxu0 0
  %782 = vmatpush1.bf16.msra.mxu0 0
  %783 = vmatprep.subr.bf16.mxu0 0
  %784 = vmatpush1.bf16.msra.mxu0 0
  %785 = vmatprep.subr.bf16.mxu0 0
  %786 = vmatpush1.bf16.msra.mxu0 0
  %787 = vmatprep.subr.bf16.mxu0 0
  %788 = vmatpush1.bf16.msra.mxu0 0
  %789 = vmatprep.subr.bf16.mxu0 0
  %790 = vmatpush1.bf16.msra.mxu0 0
  %791 = vmatprep.subr.bf16.mxu0 0
  %792 = vmatpush1.bf16.msra.mxu0 0
  %793 = vmatprep.subr.bf16.mxu0 0
  %794 = vmatpush1.bf16.msra.mxu0 0
  %795 = vmatprep.subr.bf16.mxu0 0
  %796 = vmatpush1.bf16.msra.mxu0 0
  %797 = vmatprep.mubr.bf16.mxu0 0
  %798 = vmatmul.mubr.bf16.gmra.mrb[0].mxu0 %v763
  %v799 = vpop.f32.mrb[0].mxu0
  %v800 = vadd.f32 0.0, %v799
  %v801 = vpop.f32.mrb[0].mxu0
  %v802 = vadd.f32 0.0, %v801
  %v803 = vpop.f32.mrb[0].mxu0
  %v804 = vpop.f32.mrb[0].mxu0
  %805 = vdwg.mxu0
  %806 = vmatprep.subr.bf16.mxu0 0
  %807 = vmatpush1.bf16.msra.mxu0 %v267
  %808 = vmatprep.subr.bf16.mxu0 0
  %809 = vmatpush1.bf16.msra.mxu0 %v270
  %810 = vmatprep.subr.bf16.mxu0 0
  %811 = vmatpush1.bf16.msra.mxu0 %v273
  %812 = vmatprep.subr.bf16.mxu0 0
  %813 = vmatpush1.bf16.msra.mxu0 %v276
  %814 = vmatprep.subr.bf16.mxu0 0
  %815 = vmatpush1.bf16.msra.mxu0 %v279
  %816 = vmatprep.subr.bf16.mxu0 0
  %817 = vmatpush1.bf16.msra.mxu0 %v282
  %818 = vmatprep.subr.bf16.mxu0 0
  %819 = vmatpush1.bf16.msra.mxu0 %v285
  %820 = vmatprep.subr.bf16.mxu0 0
  %821 = vmatpush1.bf16.msra.mxu0 %v288
  %822 = vmatprep.subr.bf16.mxu0 0
  %823 = vmatpush1.bf16.msra.mxu0 0
  %824 = vmatprep.subr.bf16.mxu0 0
  %825 = vmatpush1.bf16.msra.mxu0 0
  %826 = vmatprep.subr.bf16.mxu0 0
  %827 = vmatpush1.bf16.msra.mxu0 0
  %828 = vmatprep.subr.bf16.mxu0 0
  %829 = vmatpush1.bf16.msra.mxu0 0
  %830 = vmatprep.subr.bf16.mxu0 0
  %831 = vmatpush1.bf16.msra.mxu0 0
  %832 = vmatprep.subr.bf16.mxu0 0
  %833 = vmatpush1.bf16.msra.mxu0 0
  %834 = vmatprep.subr.bf16.mxu0 0
  %835 = vmatpush1.bf16.msra.mxu0 0
  %836 = vmatprep.subr.bf16.mxu0 0
  %837 = vmatpush1.bf16.msra.mxu0 0
  %838 = vmatprep.mubr.bf16.mxu0 0
  %839 = vmatmul.mubr.bf16.gmra.mrb[0].mxu0 %v763
  %v840 = vpop.f32.mrb[0].mxu0
  %v841 = vadd.f32 0.0, %v840
  %v842 = vpop.f32.mrb[0].mxu0
  %v843 = vpop.f32.mrb[0].mxu0
  %v844 = vpop.f32.mrb[0].mxu0
  %845 = vdwg.mxu0
  %v847 = vrot.slane %v800, 7
  %v848 = vrot.slane %v800, 1
  %v849 = vrot.slane %v800, 2
  %v850 = vrot.slane %v800, 3
  %v851 = vrot.slane %v800, 4
  %v852 = vrot.slane %v800, 5
  %v853 = vrot.slane %v800, 6
  %v862 = vadd.f32 %v702, %v847
  %v863 = vadd.f32 %v705, %v800
  %v864 = vadd.f32 %v708, %v848
  %v865 = vadd.f32 %v711, %v849
  %v866 = vadd.f32 %v714, %v850
  %v867 = vadd.f32 %v717, %v851
  %v868 = vadd.f32 %v720, %v852
  %v869 = vadd.f32 %v723, %v853
  %v870 = vxor.u32 %v862, 2147483648
  %v871 = vxor.u32 %v863, 2147483648
  %v872 = vxor.u32 %v864, 2147483648
  %v873 = vxor.u32 %v865, 2147483648
  %v874 = vxor.u32 %v866, 2147483648
  %v875 = vxor.u32 %v867, 2147483648
  %v876 = vxor.u32 %v868, 2147483648
  %v877 = vxor.u32 %v869, 2147483648
  %v878 = vmul.f32 %v870, 1.442695
  %v879 = vpow.pop %v878
  %v880 = vmul.f32 %v871, 1.442695
  %v881 = vpow.pop %v880
  %v882 = vmul.f32 %v872, 1.442695
  %v883 = vpow.pop %v882
  %v884 = vmul.f32 %v873, 1.442695
  %v885 = vpow.pop %v884
  %v886 = vmul.f32 %v874, 1.442695
  %v887 = vpow.pop %v886
  %v888 = vmul.f32 %v875, 1.442695
  %v889 = vpow.pop %v888
  %v890 = vmul.f32 %v876, 1.442695
  %v891 = vpow.pop %v890
  %v892 = vmul.f32 %v877, 1.442695
  %v893 = vpow.pop %v892
  %v894 = vadd.f32 %v879, 1.0
  %v895 = vadd.f32 %v881, 1.0
  %v896 = vadd.f32 %v883, 1.0
  %v897 = vadd.f32 %v885, 1.0
  %v898 = vadd.f32 %v887, 1.0
  %v899 = vadd.f32 %v889, 1.0
  %v900 = vadd.f32 %v891, 1.0
  %v901 = vadd.f32 %v893, 1.0
  %v902 = vrcp.pop %v894
  %v903 = vmul.f32 1.0, %v902
  %v904 = vrcp.pop %v895
  %v905 = vmul.f32 1.0, %v904
  %v906 = vrcp.pop %v896
  %v907 = vmul.f32 1.0, %v906
  %v908 = vrcp.pop %v897
  %v909 = vmul.f32 1.0, %v908
  %v910 = vrcp.pop %v898
  %v911 = vmul.f32 1.0, %v910
  %v912 = vrcp.pop %v899
  %v913 = vmul.f32 1.0, %v912
  %v914 = vrcp.pop %v900
  %v915 = vmul.f32 1.0, %v914
  %v916 = vrcp.pop %v901
  %v917 = vmul.f32 1.0, %v916
  %v919 = vrot.slane %v802, 7
  %v920 = vrot.slane %v802, 1
  %v921 = vrot.slane %v802, 2
  %v922 = vrot.slane %v802, 3
  %v923 = vrot.slane %v802, 4
  %v924 = vrot.slane %v802, 5
  %v925 = vrot.slane %v802, 6
  %v934 = vadd.f32 %v703, %v919
  %v935 = vadd.f32 %v706, %v802
  %v936 = vadd.f32 %v709, %v920
  %v937 = vadd.f32 %v712, %v921
  %v938 = vadd.f32 %v715, %v922
  %v939 = vadd.f32 %v718, %v923
  %v940 = vadd.f32 %v721, %v924
  %v941 = vadd.f32 %v724, %v925
  %v942 = vxor.u32 %v934, 2147483648
  %v943 = vxor.u32 %v935, 2147483648
  %v944 = vxor.u32 %v936, 2147483648
  %v945 = vxor.u32 %v937, 2147483648
  %v946 = vxor.u32 %v938, 2147483648
  %v947 = vxor.u32 %v939, 2147483648
  %v948 = vxor.u32 %v940, 2147483648
  %v949 = vxor.u32 %v941, 2147483648
  %v950 = vmul.f32 %v942, 1.442695
  %v951 = vpow.pop %v950
  %v952 = vmul.f32 %v943, 1.442695
  %v953 = vpow.pop %v952
  %v954 = vmul.f32 %v944, 1.442695
  %v955 = vpow.pop %v954
  %v956 = vmul.f32 %v945, 1.442695
  %v957 = vpow.pop %v956
  %v958 = vmul.f32 %v946, 1.442695
  %v959 = vpow.pop %v958
  %v960 = vmul.f32 %v947, 1.442695
  %v961 = vpow.pop %v960
  %v962 = vmul.f32 %v948, 1.442695
  %v963 = vpow.pop %v962
  %v964 = vmul.f32 %v949, 1.442695
  %v965 = vpow.pop %v964
  %v966 = vadd.f32 %v951, 1.0
  %v967 = vadd.f32 %v953, 1.0
  %v968 = vadd.f32 %v955, 1.0
  %v969 = vadd.f32 %v957, 1.0
  %v970 = vadd.f32 %v959, 1.0
  %v971 = vadd.f32 %v961, 1.0
  %v972 = vadd.f32 %v963, 1.0
  %v973 = vadd.f32 %v965, 1.0
  %v974 = vrcp.pop %v966
  %v975 = vmul.f32 1.0, %v974
  %v976 = vrcp.pop %v967
  %v977 = vmul.f32 1.0, %v976
  %v978 = vrcp.pop %v968
  %v979 = vmul.f32 1.0, %v978
  %v980 = vrcp.pop %v969
  %v981 = vmul.f32 1.0, %v980
  %v982 = vrcp.pop %v970
  %v983 = vmul.f32 1.0, %v982
  %v984 = vrcp.pop %v971
  %v985 = vmul.f32 1.0, %v984
  %v986 = vrcp.pop %v972
  %v987 = vmul.f32 1.0, %v986
  %v988 = vrcp.pop %v973
  %v989 = vmul.f32 1.0, %v988
  %v990 = vadd.f32 %v841, %v66
  %v992 = vrot.slane %v990, 7
  %v993 = vrot.slane %v990, 1
  %v994 = vrot.slane %v990, 2
  %v995 = vrot.slane %v990, 3
  %v996 = vrot.slane %v990, 4
  %v997 = vrot.slane %v990, 5
  %v998 = vrot.slane %v990, 6
  %v1007 = vmul.f32 %v903, %v992
  %v1008 = vmul.f32 %v905, %v990
  %v1009 = vmul.f32 %v907, %v993
  %v1010 = vmul.f32 %v909, %v994
  %v1011 = vmul.f32 %v911, %v995
  %v1012 = vmul.f32 %v913, %v996
  %v1013 = vmul.f32 %v915, %v997
  %v1014 = vmul.f32 %v917, %v998
  %v1015 = vadd.f32 %v704, %v1007
  %v1016 = vadd.f32 %v707, %v1008
  %v1017 = vadd.f32 %v710, %v1009
  %v1018 = vadd.f32 %v713, %v1010
  %v1019 = vadd.f32 %v716, %v1011
  %v1020 = vadd.f32 %v719, %v1012
  %v1021 = vadd.f32 %v722, %v1013
  %v1022 = vadd.f32 %v725, %v1014
  %v1023 = vtanh.pop %v1015
  %v1024 = vtanh.pop %v1016
  %v1025 = vtanh.pop %v1017
  %v1026 = vtanh.pop %v1018
  %v1027 = vtanh.pop %v1019
  %v1028 = vtanh.pop %v1020
  %v1029 = vtanh.pop %v1021
  %v1030 = vtanh.pop %v1022
  %v1031 = vsub.f32 1.0, %v975
  %v1032 = vsub.f32 1.0, %v977
  %v1033 = vsub.f32 1.0, %v979
  %v1034 = vsub.f32 1.0, %v981
  %v1035 = vsub.f32 1.0, %v983
  %v1036 = vsub.f32 1.0, %v985
  %v1037 = vsub.f32 1.0, %v987
  %v1038 = vsub.f32 1.0, %v989
  %v1039 = vmul.f32 %v1031, %v1023
  %v1040 = vmul.f32 %v1032, %v1024
  %v1041 = vmul.f32 %v1033, %v1025
  %v1042 = vmul.f32 %v1034, %v1026
  %v1043 = vmul.f32 %v1035, %v1027
  %v1044 = vmul.f32 %v1036, %v1028
  %v1045 = vmul.f32 %v1037, %v1029
  %v1046 = vmul.f32 %v1038, %v1030
  %v1055 = vrot.slane %v619, 7
  %v1056 = vrot.slane %v620, 7
  %v1057 = vrot.slane %v621, 7
  %v1058 = vrot.slane %v622, 7
  %v1059 = vrot.slane %v623, 7
  %v1060 = vrot.slane %v624, 7
  %v1061 = vrot.slane %v625, 7
  %v1062 = vrot.slane %v626, 7
  %v1071 = vmul.f32 %v975, %v1055
  %v1072 = vmul.f32 %v977, %v1056
  %v1073 = vmul.f32 %v979, %v1057
  %v1074 = vmul.f32 %v981, %v1058
  %v1075 = vmul.f32 %v983, %v1059
  %v1076 = vmul.f32 %v985, %v1060
  %v1077 = vmul.f32 %v987, %v1061
  %v1078 = vmul.f32 %v989, %v1062
  %v1079 = vadd.f32 %v1039, %v1071
  %v1080 = vadd.f32 %v1040, %v1072
  %v1081 = vadd.f32 %v1041, %v1073
  %v1082 = vadd.f32 %v1042, %v1074
  %v1083 = vadd.f32 %v1043, %v1075
  %v1084 = vadd.f32 %v1044, %v1076
  %v1085 = vadd.f32 %v1045, %v1077
  %v1086 = vadd.f32 %v1046, %v1078
  %v1087 = vpack.c.bf16 %v1079, %v1079
  %v1088 = vpack.c.bf16 %v1080, %v1080
  %v1089 = vpack.c.bf16 %v1081, %v1081
  %v1090 = vpack.c.bf16 %v1082, %v1082
  %v1091 = vpack.c.bf16 %v1083, %v1083
  %v1092 = vpack.c.bf16 %v1084, %v1084
  %v1093 = vpack.c.bf16 %v1085, %v1085
  %v1094 = vpack.c.bf16 %v1086, %v1086
  %vm1095 = vsmask.f32 7938
  %vm1096 = vmand %vm635, %vm1095
  %v1097 = vld [vmem:[%s5] sm:$0x1]
  %v1098 = vsel %vm1096, %v1087, %v1097
  %1099 = vst [vmem:[%s5] sm:$0x1] %v1098
  %v1100 = vld [vmem:[%s5 + $0x4] sm:$0x1]
  %v1101 = vsel %vm1096, %v1088, %v1100
  %1102 = vst [vmem:[%s5 + $0x4] sm:$0x1] %v1101
  %v1103 = vld [vmem:[%s5 + $0x8] sm:$0x1]
  %v1104 = vsel %vm1096, %v1089, %v1103
  %1105 = vst [vmem:[%s5 + $0x8] sm:$0x1] %v1104
  %v1106 = vld [vmem:[%s5 + $0xc] sm:$0x1]
  %v1107 = vsel %vm1096, %v1090, %v1106
  %1108 = vst [vmem:[%s5 + $0xc] sm:$0x1] %v1107
  %v1109 = vld [vmem:[%s5 + $0x10] sm:$0x1]
  %v1110 = vsel %vm1096, %v1091, %v1109
  %1111 = vst [vmem:[%s5 + $0x10] sm:$0x1] %v1110
  %v1112 = vld [vmem:[%s5 + $0x14] sm:$0x1]
  %v1113 = vsel %vm1096, %v1092, %v1112
  %1114 = vst [vmem:[%s5 + $0x14] sm:$0x1] %v1113
  %v1115 = vld [vmem:[%s5 + $0x18] sm:$0x1]
  %v1116 = vsel %vm1096, %v1093, %v1115
  %1117 = vst [vmem:[%s5 + $0x18] sm:$0x1] %v1116
  %v1118 = vld [vmem:[%s5 + $0x1c] sm:$0x1]
  %v1119 = vsel %vm1096, %v1094, %v1118
  %1120 = vst [vmem:[%s5 + $0x1c] sm:$0x1] %v1119
  %v1121 = vld [vmem:[%s0] sm:$0x22]
  %v1122 = vld [vmem:[%s0 + $0x8] sm:$0x2]
  %v1123 = vld [vmem:[%s0 + $0xc] sm:$0x22]
  %v1124 = vld [vmem:[%s0 + $0x14] sm:$0x2]
  %v1125 = vld [vmem:[%s0 + $0x18] sm:$0x22]
  %v1126 = vld [vmem:[%s0 + $0x20] sm:$0x2]
  %v1127 = vld [vmem:[%s0 + $0x24] sm:$0x22]
  %v1128 = vld [vmem:[%s0 + $0x2c] sm:$0x2]
  %v1129 = vld [vmem:[%s0 + $0x30] sm:$0x22]
  %v1130 = vld [vmem:[%s0 + $0x38] sm:$0x2]
  %v1131 = vld [vmem:[%s0 + $0x3c] sm:$0x22]
  %v1132 = vld [vmem:[%s0 + $0x44] sm:$0x2]
  %v1133 = vld [vmem:[%s0 + $0x48] sm:$0x22]
  %v1134 = vld [vmem:[%s0 + $0x50] sm:$0x2]
  %v1135 = vld [vmem:[%s0 + $0x54] sm:$0x22]
  %v1136 = vld [vmem:[%s0 + $0x5c] sm:$0x2]
  %v1137 = vunpack.c.l.bf16 %v1121
  %v1138 = vunpack.c.h.bf16 %v1121
  %v1139 = vunpack.c.l.bf16 %v1122
  %v1140 = vunpack.c.l.bf16 %v1123
  %v1141 = vunpack.c.h.bf16 %v1123
  %v1142 = vunpack.c.l.bf16 %v1124
  %v1143 = vunpack.c.l.bf16 %v1125
  %v1144 = vunpack.c.h.bf16 %v1125
  %v1145 = vunpack.c.l.bf16 %v1126
  %v1146 = vunpack.c.l.bf16 %v1127
  %v1147 = vunpack.c.h.bf16 %v1127
  %v1148 = vunpack.c.l.bf16 %v1128
  %v1149 = vunpack.c.l.bf16 %v1129
  %v1150 = vunpack.c.h.bf16 %v1129
  %v1151 = vunpack.c.l.bf16 %v1130
  %v1152 = vunpack.c.l.bf16 %v1131
  %v1153 = vunpack.c.h.bf16 %v1131
  %v1154 = vunpack.c.l.bf16 %v1132
  %v1155 = vunpack.c.l.bf16 %v1133
  %v1156 = vunpack.c.h.bf16 %v1133
  %v1157 = vunpack.c.l.bf16 %v1134
  %v1158 = vunpack.c.l.bf16 %v1135
  %v1159 = vunpack.c.h.bf16 %v1135
  %v1160 = vunpack.c.l.bf16 %v1136
  %v1161 = vadd.f32 %v1137, %v130
  %v1162 = vadd.f32 %v1138, %v131
  %v1163 = vadd.f32 %v1139, %v132
  %v1164 = vadd.f32 %v1140, %v133
  %v1165 = vadd.f32 %v1141, %v134
  %v1166 = vadd.f32 %v1142, %v135
  %v1167 = vadd.f32 %v1143, %v68
  %v1168 = vadd.f32 %v1144, %v69
  %v1169 = vadd.f32 %v1145, %v70
  %v1170 = vadd.f32 %v1146, %v115
  %v1171 = vadd.f32 %v1147, %v116
  %v1172 = vadd.f32 %v1148, %v117
  %v1173 = vadd.f32 %v1149, %v118
  %v1174 = vadd.f32 %v1150, %v119
  %v1175 = vadd.f32 %v1151, %v120
  %v1176 = vadd.f32 %v1152, %v121
  %v1177 = vadd.f32 %v1153, %v122
  %v1178 = vadd.f32 %v1154, %v123
  %v1179 = vadd.f32 %v1155, %v124
  %v1180 = vadd.f32 %v1156, %v125
  %v1181 = vadd.f32 %v1157, %v126
  %v1182 = vadd.f32 %v1158, %v127
  %v1183 = vadd.f32 %v1159, %v128
  %v1184 = vadd.f32 %v1160, %v129
  %v1193 = vunpack.c.l.b16 %v1087
  %v1194 = vunpack.c.l.b16 %v1088
  %v1195 = vunpack.c.l.b16 %v1089
  %v1196 = vunpack.c.l.b16 %v1090
  %v1197 = vunpack.c.l.b16 %v1091
  %v1198 = vunpack.c.l.b16 %v1092
  %v1199 = vunpack.c.l.b16 %v1093
  %v1200 = vunpack.c.l.b16 %v1094
  %v1201 = vrot.slane %v1193, 1
  %v1202 = vsel %vm743, %v1194, %v1201
  %v1203 = vrot.slane %v1195, 7
  %v1204 = vsel %vm746, %v1203, %v1202
  %v1205 = vrot.slane %v1196, 6
  %v1206 = vsel %vm749, %v1205, %v1204
  %v1207 = vrot.slane %v1197, 5
  %v1208 = vsel %vm752, %v1207, %v1206
  %v1209 = vrot.slane %v1198, 4
  %v1210 = vsel %vm755, %v1209, %v1208
  %v1211 = vrot.slane %v1199, 3
  %v1212 = vsel %vm758, %v1211, %v1210
  %v1213 = vrot.slane %v1200, 2
  %v1214 = vsel %vm761, %v1213, %v1212
  %v1215 = vpack.c.b16 %v1214, %v1214
  %1217 = vmatprep.subr.bf16.mxu0 %v266
  %1218 = vmatpush1.bf16.msra.mxu0 %v265
  %1219 = vmatprep.subr.bf16.mxu0 %v269
  %1220 = vmatpush1.bf16.msra.mxu0 %v268
  %1221 = vmatprep.subr.bf16.mxu0 %v272
  %1222 = vmatpush1.bf16.msra.mxu0 %v271
  %1223 = vmatprep.subr.bf16.mxu0 %v275
  %1224 = vmatpush1.bf16.msra.mxu0 %v274
  %1225 = vmatprep.subr.bf16.mxu0 %v278
  %1226 = vmatpush1.bf16.msra.mxu0 %v277
  %1227 = vmatprep.subr.bf16.mxu0 %v281
  %1228 = vmatpush1.bf16.msra.mxu0 %v280
  %1229 = vmatprep.subr.bf16.mxu0 %v284
  %1230 = vmatpush1.bf16.msra.mxu0 %v283
  %1231 = vmatprep.subr.bf16.mxu0 %v287
  %1232 = vmatpush1.bf16.msra.mxu0 %v286
  %1233 = vmatprep.subr.bf16.mxu0 0
  %1234 = vmatpush1.bf16.msra.mxu0 0
  %1235 = vmatprep.subr.bf16.mxu0 0
  %1236 = vmatpush1.bf16.msra.mxu0 0
  %1237 = vmatprep.subr.bf16.mxu0 0
  %1238 = vmatpush1.bf16.msra.mxu0 0
  %1239 = vmatprep.subr.bf16.mxu0 0
  %1240 = vmatpush1.bf16.msra.mxu0 0
  %1241 = vmatprep.subr.bf16.mxu0 0
  %1242 = vmatpush1.bf16.msra.mxu0 0
  %1243 = vmatprep.subr.bf16.mxu0 0
  %1244 = vmatpush1.bf16.msra.mxu0 0
  %1245 = vmatprep.subr.bf16.mxu0 0
  %1246 = vmatpush1.bf16.msra.mxu0 0
  %1247 = vmatprep.subr.bf16.mxu0 0
  %1248 = vmatpush1.bf16.msra.mxu0 0
  %1249 = vmatprep.mubr.bf16.mxu0 0
  %1250 = vmatmul.mubr.bf16.gmra.mrb[0].mxu0 %v1215
  %v1251 = vpop.f32.mrb[0].mxu0
  %v1252 = vadd.f32 0.0, %v1251
  %v1253 = vpop.f32.mrb[0].mxu0
  %v1254 = vadd.f32 0.0, %v1253
  %v1255 = vpop.f32.mrb[0].mxu0
  %v1256 = vpop.f32.mrb[0].mxu0
  %1257 = vdwg.mxu0
  %1258 = vmatprep.subr.bf16.mxu0 0
  %1259 = vmatpush1.bf16.msra.mxu0 %v267
  %1260 = vmatprep.subr.bf16.mxu0 0
  %1261 = vmatpush1.bf16.msra.mxu0 %v270
  %1262 = vmatprep.subr.bf16.mxu0 0
  %1263 = vmatpush1.bf16.msra.mxu0 %v273
  %1264 = vmatprep.subr.bf16.mxu0 0
  %1265 = vmatpush1.bf16.msra.mxu0 %v276
  %1266 = vmatprep.subr.bf16.mxu0 0
  %1267 = vmatpush1.bf16.msra.mxu0 %v279
  %1268 = vmatprep.subr.bf16.mxu0 0
  %1269 = vmatpush1.bf16.msra.mxu0 %v282
  %1270 = vmatprep.subr.bf16.mxu0 0
  %1271 = vmatpush1.bf16.msra.mxu0 %v285
  %1272 = vmatprep.subr.bf16.mxu0 0
  %1273 = vmatpush1.bf16.msra.mxu0 %v288
  %1274 = vmatprep.subr.bf16.mxu0 0
  %1275 = vmatpush1.bf16.msra.mxu0 0
  %1276 = vmatprep.subr.bf16.mxu0 0
  %1277 = vmatpush1.bf16.msra.mxu0 0
  %1278 = vmatprep.subr.bf16.mxu0 0
  %1279 = vmatpush1.bf16.msra.mxu0 0
  %1280 = vmatprep.subr.bf16.mxu0 0
  %1281 = vmatpush1.bf16.msra.mxu0 0
  %1282 = vmatprep.subr.bf16.mxu0 0
  %1283 = vmatpush1.bf16.msra.mxu0 0
  %1284 = vmatprep.subr.bf16.mxu0 0
  %1285 = vmatpush1.bf16.msra.mxu0 0
  %1286 = vmatprep.subr.bf16.mxu0 0
  %1287 = vmatpush1.bf16.msra.mxu0 0
  %1288 = vmatprep.subr.bf16.mxu0 0
  %1289 = vmatpush1.bf16.msra.mxu0 0
  %1290 = vmatprep.mubr.bf16.mxu0 0
  %1291 = vmatmul.mubr.bf16.gmra.mrb[0].mxu0 %v1215
  %v1292 = vpop.f32.mrb[0].mxu0
  %v1293 = vadd.f32 0.0, %v1292
  %v1294 = vpop.f32.mrb[0].mxu0
  %v1295 = vpop.f32.mrb[0].mxu0
  %v1296 = vpop.f32.mrb[0].mxu0
  %1297 = vdwg.mxu0
  %v1299 = vrot.slane %v1252, 6
  %v1300 = vrot.slane %v1252, 7
  %v1301 = vrot.slane %v1252, 1
  %v1302 = vrot.slane %v1252, 2
  %v1303 = vrot.slane %v1252, 3
  %v1304 = vrot.slane %v1252, 4
  %v1305 = vrot.slane %v1252, 5
  %v1314 = vadd.f32 %v1161, %v1299
  %v1315 = vadd.f32 %v1164, %v1300
  %v1316 = vadd.f32 %v1167, %v1252
  %v1317 = vadd.f32 %v1170, %v1301
  %v1318 = vadd.f32 %v1173, %v1302
  %v1319 = vadd.f32 %v1176, %v1303
  %v1320 = vadd.f32 %v1179, %v1304
  %v1321 = vadd.f32 %v1182, %v1305
  %v1322 = vxor.u32 %v1314, 2147483648
  %v1323 = vxor.u32 %v1315, 2147483648
  %v1324 = vxor.u32 %v1316, 2147483648
  %v1325 = vxor.u32 %v1317, 2147483648
  %v1326 = vxor.u32 %v1318, 2147483648
  %v1327 = vxor.u32 %v1319, 2147483648
  %v1328 = vxor.u32 %v1320, 2147483648
  %v1329 = vxor.u32 %v1321, 2147483648
  %v1330 = vmul.f32 %v1322, 1.442695
  %v1331 = vpow.pop %v1330
  %v1332 = vmul.f32 %v1323, 1.442695
  %v1333 = vpow.pop %v1332
  %v1334 = vmul.f32 %v1324, 1.442695
  %v1335 = vpow.pop %v1334
  %v1336 = vmul.f32 %v1325, 1.442695
  %v1337 = vpow.pop %v1336
  %v1338 = vmul.f32 %v1326, 1.442695
  %v1339 = vpow.pop %v1338
  %v1340 = vmul.f32 %v1327, 1.442695
  %v1341 = vpow.pop %v1340
  %v1342 = vmul.f32 %v1328, 1.442695
  %v1343 = vpow.pop %v1342
  %v1344 = vmul.f32 %v1329, 1.442695
  %v1345 = vpow.pop %v1344
  %v1346 = vadd.f32 %v1331, 1.0
  %v1347 = vadd.f32 %v1333, 1.0
  %v1348 = vadd.f32 %v1335, 1.0
  %v1349 = vadd.f32 %v1337, 1.0
  %v1350 = vadd.f32 %v1339, 1.0
  %v1351 = vadd.f32 %v1341, 1.0
  %v1352 = vadd.f32 %v1343, 1.0
  %v1353 = vadd.f32 %v1345, 1.0
  %v1354 = vrcp.pop %v1346
  %v1355 = vmul.f32 1.0, %v1354
  %v1356 = vrcp.pop %v1347
  %v1357 = vmul.f32 1.0, %v1356
  %v1358 = vrcp.pop %v1348
  %v1359 = vmul.f32 1.0, %v1358
  %v1360 = vrcp.pop %v1349
  %v1361 = vmul.f32 1.0, %v1360
  %v1362 = vrcp.pop %v1350
  %v1363 = vmul.f32 1.0, %v1362
  %v1364 = vrcp.pop %v1351
  %v1365 = vmul.f32 1.0, %v1364
  %v1366 = vrcp.pop %v1352
  %v1367 = vmul.f32 1.0, %v1366
  %v1368 = vrcp.pop %v1353
  %v1369 = vmul.f32 1.0, %v1368
  %v1371 = vrot.slane %v1254, 6
  %v1372 = vrot.slane %v1254, 7
  %v1373 = vrot.slane %v1254, 1
  %v1374 = vrot.slane %v1254, 2
  %v1375 = vrot.slane %v1254, 3
  %v1376 = vrot.slane %v1254, 4
  %v1377 = vrot.slane %v1254, 5
  %v1386 = vadd.f32 %v1162, %v1371
  %v1387 = vadd.f32 %v1165, %v1372
  %v1388 = vadd.f32 %v1168, %v1254
  %v1389 = vadd.f32 %v1171, %v1373
  %v1390 = vadd.f32 %v1174, %v1374
  %v1391 = vadd.f32 %v1177, %v1375
  %v1392 = vadd.f32 %v1180, %v1376
  %v1393 = vadd.f32 %v1183, %v1377
  %v1394 = vxor.u32 %v1386, 2147483648
  %v1395 = vxor.u32 %v1387, 2147483648
  %v1396 = vxor.u32 %v1388, 2147483648
  %v1397 = vxor.u32 %v1389, 2147483648
  %v1398 = vxor.u32 %v1390, 2147483648
  %v1399 = vxor.u32 %v1391, 2147483648
  %v1400 = vxor.u32 %v1392, 2147483648
  %v1401 = vxor.u32 %v1393, 2147483648
  %v1402 = vmul.f32 %v1394, 1.442695
  %v1403 = vpow.pop %v1402
  %v1404 = vmul.f32 %v1395, 1.442695
  %v1405 = vpow.pop %v1404
  %v1406 = vmul.f32 %v1396, 1.442695
  %v1407 = vpow.pop %v1406
  %v1408 = vmul.f32 %v1397, 1.442695
  %v1409 = vpow.pop %v1408
  %v1410 = vmul.f32 %v1398, 1.442695
  %v1411 = vpow.pop %v1410
  %v1412 = vmul.f32 %v1399, 1.442695
  %v1413 = vpow.pop %v1412
  %v1414 = vmul.f32 %v1400, 1.442695
  %v1415 = vpow.pop %v1414
  %v1416 = vmul.f32 %v1401, 1.442695
  %v1417 = vpow.pop %v1416
  %v1418 = vadd.f32 %v1403, 1.0
  %v1419 = vadd.f32 %v1405, 1.0
  %v1420 = vadd.f32 %v1407, 1.0
  %v1421 = vadd.f32 %v1409, 1.0
  %v1422 = vadd.f32 %v1411, 1.0
  %v1423 = vadd.f32 %v1413, 1.0
  %v1424 = vadd.f32 %v1415, 1.0
  %v1425 = vadd.f32 %v1417, 1.0
  %v1426 = vrcp.pop %v1418
  %v1427 = vmul.f32 1.0, %v1426
  %v1428 = vrcp.pop %v1419
  %v1429 = vmul.f32 1.0, %v1428
  %v1430 = vrcp.pop %v1420
  %v1431 = vmul.f32 1.0, %v1430
  %v1432 = vrcp.pop %v1421
  %v1433 = vmul.f32 1.0, %v1432
  %v1434 = vrcp.pop %v1422
  %v1435 = vmul.f32 1.0, %v1434
  %v1436 = vrcp.pop %v1423
  %v1437 = vmul.f32 1.0, %v1436
  %v1438 = vrcp.pop %v1424
  %v1439 = vmul.f32 1.0, %v1438
  %v1440 = vrcp.pop %v1425
  %v1441 = vmul.f32 1.0, %v1440
  %v1442 = vadd.f32 %v1293, %v66
  %v1444 = vrot.slane %v1442, 6
  %v1445 = vrot.slane %v1442, 7
  %v1446 = vrot.slane %v1442, 1
  %v1447 = vrot.slane %v1442, 2
  %v1448 = vrot.slane %v1442, 3
  %v1449 = vrot.slane %v1442, 4
  %v1450 = vrot.slane %v1442, 5
  %v1459 = vmul.f32 %v1355, %v1444
  %v1460 = vmul.f32 %v1357, %v1445
  %v1461 = vmul.f32 %v1359, %v1442
  %v1462 = vmul.f32 %v1361, %v1446
  %v1463 = vmul.f32 %v1363, %v1447
  %v1464 = vmul.f32 %v1365, %v1448
  %v1465 = vmul.f32 %v1367, %v1449
  %v1466 = vmul.f32 %v1369, %v1450
  %v1467 = vadd.f32 %v1163, %v1459
  %v1468 = vadd.f32 %v1166, %v1460
  %v1469 = vadd.f32 %v1169, %v1461
  %v1470 = vadd.f32 %v1172, %v1462
  %v1471 = vadd.f32 %v1175, %v1463
  %v1472 = vadd.f32 %v1178, %v1464
  %v1473 = vadd.f32 %v1181, %v1465
  %v1474 = vadd.f32 %v1184, %v1466
  %v1475 = vtanh.pop %v1467
  %v1476 = vtanh.pop %v1468
  %v1477 = vtanh.pop %v1469
  %v1478 = vtanh.pop %v1470
  %v1479 = vtanh.pop %v1471
  %v1480 = vtanh.pop %v1472
  %v1481 = vtanh.pop %v1473
  %v1482 = vtanh.pop %v1474
  %v1483 = vsub.f32 1.0, %v1427
  %v1484 = vsub.f32 1.0, %v1429
  %v1485 = vsub.f32 1.0, %v1431
  %v1486 = vsub.f32 1.0, %v1433
  %v1487 = vsub.f32 1.0, %v1435
  %v1488 = vsub.f32 1.0, %v1437
  %v1489 = vsub.f32 1.0, %v1439
  %v1490 = vsub.f32 1.0, %v1441
  %v1491 = vmul.f32 %v1483, %v1475
  %v1492 = vmul.f32 %v1484, %v1476
  %v1493 = vmul.f32 %v1485, %v1477
  %v1494 = vmul.f32 %v1486, %v1478
  %v1495 = vmul.f32 %v1487, %v1479
  %v1496 = vmul.f32 %v1488, %v1480
  %v1497 = vmul.f32 %v1489, %v1481
  %v1498 = vmul.f32 %v1490, %v1482
  %v1507 = vrot.slane %v1079, 7
  %v1508 = vrot.slane %v1080, 7
  %v1509 = vrot.slane %v1081, 7
  %v1510 = vrot.slane %v1082, 7
  %v1511 = vrot.slane %v1083, 7
  %v1512 = vrot.slane %v1084, 7
  %v1513 = vrot.slane %v1085, 7
  %v1514 = vrot.slane %v1086, 7
  %v1523 = vmul.f32 %v1427, %v1507
  %v1524 = vmul.f32 %v1429, %v1508
  %v1525 = vmul.f32 %v1431, %v1509
  %v1526 = vmul.f32 %v1433, %v1510
  %v1527 = vmul.f32 %v1435, %v1511
  %v1528 = vmul.f32 %v1437, %v1512
  %v1529 = vmul.f32 %v1439, %v1513
  %v1530 = vmul.f32 %v1441, %v1514
  %v1531 = vadd.f32 %v1491, %v1523
  %v1532 = vadd.f32 %v1492, %v1524
  %v1533 = vadd.f32 %v1493, %v1525
  %v1534 = vadd.f32 %v1494, %v1526
  %v1535 = vadd.f32 %v1495, %v1527
  %v1536 = vadd.f32 %v1496, %v1528
  %v1537 = vadd.f32 %v1497, %v1529
  %v1538 = vadd.f32 %v1498, %v1530
  %v1539 = vpack.c.bf16 %v1531, %v1531
  %v1540 = vpack.c.bf16 %v1532, %v1532
  %v1541 = vpack.c.bf16 %v1533, %v1533
  %v1542 = vpack.c.bf16 %v1534, %v1534
  %v1543 = vpack.c.bf16 %v1535, %v1535
  %v1544 = vpack.c.bf16 %v1536, %v1536
  %v1545 = vpack.c.bf16 %v1537, %v1537
  %v1546 = vpack.c.bf16 %v1538, %v1538
  %vm1547 = vcmask 1041409
  %vm1548 = vsmask.f32 1280
  %vm1549 = vmand %vm1547, %vm1548
  %v1550 = vld [vmem:[%s5] sm:$0x2]
  %v1551 = vsel %vm1549, %v1539, %v1550
  %1552 = vst [vmem:[%s5] sm:$0x2] %v1551
  %v1553 = vld [vmem:[%s5 + $0x4] sm:$0x2]
  %v1554 = vsel %vm1549, %v1540, %v1553
  %1555 = vst [vmem:[%s5 + $0x4] sm:$0x2] %v1554
  %v1556 = vld [vmem:[%s5 + $0x8] sm:$0x2]
  %v1557 = vsel %vm1549, %v1541, %v1556
  %1558 = vst [vmem:[%s5 + $0x8] sm:$0x2] %v1557
  %v1559 = vld [vmem:[%s5 + $0xc] sm:$0x2]
  %v1560 = vsel %vm1549, %v1542, %v1559
  %1561 = vst [vmem:[%s5 + $0xc] sm:$0x2] %v1560
  %v1562 = vld [vmem:[%s5 + $0x10] sm:$0x2]
  %v1563 = vsel %vm1549, %v1543, %v1562
  %1564 = vst [vmem:[%s5 + $0x10] sm:$0x2] %v1563
  %v1565 = vld [vmem:[%s5 + $0x14] sm:$0x2]
  %v1566 = vsel %vm1549, %v1544, %v1565
  %1567 = vst [vmem:[%s5 + $0x14] sm:$0x2] %v1566
  %v1568 = vld [vmem:[%s5 + $0x18] sm:$0x2]
  %v1569 = vsel %vm1549, %v1545, %v1568
  %1570 = vst [vmem:[%s5 + $0x18] sm:$0x2] %v1569
  %v1571 = vld [vmem:[%s5 + $0x1c] sm:$0x2]
  %v1572 = vsel %vm1549, %v1546, %v1571
  %1573 = vst [vmem:[%s5 + $0x1c] sm:$0x2] %v1572
  %v1574 = vld [vmem:[%s0] sm:$0x22]
  %v1575 = vld [vmem:[%s0 + $0x8] sm:$0x2]
  %v1576 = vld [vmem:[%s0 + $0xc] sm:$0x22]
  %v1577 = vld [vmem:[%s0 + $0x14] sm:$0x2]
  %v1578 = vld [vmem:[%s0 + $0x18] sm:$0x22]
  %v1579 = vld [vmem:[%s0 + $0x20] sm:$0x2]
  %v1580 = vld [vmem:[%s0 + $0x24] sm:$0x22]
  %v1581 = vld [vmem:[%s0 + $0x2c] sm:$0x2]
  %v1582 = vld [vmem:[%s0 + $0x30] sm:$0x22]
  %v1583 = vld [vmem:[%s0 + $0x38] sm:$0x2]
  %v1584 = vld [vmem:[%s0 + $0x3c] sm:$0x22]
  %v1585 = vld [vmem:[%s0 + $0x44] sm:$0x2]
  %v1586 = vld [vmem:[%s0 + $0x48] sm:$0x22]
  %v1587 = vld [vmem:[%s0 + $0x50] sm:$0x2]
  %v1588 = vld [vmem:[%s0 + $0x54] sm:$0x22]
  %v1589 = vld [vmem:[%s0 + $0x5c] sm:$0x2]
  %v1590 = vunpack.c.l.bf16 %v1574
  %v1591 = vunpack.c.h.bf16 %v1574
  %v1592 = vunpack.c.l.bf16 %v1575
  %v1593 = vunpack.c.l.bf16 %v1576
  %v1594 = vunpack.c.h.bf16 %v1576
  %v1595 = vunpack.c.l.bf16 %v1577
  %v1596 = vunpack.c.l.bf16 %v1578
  %v1597 = vunpack.c.h.bf16 %v1578
  %v1598 = vunpack.c.l.bf16 %v1579
  %v1599 = vunpack.c.l.bf16 %v1580
  %v1600 = vunpack.c.h.bf16 %v1580
  %v1601 = vunpack.c.l.bf16 %v1581
  %v1602 = vunpack.c.l.bf16 %v1582
  %v1603 = vunpack.c.h.bf16 %v1582
  %v1604 = vunpack.c.l.bf16 %v1583
  %v1605 = vunpack.c.l.bf16 %v1584
  %v1606 = vunpack.c.h.bf16 %v1584
  %v1607 = vunpack.c.l.bf16 %v1585
  %v1608 = vunpack.c.l.bf16 %v1586
  %v1609 = vunpack.c.h.bf16 %v1586
  %v1610 = vunpack.c.l.bf16 %v1587
  %v1611 = vunpack.c.l.bf16 %v1588
  %v1612 = vunpack.c.h.bf16 %v1588
  %v1613 = vunpack.c.l.bf16 %v1589
  %v1614 = vadd.f32 %v1590, %v127
  %v1615 = vadd.f32 %v1591, %v128
  %v1616 = vadd.f32 %v1592, %v129
  %v1617 = vadd.f32 %v1593, %v130
  %v1618 = vadd.f32 %v1594, %v131
  %v1619 = vadd.f32 %v1595, %v132
  %v1620 = vadd.f32 %v1596, %v133
  %v1621 = vadd.f32 %v1597, %v134
  %v1622 = vadd.f32 %v1598, %v135
  %v1623 = vadd.f32 %v1599, %v68
  %v1624 = vadd.f32 %v1600, %v69
  %v1625 = vadd.f32 %v1601, %v70
  %v1626 = vadd.f32 %v1602, %v115
  %v1627 = vadd.f32 %v1603, %v116
  %v1628 = vadd.f32 %v1604, %v117
  %v1629 = vadd.f32 %v1605, %v118
  %v1630 = vadd.f32 %v1606, %v119
  %v1631 = vadd.f32 %v1607, %v120
  %v1632 = vadd.f32 %v1608, %v121
  %v1633 = vadd.f32 %v1609, %v122
  %v1634 = vadd.f32 %v1610, %v123
  %v1635 = vadd.f32 %v1611, %v124
  %v1636 = vadd.f32 %v1612, %v125
  %v1637 = vadd.f32 %v1613, %v126
  %v1646 = vunpack.c.l.b16 %v1539
  %v1647 = vunpack.c.l.b16 %v1540
  %v1648 = vunpack.c.l.b16 %v1541
  %v1649 = vunpack.c.l.b16 %v1542
  %v1650 = vunpack.c.l.b16 %v1543
  %v1651 = vunpack.c.l.b16 %v1544
  %v1652 = vunpack.c.l.b16 %v1545
  %v1653 = vunpack.c.l.b16 %v1546
  %v1654 = vrot.slane %v1646, 2
  %v1655 = vrot.slane %v1647, 1
  %v1656 = vsel %vm743, %v1655, %v1654
  %v1657 = vsel %vm746, %v1648, %v1656
  %v1658 = vrot.slane %v1649, 7
  %v1659 = vsel %vm749, %v1658, %v1657
  %v1660 = vrot.slane %v1650, 6
  %v1661 = vsel %vm752, %v1660, %v1659
  %v1662 = vrot.slane %v1651, 5
  %v1663 = vsel %vm755, %v1662, %v1661
  %v1664 = vrot.slane %v1652, 4
  %v1665 = vsel %vm758, %v1664, %v1663
  %v1666 = vrot.slane %v1653, 3
  %v1667 = vsel %vm761, %v1666, %v1665
  %v1668 = vpack.c.b16 %v1667, %v1667
  %1670 = vmatprep.subr.bf16.mxu0 %v266
  %1671 = vmatpush1.bf16.msra.mxu0 %v265
  %1672 = vmatprep.subr.bf16.mxu0 %v269
  %1673 = vmatpush1.bf16.msra.mxu0 %v268
  %1674 = vmatprep.subr.bf16.mxu0 %v272
  %1675 = vmatpush1.bf16.msra.mxu0 %v271
  %1676 = vmatprep.subr.bf16.mxu0 %v275
  %1677 = vmatpush1.bf16.msra.mxu0 %v274
  %1678 = vmatprep.subr.bf16.mxu0 %v278
  %1679 = vmatpush1.bf16.msra.mxu0 %v277
  %1680 = vmatprep.subr.bf16.mxu0 %v281
  %1681 = vmatpush1.bf16.msra.mxu0 %v280
  %1682 = vmatprep.subr.bf16.mxu0 %v284
  %1683 = vmatpush1.bf16.msra.mxu0 %v283
  %1684 = vmatprep.subr.bf16.mxu0 %v287
  %1685 = vmatpush1.bf16.msra.mxu0 %v286
  %1686 = vmatprep.subr.bf16.mxu0 0
  %1687 = vmatpush1.bf16.msra.mxu0 0
  %1688 = vmatprep.subr.bf16.mxu0 0
  %1689 = vmatpush1.bf16.msra.mxu0 0
  %1690 = vmatprep.subr.bf16.mxu0 0
  %1691 = vmatpush1.bf16.msra.mxu0 0
  %1692 = vmatprep.subr.bf16.mxu0 0
  %1693 = vmatpush1.bf16.msra.mxu0 0
  %1694 = vmatprep.subr.bf16.mxu0 0
  %1695 = vmatpush1.bf16.msra.mxu0 0
  %1696 = vmatprep.subr.bf16.mxu0 0
  %1697 = vmatpush1.bf16.msra.mxu0 0
  %1698 = vmatprep.subr.bf16.mxu0 0
  %1699 = vmatpush1.bf16.msra.mxu0 0
  %1700 = vmatprep.subr.bf16.mxu0 0
  %1701 = vmatpush1.bf16.msra.mxu0 0
  %1702 = vmatprep.mubr.bf16.mxu0 0
  %1703 = vmatmul.mubr.bf16.gmra.mrb[0].mxu0 %v1668
  %v1704 = vpop.f32.mrb[0].mxu0
  %v1705 = vadd.f32 0.0, %v1704
  %v1706 = vpop.f32.mrb[0].mxu0
  %v1707 = vadd.f32 0.0, %v1706
  %v1708 = vpop.f32.mrb[0].mxu0
  %v1709 = vpop.f32.mrb[0].mxu0
  %1710 = vdwg.mxu0
  %1711 = vmatprep.subr.bf16.mxu0 0
  %1712 = vmatpush1.bf16.msra.mxu0 %v267
  %1713 = vmatprep.subr.bf16.mxu0 0
  %1714 = vmatpush1.bf16.msra.mxu0 %v270
  %1715 = vmatprep.subr.bf16.mxu0 0
  %1716 = vmatpush1.bf16.msra.mxu0 %v273
  %1717 = vmatprep.subr.bf16.mxu0 0
  %1718 = vmatpush1.bf16.msra.mxu0 %v276
  %1719 = vmatprep.subr.bf16.mxu0 0
  %1720 = vmatpush1.bf16.msra.mxu0 %v279
  %1721 = vmatprep.subr.bf16.mxu0 0
  %1722 = vmatpush1.bf16.msra.mxu0 %v282
  %1723 = vmatprep.subr.bf16.mxu0 0
  %1724 = vmatpush1.bf16.msra.mxu0 %v285
  %1725 = vmatprep.subr.bf16.mxu0 0
  %1726 = vmatpush1.bf16.msra.mxu0 %v288
  %1727 = vmatprep.subr.bf16.mxu0 0
  %1728 = vmatpush1.bf16.msra.mxu0 0
  %1729 = vmatprep.subr.bf16.mxu0 0
  %1730 = vmatpush1.bf16.msra.mxu0 0
  %1731 = vmatprep.subr.bf16.mxu0 0
  %1732 = vmatpush1.bf16.msra.mxu0 0
  %1733 = vmatprep.subr.bf16.mxu0 0
  %1734 = vmatpush1.bf16.msra.mxu0 0
  %1735 = vmatprep.subr.bf16.mxu0 0
  %1736 = vmatpush1.bf16.msra.mxu0 0
  %1737 = vmatprep.subr.bf16.mxu0 0
  %1738 = vmatpush1.bf16.msra.mxu0 0
  %1739 = vmatprep.subr.bf16.mxu0 0
  %1740 = vmatpush1.bf16.msra.mxu0 0
  %1741 = vmatprep.subr.bf16.mxu0 0
  %1742 = vmatpush1.bf16.msra.mxu0 0
  %1743 = vmatprep.mubr.bf16.mxu0 0
  %1744 = vmatmul.mubr.bf16.gmra.mrb[0].mxu0 %v1668
  %v1745 = vpop.f32.mrb[0].mxu0
  %v1746 = vadd.f32 0.0, %v1745
  %v1747 = vpop.f32.mrb[0].mxu0
  %v1748 = vpop.f32.mrb[0].mxu0
  %v1749 = vpop.f32.mrb[0].mxu0
  %1750 = vdwg.mxu0
  %v1752 = vrot.slane %v1705, 5
  %v1753 = vrot.slane %v1705, 6
  %v1754 = vrot.slane %v1705, 7
  %v1755 = vrot.slane %v1705, 1
  %v1756 = vrot.slane %v1705, 2
  %v1757 = vrot.slane %v1705, 3
  %v1758 = vrot.slane %v1705, 4
  %v1767 = vadd.f32 %v1614, %v1752
  %v1768 = vadd.f32 %v1617, %v1753
  %v1769 = vadd.f32 %v1620, %v1754
  %v1770 = vadd.f32 %v1623, %v1705
  %v1771 = vadd.f32 %v1626, %v1755
  %v1772 = vadd.f32 %v1629, %v1756
  %v1773 = vadd.f32 %v1632, %v1757
  %v1774 = vadd.f32 %v1635, %v1758
  %v1775 = vxor.u32 %v1767, 2147483648
  %v1776 = vxor.u32 %v1768, 2147483648
  %v1777 = vxor.u32 %v1769, 2147483648
  %v1778 = vxor.u32 %v1770, 2147483648
  %v1779 = vxor.u32 %v1771, 2147483648
  %v1780 = vxor.u32 %v1772, 2147483648
  %v1781 = vxor.u32 %v1773, 2147483648
  %v1782 = vxor.u32 %v1774, 2147483648
  %v1783 = vmul.f32 %v1775, 1.442695
  %v1784 = vpow.pop %v1783
  %v1785 = vmul.f32 %v1776, 1.442695
  %v1786 = vpow.pop %v1785
  %v1787 = vmul.f32 %v1777, 1.442695
  %v1788 = vpow.pop %v1787
  %v1789 = vmul.f32 %v1778, 1.442695
  %v1790 = vpow.pop %v1789
  %v1791 = vmul.f32 %v1779, 1.442695
  %v1792 = vpow.pop %v1791
  %v1793 = vmul.f32 %v1780, 1.442695
  %v1794 = vpow.pop %v1793
  %v1795 = vmul.f32 %v1781, 1.442695
  %v1796 = vpow.pop %v1795
  %v1797 = vmul.f32 %v1782, 1.442695
  %v1798 = vpow.pop %v1797
  %v1799 = vadd.f32 %v1784, 1.0
  %v1800 = vadd.f32 %v1786, 1.0
  %v1801 = vadd.f32 %v1788, 1.0
  %v1802 = vadd.f32 %v1790, 1.0
  %v1803 = vadd.f32 %v1792, 1.0
  %v1804 = vadd.f32 %v1794, 1.0
  %v1805 = vadd.f32 %v1796, 1.0
  %v1806 = vadd.f32 %v1798, 1.0
  %v1807 = vrcp.pop %v1799
  %v1808 = vmul.f32 1.0, %v1807
  %v1809 = vrcp.pop %v1800
  %v1810 = vmul.f32 1.0, %v1809
  %v1811 = vrcp.pop %v1801
  %v1812 = vmul.f32 1.0, %v1811
  %v1813 = vrcp.pop %v1802
  %v1814 = vmul.f32 1.0, %v1813
  %v1815 = vrcp.pop %v1803
  %v1816 = vmul.f32 1.0, %v1815
  %v1817 = vrcp.pop %v1804
  %v1818 = vmul.f32 1.0, %v1817
  %v1819 = vrcp.pop %v1805
  %v1820 = vmul.f32 1.0, %v1819
  %v1821 = vrcp.pop %v1806
  %v1822 = vmul.f32 1.0, %v1821
  %v1824 = vrot.slane %v1707, 5
  %v1825 = vrot.slane %v1707, 6
  %v1826 = vrot.slane %v1707, 7
  %v1827 = vrot.slane %v1707, 1
  %v1828 = vrot.slane %v1707, 2
  %v1829 = vrot.slane %v1707, 3
  %v1830 = vrot.slane %v1707, 4
  %v1839 = vadd.f32 %v1615, %v1824
  %v1840 = vadd.f32 %v1618, %v1825
  %v1841 = vadd.f32 %v1621, %v1826
  %v1842 = vadd.f32 %v1624, %v1707
  %v1843 = vadd.f32 %v1627, %v1827
  %v1844 = vadd.f32 %v1630, %v1828
  %v1845 = vadd.f32 %v1633, %v1829
  %v1846 = vadd.f32 %v1636, %v1830
  %v1847 = vxor.u32 %v1839, 2147483648
  %v1848 = vxor.u32 %v1840, 2147483648
  %v1849 = vxor.u32 %v1841, 2147483648
  %v1850 = vxor.u32 %v1842, 2147483648
  %v1851 = vxor.u32 %v1843, 2147483648
  %v1852 = vxor.u32 %v1844, 2147483648
  %v1853 = vxor.u32 %v1845, 2147483648
  %v1854 = vxor.u32 %v1846, 2147483648
  %v1855 = vmul.f32 %v1847, 1.442695
  %v1856 = vpow.pop %v1855
  %v1857 = vmul.f32 %v1848, 1.442695
  %v1858 = vpow.pop %v1857
  %v1859 = vmul.f32 %v1849, 1.442695
  %v1860 = vpow.pop %v1859
  %v1861 = vmul.f32 %v1850, 1.442695
  %v1862 = vpow.pop %v1861
  %v1863 = vmul.f32 %v1851, 1.442695
  %v1864 = vpow.pop %v1863
  %v1865 = vmul.f32 %v1852, 1.442695
  %v1866 = vpow.pop %v1865
  %v1867 = vmul.f32 %v1853, 1.442695
  %v1868 = vpow.pop %v1867
  %v1869 = vmul.f32 %v1854, 1.442695
  %v1870 = vpow.pop %v1869
  %v1871 = vadd.f32 %v1856, 1.0
  %v1872 = vadd.f32 %v1858, 1.0
  %v1873 = vadd.f32 %v1860, 1.0
  %v1874 = vadd.f32 %v1862, 1.0
  %v1875 = vadd.f32 %v1864, 1.0
  %v1876 = vadd.f32 %v1866, 1.0
  %v1877 = vadd.f32 %v1868, 1.0
  %v1878 = vadd.f32 %v1870, 1.0
  %v1879 = vrcp.pop %v1871
  %v1880 = vmul.f32 1.0, %v1879
  %v1881 = vrcp.pop %v1872
  %v1882 = vmul.f32 1.0, %v1881
  %v1883 = vrcp.pop %v1873
  %v1884 = vmul.f32 1.0, %v1883
  %v1885 = vrcp.pop %v1874
  %v1886 = vmul.f32 1.0, %v1885
  %v1887 = vrcp.pop %v1875
  %v1888 = vmul.f32 1.0, %v1887
  %v1889 = vrcp.pop %v1876
  %v1890 = vmul.f32 1.0, %v1889
  %v1891 = vrcp.pop %v1877
  %v1892 = vmul.f32 1.0, %v1891
  %v1893 = vrcp.pop %v1878
  %v1894 = vmul.f32 1.0, %v1893
  %v1895 = vadd.f32 %v1746, %v66
  %v1897 = vrot.slane %v1895, 5
  %v1898 = vrot.slane %v1895, 6
  %v1899 = vrot.slane %v1895, 7
  %v1900 = vrot.slane %v1895, 1
  %v1901 = vrot.slane %v1895, 2
  %v1902 = vrot.slane %v1895, 3
  %v1903 = vrot.slane %v1895, 4
  %v1912 = vmul.f32 %v1808, %v1897
  %v1913 = vmul.f32 %v1810, %v1898
  %v1914 = vmul.f32 %v1812, %v1899
  %v1915 = vmul.f32 %v1814, %v1895
  %v1916 = vmul.f32 %v1816, %v1900
  %v1917 = vmul.f32 %v1818, %v1901
  %v1918 = vmul.f32 %v1820, %v1902
  %v1919 = vmul.f32 %v1822, %v1903
  %v1920 = vadd.f32 %v1616, %v1912
  %v1921 = vadd.f32 %v1619, %v1913
  %v1922 = vadd.f32 %v1622, %v1914
  %v1923 = vadd.f32 %v1625, %v1915
  %v1924 = vadd.f32 %v1628, %v1916
  %v1925 = vadd.f32 %v1631, %v1917
  %v1926 = vadd.f32 %v1634, %v1918
  %v1927 = vadd.f32 %v1637, %v1919
  %v1928 = vtanh.pop %v1920
  %v1929 = vtanh.pop %v1921
  %v1930 = vtanh.pop %v1922
  %v1931 = vtanh.pop %v1923
  %v1932 = vtanh.pop %v1924
  %v1933 = vtanh.pop %v1925
  %v1934 = vtanh.pop %v1926
  %v1935 = vtanh.pop %v1927
  %v1936 = vsub.f32 1.0, %v1880
  %v1937 = vsub.f32 1.0, %v1882
  %v1938 = vsub.f32 1.0, %v1884
  %v1939 = vsub.f32 1.0, %v1886
  %v1940 = vsub.f32 1.0, %v1888
  %v1941 = vsub.f32 1.0, %v1890
  %v1942 = vsub.f32 1.0, %v1892
  %v1943 = vsub.f32 1.0, %v1894
  %v1944 = vmul.f32 %v1936, %v1928
  %v1945 = vmul.f32 %v1937, %v1929
  %v1946 = vmul.f32 %v1938, %v1930
  %v1947 = vmul.f32 %v1939, %v1931
  %v1948 = vmul.f32 %v1940, %v1932
  %v1949 = vmul.f32 %v1941, %v1933
  %v1950 = vmul.f32 %v1942, %v1934
  %v1951 = vmul.f32 %v1943, %v1935
  %v1960 = vrot.slane %v1531, 7
  %v1961 = vrot.slane %v1532, 7
  %v1962 = vrot.slane %v1533, 7
  %v1963 = vrot.slane %v1534, 7
  %v1964 = vrot.slane %v1535, 7
  %v1965 = vrot.slane %v1536, 7
  %v1966 = vrot.slane %v1537, 7
  %v1967 = vrot.slane %v1538, 7
  %v1976 = vmul.f32 %v1880, %v1960
  %v1977 = vmul.f32 %v1882, %v1961
  %v1978 = vmul.f32 %v1884, %v1962
  %v1979 = vmul.f32 %v1886, %v1963
  %v1980 = vmul.f32 %v1888, %v1964
  %v1981 = vmul.f32 %v1890, %v1965
  %v1982 = vmul.f32 %v1892, %v1966
  %v1983 = vmul.f32 %v1894, %v1967
  %v1984 = vadd.f32 %v1944, %v1976
  %v1985 = vadd.f32 %v1945, %v1977
  %v1986 = vadd.f32 %v1946, %v1978
  %v1987 = vadd.f32 %v1947, %v1979
  %v1988 = vadd.f32 %v1948, %v1980
  %v1989 = vadd.f32 %v1949, %v1981
  %v1990 = vadd.f32 %v1950, %v1982
  %v1991 = vadd.f32 %v1951, %v1983
  %v1992 = vpack.c.bf16 %v1984, %v1984
  %v1993 = vpack.c.bf16 %v1985, %v1985
  %v1994 = vpack.c.bf16 %v1986, %v1986
  %v1995 = vpack.c.bf16 %v1987, %v1987
  %v1996 = vpack.c.bf16 %v1988, %v1988
  %v1997 = vpack.c.bf16 %v1989, %v1989
  %v1998 = vpack.c.bf16 %v1990, %v1990
  %v1999 = vpack.c.bf16 %v1991, %v1991
  %vm2000 = vsmask.f32 7942
  %vm2001 = vmand %vm1547, %vm2000
  %v2002 = vld [vmem:[%s5] sm:$0x2]
  %v2003 = vsel %vm2001, %v1992, %v2002
  %2004 = vst [vmem:[%s5] sm:$0x2] %v2003
  %v2005 = vld [vmem:[%s5 + $0x4] sm:$0x2]
  %v2006 = vsel %vm2001, %v1993, %v2005
  %2007 = vst [vmem:[%s5 + $0x4] sm:$0x2] %v2006
  %v2008 = vld [vmem:[%s5 + $0x8] sm:$0x2]
  %v2009 = vsel %vm2001, %v1994, %v2008
  %2010 = vst [vmem:[%s5 + $0x8] sm:$0x2] %v2009
  %v2011 = vld [vmem:[%s5 + $0xc] sm:$0x2]
  %v2012 = vsel %vm2001, %v1995, %v2011
  %2013 = vst [vmem:[%s5 + $0xc] sm:$0x2] %v2012
  %v2014 = vld [vmem:[%s5 + $0x10] sm:$0x2]
  %v2015 = vsel %vm2001, %v1996, %v2014
  %2016 = vst [vmem:[%s5 + $0x10] sm:$0x2] %v2015
  %v2017 = vld [vmem:[%s5 + $0x14] sm:$0x2]
  %v2018 = vsel %vm2001, %v1997, %v2017
  %2019 = vst [vmem:[%s5 + $0x14] sm:$0x2] %v2018
  %v2020 = vld [vmem:[%s5 + $0x18] sm:$0x2]
  %v2021 = vsel %vm2001, %v1998, %v2020
  %2022 = vst [vmem:[%s5 + $0x18] sm:$0x2] %v2021
  %v2023 = vld [vmem:[%s5 + $0x1c] sm:$0x2]
  %v2024 = vsel %vm2001, %v1999, %v2023
  %2025 = vst [vmem:[%s5 + $0x1c] sm:$0x2] %v2024
  %v2026 = vld [vmem:[%s0] sm:$0x44]
  %v2027 = vld [vmem:[%s0 + $0x8] sm:$0x4]
  %v2028 = vld [vmem:[%s0 + $0xc] sm:$0x44]
  %v2029 = vld [vmem:[%s0 + $0x14] sm:$0x4]
  %v2030 = vld [vmem:[%s0 + $0x18] sm:$0x44]
  %v2031 = vld [vmem:[%s0 + $0x20] sm:$0x4]
  %v2032 = vld [vmem:[%s0 + $0x24] sm:$0x44]
  %v2033 = vld [vmem:[%s0 + $0x2c] sm:$0x4]
  %v2034 = vld [vmem:[%s0 + $0x30] sm:$0x44]
  %v2035 = vld [vmem:[%s0 + $0x38] sm:$0x4]
  %v2036 = vld [vmem:[%s0 + $0x3c] sm:$0x44]
  %v2037 = vld [vmem:[%s0 + $0x44] sm:$0x4]
  %v2038 = vld [vmem:[%s0 + $0x48] sm:$0x44]
  %v2039 = vld [vmem:[%s0 + $0x50] sm:$0x4]
  %v2040 = vld [vmem:[%s0 + $0x54] sm:$0x44]
  %v2041 = vld [vmem:[%s0 + $0x5c] sm:$0x4]
  %v2042 = vunpack.c.l.bf16 %v2026
  %v2043 = vunpack.c.h.bf16 %v2026
  %v2044 = vunpack.c.l.bf16 %v2027
  %v2045 = vunpack.c.l.bf16 %v2028
  %v2046 = vunpack.c.h.bf16 %v2028
  %v2047 = vunpack.c.l.bf16 %v2029
  %v2048 = vunpack.c.l.bf16 %v2030
  %v2049 = vunpack.c.h.bf16 %v2030
  %v2050 = vunpack.c.l.bf16 %v2031
  %v2051 = vunpack.c.l.bf16 %v2032
  %v2052 = vunpack.c.h.bf16 %v2032
  %v2053 = vunpack.c.l.bf16 %v2033
  %v2054 = vunpack.c.l.bf16 %v2034
  %v2055 = vunpack.c.h.bf16 %v2034
  %v2056 = vunpack.c.l.bf16 %v2035
  %v2057 = vunpack.c.l.bf16 %v2036
  %v2058 = vunpack.c.h.bf16 %v2036
  %v2059 = vunpack.c.l.bf16 %v2037
  %v2060 = vunpack.c.l.bf16 %v2038
  %v2061 = vunpack.c.h.bf16 %v2038
  %v2062 = vunpack.c.l.bf16 %v2039
  %v2063 = vunpack.c.l.bf16 %v2040
  %v2064 = vunpack.c.h.bf16 %v2040
  %v2065 = vunpack.c.l.bf16 %v2041
  %v2066 = vadd.f32 %v2042, %v124
  %v2067 = vadd.f32 %v2043, %v125
  %v2068 = vadd.f32 %v2044, %v126
  %v2069 = vadd.f32 %v2045, %v127
  %v2070 = vadd.f32 %v2046, %v128
  %v2071 = vadd.f32 %v2047, %v129
  %v2072 = vadd.f32 %v2048, %v130
  %v2073 = vadd.f32 %v2049, %v131
  %v2074 = vadd.f32 %v2050, %v132
  %v2075 = vadd.f32 %v2051, %v133
  %v2076 = vadd.f32 %v2052, %v134
  %v2077 = vadd.f32 %v2053, %v135
  %v2078 = vadd.f32 %v2054, %v68
  %v2079 = vadd.f32 %v2055, %v69
  %v2080 = vadd.f32 %v2056, %v70
  %v2081 = vadd.f32 %v2057, %v115
  %v2082 = vadd.f32 %v2058, %v116
  %v2083 = vadd.f32 %v2059, %v117
  %v2084 = vadd.f32 %v2060, %v118
  %v2085 = vadd.f32 %v2061, %v119
  %v2086 = vadd.f32 %v2062, %v120
  %v2087 = vadd.f32 %v2063, %v121
  %v2088 = vadd.f32 %v2064, %v122
  %v2089 = vadd.f32 %v2065, %v123
  %v2098 = vunpack.c.l.b16 %v1992
  %v2099 = vunpack.c.l.b16 %v1993
  %v2100 = vunpack.c.l.b16 %v1994
  %v2101 = vunpack.c.l.b16 %v1995
  %v2102 = vunpack.c.l.b16 %v1996
  %v2103 = vunpack.c.l.b16 %v1997
  %v2104 = vunpack.c.l.b16 %v1998
  %v2105 = vunpack.c.l.b16 %v1999
  %v2106 = vrot.slane %v2098, 3
  %v2107 = vrot.slane %v2099, 2
  %v2108 = vsel %vm743, %v2107, %v2106
  %v2109 = vrot.slane %v2100, 1
  %v2110 = vsel %vm746, %v2109, %v2108
  %v2111 = vsel %vm749, %v2101, %v2110
  %v2112 = vrot.slane %v2102, 7
  %v2113 = vsel %vm752, %v2112, %v2111
  %v2114 = vrot.slane %v2103, 6
  %v2115 = vsel %vm755, %v2114, %v2113
  %v2116 = vrot.slane %v2104, 5
  %v2117 = vsel %vm758, %v2116, %v2115
  %v2118 = vrot.slane %v2105, 4
  %v2119 = vsel %vm761, %v2118, %v2117
  %v2120 = vpack.c.b16 %v2119, %v2119
  %2122 = vmatprep.subr.bf16.mxu0 %v266
  %2123 = vmatpush1.bf16.msra.mxu0 %v265
  %2124 = vmatprep.subr.bf16.mxu0 %v269
  %2125 = vmatpush1.bf16.msra.mxu0 %v268
  %2126 = vmatprep.subr.bf16.mxu0 %v272
  %2127 = vmatpush1.bf16.msra.mxu0 %v271
  %2128 = vmatprep.subr.bf16.mxu0 %v275
  %2129 = vmatpush1.bf16.msra.mxu0 %v274
  %2130 = vmatprep.subr.bf16.mxu0 %v278
  %2131 = vmatpush1.bf16.msra.mxu0 %v277
  %2132 = vmatprep.subr.bf16.mxu0 %v281
  %2133 = vmatpush1.bf16.msra.mxu0 %v280
  %2134 = vmatprep.subr.bf16.mxu0 %v284
  %2135 = vmatpush1.bf16.msra.mxu0 %v283
  %2136 = vmatprep.subr.bf16.mxu0 %v287
  %2137 = vmatpush1.bf16.msra.mxu0 %v286
  %2138 = vmatprep.subr.bf16.mxu0 0
  %2139 = vmatpush1.bf16.msra.mxu0 0
  %2140 = vmatprep.subr.bf16.mxu0 0
  %2141 = vmatpush1.bf16.msra.mxu0 0
  %2142 = vmatprep.subr.bf16.mxu0 0
  %2143 = vmatpush1.bf16.msra.mxu0 0
  %2144 = vmatprep.subr.bf16.mxu0 0
  %2145 = vmatpush1.bf16.msra.mxu0 0
  %2146 = vmatprep.subr.bf16.mxu0 0
  %2147 = vmatpush1.bf16.msra.mxu0 0
  %2148 = vmatprep.subr.bf16.mxu0 0
  %2149 = vmatpush1.bf16.msra.mxu0 0
  %2150 = vmatprep.subr.bf16.mxu0 0
  %2151 = vmatpush1.bf16.msra.mxu0 0
  %2152 = vmatprep.subr.bf16.mxu0 0
  %2153 = vmatpush1.bf16.msra.mxu0 0
  %2154 = vmatprep.mubr.bf16.mxu0 0
  %2155 = vmatmul.mubr.bf16.gmra.mrb[0].mxu0 %v2120
  %v2156 = vpop.f32.mrb[0].mxu0
  %v2157 = vadd.f32 0.0, %v2156
  %v2158 = vpop.f32.mrb[0].mxu0
  %v2159 = vadd.f32 0.0, %v2158
  %v2160 = vpop.f32.mrb[0].mxu0
  %v2161 = vpop.f32.mrb[0].mxu0
  %2162 = vdwg.mxu0
  %2163 = vmatprep.subr.bf16.mxu0 0
  %2164 = vmatpush1.bf16.msra.mxu0 %v267
  %2165 = vmatprep.subr.bf16.mxu0 0
  %2166 = vmatpush1.bf16.msra.mxu0 %v270
  %2167 = vmatprep.subr.bf16.mxu0 0
  %2168 = vmatpush1.bf16.msra.mxu0 %v273
  %2169 = vmatprep.subr.bf16.mxu0 0
  %2170 = vmatpush1.bf16.msra.mxu0 %v276
  %2171 = vmatprep.subr.bf16.mxu0 0
  %2172 = vmatpush1.bf16.msra.mxu0 %v279
  %2173 = vmatprep.subr.bf16.mxu0 0
  %2174 = vmatpush1.bf16.msra.mxu0 %v282
  %2175 = vmatprep.subr.bf16.mxu0 0
  %2176 = vmatpush1.bf16.msra.mxu0 %v285
  %2177 = vmatprep.subr.bf16.mxu0 0
  %2178 = vmatpush1.bf16.msra.mxu0 %v288
  %2179 = vmatprep.subr.bf16.mxu0 0
  %2180 = vmatpush1.bf16.msra.mxu0 0
  %2181 = vmatprep.subr.bf16.mxu0 0
  %2182 = vmatpush1.bf16.msra.mxu0 0
  %2183 = vmatprep.subr.bf16.mxu0 0
  %2184 = vmatpush1.bf16.msra.mxu0 0
  %2185 = vmatprep.subr.bf16.mxu0 0
  %2186 = vmatpush1.bf16.msra.mxu0 0
  %2187 = vmatprep.subr.bf16.mxu0 0
  %2188 = vmatpush1.bf16.msra.mxu0 0
  %2189 = vmatprep.subr.bf16.mxu0 0
  %2190 = vmatpush1.bf16.msra.mxu0 0
  %2191 = vmatprep.subr.bf16.mxu0 0
  %2192 = vmatpush1.bf16.msra.mxu0 0
  %2193 = vmatprep.subr.bf16.mxu0 0
  %2194 = vmatpush1.bf16.msra.mxu0 0
  %2195 = vmatprep.mubr.bf16.mxu0 0
  %2196 = vmatmul.mubr.bf16.gmra.mrb[0].mxu0 %v2120
  %v2197 = vpop.f32.mrb[0].mxu0
  %v2198 = vadd.f32 0.0, %v2197
  %v2199 = vpop.f32.mrb[0].mxu0
  %v2200 = vpop.f32.mrb[0].mxu0
  %v2201 = vpop.f32.mrb[0].mxu0
  %2202 = vdwg.mxu0
  %v2204 = vrot.slane %v2157, 4
  %v2205 = vrot.slane %v2157, 5
  %v2206 = vrot.slane %v2157, 6
  %v2207 = vrot.slane %v2157, 7
  %v2208 = vrot.slane %v2157, 1
  %v2209 = vrot.slane %v2157, 2
  %v2210 = vrot.slane %v2157, 3
  %v2219 = vadd.f32 %v2066, %v2204
  %v2220 = vadd.f32 %v2069, %v2205
  %v2221 = vadd.f32 %v2072, %v2206
  %v2222 = vadd.f32 %v2075, %v2207
  %v2223 = vadd.f32 %v2078, %v2157
  %v2224 = vadd.f32 %v2081, %v2208
  %v2225 = vadd.f32 %v2084, %v2209
  %v2226 = vadd.f32 %v2087, %v2210
  %v2227 = vxor.u32 %v2219, 2147483648
  %v2228 = vxor.u32 %v2220, 2147483648
  %v2229 = vxor.u32 %v2221, 2147483648
  %v2230 = vxor.u32 %v2222, 2147483648
  %v2231 = vxor.u32 %v2223, 2147483648
  %v2232 = vxor.u32 %v2224, 2147483648
  %v2233 = vxor.u32 %v2225, 2147483648
  %v2234 = vxor.u32 %v2226, 2147483648
  %v2235 = vmul.f32 %v2227, 1.442695
  %v2236 = vpow.pop %v2235
  %v2237 = vmul.f32 %v2228, 1.442695
  %v2238 = vpow.pop %v2237
  %v2239 = vmul.f32 %v2229, 1.442695
  %v2240 = vpow.pop %v2239
  %v2241 = vmul.f32 %v2230, 1.442695
  %v2242 = vpow.pop %v2241
  %v2243 = vmul.f32 %v2231, 1.442695
  %v2244 = vpow.pop %v2243
  %v2245 = vmul.f32 %v2232, 1.442695
  %v2246 = vpow.pop %v2245
  %v2247 = vmul.f32 %v2233, 1.442695
  %v2248 = vpow.pop %v2247
  %v2249 = vmul.f32 %v2234, 1.442695
  %v2250 = vpow.pop %v2249
  %v2251 = vadd.f32 %v2236, 1.0
  %v2252 = vadd.f32 %v2238, 1.0
  %v2253 = vadd.f32 %v2240, 1.0
  %v2254 = vadd.f32 %v2242, 1.0
  %v2255 = vadd.f32 %v2244, 1.0
  %v2256 = vadd.f32 %v2246, 1.0
  %v2257 = vadd.f32 %v2248, 1.0
  %v2258 = vadd.f32 %v2250, 1.0
  %v2259 = vrcp.pop %v2251
  %v2260 = vmul.f32 1.0, %v2259
  %v2261 = vrcp.pop %v2252
  %v2262 = vmul.f32 1.0, %v2261
  %v2263 = vrcp.pop %v2253
  %v2264 = vmul.f32 1.0, %v2263
  %v2265 = vrcp.pop %v2254
  %v2266 = vmul.f32 1.0, %v2265
  %v2267 = vrcp.pop %v2255
  %v2268 = vmul.f32 1.0, %v2267
  %v2269 = vrcp.pop %v2256
  %v2270 = vmul.f32 1.0, %v2269
  %v2271 = vrcp.pop %v2257
  %v2272 = vmul.f32 1.0, %v2271
  %v2273 = vrcp.pop %v2258
  %v2274 = vmul.f32 1.0, %v2273
  %v2276 = vrot.slane %v2159, 4
  %v2277 = vrot.slane %v2159, 5
  %v2278 = vrot.slane %v2159, 6
  %v2279 = vrot.slane %v2159, 7
  %v2280 = vrot.slane %v2159, 1
  %v2281 = vrot.slane %v2159, 2
  %v2282 = vrot.slane %v2159, 3
  %v2291 = vadd.f32 %v2067, %v2276
  %v2292 = vadd.f32 %v2070, %v2277
  %v2293 = vadd.f32 %v2073, %v2278
  %v2294 = vadd.f32 %v2076, %v2279
  %v2295 = vadd.f32 %v2079, %v2159
  %v2296 = vadd.f32 %v2082, %v2280
  %v2297 = vadd.f32 %v2085, %v2281
  %v2298 = vadd.f32 %v2088, %v2282
  %v2299 = vxor.u32 %v2291, 2147483648
  %v2300 = vxor.u32 %v2292, 2147483648
  %v2301 = vxor.u32 %v2293, 2147483648
  %v2302 = vxor.u32 %v2294, 2147483648
  %v2303 = vxor.u32 %v2295, 2147483648
  %v2304 = vxor.u32 %v2296, 2147483648
  %v2305 = vxor.u32 %v2297, 2147483648
  %v2306 = vxor.u32 %v2298, 2147483648
  %v2307 = vmul.f32 %v2299, 1.442695
  %v2308 = vpow.pop %v2307
  %v2309 = vmul.f32 %v2300, 1.442695
  %v2310 = vpow.pop %v2309
  %v2311 = vmul.f32 %v2301, 1.442695
  %v2312 = vpow.pop %v2311
  %v2313 = vmul.f32 %v2302, 1.442695
  %v2314 = vpow.pop %v2313
  %v2315 = vmul.f32 %v2303, 1.442695
  %v2316 = vpow.pop %v2315
  %v2317 = vmul.f32 %v2304, 1.442695
  %v2318 = vpow.pop %v2317
  %v2319 = vmul.f32 %v2305, 1.442695
  %v2320 = vpow.pop %v2319
  %v2321 = vmul.f32 %v2306, 1.442695
  %v2322 = vpow.pop %v2321
  %v2323 = vadd.f32 %v2308, 1.0
  %v2324 = vadd.f32 %v2310, 1.0
  %v2325 = vadd.f32 %v2312, 1.0
  %v2326 = vadd.f32 %v2314, 1.0
  %v2327 = vadd.f32 %v2316, 1.0
  %v2328 = vadd.f32 %v2318, 1.0
  %v2329 = vadd.f32 %v2320, 1.0
  %v2330 = vadd.f32 %v2322, 1.0
  %v2331 = vrcp.pop %v2323
  %v2332 = vmul.f32 1.0, %v2331
  %v2333 = vrcp.pop %v2324
  %v2334 = vmul.f32 1.0, %v2333
  %v2335 = vrcp.pop %v2325
  %v2336 = vmul.f32 1.0, %v2335
  %v2337 = vrcp.pop %v2326
  %v2338 = vmul.f32 1.0, %v2337
  %v2339 = vrcp.pop %v2327
  %v2340 = vmul.f32 1.0, %v2339
  %v2341 = vrcp.pop %v2328
  %v2342 = vmul.f32 1.0, %v2341
  %v2343 = vrcp.pop %v2329
  %v2344 = vmul.f32 1.0, %v2343
  %v2345 = vrcp.pop %v2330
  %v2346 = vmul.f32 1.0, %v2345
  %v2347 = vadd.f32 %v2198, %v66
  %v2349 = vrot.slane %v2347, 4
  %v2350 = vrot.slane %v2347, 5
  %v2351 = vrot.slane %v2347, 6
  %v2352 = vrot.slane %v2347, 7
  %v2353 = vrot.slane %v2347, 1
  %v2354 = vrot.slane %v2347, 2
  %v2355 = vrot.slane %v2347, 3
  %v2364 = vmul.f32 %v2260, %v2349
  %v2365 = vmul.f32 %v2262, %v2350
  %v2366 = vmul.f32 %v2264, %v2351
  %v2367 = vmul.f32 %v2266, %v2352
  %v2368 = vmul.f32 %v2268, %v2347
  %v2369 = vmul.f32 %v2270, %v2353
  %v2370 = vmul.f32 %v2272, %v2354
  %v2371 = vmul.f32 %v2274, %v2355
  %v2372 = vadd.f32 %v2068, %v2364
  %v2373 = vadd.f32 %v2071, %v2365
  %v2374 = vadd.f32 %v2074, %v2366
  %v2375 = vadd.f32 %v2077, %v2367
  %v2376 = vadd.f32 %v2080, %v2368
  %v2377 = vadd.f32 %v2083, %v2369
  %v2378 = vadd.f32 %v2086, %v2370
  %v2379 = vadd.f32 %v2089, %v2371
  %v2380 = vtanh.pop %v2372
  %v2381 = vtanh.pop %v2373
  %v2382 = vtanh.pop %v2374
  %v2383 = vtanh.pop %v2375
  %v2384 = vtanh.pop %v2376
  %v2385 = vtanh.pop %v2377
  %v2386 = vtanh.pop %v2378
  %v2387 = vtanh.pop %v2379
  %v2388 = vsub.f32 1.0, %v2332
  %v2389 = vsub.f32 1.0, %v2334
  %v2390 = vsub.f32 1.0, %v2336
  %v2391 = vsub.f32 1.0, %v2338
  %v2392 = vsub.f32 1.0, %v2340
  %v2393 = vsub.f32 1.0, %v2342
  %v2394 = vsub.f32 1.0, %v2344
  %v2395 = vsub.f32 1.0, %v2346
  %v2396 = vmul.f32 %v2388, %v2380
  %v2397 = vmul.f32 %v2389, %v2381
  %v2398 = vmul.f32 %v2390, %v2382
  %v2399 = vmul.f32 %v2391, %v2383
  %v2400 = vmul.f32 %v2392, %v2384
  %v2401 = vmul.f32 %v2393, %v2385
  %v2402 = vmul.f32 %v2394, %v2386
  %v2403 = vmul.f32 %v2395, %v2387
  %v2412 = vrot.slane %v1984, 7
  %v2413 = vrot.slane %v1985, 7
  %v2414 = vrot.slane %v1986, 7
  %v2415 = vrot.slane %v1987, 7
  %v2416 = vrot.slane %v1988, 7
  %v2417 = vrot.slane %v1989, 7
  %v2418 = vrot.slane %v1990, 7
  %v2419 = vrot.slane %v1991, 7
  %v2428 = vmul.f32 %v2332, %v2412
  %v2429 = vmul.f32 %v2334, %v2413
  %v2430 = vmul.f32 %v2336, %v2414
  %v2431 = vmul.f32 %v2338, %v2415
  %v2432 = vmul.f32 %v2340, %v2416
  %v2433 = vmul.f32 %v2342, %v2417
  %v2434 = vmul.f32 %v2344, %v2418
  %v2435 = vmul.f32 %v2346, %v2419
  %v2436 = vadd.f32 %v2396, %v2428
  %v2437 = vadd.f32 %v2397, %v2429
  %v2438 = vadd.f32 %v2398, %v2430
  %v2439 = vadd.f32 %v2399, %v2431
  %v2440 = vadd.f32 %v2400, %v2432
  %v2441 = vadd.f32 %v2401, %v2433
  %v2442 = vadd.f32 %v2402, %v2434
  %v2443 = vadd.f32 %v2403, %v2435
  %v2444 = vpack.c.bf16 %v2436, %v2436
  %v2445 = vpack.c.bf16 %v2437, %v2437
  %v2446 = vpack.c.bf16 %v2438, %v2438
  %v2447 = vpack.c.bf16 %v2439, %v2439
  %v2448 = vpack.c.bf16 %v2440, %v2440
  %v2449 = vpack.c.bf16 %v2441, %v2441
  %v2450 = vpack.c.bf16 %v2442, %v2442
  %v2451 = vpack.c.bf16 %v2443, %v2443
  %vm2452 = vcmask 1042434
  %vm2453 = vsmask.f32 2304
  %vm2454 = vmand %vm2452, %vm2453
  %v2455 = vld [vmem:[%s5] sm:$0x4]
  %v2456 = vsel %vm2454, %v2444, %v2455
  %2457 = vst [vmem:[%s5] sm:$0x4] %v2456
  %v2458 = vld [vmem:[%s5 + $0x4] sm:$0x4]
  %v2459 = vsel %vm2454, %v2445, %v2458
  %2460 = vst [vmem:[%s5 + $0x4] sm:$0x4] %v2459
  %v2461 = vld [vmem:[%s5 + $0x8] sm:$0x4]
  %v2462 = vsel %vm2454, %v2446, %v2461
  %2463 = vst [vmem:[%s5 + $0x8] sm:$0x4] %v2462
  %v2464 = vld [vmem:[%s5 + $0xc] sm:$0x4]
  %v2465 = vsel %vm2454, %v2447, %v2464
  %2466 = vst [vmem:[%s5 + $0xc] sm:$0x4] %v2465
  %v2467 = vld [vmem:[%s5 + $0x10] sm:$0x4]
  %v2468 = vsel %vm2454, %v2448, %v2467
  %2469 = vst [vmem:[%s5 + $0x10] sm:$0x4] %v2468
  %v2470 = vld [vmem:[%s5 + $0x14] sm:$0x4]
  %v2471 = vsel %vm2454, %v2449, %v2470
  %2472 = vst [vmem:[%s5 + $0x14] sm:$0x4] %v2471
  %v2473 = vld [vmem:[%s5 + $0x18] sm:$0x4]
  %v2474 = vsel %vm2454, %v2450, %v2473
  %2475 = vst [vmem:[%s5 + $0x18] sm:$0x4] %v2474
  %v2476 = vld [vmem:[%s5 + $0x1c] sm:$0x4]
  %v2477 = vsel %vm2454, %v2451, %v2476
  %2478 = vst [vmem:[%s5 + $0x1c] sm:$0x4] %v2477
  %v2479 = vld [vmem:[%s0] sm:$0x44]
  %v2480 = vld [vmem:[%s0 + $0x8] sm:$0x4]
  %v2481 = vld [vmem:[%s0 + $0xc] sm:$0x44]
  %v2482 = vld [vmem:[%s0 + $0x14] sm:$0x4]
  %v2483 = vld [vmem:[%s0 + $0x18] sm:$0x44]
  %v2484 = vld [vmem:[%s0 + $0x20] sm:$0x4]
  %v2485 = vld [vmem:[%s0 + $0x24] sm:$0x44]
  %v2486 = vld [vmem:[%s0 + $0x2c] sm:$0x4]
  %v2487 = vld [vmem:[%s0 + $0x30] sm:$0x44]
  %v2488 = vld [vmem:[%s0 + $0x38] sm:$0x4]
  %v2489 = vld [vmem:[%s0 + $0x3c] sm:$0x44]
  %v2490 = vld [vmem:[%s0 + $0x44] sm:$0x4]
  %v2491 = vld [vmem:[%s0 + $0x48] sm:$0x44]
  %v2492 = vld [vmem:[%s0 + $0x50] sm:$0x4]
  %v2493 = vld [vmem:[%s0 + $0x54] sm:$0x44]
  %v2494 = vld [vmem:[%s0 + $0x5c] sm:$0x4]
  %v2495 = vunpack.c.l.bf16 %v2479
  %v2496 = vunpack.c.h.bf16 %v2479
  %v2497 = vunpack.c.l.bf16 %v2480
  %v2498 = vunpack.c.l.bf16 %v2481
  %v2499 = vunpack.c.h.bf16 %v2481
  %v2500 = vunpack.c.l.bf16 %v2482
  %v2501 = vunpack.c.l.bf16 %v2483
  %v2502 = vunpack.c.h.bf16 %v2483
  %v2503 = vunpack.c.l.bf16 %v2484
  %v2504 = vunpack.c.l.bf16 %v2485
  %v2505 = vunpack.c.h.bf16 %v2485
  %v2506 = vunpack.c.l.bf16 %v2486
  %v2507 = vunpack.c.l.bf16 %v2487
  %v2508 = vunpack.c.h.bf16 %v2487
  %v2509 = vunpack.c.l.bf16 %v2488
  %v2510 = vunpack.c.l.bf16 %v2489
  %v2511 = vunpack.c.h.bf16 %v2489
  %v2512 = vunpack.c.l.bf16 %v2490
  %v2513 = vunpack.c.l.bf16 %v2491
  %v2514 = vunpack.c.h.bf16 %v2491
  %v2515 = vunpack.c.l.bf16 %v2492
  %v2516 = vunpack.c.l.bf16 %v2493
  %v2517 = vunpack.c.h.bf16 %v2493
  %v2518 = vunpack.c.l.bf16 %v2494
  %v2519 = vadd.f32 %v2495, %v121
  %v2520 = vadd.f32 %v2496, %v122
  %v2521 = vadd.f32 %v2497, %v123
  %v2522 = vadd.f32 %v2498, %v124
  %v2523 = vadd.f32 %v2499, %v125
  %v2524 = vadd.f32 %v2500, %v126
  %v2525 = vadd.f32 %v2501, %v127
  %v2526 = vadd.f32 %v2502, %v128
  %v2527 = vadd.f32 %v2503, %v129
  %v2528 = vadd.f32 %v2504, %v130
  %v2529 = vadd.f32 %v2505, %v131
  %v2530 = vadd.f32 %v2506, %v132
  %v2531 = vadd.f32 %v2507, %v133
  %v2532 = vadd.f32 %v2508, %v134
  %v2533 = vadd.f32 %v2509, %v135
  %v2534 = vadd.f32 %v2510, %v68
  %v2535 = vadd.f32 %v2511, %v69
  %v2536 = vadd.f32 %v2512, %v70
  %v2537 = vadd.f32 %v2513, %v115
  %v2538 = vadd.f32 %v2514, %v116
  %v2539 = vadd.f32 %v2515, %v117
  %v2540 = vadd.f32 %v2516, %v118
  %v2541 = vadd.f32 %v2517, %v119
  %v2542 = vadd.f32 %v2518, %v120
  %v2551 = vunpack.c.l.b16 %v2444
  %v2552 = vunpack.c.l.b16 %v2445
  %v2553 = vunpack.c.l.b16 %v2446
  %v2554 = vunpack.c.l.b16 %v2447
  %v2555 = vunpack.c.l.b16 %v2448
  %v2556 = vunpack.c.l.b16 %v2449
  %v2557 = vunpack.c.l.b16 %v2450
  %v2558 = vunpack.c.l.b16 %v2451
  %v2559 = vrot.slane %v2551, 4
  %v2560 = vrot.slane %v2552, 3
  %v2561 = vsel %vm743, %v2560, %v2559
  %v2562 = vrot.slane %v2553, 2
  %v2563 = vsel %vm746, %v2562, %v2561
  %v2564 = vrot.slane %v2554, 1
  %v2565 = vsel %vm749, %v2564, %v2563
  %v2566 = vsel %vm752, %v2555, %v2565
  %v2567 = vrot.slane %v2556, 7
  %v2568 = vsel %vm755, %v2567, %v2566
  %v2569 = vrot.slane %v2557, 6
  %v2570 = vsel %vm758, %v2569, %v2568
  %v2571 = vrot.slane %v2558, 5
  %v2572 = vsel %vm761, %v2571, %v2570
  %v2573 = vpack.c.b16 %v2572, %v2572
  %2575 = vmatprep.subr.bf16.mxu0 %v266
  %2576 = vmatpush1.bf16.msra.mxu0 %v265
  %2577 = vmatprep.subr.bf16.mxu0 %v269
  %2578 = vmatpush1.bf16.msra.mxu0 %v268
  %2579 = vmatprep.subr.bf16.mxu0 %v272
  %2580 = vmatpush1.bf16.msra.mxu0 %v271
  %2581 = vmatprep.subr.bf16.mxu0 %v275
  %2582 = vmatpush1.bf16.msra.mxu0 %v274
  %2583 = vmatprep.subr.bf16.mxu0 %v278
  %2584 = vmatpush1.bf16.msra.mxu0 %v277
  %2585 = vmatprep.subr.bf16.mxu0 %v281
  %2586 = vmatpush1.bf16.msra.mxu0 %v280
  %2587 = vmatprep.subr.bf16.mxu0 %v284
  %2588 = vmatpush1.bf16.msra.mxu0 %v283
  %2589 = vmatprep.subr.bf16.mxu0 %v287
  %2590 = vmatpush1.bf16.msra.mxu0 %v286
  %2591 = vmatprep.subr.bf16.mxu0 0
  %2592 = vmatpush1.bf16.msra.mxu0 0
  %2593 = vmatprep.subr.bf16.mxu0 0
  %2594 = vmatpush1.bf16.msra.mxu0 0
  %2595 = vmatprep.subr.bf16.mxu0 0
  %2596 = vmatpush1.bf16.msra.mxu0 0
  %2597 = vmatprep.subr.bf16.mxu0 0
  %2598 = vmatpush1.bf16.msra.mxu0 0
  %2599 = vmatprep.subr.bf16.mxu0 0
  %2600 = vmatpush1.bf16.msra.mxu0 0
  %2601 = vmatprep.subr.bf16.mxu0 0
  %2602 = vmatpush1.bf16.msra.mxu0 0
  %2603 = vmatprep.subr.bf16.mxu0 0
  %2604 = vmatpush1.bf16.msra.mxu0 0
  %2605 = vmatprep.subr.bf16.mxu0 0
  %2606 = vmatpush1.bf16.msra.mxu0 0
  %2607 = vmatprep.mubr.bf16.mxu0 0
  %2608 = vmatmul.mubr.bf16.gmra.mrb[0].mxu0 %v2573
  %v2609 = vpop.f32.mrb[0].mxu0
  %v2610 = vadd.f32 0.0, %v2609
  %v2611 = vpop.f32.mrb[0].mxu0
  %v2612 = vadd.f32 0.0, %v2611
  %v2613 = vpop.f32.mrb[0].mxu0
  %v2614 = vpop.f32.mrb[0].mxu0
  %2615 = vdwg.mxu0
  %2616 = vmatprep.subr.bf16.mxu0 0
  %2617 = vmatpush1.bf16.msra.mxu0 %v267
  %2618 = vmatprep.subr.bf16.mxu0 0
  %2619 = vmatpush1.bf16.msra.mxu0 %v270
  %2620 = vmatprep.subr.bf16.mxu0 0
  %2621 = vmatpush1.bf16.msra.mxu0 %v273
  %2622 = vmatprep.subr.bf16.mxu0 0
  %2623 = vmatpush1.bf16.msra.mxu0 %v276
  %2624 = vmatprep.subr.bf16.mxu0 0
  %2625 = vmatpush1.bf16.msra.mxu0 %v279
  %2626 = vmatprep.subr.bf16.mxu0 0
  %2627 = vmatpush1.bf16.msra.mxu0 %v282
  %2628 = vmatprep.subr.bf16.mxu0 0
  %2629 = vmatpush1.bf16.msra.mxu0 %v285
  %2630 = vmatprep.subr.bf16.mxu0 0
  %2631 = vmatpush1.bf16.msra.mxu0 %v288
  %2632 = vmatprep.subr.bf16.mxu0 0
  %2633 = vmatpush1.bf16.msra.mxu0 0
  %2634 = vmatprep.subr.bf16.mxu0 0
  %2635 = vmatpush1.bf16.msra.mxu0 0
  %2636 = vmatprep.subr.bf16.mxu0 0
  %2637 = vmatpush1.bf16.msra.mxu0 0
  %2638 = vmatprep.subr.bf16.mxu0 0
  %2639 = vmatpush1.bf16.msra.mxu0 0
  %2640 = vmatprep.subr.bf16.mxu0 0
  %2641 = vmatpush1.bf16.msra.mxu0 0
  %2642 = vmatprep.subr.bf16.mxu0 0
  %2643 = vmatpush1.bf16.msra.mxu0 0
  %2644 = vmatprep.subr.bf16.mxu0 0
  %2645 = vmatpush1.bf16.msra.mxu0 0
  %2646 = vmatprep.subr.bf16.mxu0 0
  %2647 = vmatpush1.bf16.msra.mxu0 0
  %2648 = vmatprep.mubr.bf16.mxu0 0
  %2649 = vmatmul.mubr.bf16.gmra.mrb[0].mxu0 %v2573
  %v2650 = vpop.f32.mrb[0].mxu0
  %v2651 = vadd.f32 0.0, %v2650
  %v2652 = vpop.f32.mrb[0].mxu0
  %v2653 = vpop.f32.mrb[0].mxu0
  %v2654 = vpop.f32.mrb[0].mxu0
  %2655 = vdwg.mxu0
  %v2657 = vrot.slane %v2610, 3
  %v2658 = vrot.slane %v2610, 4
  %v2659 = vrot.slane %v2610, 5
  %v2660 = vrot.slane %v2610, 6
  %v2661 = vrot.slane %v2610, 7
  %v2662 = vrot.slane %v2610, 1
  %v2663 = vrot.slane %v2610, 2
  %v2672 = vadd.f32 %v2519, %v2657
  %v2673 = vadd.f32 %v2522, %v2658
  %v2674 = vadd.f32 %v2525, %v2659
  %v2675 = vadd.f32 %v2528, %v2660
  %v2676 = vadd.f32 %v2531, %v2661
  %v2677 = vadd.f32 %v2534, %v2610
  %v2678 = vadd.f32 %v2537, %v2662
  %v2679 = vadd.f32 %v2540, %v2663
  %v2680 = vxor.u32 %v2672, 2147483648
  %v2681 = vxor.u32 %v2673, 2147483648
  %v2682 = vxor.u32 %v2674, 2147483648
  %v2683 = vxor.u32 %v2675, 2147483648
  %v2684 = vxor.u32 %v2676, 2147483648
  %v2685 = vxor.u32 %v2677, 2147483648
  %v2686 = vxor.u32 %v2678, 2147483648
  %v2687 = vxor.u32 %v2679, 2147483648
  %v2688 = vmul.f32 %v2680, 1.442695
  %v2689 = vpow.pop %v2688
  %v2690 = vmul.f32 %v2681, 1.442695
  %v2691 = vpow.pop %v2690
  %v2692 = vmul.f32 %v2682, 1.442695
  %v2693 = vpow.pop %v2692
  %v2694 = vmul.f32 %v2683, 1.442695
  %v2695 = vpow.pop %v2694
  %v2696 = vmul.f32 %v2684, 1.442695
  %v2697 = vpow.pop %v2696
  %v2698 = vmul.f32 %v2685, 1.442695
  %v2699 = vpow.pop %v2698
  %v2700 = vmul.f32 %v2686, 1.442695
  %v2701 = vpow.pop %v2700
  %v2702 = vmul.f32 %v2687, 1.442695
  %v2703 = vpow.pop %v2702
  %v2704 = vadd.f32 %v2689, 1.0
  %v2705 = vadd.f32 %v2691, 1.0
  %v2706 = vadd.f32 %v2693, 1.0
  %v2707 = vadd.f32 %v2695, 1.0
  %v2708 = vadd.f32 %v2697, 1.0
  %v2709 = vadd.f32 %v2699, 1.0
  %v2710 = vadd.f32 %v2701, 1.0
  %v2711 = vadd.f32 %v2703, 1.0
  %v2712 = vrcp.pop %v2704
  %v2713 = vmul.f32 1.0, %v2712
  %v2714 = vrcp.pop %v2705
  %v2715 = vmul.f32 1.0, %v2714
  %v2716 = vrcp.pop %v2706
  %v2717 = vmul.f32 1.0, %v2716
  %v2718 = vrcp.pop %v2707
  %v2719 = vmul.f32 1.0, %v2718
  %v2720 = vrcp.pop %v2708
  %v2721 = vmul.f32 1.0, %v2720
  %v2722 = vrcp.pop %v2709
  %v2723 = vmul.f32 1.0, %v2722
  %v2724 = vrcp.pop %v2710
  %v2725 = vmul.f32 1.0, %v2724
  %v2726 = vrcp.pop %v2711
  %v2727 = vmul.f32 1.0, %v2726
  %v2729 = vrot.slane %v2612, 3
  %v2730 = vrot.slane %v2612, 4
  %v2731 = vrot.slane %v2612, 5
  %v2732 = vrot.slane %v2612, 6
  %v2733 = vrot.slane %v2612, 7
  %v2734 = vrot.slane %v2612, 1
  %v2735 = vrot.slane %v2612, 2
  %v2744 = vadd.f32 %v2520, %v2729
  %v2745 = vadd.f32 %v2523, %v2730
  %v2746 = vadd.f32 %v2526, %v2731
  %v2747 = vadd.f32 %v2529, %v2732
  %v2748 = vadd.f32 %v2532, %v2733
  %v2749 = vadd.f32 %v2535, %v2612
  %v2750 = vadd.f32 %v2538, %v2734
  %v2751 = vadd.f32 %v2541, %v2735
  %v2752 = vxor.u32 %v2744, 2147483648
  %v2753 = vxor.u32 %v2745, 2147483648
  %v2754 = vxor.u32 %v2746, 2147483648
  %v2755 = vxor.u32 %v2747, 2147483648
  %v2756 = vxor.u32 %v2748, 2147483648
  %v2757 = vxor.u32 %v2749, 2147483648
  %v2758 = vxor.u32 %v2750, 2147483648
  %v2759 = vxor.u32 %v2751, 2147483648
  %v2760 = vmul.f32 %v2752, 1.442695
  %v2761 = vpow.pop %v2760
  %v2762 = vmul.f32 %v2753, 1.442695
  %v2763 = vpow.pop %v2762
  %v2764 = vmul.f32 %v2754, 1.442695
  %v2765 = vpow.pop %v2764
  %v2766 = vmul.f32 %v2755, 1.442695
  %v2767 = vpow.pop %v2766
  %v2768 = vmul.f32 %v2756, 1.442695
  %v2769 = vpow.pop %v2768
  %v2770 = vmul.f32 %v2757, 1.442695
  %v2771 = vpow.pop %v2770
  %v2772 = vmul.f32 %v2758, 1.442695
  %v2773 = vpow.pop %v2772
  %v2774 = vmul.f32 %v2759, 1.442695
  %v2775 = vpow.pop %v2774
  %v2776 = vadd.f32 %v2761, 1.0
  %v2777 = vadd.f32 %v2763, 1.0
  %v2778 = vadd.f32 %v2765, 1.0
  %v2779 = vadd.f32 %v2767, 1.0
  %v2780 = vadd.f32 %v2769, 1.0
  %v2781 = vadd.f32 %v2771, 1.0
  %v2782 = vadd.f32 %v2773, 1.0
  %v2783 = vadd.f32 %v2775, 1.0
  %v2784 = vrcp.pop %v2776
  %v2785 = vmul.f32 1.0, %v2784
  %v2786 = vrcp.pop %v2777
  %v2787 = vmul.f32 1.0, %v2786
  %v2788 = vrcp.pop %v2778
  %v2789 = vmul.f32 1.0, %v2788
  %v2790 = vrcp.pop %v2779
  %v2791 = vmul.f32 1.0, %v2790
  %v2792 = vrcp.pop %v2780
  %v2793 = vmul.f32 1.0, %v2792
  %v2794 = vrcp.pop %v2781
  %v2795 = vmul.f32 1.0, %v2794
  %v2796 = vrcp.pop %v2782
  %v2797 = vmul.f32 1.0, %v2796
  %v2798 = vrcp.pop %v2783
  %v2799 = vmul.f32 1.0, %v2798
  %v2800 = vadd.f32 %v2651, %v66
  %v2802 = vrot.slane %v2800, 3
  %v2803 = vrot.slane %v2800, 4
  %v2804 = vrot.slane %v2800, 5
  %v2805 = vrot.slane %v2800, 6
  %v2806 = vrot.slane %v2800, 7
  %v2807 = vrot.slane %v2800, 1
  %v2808 = vrot.slane %v2800, 2
  %v2817 = vmul.f32 %v2713, %v2802
  %v2818 = vmul.f32 %v2715, %v2803
  %v2819 = vmul.f32 %v2717, %v2804
  %v2820 = vmul.f32 %v2719, %v2805
  %v2821 = vmul.f32 %v2721, %v2806
  %v2822 = vmul.f32 %v2723, %v2800
  %v2823 = vmul.f32 %v2725, %v2807
  %v2824 = vmul.f32 %v2727, %v2808
  %v2825 = vadd.f32 %v2521, %v2817
  %v2826 = vadd.f32 %v2524, %v2818
  %v2827 = vadd.f32 %v2527, %v2819
  %v2828 = vadd.f32 %v2530, %v2820
  %v2829 = vadd.f32 %v2533, %v2821
  %v2830 = vadd.f32 %v2536, %v2822
  %v2831 = vadd.f32 %v2539, %v2823
  %v2832 = vadd.f32 %v2542, %v2824
  %v2833 = vtanh.pop %v2825
  %v2834 = vtanh.pop %v2826
  %v2835 = vtanh.pop %v2827
  %v2836 = vtanh.pop %v2828
  %v2837 = vtanh.pop %v2829
  %v2838 = vtanh.pop %v2830
  %v2839 = vtanh.pop %v2831
  %v2840 = vtanh.pop %v2832
  %v2841 = vsub.f32 1.0, %v2785
  %v2842 = vsub.f32 1.0, %v2787
  %v2843 = vsub.f32 1.0, %v2789
  %v2844 = vsub.f32 1.0, %v2791
  %v2845 = vsub.f32 1.0, %v2793
  %v2846 = vsub.f32 1.0, %v2795
  %v2847 = vsub.f32 1.0, %v2797
  %v2848 = vsub.f32 1.0, %v2799
  %v2849 = vmul.f32 %v2841, %v2833
  %v2850 = vmul.f32 %v2842, %v2834
  %v2851 = vmul.f32 %v2843, %v2835
  %v2852 = vmul.f32 %v2844, %v2836
  %v2853 = vmul.f32 %v2845, %v2837
  %v2854 = vmul.f32 %v2846, %v2838
  %v2855 = vmul.f32 %v2847, %v2839
  %v2856 = vmul.f32 %v2848, %v2840
  %v2865 = vrot.slane %v2436, 7
  %v2866 = vrot.slane %v2437, 7
  %v2867 = vrot.slane %v2438, 7
  %v2868 = vrot.slane %v2439, 7
  %v2869 = vrot.slane %v2440, 7
  %v2870 = vrot.slane %v2441, 7
  %v2871 = vrot.slane %v2442, 7
  %v2872 = vrot.slane %v2443, 7
  %v2881 = vmul.f32 %v2785, %v2865
  %v2882 = vmul.f32 %v2787, %v2866
  %v2883 = vmul.f32 %v2789, %v2867
  %v2884 = vmul.f32 %v2791, %v2868
  %v2885 = vmul.f32 %v2793, %v2869
  %v2886 = vmul.f32 %v2795, %v2870
  %v2887 = vmul.f32 %v2797, %v2871
  %v2888 = vmul.f32 %v2799, %v2872
  %v2889 = vadd.f32 %v2849, %v2881
  %v2890 = vadd.f32 %v2850, %v2882
  %v2891 = vadd.f32 %v2851, %v2883
  %v2892 = vadd.f32 %v2852, %v2884
  %v2893 = vadd.f32 %v2853, %v2885
  %v2894 = vadd.f32 %v2854, %v2886
  %v2895 = vadd.f32 %v2855, %v2887
  %v2896 = vadd.f32 %v2856, %v2888
  %v2897 = vpack.c.bf16 %v2889, %v2889
  %v2898 = vpack.c.bf16 %v2890, %v2890
  %v2899 = vpack.c.bf16 %v2891, %v2891
  %v2900 = vpack.c.bf16 %v2892, %v2892
  %v2901 = vpack.c.bf16 %v2893, %v2893
  %v2902 = vpack.c.bf16 %v2894, %v2894
  %v2903 = vpack.c.bf16 %v2895, %v2895
  %v2904 = vpack.c.bf16 %v2896, %v2896
  %vm2905 = vsmask.f32 7946
  %vm2906 = vmand %vm2452, %vm2905
  %v2907 = vld [vmem:[%s5] sm:$0x4]
  %v2908 = vsel %vm2906, %v2897, %v2907
  %2909 = vst [vmem:[%s5] sm:$0x4] %v2908
  %v2910 = vld [vmem:[%s5 + $0x4] sm:$0x4]
  %v2911 = vsel %vm2906, %v2898, %v2910
  %2912 = vst [vmem:[%s5 + $0x4] sm:$0x4] %v2911
  %v2913 = vld [vmem:[%s5 + $0x8] sm:$0x4]
  %v2914 = vsel %vm2906, %v2899, %v2913
  %2915 = vst [vmem:[%s5 + $0x8] sm:$0x4] %v2914
  %v2916 = vld [vmem:[%s5 + $0xc] sm:$0x4]
  %v2917 = vsel %vm2906, %v2900, %v2916
  %2918 = vst [vmem:[%s5 + $0xc] sm:$0x4] %v2917
  %v2919 = vld [vmem:[%s5 + $0x10] sm:$0x4]
  %v2920 = vsel %vm2906, %v2901, %v2919
  %2921 = vst [vmem:[%s5 + $0x10] sm:$0x4] %v2920
  %v2922 = vld [vmem:[%s5 + $0x14] sm:$0x4]
  %v2923 = vsel %vm2906, %v2902, %v2922
  %2924 = vst [vmem:[%s5 + $0x14] sm:$0x4] %v2923
  %v2925 = vld [vmem:[%s5 + $0x18] sm:$0x4]
  %v2926 = vsel %vm2906, %v2903, %v2925
  %2927 = vst [vmem:[%s5 + $0x18] sm:$0x4] %v2926
  %v2928 = vld [vmem:[%s5 + $0x1c] sm:$0x4]
  %v2929 = vsel %vm2906, %v2904, %v2928
  %2930 = vst [vmem:[%s5 + $0x1c] sm:$0x4] %v2929
  %v2931 = vld [vmem:[%s0] sm:$0x88]
  %v2932 = vld [vmem:[%s0 + $0x8] sm:$0x8]
  %v2933 = vld [vmem:[%s0 + $0xc] sm:$0x88]
  %v2934 = vld [vmem:[%s0 + $0x14] sm:$0x8]
  %v2935 = vld [vmem:[%s0 + $0x18] sm:$0x88]
  %v2936 = vld [vmem:[%s0 + $0x20] sm:$0x8]
  %v2937 = vld [vmem:[%s0 + $0x24] sm:$0x88]
  %v2938 = vld [vmem:[%s0 + $0x2c] sm:$0x8]
  %v2939 = vld [vmem:[%s0 + $0x30] sm:$0x88]
  %v2940 = vld [vmem:[%s0 + $0x38] sm:$0x8]
  %v2941 = vld [vmem:[%s0 + $0x3c] sm:$0x88]
  %v2942 = vld [vmem:[%s0 + $0x44] sm:$0x8]
  %v2943 = vld [vmem:[%s0 + $0x48] sm:$0x88]
  %v2944 = vld [vmem:[%s0 + $0x50] sm:$0x8]
  %v2945 = vld [vmem:[%s0 + $0x54] sm:$0x88]
  %v2946 = vld [vmem:[%s0 + $0x5c] sm:$0x8]
  %v2947 = vunpack.c.l.bf16 %v2931
  %v2948 = vunpack.c.h.bf16 %v2931
  %v2949 = vunpack.c.l.bf16 %v2932
  %v2950 = vunpack.c.l.bf16 %v2933
  %v2951 = vunpack.c.h.bf16 %v2933
  %v2952 = vunpack.c.l.bf16 %v2934
  %v2953 = vunpack.c.l.bf16 %v2935
  %v2954 = vunpack.c.h.bf16 %v2935
  %v2955 = vunpack.c.l.bf16 %v2936
  %v2956 = vunpack.c.l.bf16 %v2937
  %v2957 = vunpack.c.h.bf16 %v2937
  %v2958 = vunpack.c.l.bf16 %v2938
  %v2959 = vunpack.c.l.bf16 %v2939
  %v2960 = vunpack.c.h.bf16 %v2939
  %v2961 = vunpack.c.l.bf16 %v2940
  %v2962 = vunpack.c.l.bf16 %v2941
  %v2963 = vunpack.c.h.bf16 %v2941
  %v2964 = vunpack.c.l.bf16 %v2942
  %v2965 = vunpack.c.l.bf16 %v2943
  %v2966 = vunpack.c.h.bf16 %v2943
  %v2967 = vunpack.c.l.bf16 %v2944
  %v2968 = vunpack.c.l.bf16 %v2945
  %v2969 = vunpack.c.h.bf16 %v2945
  %v2970 = vunpack.c.l.bf16 %v2946
  %v2971 = vadd.f32 %v2947, %v118
  %v2972 = vadd.f32 %v2948, %v119
  %v2973 = vadd.f32 %v2949, %v120
  %v2974 = vadd.f32 %v2950, %v121
  %v2975 = vadd.f32 %v2951, %v122
  %v2976 = vadd.f32 %v2952, %v123
  %v2977 = vadd.f32 %v2953, %v124
  %v2978 = vadd.f32 %v2954, %v125
  %v2979 = vadd.f32 %v2955, %v126
  %v2980 = vadd.f32 %v2956, %v127
  %v2981 = vadd.f32 %v2957, %v128
  %v2982 = vadd.f32 %v2958, %v129
  %v2983 = vadd.f32 %v2959, %v130
  %v2984 = vadd.f32 %v2960, %v131
  %v2985 = vadd.f32 %v2961, %v132
  %v2986 = vadd.f32 %v2962, %v133
  %v2987 = vadd.f32 %v2963, %v134
  %v2988 = vadd.f32 %v2964, %v135
  %v2989 = vadd.f32 %v2965, %v68
  %v2990 = vadd.f32 %v2966, %v69
  %v2991 = vadd.f32 %v2967, %v70
  %v2992 = vadd.f32 %v2968, %v115
  %v2993 = vadd.f32 %v2969, %v116
  %v2994 = vadd.f32 %v2970, %v117
  %v3003 = vunpack.c.l.b16 %v2897
  %v3004 = vunpack.c.l.b16 %v2898
  %v3005 = vunpack.c.l.b16 %v2899
  %v3006 = vunpack.c.l.b16 %v2900
  %v3007 = vunpack.c.l.b16 %v2901
  %v3008 = vunpack.c.l.b16 %v2902
  %v3009 = vunpack.c.l.b16 %v2903
  %v3010 = vunpack.c.l.b16 %v2904
  %v3011 = vrot.slane %v3003, 5
  %v3012 = vrot.slane %v3004, 4
  %v3013 = vsel %vm743, %v3012, %v3011
  %v3014 = vrot.slane %v3005, 3
  %v3015 = vsel %vm746, %v3014, %v3013
  %v3016 = vrot.slane %v3006, 2
  %v3017 = vsel %vm749, %v3016, %v3015
  %v3018 = vrot.slane %v3007, 1
  %v3019 = vsel %vm752, %v3018, %v3017
  %v3020 = vsel %vm755, %v3008, %v3019
  %v3021 = vrot.slane %v3009, 7
  %v3022 = vsel %vm758, %v3021, %v3020
  %v3023 = vrot.slane %v3010, 6
  %v3024 = vsel %vm761, %v3023, %v3022
  %v3025 = vpack.c.b16 %v3024, %v3024
  %3027 = vmatprep.subr.bf16.mxu0 %v266
  %3028 = vmatpush1.bf16.msra.mxu0 %v265
  %3029 = vmatprep.subr.bf16.mxu0 %v269
  %3030 = vmatpush1.bf16.msra.mxu0 %v268
  %3031 = vmatprep.subr.bf16.mxu0 %v272
  %3032 = vmatpush1.bf16.msra.mxu0 %v271
  %3033 = vmatprep.subr.bf16.mxu0 %v275
  %3034 = vmatpush1.bf16.msra.mxu0 %v274
  %3035 = vmatprep.subr.bf16.mxu0 %v278
  %3036 = vmatpush1.bf16.msra.mxu0 %v277
  %3037 = vmatprep.subr.bf16.mxu0 %v281
  %3038 = vmatpush1.bf16.msra.mxu0 %v280
  %3039 = vmatprep.subr.bf16.mxu0 %v284
  %3040 = vmatpush1.bf16.msra.mxu0 %v283
  %3041 = vmatprep.subr.bf16.mxu0 %v287
  %3042 = vmatpush1.bf16.msra.mxu0 %v286
  %3043 = vmatprep.subr.bf16.mxu0 0
  %3044 = vmatpush1.bf16.msra.mxu0 0
  %3045 = vmatprep.subr.bf16.mxu0 0
  %3046 = vmatpush1.bf16.msra.mxu0 0
  %3047 = vmatprep.subr.bf16.mxu0 0
  %3048 = vmatpush1.bf16.msra.mxu0 0
  %3049 = vmatprep.subr.bf16.mxu0 0
  %3050 = vmatpush1.bf16.msra.mxu0 0
  %3051 = vmatprep.subr.bf16.mxu0 0
  %3052 = vmatpush1.bf16.msra.mxu0 0
  %3053 = vmatprep.subr.bf16.mxu0 0
  %3054 = vmatpush1.bf16.msra.mxu0 0
  %3055 = vmatprep.subr.bf16.mxu0 0
  %3056 = vmatpush1.bf16.msra.mxu0 0
  %3057 = vmatprep.subr.bf16.mxu0 0
  %3058 = vmatpush1.bf16.msra.mxu0 0
  %3059 = vmatprep.mubr.bf16.mxu0 0
  %3060 = vmatmul.mubr.bf16.gmra.mrb[0].mxu0 %v3025
  %v3061 = vpop.f32.mrb[0].mxu0
  %v3062 = vadd.f32 0.0, %v3061
  %v3063 = vpop.f32.mrb[0].mxu0
  %v3064 = vadd.f32 0.0, %v3063
  %v3065 = vpop.f32.mrb[0].mxu0
  %v3066 = vpop.f32.mrb[0].mxu0
  %3067 = vdwg.mxu0
  %3068 = vmatprep.subr.bf16.mxu0 0
  %3069 = vmatpush1.bf16.msra.mxu0 %v267
  %3070 = vmatprep.subr.bf16.mxu0 0
  %3071 = vmatpush1.bf16.msra.mxu0 %v270
  %3072 = vmatprep.subr.bf16.mxu0 0
  %3073 = vmatpush1.bf16.msra.mxu0 %v273
  %3074 = vmatprep.subr.bf16.mxu0 0
  %3075 = vmatpush1.bf16.msra.mxu0 %v276
  %3076 = vmatprep.subr.bf16.mxu0 0
  %3077 = vmatpush1.bf16.msra.mxu0 %v279
  %3078 = vmatprep.subr.bf16.mxu0 0
  %3079 = vmatpush1.bf16.msra.mxu0 %v282
  %3080 = vmatprep.subr.bf16.mxu0 0
  %3081 = vmatpush1.bf16.msra.mxu0 %v285
  %3082 = vmatprep.subr.bf16.mxu0 0
  %3083 = vmatpush1.bf16.msra.mxu0 %v288
  %3084 = vmatprep.subr.bf16.mxu0 0
  %3085 = vmatpush1.bf16.msra.mxu0 0
  %3086 = vmatprep.subr.bf16.mxu0 0
  %3087 = vmatpush1.bf16.msra.mxu0 0
  %3088 = vmatprep.subr.bf16.mxu0 0
  %3089 = vmatpush1.bf16.msra.mxu0 0
  %3090 = vmatprep.subr.bf16.mxu0 0
  %3091 = vmatpush1.bf16.msra.mxu0 0
  %3092 = vmatprep.subr.bf16.mxu0 0
  %3093 = vmatpush1.bf16.msra.mxu0 0
  %3094 = vmatprep.subr.bf16.mxu0 0
  %3095 = vmatpush1.bf16.msra.mxu0 0
  %3096 = vmatprep.subr.bf16.mxu0 0
  %3097 = vmatpush1.bf16.msra.mxu0 0
  %3098 = vmatprep.subr.bf16.mxu0 0
  %3099 = vmatpush1.bf16.msra.mxu0 0
  %3100 = vmatprep.mubr.bf16.mxu0 0
  %3101 = vmatmul.mubr.bf16.gmra.mrb[0].mxu0 %v3025
  %v3102 = vpop.f32.mrb[0].mxu0
  %v3103 = vadd.f32 0.0, %v3102
  %v3104 = vpop.f32.mrb[0].mxu0
  %v3105 = vpop.f32.mrb[0].mxu0
  %v3106 = vpop.f32.mrb[0].mxu0
  %3107 = vdwg.mxu0
  %v3109 = vrot.slane %v3062, 2
  %v3110 = vrot.slane %v3062, 3
  %v3111 = vrot.slane %v3062, 4
  %v3112 = vrot.slane %v3062, 5
  %v3113 = vrot.slane %v3062, 6
  %v3114 = vrot.slane %v3062, 7
  %v3115 = vrot.slane %v3062, 1
  %v3124 = vadd.f32 %v2971, %v3109
  %v3125 = vadd.f32 %v2974, %v3110
  %v3126 = vadd.f32 %v2977, %v3111
  %v3127 = vadd.f32 %v2980, %v3112
  %v3128 = vadd.f32 %v2983, %v3113
  %v3129 = vadd.f32 %v2986, %v3114
  %v3130 = vadd.f32 %v2989, %v3062
  %v3131 = vadd.f32 %v2992, %v3115
  %v3132 = vxor.u32 %v3124, 2147483648
  %v3133 = vxor.u32 %v3125, 2147483648
  %v3134 = vxor.u32 %v3126, 2147483648
  %v3135 = vxor.u32 %v3127, 2147483648
  %v3136 = vxor.u32 %v3128, 2147483648
  %v3137 = vxor.u32 %v3129, 2147483648
  %v3138 = vxor.u32 %v3130, 2147483648
  %v3139 = vxor.u32 %v3131, 2147483648
  %v3140 = vmul.f32 %v3132, 1.442695
  %v3141 = vpow.pop %v3140
  %v3142 = vmul.f32 %v3133, 1.442695
  %v3143 = vpow.pop %v3142
  %v3144 = vmul.f32 %v3134, 1.442695
  %v3145 = vpow.pop %v3144
  %v3146 = vmul.f32 %v3135, 1.442695
  %v3147 = vpow.pop %v3146
  %v3148 = vmul.f32 %v3136, 1.442695
  %v3149 = vpow.pop %v3148
  %v3150 = vmul.f32 %v3137, 1.442695
  %v3151 = vpow.pop %v3150
  %v3152 = vmul.f32 %v3138, 1.442695
  %v3153 = vpow.pop %v3152
  %v3154 = vmul.f32 %v3139, 1.442695
  %v3155 = vpow.pop %v3154
  %v3156 = vadd.f32 %v3141, 1.0
  %v3157 = vadd.f32 %v3143, 1.0
  %v3158 = vadd.f32 %v3145, 1.0
  %v3159 = vadd.f32 %v3147, 1.0
  %v3160 = vadd.f32 %v3149, 1.0
  %v3161 = vadd.f32 %v3151, 1.0
  %v3162 = vadd.f32 %v3153, 1.0
  %v3163 = vadd.f32 %v3155, 1.0
  %v3164 = vrcp.pop %v3156
  %v3165 = vmul.f32 1.0, %v3164
  %v3166 = vrcp.pop %v3157
  %v3167 = vmul.f32 1.0, %v3166
  %v3168 = vrcp.pop %v3158
  %v3169 = vmul.f32 1.0, %v3168
  %v3170 = vrcp.pop %v3159
  %v3171 = vmul.f32 1.0, %v3170
  %v3172 = vrcp.pop %v3160
  %v3173 = vmul.f32 1.0, %v3172
  %v3174 = vrcp.pop %v3161
  %v3175 = vmul.f32 1.0, %v3174
  %v3176 = vrcp.pop %v3162
  %v3177 = vmul.f32 1.0, %v3176
  %v3178 = vrcp.pop %v3163
  %v3179 = vmul.f32 1.0, %v3178
  %v3181 = vrot.slane %v3064, 2
  %v3182 = vrot.slane %v3064, 3
  %v3183 = vrot.slane %v3064, 4
  %v3184 = vrot.slane %v3064, 5
  %v3185 = vrot.slane %v3064, 6
  %v3186 = vrot.slane %v3064, 7
  %v3187 = vrot.slane %v3064, 1
  %v3196 = vadd.f32 %v2972, %v3181
  %v3197 = vadd.f32 %v2975, %v3182
  %v3198 = vadd.f32 %v2978, %v3183
  %v3199 = vadd.f32 %v2981, %v3184
  %v3200 = vadd.f32 %v2984, %v3185
  %v3201 = vadd.f32 %v2987, %v3186
  %v3202 = vadd.f32 %v2990, %v3064
  %v3203 = vadd.f32 %v2993, %v3187
  %v3204 = vxor.u32 %v3196, 2147483648
  %v3205 = vxor.u32 %v3197, 2147483648
  %v3206 = vxor.u32 %v3198, 2147483648
  %v3207 = vxor.u32 %v3199, 2147483648
  %v3208 = vxor.u32 %v3200, 2147483648
  %v3209 = vxor.u32 %v3201, 2147483648
  %v3210 = vxor.u32 %v3202, 2147483648
  %v3211 = vxor.u32 %v3203, 2147483648
  %v3212 = vmul.f32 %v3204, 1.442695
  %v3213 = vpow.pop %v3212
  %v3214 = vmul.f32 %v3205, 1.442695
  %v3215 = vpow.pop %v3214
  %v3216 = vmul.f32 %v3206, 1.442695
  %v3217 = vpow.pop %v3216
  %v3218 = vmul.f32 %v3207, 1.442695
  %v3219 = vpow.pop %v3218
  %v3220 = vmul.f32 %v3208, 1.442695
  %v3221 = vpow.pop %v3220
  %v3222 = vmul.f32 %v3209, 1.442695
  %v3223 = vpow.pop %v3222
  %v3224 = vmul.f32 %v3210, 1.442695
  %v3225 = vpow.pop %v3224
  %v3226 = vmul.f32 %v3211, 1.442695
  %v3227 = vpow.pop %v3226
  %v3228 = vadd.f32 %v3213, 1.0
  %v3229 = vadd.f32 %v3215, 1.0
  %v3230 = vadd.f32 %v3217, 1.0
  %v3231 = vadd.f32 %v3219, 1.0
  %v3232 = vadd.f32 %v3221, 1.0
  %v3233 = vadd.f32 %v3223, 1.0
  %v3234 = vadd.f32 %v3225, 1.0
  %v3235 = vadd.f32 %v3227, 1.0
  %v3236 = vrcp.pop %v3228
  %v3237 = vmul.f32 1.0, %v3236
  %v3238 = vrcp.pop %v3229
  %v3239 = vmul.f32 1.0, %v3238
  %v3240 = vrcp.pop %v3230
  %v3241 = vmul.f32 1.0, %v3240
  %v3242 = vrcp.pop %v3231
  %v3243 = vmul.f32 1.0, %v3242
  %v3244 = vrcp.pop %v3232
  %v3245 = vmul.f32 1.0, %v3244
  %v3246 = vrcp.pop %v3233
  %v3247 = vmul.f32 1.0, %v3246
  %v3248 = vrcp.pop %v3234
  %v3249 = vmul.f32 1.0, %v3248
  %v3250 = vrcp.pop %v3235
  %v3251 = vmul.f32 1.0, %v3250
  %v3252 = vadd.f32 %v3103, %v66
  %v3254 = vrot.slane %v3252, 2
  %v3255 = vrot.slane %v3252, 3
  %v3256 = vrot.slane %v3252, 4
  %v3257 = vrot.slane %v3252, 5
  %v3258 = vrot.slane %v3252, 6
  %v3259 = vrot.slane %v3252, 7
  %v3260 = vrot.slane %v3252, 1
  %v3269 = vmul.f32 %v3165, %v3254
  %v3270 = vmul.f32 %v3167, %v3255
  %v3271 = vmul.f32 %v3169, %v3256
  %v3272 = vmul.f32 %v3171, %v3257
  %v3273 = vmul.f32 %v3173, %v3258
  %v3274 = vmul.f32 %v3175, %v3259
  %v3275 = vmul.f32 %v3177, %v3252
  %v3276 = vmul.f32 %v3179, %v3260
  %v3277 = vadd.f32 %v2973, %v3269
  %v3278 = vadd.f32 %v2976, %v3270
  %v3279 = vadd.f32 %v2979, %v3271
  %v3280 = vadd.f32 %v2982, %v3272
  %v3281 = vadd.f32 %v2985, %v3273
  %v3282 = vadd.f32 %v2988, %v3274
  %v3283 = vadd.f32 %v2991, %v3275
  %v3284 = vadd.f32 %v2994, %v3276
  %v3285 = vtanh.pop %v3277
  %v3286 = vtanh.pop %v3278
  %v3287 = vtanh.pop %v3279
  %v3288 = vtanh.pop %v3280
  %v3289 = vtanh.pop %v3281
  %v3290 = vtanh.pop %v3282
  %v3291 = vtanh.pop %v3283
  %v3292 = vtanh.pop %v3284
  %v3293 = vsub.f32 1.0, %v3237
  %v3294 = vsub.f32 1.0, %v3239
  %v3295 = vsub.f32 1.0, %v3241
  %v3296 = vsub.f32 1.0, %v3243
  %v3297 = vsub.f32 1.0, %v3245
  %v3298 = vsub.f32 1.0, %v3247
  %v3299 = vsub.f32 1.0, %v3249
  %v3300 = vsub.f32 1.0, %v3251
  %v3301 = vmul.f32 %v3293, %v3285
  %v3302 = vmul.f32 %v3294, %v3286
  %v3303 = vmul.f32 %v3295, %v3287
  %v3304 = vmul.f32 %v3296, %v3288
  %v3305 = vmul.f32 %v3297, %v3289
  %v3306 = vmul.f32 %v3298, %v3290
  %v3307 = vmul.f32 %v3299, %v3291
  %v3308 = vmul.f32 %v3300, %v3292
  %v3317 = vrot.slane %v2889, 7
  %v3318 = vrot.slane %v2890, 7
  %v3319 = vrot.slane %v2891, 7
  %v3320 = vrot.slane %v2892, 7
  %v3321 = vrot.slane %v2893, 7
  %v3322 = vrot.slane %v2894, 7
  %v3323 = vrot.slane %v2895, 7
  %v3324 = vrot.slane %v2896, 7
  %v3333 = vmul.f32 %v3237, %v3317
  %v3334 = vmul.f32 %v3239, %v3318
  %v3335 = vmul.f32 %v3241, %v3319
  %v3336 = vmul.f32 %v3243, %v3320
  %v3337 = vmul.f32 %v3245, %v3321
  %v3338 = vmul.f32 %v3247, %v3322
  %v3339 = vmul.f32 %v3249, %v3323
  %v3340 = vmul.f32 %v3251, %v3324
  %v3341 = vadd.f32 %v3301, %v3333
  %v3342 = vadd.f32 %v3302, %v3334
  %v3343 = vadd.f32 %v3303, %v3335
  %v3344 = vadd.f32 %v3304, %v3336
  %v3345 = vadd.f32 %v3305, %v3337
  %v3346 = vadd.f32 %v3306, %v3338
  %v3347 = vadd.f32 %v3307, %v3339
  %v3348 = vadd.f32 %v3308, %v3340
  %v3349 = vpack.c.bf16 %v3341, %v3341
  %v3350 = vpack.c.bf16 %v3342, %v3342
  %v3351 = vpack.c.bf16 %v3343, %v3343
  %v3352 = vpack.c.bf16 %v3344, %v3344
  %v3353 = vpack.c.bf16 %v3345, %v3345
  %v3354 = vpack.c.bf16 %v3346, %v3346
  %v3355 = vpack.c.bf16 %v3347, %v3347
  %v3356 = vpack.c.bf16 %v3348, %v3348
  %vm3357 = vcmask 1043459
  %vm3358 = vsmask.f32 3328
  %vm3359 = vmand %vm3357, %vm3358
  %v3360 = vld [vmem:[%s5] sm:$0x8]
  %v3361 = vsel %vm3359, %v3349, %v3360
  %3362 = vst [vmem:[%s5] sm:$0x8] %v3361
  %v3363 = vld [vmem:[%s5 + $0x4] sm:$0x8]
  %v3364 = vsel %vm3359, %v3350, %v3363
  %3365 = vst [vmem:[%s5 + $0x4] sm:$0x8] %v3364
  %v3366 = vld [vmem:[%s5 + $0x8] sm:$0x8]
  %v3367 = vsel %vm3359, %v3351, %v3366
  %3368 = vst [vmem:[%s5 + $0x8] sm:$0x8] %v3367
  %v3369 = vld [vmem:[%s5 + $0xc] sm:$0x8]
  %v3370 = vsel %vm3359, %v3352, %v3369
  %3371 = vst [vmem:[%s5 + $0xc] sm:$0x8] %v3370
  %v3372 = vld [vmem:[%s5 + $0x10] sm:$0x8]
  %v3373 = vsel %vm3359, %v3353, %v3372
  %3374 = vst [vmem:[%s5 + $0x10] sm:$0x8] %v3373
  %v3375 = vld [vmem:[%s5 + $0x14] sm:$0x8]
  %v3376 = vsel %vm3359, %v3354, %v3375
  %3377 = vst [vmem:[%s5 + $0x14] sm:$0x8] %v3376
  %v3378 = vld [vmem:[%s5 + $0x18] sm:$0x8]
  %v3379 = vsel %vm3359, %v3355, %v3378
  %3380 = vst [vmem:[%s5 + $0x18] sm:$0x8] %v3379
  %v3381 = vld [vmem:[%s5 + $0x1c] sm:$0x8]
  %v3382 = vsel %vm3359, %v3356, %v3381
  %3383 = vst [vmem:[%s5 + $0x1c] sm:$0x8] %v3382
  %v3384 = vld [vmem:[%s0] sm:$0x88]
  %v3385 = vld [vmem:[%s0 + $0x8] sm:$0x8]
  %v3386 = vld [vmem:[%s0 + $0xc] sm:$0x88]
  %v3387 = vld [vmem:[%s0 + $0x14] sm:$0x8]
  %v3388 = vld [vmem:[%s0 + $0x18] sm:$0x88]
  %v3389 = vld [vmem:[%s0 + $0x20] sm:$0x8]
  %v3390 = vld [vmem:[%s0 + $0x24] sm:$0x88]
  %v3391 = vld [vmem:[%s0 + $0x2c] sm:$0x8]
  %v3392 = vld [vmem:[%s0 + $0x30] sm:$0x88]
  %v3393 = vld [vmem:[%s0 + $0x38] sm:$0x8]
  %v3394 = vld [vmem:[%s0 + $0x3c] sm:$0x88]
  %v3395 = vld [vmem:[%s0 + $0x44] sm:$0x8]
  %v3396 = vld [vmem:[%s0 + $0x48] sm:$0x88]
  %v3397 = vld [vmem:[%s0 + $0x50] sm:$0x8]
  %v3398 = vld [vmem:[%s0 + $0x54] sm:$0x88]
  %v3399 = vld [vmem:[%s0 + $0x5c] sm:$0x8]
  %v3400 = vunpack.c.l.bf16 %v3384
  %v3401 = vunpack.c.h.bf16 %v3384
  %v3402 = vunpack.c.l.bf16 %v3385
  %v3403 = vunpack.c.l.bf16 %v3386
  %v3404 = vunpack.c.h.bf16 %v3386
  %v3405 = vunpack.c.l.bf16 %v3387
  %v3406 = vunpack.c.l.bf16 %v3388
  %v3407 = vunpack.c.h.bf16 %v3388
  %v3408 = vunpack.c.l.bf16 %v3389
  %v3409 = vunpack.c.l.bf16 %v3390
  %v3410 = vunpack.c.h.bf16 %v3390
  %v3411 = vunpack.c.l.bf16 %v3391
  %v3412 = vunpack.c.l.bf16 %v3392
  %v3413 = vunpack.c.h.bf16 %v3392
  %v3414 = vunpack.c.l.bf16 %v3393
  %v3415 = vunpack.c.l.bf16 %v3394
  %v3416 = vunpack.c.h.bf16 %v3394
  %v3417 = vunpack.c.l.bf16 %v3395
  %v3418 = vunpack.c.l.bf16 %v3396
  %v3419 = vunpack.c.h.bf16 %v3396
  %v3420 = vunpack.c.l.bf16 %v3397
  %v3421 = vunpack.c.l.bf16 %v3398
  %v3422 = vunpack.c.h.bf16 %v3398
  %v3423 = vunpack.c.l.bf16 %v3399
  %v3424 = vadd.f32 %v3400, %v115
  %v3425 = vadd.f32 %v3401, %v116
  %v3426 = vadd.f32 %v3402, %v117
  %v3427 = vadd.f32 %v3403, %v118
  %v3428 = vadd.f32 %v3404, %v119
  %v3429 = vadd.f32 %v3405, %v120
  %v3430 = vadd.f32 %v3406, %v121
  %v3431 = vadd.f32 %v3407, %v122
  %v3432 = vadd.f32 %v3408, %v123
  %v3433 = vadd.f32 %v3409, %v124
  %v3434 = vadd.f32 %v3410, %v125
  %v3435 = vadd.f32 %v3411, %v126
  %v3436 = vadd.f32 %v3412, %v127
  %v3437 = vadd.f32 %v3413, %v128
  %v3438 = vadd.f32 %v3414, %v129
  %v3439 = vadd.f32 %v3415, %v130
  %v3440 = vadd.f32 %v3416, %v131
  %v3441 = vadd.f32 %v3417, %v132
  %v3442 = vadd.f32 %v3418, %v133
  %v3443 = vadd.f32 %v3419, %v134
  %v3444 = vadd.f32 %v3420, %v135
  %v3445 = vadd.f32 %v3421, %v68
  %v3446 = vadd.f32 %v3422, %v69
  %v3447 = vadd.f32 %v3423, %v70
  %v3456 = vunpack.c.l.b16 %v3349
  %v3457 = vunpack.c.l.b16 %v3350
  %v3458 = vunpack.c.l.b16 %v3351
  %v3459 = vunpack.c.l.b16 %v3352
  %v3460 = vunpack.c.l.b16 %v3353
  %v3461 = vunpack.c.l.b16 %v3354
  %v3462 = vunpack.c.l.b16 %v3355
  %v3463 = vunpack.c.l.b16 %v3356
  %v3464 = vrot.slane %v3456, 6
  %v3465 = vrot.slane %v3457, 5
  %v3466 = vsel %vm743, %v3465, %v3464
  %v3467 = vrot.slane %v3458, 4
  %v3468 = vsel %vm746, %v3467, %v3466
  %v3469 = vrot.slane %v3459, 3
  %v3470 = vsel %vm749, %v3469, %v3468
  %v3471 = vrot.slane %v3460, 2
  %v3472 = vsel %vm752, %v3471, %v3470
  %v3473 = vrot.slane %v3461, 1
  %v3474 = vsel %vm755, %v3473, %v3472
  %v3475 = vsel %vm758, %v3462, %v3474
  %v3476 = vrot.slane %v3463, 7
  %v3477 = vsel %vm761, %v3476, %v3475
  %v3478 = vpack.c.b16 %v3477, %v3477
  %3480 = vmatprep.subr.bf16.mxu0 %v266
  %3481 = vmatpush1.bf16.msra.mxu0 %v265
  %3482 = vmatprep.subr.bf16.mxu0 %v269
  %3483 = vmatpush1.bf16.msra.mxu0 %v268
  %3484 = vmatprep.subr.bf16.mxu0 %v272
  %3485 = vmatpush1.bf16.msra.mxu0 %v271
  %3486 = vmatprep.subr.bf16.mxu0 %v275
  %3487 = vmatpush1.bf16.msra.mxu0 %v274
  %3488 = vmatprep.subr.bf16.mxu0 %v278
  %3489 = vmatpush1.bf16.msra.mxu0 %v277
  %3490 = vmatprep.subr.bf16.mxu0 %v281
  %3491 = vmatpush1.bf16.msra.mxu0 %v280
  %3492 = vmatprep.subr.bf16.mxu0 %v284
  %3493 = vmatpush1.bf16.msra.mxu0 %v283
  %3494 = vmatprep.subr.bf16.mxu0 %v287
  %3495 = vmatpush1.bf16.msra.mxu0 %v286
  %3496 = vmatprep.subr.bf16.mxu0 0
  %3497 = vmatpush1.bf16.msra.mxu0 0
  %3498 = vmatprep.subr.bf16.mxu0 0
  %3499 = vmatpush1.bf16.msra.mxu0 0
  %3500 = vmatprep.subr.bf16.mxu0 0
  %3501 = vmatpush1.bf16.msra.mxu0 0
  %3502 = vmatprep.subr.bf16.mxu0 0
  %3503 = vmatpush1.bf16.msra.mxu0 0
  %3504 = vmatprep.subr.bf16.mxu0 0
  %3505 = vmatpush1.bf16.msra.mxu0 0
  %3506 = vmatprep.subr.bf16.mxu0 0
  %3507 = vmatpush1.bf16.msra.mxu0 0
  %3508 = vmatprep.subr.bf16.mxu0 0
  %3509 = vmatpush1.bf16.msra.mxu0 0
  %3510 = vmatprep.subr.bf16.mxu0 0
  %3511 = vmatpush1.bf16.msra.mxu0 0
  %3512 = vmatprep.mubr.bf16.mxu0 0
  %3513 = vmatmul.mubr.bf16.gmra.mrb[0].mxu0 %v3478
  %v3514 = vpop.f32.mrb[0].mxu0
  %v3515 = vadd.f32 0.0, %v3514
  %v3516 = vpop.f32.mrb[0].mxu0
  %v3517 = vadd.f32 0.0, %v3516
  %v3518 = vpop.f32.mrb[0].mxu0
  %v3519 = vpop.f32.mrb[0].mxu0
  %3520 = vdwg.mxu0
  %3521 = vmatprep.subr.bf16.mxu0 0
  %3522 = vmatpush1.bf16.msra.mxu0 %v267
  %3523 = vmatprep.subr.bf16.mxu0 0
  %3524 = vmatpush1.bf16.msra.mxu0 %v270
  %3525 = vmatprep.subr.bf16.mxu0 0
  %3526 = vmatpush1.bf16.msra.mxu0 %v273
  %3527 = vmatprep.subr.bf16.mxu0 0
  %3528 = vmatpush1.bf16.msra.mxu0 %v276
  %3529 = vmatprep.subr.bf16.mxu0 0
  %3530 = vmatpush1.bf16.msra.mxu0 %v279
  %3531 = vmatprep.subr.bf16.mxu0 0
  %3532 = vmatpush1.bf16.msra.mxu0 %v282
  %3533 = vmatprep.subr.bf16.mxu0 0
  %3534 = vmatpush1.bf16.msra.mxu0 %v285
  %3535 = vmatprep.subr.bf16.mxu0 0
  %3536 = vmatpush1.bf16.msra.mxu0 %v288
  %3537 = vmatprep.subr.bf16.mxu0 0
  %3538 = vmatpush1.bf16.msra.mxu0 0
  %3539 = vmatprep.subr.bf16.mxu0 0
  %3540 = vmatpush1.bf16.msra.mxu0 0
  %3541 = vmatprep.subr.bf16.mxu0 0
  %3542 = vmatpush1.bf16.msra.mxu0 0
  %3543 = vmatprep.subr.bf16.mxu0 0
  %3544 = vmatpush1.bf16.msra.mxu0 0
  %3545 = vmatprep.subr.bf16.mxu0 0
  %3546 = vmatpush1.bf16.msra.mxu0 0
  %3547 = vmatprep.subr.bf16.mxu0 0
  %3548 = vmatpush1.bf16.msra.mxu0 0
  %3549 = vmatprep.subr.bf16.mxu0 0
  %3550 = vmatpush1.bf16.msra.mxu0 0
  %3551 = vmatprep.subr.bf16.mxu0 0
  %3552 = vmatpush1.bf16.msra.mxu0 0
  %3553 = vmatprep.mubr.bf16.mxu0 0
  %3554 = vmatmul.mubr.bf16.gmra.mrb[0].mxu0 %v3478
  %v3555 = vpop.f32.mrb[0].mxu0
  %v3556 = vadd.f32 0.0, %v3555
  %v3557 = vpop.f32.mrb[0].mxu0
  %v3558 = vpop.f32.mrb[0].mxu0
  %v3559 = vpop.f32.mrb[0].mxu0
  %3560 = vdwg.mxu0
  %v3562 = vrot.slane %v3515, 1
  %v3563 = vrot.slane %v3515, 2
  %v3564 = vrot.slane %v3515, 3
  %v3565 = vrot.slane %v3515, 4
  %v3566 = vrot.slane %v3515, 5
  %v3567 = vrot.slane %v3515, 6
  %v3568 = vrot.slane %v3515, 7
  %v3577 = vadd.f32 %v3424, %v3562
  %v3578 = vadd.f32 %v3427, %v3563
  %v3579 = vadd.f32 %v3430, %v3564
  %v3580 = vadd.f32 %v3433, %v3565
  %v3581 = vadd.f32 %v3436, %v3566
  %v3582 = vadd.f32 %v3439, %v3567
  %v3583 = vadd.f32 %v3442, %v3568
  %v3584 = vadd.f32 %v3445, %v3515
  %v3585 = vxor.u32 %v3577, 2147483648
  %v3586 = vxor.u32 %v3578, 2147483648
  %v3587 = vxor.u32 %v3579, 2147483648
  %v3588 = vxor.u32 %v3580, 2147483648
  %v3589 = vxor.u32 %v3581, 2147483648
  %v3590 = vxor.u32 %v3582, 2147483648
  %v3591 = vxor.u32 %v3583, 2147483648
  %v3592 = vxor.u32 %v3584, 2147483648
  %v3593 = vmul.f32 %v3585, 1.442695
  %v3594 = vpow.pop %v3593
  %v3595 = vmul.f32 %v3586, 1.442695
  %v3596 = vpow.pop %v3595
  %v3597 = vmul.f32 %v3587, 1.442695
  %v3598 = vpow.pop %v3597
  %v3599 = vmul.f32 %v3588, 1.442695
  %v3600 = vpow.pop %v3599
  %v3601 = vmul.f32 %v3589, 1.442695
  %v3602 = vpow.pop %v3601
  %v3603 = vmul.f32 %v3590, 1.442695
  %v3604 = vpow.pop %v3603
  %v3605 = vmul.f32 %v3591, 1.442695
  %v3606 = vpow.pop %v3605
  %v3607 = vmul.f32 %v3592, 1.442695
  %v3608 = vpow.pop %v3607
  %v3609 = vadd.f32 %v3594, 1.0
  %v3610 = vadd.f32 %v3596, 1.0
  %v3611 = vadd.f32 %v3598, 1.0
  %v3612 = vadd.f32 %v3600, 1.0
  %v3613 = vadd.f32 %v3602, 1.0
  %v3614 = vadd.f32 %v3604, 1.0
  %v3615 = vadd.f32 %v3606, 1.0
  %v3616 = vadd.f32 %v3608, 1.0
  %v3617 = vrcp.pop %v3609
  %v3618 = vmul.f32 1.0, %v3617
  %v3619 = vrcp.pop %v3610
  %v3620 = vmul.f32 1.0, %v3619
  %v3621 = vrcp.pop %v3611
  %v3622 = vmul.f32 1.0, %v3621
  %v3623 = vrcp.pop %v3612
  %v3624 = vmul.f32 1.0, %v3623
  %v3625 = vrcp.pop %v3613
  %v3626 = vmul.f32 1.0, %v3625
  %v3627 = vrcp.pop %v3614
  %v3628 = vmul.f32 1.0, %v3627
  %v3629 = vrcp.pop %v3615
  %v3630 = vmul.f32 1.0, %v3629
  %v3631 = vrcp.pop %v3616
  %v3632 = vmul.f32 1.0, %v3631
  %v3634 = vrot.slane %v3517, 1
  %v3635 = vrot.slane %v3517, 2
  %v3636 = vrot.slane %v3517, 3
  %v3637 = vrot.slane %v3517, 4
  %v3638 = vrot.slane %v3517, 5
  %v3639 = vrot.slane %v3517, 6
  %v3640 = vrot.slane %v3517, 7
  %v3649 = vadd.f32 %v3425, %v3634
  %v3650 = vadd.f32 %v3428, %v3635
  %v3651 = vadd.f32 %v3431, %v3636
  %v3652 = vadd.f32 %v3434, %v3637
  %v3653 = vadd.f32 %v3437, %v3638
  %v3654 = vadd.f32 %v3440, %v3639
  %v3655 = vadd.f32 %v3443, %v3640
  %v3656 = vadd.f32 %v3446, %v3517
  %v3657 = vxor.u32 %v3649, 2147483648
  %v3658 = vxor.u32 %v3650, 2147483648
  %v3659 = vxor.u32 %v3651, 2147483648
  %v3660 = vxor.u32 %v3652, 2147483648
  %v3661 = vxor.u32 %v3653, 2147483648
  %v3662 = vxor.u32 %v3654, 2147483648
  %v3663 = vxor.u32 %v3655, 2147483648
  %v3664 = vxor.u32 %v3656, 2147483648
  %v3665 = vmul.f32 %v3657, 1.442695
  %v3666 = vpow.pop %v3665
  %v3667 = vmul.f32 %v3658, 1.442695
  %v3668 = vpow.pop %v3667
  %v3669 = vmul.f32 %v3659, 1.442695
  %v3670 = vpow.pop %v3669
  %v3671 = vmul.f32 %v3660, 1.442695
  %v3672 = vpow.pop %v3671
  %v3673 = vmul.f32 %v3661, 1.442695
  %v3674 = vpow.pop %v3673
  %v3675 = vmul.f32 %v3662, 1.442695
  %v3676 = vpow.pop %v3675
  %v3677 = vmul.f32 %v3663, 1.442695
  %v3678 = vpow.pop %v3677
  %v3679 = vmul.f32 %v3664, 1.442695
  %v3680 = vpow.pop %v3679
  %v3681 = vadd.f32 %v3666, 1.0
  %v3682 = vadd.f32 %v3668, 1.0
  %v3683 = vadd.f32 %v3670, 1.0
  %v3684 = vadd.f32 %v3672, 1.0
  %v3685 = vadd.f32 %v3674, 1.0
  %v3686 = vadd.f32 %v3676, 1.0
  %v3687 = vadd.f32 %v3678, 1.0
  %v3688 = vadd.f32 %v3680, 1.0
  %v3689 = vrcp.pop %v3681
  %v3690 = vmul.f32 1.0, %v3689
  %v3691 = vrcp.pop %v3682
  %v3692 = vmul.f32 1.0, %v3691
  %v3693 = vrcp.pop %v3683
  %v3694 = vmul.f32 1.0, %v3693
  %v3695 = vrcp.pop %v3684
  %v3696 = vmul.f32 1.0, %v3695
  %v3697 = vrcp.pop %v3685
  %v3698 = vmul.f32 1.0, %v3697
  %v3699 = vrcp.pop %v3686
  %v3700 = vmul.f32 1.0, %v3699
  %v3701 = vrcp.pop %v3687
  %v3702 = vmul.f32 1.0, %v3701
  %v3703 = vrcp.pop %v3688
  %v3704 = vmul.f32 1.0, %v3703
  %v3705 = vadd.f32 %v3556, %v66
  %v3707 = vrot.slane %v3705, 1
  %v3708 = vrot.slane %v3705, 2
  %v3709 = vrot.slane %v3705, 3
  %v3710 = vrot.slane %v3705, 4
  %v3711 = vrot.slane %v3705, 5
  %v3712 = vrot.slane %v3705, 6
  %v3713 = vrot.slane %v3705, 7
  %v3722 = vmul.f32 %v3618, %v3707
  %v3723 = vmul.f32 %v3620, %v3708
  %v3724 = vmul.f32 %v3622, %v3709
  %v3725 = vmul.f32 %v3624, %v3710
  %v3726 = vmul.f32 %v3626, %v3711
  %v3727 = vmul.f32 %v3628, %v3712
  %v3728 = vmul.f32 %v3630, %v3713
  %v3729 = vmul.f32 %v3632, %v3705
  %v3730 = vadd.f32 %v3426, %v3722
  %v3731 = vadd.f32 %v3429, %v3723
  %v3732 = vadd.f32 %v3432, %v3724
  %v3733 = vadd.f32 %v3435, %v3725
  %v3734 = vadd.f32 %v3438, %v3726
  %v3735 = vadd.f32 %v3441, %v3727
  %v3736 = vadd.f32 %v3444, %v3728
  %v3737 = vadd.f32 %v3447, %v3729
  %v3738 = vtanh.pop %v3730
  %v3739 = vtanh.pop %v3731
  %v3740 = vtanh.pop %v3732
  %v3741 = vtanh.pop %v3733
  %v3742 = vtanh.pop %v3734
  %v3743 = vtanh.pop %v3735
  %v3744 = vtanh.pop %v3736
  %v3745 = vtanh.pop %v3737
  %v3746 = vsub.f32 1.0, %v3690
  %v3747 = vsub.f32 1.0, %v3692
  %v3748 = vsub.f32 1.0, %v3694
  %v3749 = vsub.f32 1.0, %v3696
  %v3750 = vsub.f32 1.0, %v3698
  %v3751 = vsub.f32 1.0, %v3700
  %v3752 = vsub.f32 1.0, %v3702
  %v3753 = vsub.f32 1.0, %v3704
  %v3754 = vmul.f32 %v3746, %v3738
  %v3755 = vmul.f32 %v3747, %v3739
  %v3756 = vmul.f32 %v3748, %v3740
  %v3757 = vmul.f32 %v3749, %v3741
  %v3758 = vmul.f32 %v3750, %v3742
  %v3759 = vmul.f32 %v3751, %v3743
  %v3760 = vmul.f32 %v3752, %v3744
  %v3761 = vmul.f32 %v3753, %v3745
  %v3770 = vrot.slane %v3341, 7
  %v3771 = vrot.slane %v3342, 7
  %v3772 = vrot.slane %v3343, 7
  %v3773 = vrot.slane %v3344, 7
  %v3774 = vrot.slane %v3345, 7
  %v3775 = vrot.slane %v3346, 7
  %v3776 = vrot.slane %v3347, 7
  %v3777 = vrot.slane %v3348, 7
  %v3786 = vmul.f32 %v3690, %v3770
  %v3787 = vmul.f32 %v3692, %v3771
  %v3788 = vmul.f32 %v3694, %v3772
  %v3789 = vmul.f32 %v3696, %v3773
  %v3790 = vmul.f32 %v3698, %v3774
  %v3791 = vmul.f32 %v3700, %v3775
  %v3792 = vmul.f32 %v3702, %v3776
  %v3793 = vmul.f32 %v3704, %v3777
  %v3794 = vadd.f32 %v3754, %v3786
  %v3795 = vadd.f32 %v3755, %v3787
  %v3796 = vadd.f32 %v3756, %v3788
  %v3797 = vadd.f32 %v3757, %v3789
  %v3798 = vadd.f32 %v3758, %v3790
  %v3799 = vadd.f32 %v3759, %v3791
  %v3800 = vadd.f32 %v3760, %v3792
  %v3801 = vadd.f32 %v3761, %v3793
  %v3802 = vpack.c.bf16 %v3794, %v3794
  %v3803 = vpack.c.bf16 %v3795, %v3795
  %v3804 = vpack.c.bf16 %v3796, %v3796
  %v3805 = vpack.c.bf16 %v3797, %v3797
  %v3806 = vpack.c.bf16 %v3798, %v3798
  %v3807 = vpack.c.bf16 %v3799, %v3799
  %v3808 = vpack.c.bf16 %v3800, %v3800
  %v3809 = vpack.c.bf16 %v3801, %v3801
  %vm3810 = vsmask.f32 7950
  %vm3811 = vmand %vm3357, %vm3810
  %v3812 = vld [vmem:[%s5] sm:$0x8]
  %v3813 = vsel %vm3811, %v3802, %v3812
  %3814 = vst [vmem:[%s5] sm:$0x8] %v3813
  %v3815 = vld [vmem:[%s5 + $0x4] sm:$0x8]
  %v3816 = vsel %vm3811, %v3803, %v3815
  %3817 = vst [vmem:[%s5 + $0x4] sm:$0x8] %v3816
  %v3818 = vld [vmem:[%s5 + $0x8] sm:$0x8]
  %v3819 = vsel %vm3811, %v3804, %v3818
  %3820 = vst [vmem:[%s5 + $0x8] sm:$0x8] %v3819
  %v3821 = vld [vmem:[%s5 + $0xc] sm:$0x8]
  %v3822 = vsel %vm3811, %v3805, %v3821
  %3823 = vst [vmem:[%s5 + $0xc] sm:$0x8] %v3822
  %v3824 = vld [vmem:[%s5 + $0x10] sm:$0x8]
  %v3825 = vsel %vm3811, %v3806, %v3824
  %3826 = vst [vmem:[%s5 + $0x10] sm:$0x8] %v3825
  %v3827 = vld [vmem:[%s5 + $0x14] sm:$0x8]
  %v3828 = vsel %vm3811, %v3807, %v3827
  %3829 = vst [vmem:[%s5 + $0x14] sm:$0x8] %v3828
  %v3830 = vld [vmem:[%s5 + $0x18] sm:$0x8]
  %v3831 = vsel %vm3811, %v3808, %v3830
  %3832 = vst [vmem:[%s5 + $0x18] sm:$0x8] %v3831
  %v3833 = vld [vmem:[%s5 + $0x1c] sm:$0x8]
  %v3834 = vsel %vm3811, %v3809, %v3833
  %3835 = vst [vmem:[%s5 + $0x1c] sm:$0x8] %v3834
  %v3844 = vrot.slane %v3795, 7
  %v3845 = vrot.slane %v3796, 6
  %v3846 = vsel %vm743, %v3845, %v3844
  %v3847 = vrot.slane %v3797, 5
  %v3848 = vsel %vm746, %v3847, %v3846
  %v3849 = vrot.slane %v3798, 4
  %v3850 = vsel %vm749, %v3849, %v3848
  %v3851 = vrot.slane %v3799, 3
  %v3852 = vsel %vm752, %v3851, %v3850
  %v3853 = vrot.slane %v3800, 2
  %v3854 = vsel %vm755, %v3853, %v3852
  %v3855 = vrot.slane %v3801, 1
  %v3856 = vsel %vm758, %v3855, %v3854
  %3859 = vst [vmem:[#allocation2 - $0x7] sm:$0x80] %v3794
  %3860 = vst [vmem:[#allocation2 + $0x1] sm:$0x7f] %v3856
  // Predicated region
  $region26: #{forward.8} parent=0 // pred_check
    %p3861 = pneg %p23
  $region27: #{forward.8} parent=0 // pred_check_branch
    %3863 = sbr.rel (%p3861) target = $region29
  $region28: #{forward.8} parent=0 // pred_region
    %3864 = vst [vmem:[%s6 - $0x7] sm:$0x80] %v3794
    %3865 = vst [vmem:[%s6 + $0x1] sm:$0x7f] %v3856
  $region29: #{forward.8} parent=0 // pred_fallthru
    _
  // Predicated region
  $region30: #{forward.8} parent=0 // pred_check
    _
  $region31: #{forward.8} parent=0 // pred_check_branch
    %3867 = sbr.rel (0) target = $region33
  $region32: #{forward.8} parent=0 // pred_region
    _
  $region33: #{forward.8} parent=0 // pred_fallthru
    _
  // Predicated region
  $region34: #{forward.8} parent=0 // pred_check
    _
  $region35: #{forward.8} parent=0 // pred_check_branch
    %3869 = sbr.rel (0) target = $region37
  $region36: #{forward.8} parent=0 // pred_region
    _
  $region37: #{forward.8} parent=0 // pred_fallthru
    _
  // Predicated region
  $region38: #{forward.8} parent=0 // pred_check
    _
  $region39: #{forward.8} parent=0 // pred_check_branch
    %3871 = sbr.rel (0) target = $region41
  $region40: #{forward.8} parent=0 // pred_region
    _
  $region41: #{forward.8} parent=0 // pred_fallthru
    _
  // Predicated region
  $region42: #{forward.8} parent=0 // pred_check
    _
  $region43: #{forward.8} parent=0 // pred_check_branch
    %3873 = sbr.rel (0) target = $region45
  $region44: #{forward.8} parent=0 // pred_region
    _
  $region45: #{forward.8} parent=0 // pred_fallthru
    _

// kernel: forward.10
$region0: #{forward.10}
  #allocation0 [shape = 'u32[]', space=smem, size = 0x4, offset = 0x4, fixed_abs, tag = 'smem constant byte address 0x4 - core index']
  #allocation1 [shape = 'u32[144,128]{1,0:T(1,128)}', space=vmem, size = 0x12000, scoped, tag = 'internal scratch']
  #allocation2 [shape = 'f32[8,128]{1,0:T(8,128)}', space=vmem, size = 0x1000, scoped, tag = 'scratch operand']
  %s0 = inlined_call_operand.vmem [shape: bf16[8,8,384], index: 0, kind: input, shape index: {}]
  %s1 = inlined_call_operand.vmem [shape: f32[8,128], index: 1, kind: input, shape index: {}]
  %s2 = inlined_call_operand.vmem [shape: bf16[128,384], index: 2, kind: input, shape index: {}]
  %s3 = inlined_call_operand.vmem [shape: f32[1,128], index: 3, kind: input, shape index: {}]
  %s4 = inlined_call_operand.vmem [shape: bf16[8,8,128], index: 4, kind: output, shape index: {0}]
  %s5 = inlined_call_operand.vmem [shape: f32[8,128], index: 5, kind: output, shape index: {1}]
  %6 = xla_tuple %s4, %s5
  %s7 = sld [smem:[#allocation0]]
  $region42: #{forward.10} parent=0
    _
  %s9 = ssub.s32 1, %s7
  %s10 = scalar_select 0, %s9, %s7
  // Predicated region
  $region2: #{forward.10} parent=0 // pred_check
    _
  $region3: #{forward.10} parent=0 // pred_check_branch
    %12 = sbr.rel (0) target = $region5
  $region4: #{forward.10} parent=0 // pred_region
    _
  $region5: #{forward.10} parent=0 // pred_fallthru
    _
  // Predicated region
  $region6: #{forward.10} parent=0 // pred_check
    _
  $region7: #{forward.10} parent=0 // pred_check_branch
    %14 = sbr.rel (0) target = $region9
  $region8: #{forward.10} parent=0 // pred_region
    _
  $region9: #{forward.10} parent=0 // pred_fallthru
    _
  // Predicated region
  $region10: #{forward.10} parent=0 // pred_check
    _
  $region11: #{forward.10} parent=0 // pred_check_branch
    %16 = sbr.rel (0) target = $region13
  $region12: #{forward.10} parent=0 // pred_region
    _
  $region13: #{forward.10} parent=0 // pred_fallthru
    _
  // Predicated region
  $region14: #{forward.10} parent=0 // pred_check
    _
  $region15: #{forward.10} parent=0 // pred_check_branch
    %18 = sbr.rel (0) target = $region17
  $region16: #{forward.10} parent=0 // pred_region
    _
  $region17: #{forward.10} parent=0 // pred_fallthru
    _
  %p20 = scmp.eq.s32.totalorder 0, 0
  // Predicated region
  $region18: #{forward.10} parent=0 // pred_check
    %p21 = pneg %p20
  $region19: #{forward.10} parent=0 // pred_check_branch
    %23 = sbr.rel (%p21) target = $region21
  $region20: #{forward.10} parent=0 // pred_region
    %v24 = vld [vmem:[%s1] sm:$0xff]
    %25 = vst [vmem:[#allocation2] sm:$0xff] %v24
  $region21: #{forward.10} parent=0 // pred_fallthru
    _
  %v26 = vld [vmem:[%s2] sm:$0xff]
  %v27 = vld [vmem:[%s2 + $0x8] sm:$0xf]
  %v28 = vld [vmem:[%s2 + $0xc] sm:$0xff]
  %v29 = vld [vmem:[%s2 + $0x14] sm:$0xf]
  %v30 = vld [vmem:[%s2 + $0x18] sm:$0xff]
  %v31 = vld [vmem:[%s2 + $0x20] sm:$0xf]
  %v32 = vld [vmem:[%s2 + $0x24] sm:$0xff]
  %v33 = vld [vmem:[%s2 + $0x2c] sm:$0xf]
  %v34 = vld [vmem:[%s2 + $0x30] sm:$0xff]
  %v35 = vld [vmem:[%s2 + $0x38] sm:$0xf]
  %v36 = vld [vmem:[%s2 + $0x3c] sm:$0xff]
  %v37 = vld [vmem:[%s2 + $0x44] sm:$0xf]
  %v38 = vld [vmem:[%s2 + $0x48] sm:$0xff]
  %v39 = vld [vmem:[%s2 + $0x50] sm:$0xf]
  %v40 = vld [vmem:[%s2 + $0x54] sm:$0xff]
  %v41 = vld [vmem:[%s2 + $0x5c] sm:$0xf]
  %v42 = vld [vmem:[%s2 + $0x60] sm:$0xff]
  %v43 = vld [vmem:[%s2 + $0x68] sm:$0xf]
  %v44 = vld [vmem:[%s2 + $0x6c] sm:$0xff]
  %v45 = vld [vmem:[%s2 + $0x74] sm:$0xf]
  %v46 = vld [vmem:[%s2 + $0x78] sm:$0xff]
  %v47 = vld [vmem:[%s2 + $0x80] sm:$0xf]
  %v48 = vld [vmem:[%s2 + $0x84] sm:$0xff]
  %v49 = vld [vmem:[%s2 + $0x8c] sm:$0xf]
  %v50 = vld [vmem:[%s2 + $0x90] sm:$0xff]
  %v51 = vld [vmem:[%s2 + $0x98] sm:$0xf]
  %v52 = vld [vmem:[%s2 + $0x9c] sm:$0xff]
  %v53 = vld [vmem:[%s2 + $0xa4] sm:$0xf]
  %v54 = vld [vmem:[%s2 + $0xa8] sm:$0xff]
  %v55 = vld [vmem:[%s2 + $0xb0] sm:$0xf]
  %v56 = vld [vmem:[%s2 + $0xb4] sm:$0xff]
  %v57 = vld [vmem:[%s2 + $0xbc] sm:$0xf]
  %v58 = vld [vmem:[%s3] sm:$0x1]
  %v60 = vlaneseq
  %v61 = vshrl.u32 %v60, 7
  %v62 = vsub.s32 0, %v61
  %v63 = vrot.slane %v58, %v62
  %v65 = vld [vmem:[#allocation2] sm:$0xff]
  %v66 = vld [vmem:[%s0] sm:$0x11]
  %v67 = vld [vmem:[%s0 + $0x8] sm:$0x1]
  %v68 = vld [vmem:[%s0 + $0xc] sm:$0x11]
  %v69 = vld [vmem:[%s0 + $0x14] sm:$0x1]
  %v70 = vld [vmem:[%s0 + $0x18] sm:$0x11]
  %v71 = vld [vmem:[%s0 + $0x20] sm:$0x1]
  %v72 = vld [vmem:[%s0 + $0x24] sm:$0x11]
  %v73 = vld [vmem:[%s0 + $0x2c] sm:$0x1]
  %v74 = vld [vmem:[%s0 + $0x30] sm:$0x11]
  %v75 = vld [vmem:[%s0 + $0x38] sm:$0x1]
  %v76 = vld [vmem:[%s0 + $0x3c] sm:$0x11]
  %v77 = vld [vmem:[%s0 + $0x44] sm:$0x1]
  %v78 = vld [vmem:[%s0 + $0x48] sm:$0x11]
  %v79 = vld [vmem:[%s0 + $0x50] sm:$0x1]
  %v80 = vld [vmem:[%s0 + $0x54] sm:$0x11]
  %v81 = vld [vmem:[%s0 + $0x5c] sm:$0x1]
  %v82 = vunpack.c.l.bf16 %v66
  %v83 = vunpack.c.h.bf16 %v66
  %v84 = vunpack.c.l.bf16 %v67
  %v85 = vunpack.c.l.bf16 %v68
  %v86 = vunpack.c.h.bf16 %v68
  %v87 = vunpack.c.l.bf16 %v69
  %v88 = vunpack.c.l.bf16 %v70
  %v89 = vunpack.c.h.bf16 %v70
  %v90 = vunpack.c.l.bf16 %v71
  %v91 = vunpack.c.l.bf16 %v72
  %v92 = vunpack.c.h.bf16 %v72
  %v93 = vunpack.c.l.bf16 %v73
  %v94 = vunpack.c.l.bf16 %v74
  %v95 = vunpack.c.h.bf16 %v74
  %v96 = vunpack.c.l.bf16 %v75
  %v97 = vunpack.c.l.bf16 %v76
  %v98 = vunpack.c.h.bf16 %v76
  %v99 = vunpack.c.l.bf16 %v77
  %v100 = vunpack.c.l.bf16 %v78
  %v101 = vunpack.c.h.bf16 %v78
  %v102 = vunpack.c.l.bf16 %v79
  %v103 = vunpack.c.l.bf16 %v80
  %v104 = vunpack.c.h.bf16 %v80
  %v105 = vunpack.c.l.bf16 %v81
  %v106 = vpack.c.bf16 %v65, %v65
  %v139 = vunpack.c.l.b16 %v26
  %v140 = vunpack.c.h.b16 %v26
  %v141 = vunpack.c.l.b16 %v27
  %v142 = vunpack.c.l.b16 %v28
  %v143 = vunpack.c.h.b16 %v28
  %v144 = vunpack.c.l.b16 %v29
  %v145 = vunpack.c.l.b16 %v30
  %v146 = vunpack.c.h.b16 %v30
  %v147 = vunpack.c.l.b16 %v31
  %v148 = vunpack.c.l.b16 %v32
  %v149 = vunpack.c.h.b16 %v32
  %v150 = vunpack.c.l.b16 %v33
  %v151 = vunpack.c.l.b16 %v34
  %v152 = vunpack.c.h.b16 %v34
  %v153 = vunpack.c.l.b16 %v35
  %v154 = vunpack.c.l.b16 %v36
  %v155 = vunpack.c.h.b16 %v36
  %v156 = vunpack.c.l.b16 %v37
  %v157 = vunpack.c.l.b16 %v38
  %v158 = vunpack.c.h.b16 %v38
  %v159 = vunpack.c.l.b16 %v39
  %v160 = vunpack.c.l.b16 %v40
  %v161 = vunpack.c.h.b16 %v40
  %v162 = vunpack.c.l.b16 %v41
  %v163 = vunpack.c.l.b16 %v42
  %v164 = vunpack.c.h.b16 %v42
  %v165 = vunpack.c.l.b16 %v43
  %v166 = vunpack.c.l.b16 %v44
  %v167 = vunpack.c.h.b16 %v44
  %v168 = vunpack.c.l.b16 %v45
  %v169 = vunpack.c.l.b16 %v46
  %v170 = vunpack.c.h.b16 %v46
  %v171 = vunpack.c.l.b16 %v47
  %v172 = vunpack.c.l.b16 %v48
  %v173 = vunpack.c.h.b16 %v48
  %v174 = vunpack.c.l.b16 %v49
  %v175 = vunpack.c.l.b16 %v50
  %v176 = vunpack.c.h.b16 %v50
  %v177 = vunpack.c.l.b16 %v51
  %v178 = vunpack.c.l.b16 %v52
  %v179 = vunpack.c.h.b16 %v52
  %v180 = vunpack.c.l.b16 %v53
  %v181 = vunpack.c.l.b16 %v54
  %v182 = vunpack.c.h.b16 %v54
  %v183 = vunpack.c.l.b16 %v55
  %v184 = vunpack.c.l.b16 %v56
  %v185 = vunpack.c.h.b16 %v56
  %v186 = vunpack.c.l.b16 %v57
  %v187 = vpack.c.b16 %v142, %v139
  %v188 = vpack.c.b16 %v143, %v140
  %v189 = vpack.c.b16 %v144, %v141
  %v190 = vpack.c.b16 %v148, %v145
  %v191 = vpack.c.b16 %v149, %v146
  %v192 = vpack.c.b16 %v150, %v147
  %v193 = vpack.c.b16 %v154, %v151
  %v194 = vpack.c.b16 %v155, %v152
  %v195 = vpack.c.b16 %v156, %v153
  %v196 = vpack.c.b16 %v160, %v157
  %v197 = vpack.c.b16 %v161, %v158
  %v198 = vpack.c.b16 %v162, %v159
  %v199 = vpack.c.b16 %v166, %v163
  %v200 = vpack.c.b16 %v167, %v164
  %v201 = vpack.c.b16 %v168, %v165
  %v202 = vpack.c.b16 %v172, %v169
  %v203 = vpack.c.b16 %v173, %v170
  %v204 = vpack.c.b16 %v174, %v171
  %v205 = vpack.c.b16 %v178, %v175
  %v206 = vpack.c.b16 %v179, %v176
  %v207 = vpack.c.b16 %v180, %v177
  %v208 = vpack.c.b16 %v184, %v181
  %v209 = vpack.c.b16 %v185, %v182
  %v210 = vpack.c.b16 %v186, %v183
  %235 = vmatprep.subr.bf16.mxu0 %v188
  %236 = vmatpush1.bf16.msra.mxu0 %v187
  %237 = vmatprep.subr.bf16.mxu0 %v191
  %238 = vmatpush1.bf16.msra.mxu0 %v190
  %239 = vmatprep.subr.bf16.mxu0 %v194
  %240 = vmatpush1.bf16.msra.mxu0 %v193
  %241 = vmatprep.subr.bf16.mxu0 %v197
  %242 = vmatpush1.bf16.msra.mxu0 %v196
  %243 = vmatprep.subr.bf16.mxu0 %v200
  %244 = vmatpush1.bf16.msra.mxu0 %v199
  %245 = vmatprep.subr.bf16.mxu0 %v203
  %246 = vmatpush1.bf16.msra.mxu0 %v202
  %247 = vmatprep.subr.bf16.mxu0 %v206
  %248 = vmatpush1.bf16.msra.mxu0 %v205
  %249 = vmatprep.subr.bf16.mxu0 %v209
  %250 = vmatpush1.bf16.msra.mxu0 %v208
  %251 = vmatprep.subr.bf16.mxu0 0
  %252 = vmatpush1.bf16.msra.mxu0 0
  %253 = vmatprep.subr.bf16.mxu0 0
  %254 = vmatpush1.bf16.msra.mxu0 0
  %255 = vmatprep.subr.bf16.mxu0 0
  %256 = vmatpush1.bf16.msra.mxu0 0
  %257 = vmatprep.subr.bf16.mxu0 0
  %258 = vmatpush1.bf16.msra.mxu0 0
  %259 = vmatprep.subr.bf16.mxu0 0
  %260 = vmatpush1.bf16.msra.mxu0 0
  %261 = vmatprep.subr.bf16.mxu0 0
  %262 = vmatpush1.bf16.msra.mxu0 0
  %263 = vmatprep.subr.bf16.mxu0 0
  %264 = vmatpush1.bf16.msra.mxu0 0
  %265 = vmatprep.subr.bf16.mxu0 0
  %266 = vmatpush1.bf16.msra.mxu0 0
  %267 = vmatprep.mubr.bf16.mxu0 0
  %268 = vmatmul.mubr.bf16.gmra.mrb[0].mxu0 %v106
  %v269 = vpop.f32.mrb[0].mxu0
  %v270 = vadd.f32 0.0, %v269
  %v271 = vpop.f32.mrb[0].mxu0
  %v272 = vadd.f32 0.0, %v271
  %v273 = vpop.f32.mrb[0].mxu0
  %v274 = vpop.f32.mrb[0].mxu0
  %275 = vdwg.mxu0
  %276 = vmatprep.subr.bf16.mxu0 0
  %277 = vmatpush1.bf16.msra.mxu0 %v189
  %278 = vmatprep.subr.bf16.mxu0 0
  %279 = vmatpush1.bf16.msra.mxu0 %v192
  %280 = vmatprep.subr.bf16.mxu0 0
  %281 = vmatpush1.bf16.msra.mxu0 %v195
  %282 = vmatprep.subr.bf16.mxu0 0
  %283 = vmatpush1.bf16.msra.mxu0 %v198
  %284 = vmatprep.subr.bf16.mxu0 0
  %285 = vmatpush1.bf16.msra.mxu0 %v201
  %286 = vmatprep.subr.bf16.mxu0 0
  %287 = vmatpush1.bf16.msra.mxu0 %v204
  %288 = vmatprep.subr.bf16.mxu0 0
  %289 = vmatpush1.bf16.msra.mxu0 %v207
  %290 = vmatprep.subr.bf16.mxu0 0
  %291 = vmatpush1.bf16.msra.mxu0 %v210
  %292 = vmatprep.subr.bf16.mxu0 0
  %293 = vmatpush1.bf16.msra.mxu0 0
  %294 = vmatprep.subr.bf16.mxu0 0
  %295 = vmatpush1.bf16.msra.mxu0 0
  %296 = vmatprep.subr.bf16.mxu0 0
  %297 = vmatpush1.bf16.msra.mxu0 0
  %298 = vmatprep.subr.bf16.mxu0 0
  %299 = vmatpush1.bf16.msra.mxu0 0
  %300 = vmatprep.subr.bf16.mxu0 0
  %301 = vmatpush1.bf16.msra.mxu0 0
  %302 = vmatprep.subr.bf16.mxu0 0
  %303 = vmatpush1.bf16.msra.mxu0 0
  %304 = vmatprep.subr.bf16.mxu0 0
  %305 = vmatpush1.bf16.msra.mxu0 0
  %306 = vmatprep.subr.bf16.mxu0 0
  %307 = vmatpush1.bf16.msra.mxu0 0
  %308 = vmatprep.mubr.bf16.mxu0 0
  %309 = vmatmul.mubr.bf16.gmra.mrb[0].mxu0 %v106
  %v310 = vpop.f32.mrb[0].mxu0
  %v311 = vadd.f32 0.0, %v310
  %v312 = vpop.f32.mrb[0].mxu0
  %v313 = vpop.f32.mrb[0].mxu0
  %v314 = vpop.f32.mrb[0].mxu0
  %315 = vdwg.mxu0
  %v317 = vrot.slane %v270, 1
  %v318 = vrot.slane %v270, 2
  %v319 = vrot.slane %v270, 3
  %v320 = vrot.slane %v270, 4
  %v321 = vrot.slane %v270, 5
  %v322 = vrot.slane %v270, 6
  %v323 = vrot.slane %v270, 7
  %v332 = vadd.f32 %v82, %v270
  %v333 = vadd.f32 %v85, %v317
  %v334 = vadd.f32 %v88, %v318
  %v335 = vadd.f32 %v91, %v319
  %v336 = vadd.f32 %v94, %v320
  %v337 = vadd.f32 %v97, %v321
  %v338 = vadd.f32 %v100, %v322
  %v339 = vadd.f32 %v103, %v323
  %v340 = vxor.u32 %v332, 2147483648
  %v341 = vxor.u32 %v333, 2147483648
  %v342 = vxor.u32 %v334, 2147483648
  %v343 = vxor.u32 %v335, 2147483648
  %v344 = vxor.u32 %v336, 2147483648
  %v345 = vxor.u32 %v337, 2147483648
  %v346 = vxor.u32 %v338, 2147483648
  %v347 = vxor.u32 %v339, 2147483648
  %v348 = vmul.f32 %v340, 1.442695
  %v349 = vpow.pop %v348
  %v350 = vmul.f32 %v341, 1.442695
  %v351 = vpow.pop %v350
  %v352 = vmul.f32 %v342, 1.442695
  %v353 = vpow.pop %v352
  %v354 = vmul.f32 %v343, 1.442695
  %v355 = vpow.pop %v354
  %v356 = vmul.f32 %v344, 1.442695
  %v357 = vpow.pop %v356
  %v358 = vmul.f32 %v345, 1.442695
  %v359 = vpow.pop %v358
  %v360 = vmul.f32 %v346, 1.442695
  %v361 = vpow.pop %v360
  %v362 = vmul.f32 %v347, 1.442695
  %v363 = vpow.pop %v362
  %v364 = vadd.f32 %v349, 1.0
  %v365 = vadd.f32 %v351, 1.0
  %v366 = vadd.f32 %v353, 1.0
  %v367 = vadd.f32 %v355, 1.0
  %v368 = vadd.f32 %v357, 1.0
  %v369 = vadd.f32 %v359, 1.0
  %v370 = vadd.f32 %v361, 1.0
  %v371 = vadd.f32 %v363, 1.0
  %v372 = vrcp.pop %v364
  %v373 = vmul.f32 1.0, %v372
  %v374 = vrcp.pop %v365
  %v375 = vmul.f32 1.0, %v374
  %v376 = vrcp.pop %v366
  %v377 = vmul.f32 1.0, %v376
  %v378 = vrcp.pop %v367
  %v379 = vmul.f32 1.0, %v378
  %v380 = vrcp.pop %v368
  %v381 = vmul.f32 1.0, %v380
  %v382 = vrcp.pop %v369
  %v383 = vmul.f32 1.0, %v382
  %v384 = vrcp.pop %v370
  %v385 = vmul.f32 1.0, %v384
  %v386 = vrcp.pop %v371
  %v387 = vmul.f32 1.0, %v386
  %v389 = vrot.slane %v272, 1
  %v390 = vrot.slane %v272, 2
  %v391 = vrot.slane %v272, 3
  %v392 = vrot.slane %v272, 4
  %v393 = vrot.slane %v272, 5
  %v394 = vrot.slane %v272, 6
  %v395 = vrot.slane %v272, 7
  %v404 = vadd.f32 %v83, %v272
  %v405 = vadd.f32 %v86, %v389
  %v406 = vadd.f32 %v89, %v390
  %v407 = vadd.f32 %v92, %v391
  %v408 = vadd.f32 %v95, %v392
  %v409 = vadd.f32 %v98, %v393
  %v410 = vadd.f32 %v101, %v394
  %v411 = vadd.f32 %v104, %v395
  %v412 = vxor.u32 %v404, 2147483648
  %v413 = vxor.u32 %v405, 2147483648
  %v414 = vxor.u32 %v406, 2147483648
  %v415 = vxor.u32 %v407, 2147483648
  %v416 = vxor.u32 %v408, 2147483648
  %v417 = vxor.u32 %v409, 2147483648
  %v418 = vxor.u32 %v410, 2147483648
  %v419 = vxor.u32 %v411, 2147483648
  %v420 = vmul.f32 %v412, 1.442695
  %v421 = vpow.pop %v420
  %v422 = vmul.f32 %v413, 1.442695
  %v423 = vpow.pop %v422
  %v424 = vmul.f32 %v414, 1.442695
  %v425 = vpow.pop %v424
  %v426 = vmul.f32 %v415, 1.442695
  %v427 = vpow.pop %v426
  %v428 = vmul.f32 %v416, 1.442695
  %v429 = vpow.pop %v428
  %v430 = vmul.f32 %v417, 1.442695
  %v431 = vpow.pop %v430
  %v432 = vmul.f32 %v418, 1.442695
  %v433 = vpow.pop %v432
  %v434 = vmul.f32 %v419, 1.442695
  %v435 = vpow.pop %v434
  %v436 = vadd.f32 %v421, 1.0
  %v437 = vadd.f32 %v423, 1.0
  %v438 = vadd.f32 %v425, 1.0
  %v439 = vadd.f32 %v427, 1.0
  %v440 = vadd.f32 %v429, 1.0
  %v441 = vadd.f32 %v431, 1.0
  %v442 = vadd.f32 %v433, 1.0
  %v443 = vadd.f32 %v435, 1.0
  %v444 = vrcp.pop %v436
  %v445 = vmul.f32 1.0, %v444
  %v446 = vrcp.pop %v437
  %v447 = vmul.f32 1.0, %v446
  %v448 = vrcp.pop %v438
  %v449 = vmul.f32 1.0, %v448
  %v450 = vrcp.pop %v439
  %v451 = vmul.f32 1.0, %v450
  %v452 = vrcp.pop %v440
  %v453 = vmul.f32 1.0, %v452
  %v454 = vrcp.pop %v441
  %v455 = vmul.f32 1.0, %v454
  %v456 = vrcp.pop %v442
  %v457 = vmul.f32 1.0, %v456
  %v458 = vrcp.pop %v443
  %v459 = vmul.f32 1.0, %v458
  %v460 = vadd.f32 %v311, %v63
  %v462 = vrot.slane %v460, 1
  %v463 = vrot.slane %v460, 2
  %v464 = vrot.slane %v460, 3
  %v465 = vrot.slane %v460, 4
  %v466 = vrot.slane %v460, 5
  %v467 = vrot.slane %v460, 6
  %v468 = vrot.slane %v460, 7
  %v477 = vmul.f32 %v373, %v460
  %v478 = vmul.f32 %v375, %v462
  %v479 = vmul.f32 %v377, %v463
  %v480 = vmul.f32 %v379, %v464
  %v481 = vmul.f32 %v381, %v465
  %v482 = vmul.f32 %v383, %v466
  %v483 = vmul.f32 %v385, %v467
  %v484 = vmul.f32 %v387, %v468
  %v485 = vadd.f32 %v84, %v477
  %v486 = vadd.f32 %v87, %v478
  %v487 = vadd.f32 %v90, %v479
  %v488 = vadd.f32 %v93, %v480
  %v489 = vadd.f32 %v96, %v481
  %v490 = vadd.f32 %v99, %v482
  %v491 = vadd.f32 %v102, %v483
  %v492 = vadd.f32 %v105, %v484
  %v493 = vtanh.pop %v485
  %v494 = vtanh.pop %v486
  %v495 = vtanh.pop %v487
  %v496 = vtanh.pop %v488
  %v497 = vtanh.pop %v489
  %v498 = vtanh.pop %v490
  %v499 = vtanh.pop %v491
  %v500 = vtanh.pop %v492
  %v501 = vsub.f32 1.0, %v445
  %v502 = vsub.f32 1.0, %v447
  %v503 = vsub.f32 1.0, %v449
  %v504 = vsub.f32 1.0, %v451
  %v505 = vsub.f32 1.0, %v453
  %v506 = vsub.f32 1.0, %v455
  %v507 = vsub.f32 1.0, %v457
  %v508 = vsub.f32 1.0, %v459
  %v509 = vmul.f32 %v501, %v493
  %v510 = vmul.f32 %v502, %v494
  %v511 = vmul.f32 %v503, %v495
  %v512 = vmul.f32 %v504, %v496
  %v513 = vmul.f32 %v505, %v497
  %v514 = vmul.f32 %v506, %v498
  %v515 = vmul.f32 %v507, %v499
  %v516 = vmul.f32 %v508, %v500
  %v518 = vrot.slane %v65, 1
  %v519 = vrot.slane %v65, 2
  %v520 = vrot.slane %v65, 3
  %v521 = vrot.slane %v65, 4
  %v522 = vrot.slane %v65, 5
  %v523 = vrot.slane %v65, 6
  %v524 = vrot.slane %v65, 7
  %v533 = vmul.f32 %v445, %v65
  %v534 = vmul.f32 %v447, %v518
  %v535 = vmul.f32 %v449, %v519
  %v536 = vmul.f32 %v451, %v520
  %v537 = vmul.f32 %v453, %v521
  %v538 = vmul.f32 %v455, %v522
  %v539 = vmul.f32 %v457, %v523
  %v540 = vmul.f32 %v459, %v524
  %v541 = vadd.f32 %v509, %v533
  %v542 = vadd.f32 %v510, %v534
  %v543 = vadd.f32 %v511, %v535
  %v544 = vadd.f32 %v512, %v536
  %v545 = vadd.f32 %v513, %v537
  %v546 = vadd.f32 %v514, %v538
  %v547 = vadd.f32 %v515, %v539
  %v548 = vadd.f32 %v516, %v540
  %v549 = vpack.c.bf16 %v541, %v541
  %v550 = vpack.c.bf16 %v542, %v542
  %v551 = vpack.c.bf16 %v543, %v543
  %v552 = vpack.c.bf16 %v544, %v544
  %v553 = vpack.c.bf16 %v545, %v545
  %v554 = vpack.c.bf16 %v546, %v546
  %v555 = vpack.c.bf16 %v547, %v547
  %v556 = vpack.c.bf16 %v548, %v548
  %vm557 = vcmask 1040384
  %vm558 = vsmask.f32 256
  %vm559 = vmand %vm557, %vm558
  %v560 = vld [vmem:[%s4] sm:$0x1]
  %v561 = vsel %vm559, %v549, %v560
  %562 = vst [vmem:[%s4] sm:$0x1] %v561
  %v563 = vld [vmem:[%s4 + $0x4] sm:$0x1]
  %v564 = vsel %vm559, %v550, %v563
  %565 = vst [vmem:[%s4 + $0x4] sm:$0x1] %v564
  %v566 = vld [vmem:[%s4 + $0x8] sm:$0x1]
  %v567 = vsel %vm559, %v551, %v566
  %568 = vst [vmem:[%s4 + $0x8] sm:$0x1] %v567
  %v569 = vld [vmem:[%s4 + $0xc] sm:$0x1]
  %v570 = vsel %vm559, %v552, %v569
  %571 = vst [vmem:[%s4 + $0xc] sm:$0x1] %v570
  %v572 = vld [vmem:[%s4 + $0x10] sm:$0x1]
  %v573 = vsel %vm559, %v553, %v572
  %574 = vst [vmem:[%s4 + $0x10] sm:$0x1] %v573
  %v575 = vld [vmem:[%s4 + $0x14] sm:$0x1]
  %v576 = vsel %vm559, %v554, %v575
  %577 = vst [vmem:[%s4 + $0x14] sm:$0x1] %v576
  %v578 = vld [vmem:[%s4 + $0x18] sm:$0x1]
  %v579 = vsel %vm559, %v555, %v578
  %580 = vst [vmem:[%s4 + $0x18] sm:$0x1] %v579
  %v581 = vld [vmem:[%s4 + $0x1c] sm:$0x1]
  %v582 = vsel %vm559, %v556, %v581
  %583 = vst [vmem:[%s4 + $0x1c] sm:$0x1] %v582
  %v584 = vld [vmem:[%s0] sm:$0x11]
  %v585 = vld [vmem:[%s0 + $0x8] sm:$0x1]
  %v586 = vld [vmem:[%s0 + $0xc] sm:$0x11]
  %v587 = vld [vmem:[%s0 + $0x14] sm:$0x1]
  %v588 = vld [vmem:[%s0 + $0x18] sm:$0x11]
  %v589 = vld [vmem:[%s0 + $0x20] sm:$0x1]
  %v590 = vld [vmem:[%s0 + $0x24] sm:$0x11]
  %v591 = vld [vmem:[%s0 + $0x2c] sm:$0x1]
  %v592 = vld [vmem:[%s0 + $0x30] sm:$0x11]
  %v593 = vld [vmem:[%s0 + $0x38] sm:$0x1]
  %v594 = vld [vmem:[%s0 + $0x3c] sm:$0x11]
  %v595 = vld [vmem:[%s0 + $0x44] sm:$0x1]
  %v596 = vld [vmem:[%s0 + $0x48] sm:$0x11]
  %v597 = vld [vmem:[%s0 + $0x50] sm:$0x1]
  %v598 = vld [vmem:[%s0 + $0x54] sm:$0x11]
  %v599 = vld [vmem:[%s0 + $0x5c] sm:$0x1]
  %v600 = vunpack.c.l.bf16 %v584
  %v601 = vunpack.c.h.bf16 %v584
  %v602 = vunpack.c.l.bf16 %v585
  %v603 = vunpack.c.l.bf16 %v586
  %v604 = vunpack.c.h.bf16 %v586
  %v605 = vunpack.c.l.bf16 %v587
  %v606 = vunpack.c.l.bf16 %v588
  %v607 = vunpack.c.h.bf16 %v588
  %v608 = vunpack.c.l.bf16 %v589
  %v609 = vunpack.c.l.bf16 %v590
  %v610 = vunpack.c.h.bf16 %v590
  %v611 = vunpack.c.l.bf16 %v591
  %v612 = vunpack.c.l.bf16 %v592
  %v613 = vunpack.c.h.bf16 %v592
  %v614 = vunpack.c.l.bf16 %v593
  %v615 = vunpack.c.l.bf16 %v594
  %v616 = vunpack.c.h.bf16 %v594
  %v617 = vunpack.c.l.bf16 %v595
  %v618 = vunpack.c.l.bf16 %v596
  %v619 = vunpack.c.h.bf16 %v596
  %v620 = vunpack.c.l.bf16 %v597
  %v621 = vunpack.c.l.bf16 %v598
  %v622 = vunpack.c.h.bf16 %v598
  %v623 = vunpack.c.l.bf16 %v599
  %v632 = vunpack.c.l.b16 %v549
  %v633 = vunpack.c.l.b16 %v550
  %v634 = vunpack.c.l.b16 %v551
  %v635 = vunpack.c.l.b16 %v552
  %v636 = vunpack.c.l.b16 %v553
  %v637 = vunpack.c.l.b16 %v554
  %v638 = vunpack.c.l.b16 %v555
  %v639 = vunpack.c.l.b16 %v556
  %v640 = vrot.slane %v633, 7
  %vm641 = vcmask 1041409
  %v642 = vsel %vm641, %v640, %v632
  %v643 = vrot.slane %v634, 6
  %vm644 = vcmask 1042434
  %v645 = vsel %vm644, %v643, %v642
  %v646 = vrot.slane %v635, 5
  %vm647 = vcmask 1043459
  %v648 = vsel %vm647, %v646, %v645
  %v649 = vrot.slane %v636, 4
  %vm650 = vcmask 1044484
  %v651 = vsel %vm650, %v649, %v648
  %v652 = vrot.slane %v637, 3
  %vm653 = vcmask 1045509
  %v654 = vsel %vm653, %v652, %v651
  %v655 = vrot.slane %v638, 2
  %vm656 = vcmask 1046534
  %v657 = vsel %vm656, %v655, %v654
  %v658 = vrot.slane %v639, 1
  %vm659 = vcmask 1047559
  %v660 = vsel %vm659, %v658, %v657
  %v661 = vpack.c.b16 %v660, %v660
  %663 = vmatprep.subr.bf16.mxu0 %v188
  %664 = vmatpush1.bf16.msra.mxu0 %v187
  %665 = vmatprep.subr.bf16.mxu0 %v191
  %666 = vmatpush1.bf16.msra.mxu0 %v190
  %667 = vmatprep.subr.bf16.mxu0 %v194
  %668 = vmatpush1.bf16.msra.mxu0 %v193
  %669 = vmatprep.subr.bf16.mxu0 %v197
  %670 = vmatpush1.bf16.msra.mxu0 %v196
  %671 = vmatprep.subr.bf16.mxu0 %v200
  %672 = vmatpush1.bf16.msra.mxu0 %v199
  %673 = vmatprep.subr.bf16.mxu0 %v203
  %674 = vmatpush1.bf16.msra.mxu0 %v202
  %675 = vmatprep.subr.bf16.mxu0 %v206
  %676 = vmatpush1.bf16.msra.mxu0 %v205
  %677 = vmatprep.subr.bf16.mxu0 %v209
  %678 = vmatpush1.bf16.msra.mxu0 %v208
  %679 = vmatprep.subr.bf16.mxu0 0
  %680 = vmatpush1.bf16.msra.mxu0 0
  %681 = vmatprep.subr.bf16.mxu0 0
  %682 = vmatpush1.bf16.msra.mxu0 0
  %683 = vmatprep.subr.bf16.mxu0 0
  %684 = vmatpush1.bf16.msra.mxu0 0
  %685 = vmatprep.subr.bf16.mxu0 0
  %686 = vmatpush1.bf16.msra.mxu0 0
  %687 = vmatprep.subr.bf16.mxu0 0
  %688 = vmatpush1.bf16.msra.mxu0 0
  %689 = vmatprep.subr.bf16.mxu0 0
  %690 = vmatpush1.bf16.msra.mxu0 0
  %691 = vmatprep.subr.bf16.mxu0 0
  %692 = vmatpush1.bf16.msra.mxu0 0
  %693 = vmatprep.subr.bf16.mxu0 0
  %694 = vmatpush1.bf16.msra.mxu0 0
  %695 = vmatprep.mubr.bf16.mxu0 0
  %696 = vmatmul.mubr.bf16.gmra.mrb[0].mxu0 %v661
  %v697 = vpop.f32.mrb[0].mxu0
  %v698 = vadd.f32 0.0, %v697
  %v699 = vpop.f32.mrb[0].mxu0
  %v700 = vadd.f32 0.0, %v699
  %v701 = vpop.f32.mrb[0].mxu0
  %v702 = vpop.f32.mrb[0].mxu0
  %703 = vdwg.mxu0
  %704 = vmatprep.subr.bf16.mxu0 0
  %705 = vmatpush1.bf16.msra.mxu0 %v189
  %706 = vmatprep.subr.bf16.mxu0 0
  %707 = vmatpush1.bf16.msra.mxu0 %v192
  %708 = vmatprep.subr.bf16.mxu0 0
  %709 = vmatpush1.bf16.msra.mxu0 %v195
  %710 = vmatprep.subr.bf16.mxu0 0
  %711 = vmatpush1.bf16.msra.mxu0 %v198
  %712 = vmatprep.subr.bf16.mxu0 0
  %713 = vmatpush1.bf16.msra.mxu0 %v201
  %714 = vmatprep.subr.bf16.mxu0 0
  %715 = vmatpush1.bf16.msra.mxu0 %v204
  %716 = vmatprep.subr.bf16.mxu0 0
  %717 = vmatpush1.bf16.msra.mxu0 %v207
  %718 = vmatprep.subr.bf16.mxu0 0
  %719 = vmatpush1.bf16.msra.mxu0 %v210
  %720 = vmatprep.subr.bf16.mxu0 0
  %721 = vmatpush1.bf16.msra.mxu0 0
  %722 = vmatprep.subr.bf16.mxu0 0
  %723 = vmatpush1.bf16.msra.mxu0 0
  %724 = vmatprep.subr.bf16.mxu0 0
  %725 = vmatpush1.bf16.msra.mxu0 0
  %726 = vmatprep.subr.bf16.mxu0 0
  %727 = vmatpush1.bf16.msra.mxu0 0
  %728 = vmatprep.subr.bf16.mxu0 0
  %729 = vmatpush1.bf16.msra.mxu0 0
  %730 = vmatprep.subr.bf16.mxu0 0
  %731 = vmatpush1.bf16.msra.mxu0 0
  %732 = vmatprep.subr.bf16.mxu0 0
  %733 = vmatpush1.bf16.msra.mxu0 0
  %734 = vmatprep.subr.bf16.mxu0 0
  %735 = vmatpush1.bf16.msra.mxu0 0
  %736 = vmatprep.mubr.bf16.mxu0 0
  %737 = vmatmul.mubr.bf16.gmra.mrb[0].mxu0 %v661
  %v738 = vpop.f32.mrb[0].mxu0
  %v739 = vadd.f32 0.0, %v738
  %v740 = vpop.f32.mrb[0].mxu0
  %v741 = vpop.f32.mrb[0].mxu0
  %v742 = vpop.f32.mrb[0].mxu0
  %743 = vdwg.mxu0
  %v745 = vrot.slane %v698, 7
  %v746 = vrot.slane %v698, 1
  %v747 = vrot.slane %v698, 2
  %v748 = vrot.slane %v698, 3
  %v749 = vrot.slane %v698, 4
  %v750 = vrot.slane %v698, 5
  %v751 = vrot.slane %v698, 6
  %v760 = vadd.f32 %v600, %v745
  %v761 = vadd.f32 %v603, %v698
  %v762 = vadd.f32 %v606, %v746
  %v763 = vadd.f32 %v609, %v747
  %v764 = vadd.f32 %v612, %v748
  %v765 = vadd.f32 %v615, %v749
  %v766 = vadd.f32 %v618, %v750
  %v767 = vadd.f32 %v621, %v751
  %v768 = vxor.u32 %v760, 2147483648
  %v769 = vxor.u32 %v761, 2147483648
  %v770 = vxor.u32 %v762, 2147483648
  %v771 = vxor.u32 %v763, 2147483648
  %v772 = vxor.u32 %v764, 2147483648
  %v773 = vxor.u32 %v765, 2147483648
  %v774 = vxor.u32 %v766, 2147483648
  %v775 = vxor.u32 %v767, 2147483648
  %v776 = vmul.f32 %v768, 1.442695
  %v777 = vpow.pop %v776
  %v778 = vmul.f32 %v769, 1.442695
  %v779 = vpow.pop %v778
  %v780 = vmul.f32 %v770, 1.442695
  %v781 = vpow.pop %v780
  %v782 = vmul.f32 %v771, 1.442695
  %v783 = vpow.pop %v782
  %v784 = vmul.f32 %v772, 1.442695
  %v785 = vpow.pop %v784
  %v786 = vmul.f32 %v773, 1.442695
  %v787 = vpow.pop %v786
  %v788 = vmul.f32 %v774, 1.442695
  %v789 = vpow.pop %v788
  %v790 = vmul.f32 %v775, 1.442695
  %v791 = vpow.pop %v790
  %v792 = vadd.f32 %v777, 1.0
  %v793 = vadd.f32 %v779, 1.0
  %v794 = vadd.f32 %v781, 1.0
  %v795 = vadd.f32 %v783, 1.0
  %v796 = vadd.f32 %v785, 1.0
  %v797 = vadd.f32 %v787, 1.0
  %v798 = vadd.f32 %v789, 1.0
  %v799 = vadd.f32 %v791, 1.0
  %v800 = vrcp.pop %v792
  %v801 = vmul.f32 1.0, %v800
  %v802 = vrcp.pop %v793
  %v803 = vmul.f32 1.0, %v802
  %v804 = vrcp.pop %v794
  %v805 = vmul.f32 1.0, %v804
  %v806 = vrcp.pop %v795
  %v807 = vmul.f32 1.0, %v806
  %v808 = vrcp.pop %v796
  %v809 = vmul.f32 1.0, %v808
  %v810 = vrcp.pop %v797
  %v811 = vmul.f32 1.0, %v810
  %v812 = vrcp.pop %v798
  %v813 = vmul.f32 1.0, %v812
  %v814 = vrcp.pop %v799
  %v815 = vmul.f32 1.0, %v814
  %v817 = vrot.slane %v700, 7
  %v818 = vrot.slane %v700, 1
  %v819 = vrot.slane %v700, 2
  %v820 = vrot.slane %v700, 3
  %v821 = vrot.slane %v700, 4
  %v822 = vrot.slane %v700, 5
  %v823 = vrot.slane %v700, 6
  %v832 = vadd.f32 %v601, %v817
  %v833 = vadd.f32 %v604, %v700
  %v834 = vadd.f32 %v607, %v818
  %v835 = vadd.f32 %v610, %v819
  %v836 = vadd.f32 %v613, %v820
  %v837 = vadd.f32 %v616, %v821
  %v838 = vadd.f32 %v619, %v822
  %v839 = vadd.f32 %v622, %v823
  %v840 = vxor.u32 %v832, 2147483648
  %v841 = vxor.u32 %v833, 2147483648
  %v842 = vxor.u32 %v834, 2147483648
  %v843 = vxor.u32 %v835, 2147483648
  %v844 = vxor.u32 %v836, 2147483648
  %v845 = vxor.u32 %v837, 2147483648
  %v846 = vxor.u32 %v838, 2147483648
  %v847 = vxor.u32 %v839, 2147483648
  %v848 = vmul.f32 %v840, 1.442695
  %v849 = vpow.pop %v848
  %v850 = vmul.f32 %v841, 1.442695
  %v851 = vpow.pop %v850
  %v852 = vmul.f32 %v842, 1.442695
  %v853 = vpow.pop %v852
  %v854 = vmul.f32 %v843, 1.442695
  %v855 = vpow.pop %v854
  %v856 = vmul.f32 %v844, 1.442695
  %v857 = vpow.pop %v856
  %v858 = vmul.f32 %v845, 1.442695
  %v859 = vpow.pop %v858
  %v860 = vmul.f32 %v846, 1.442695
  %v861 = vpow.pop %v860
  %v862 = vmul.f32 %v847, 1.442695
  %v863 = vpow.pop %v862
  %v864 = vadd.f32 %v849, 1.0
  %v865 = vadd.f32 %v851, 1.0
  %v866 = vadd.f32 %v853, 1.0
  %v867 = vadd.f32 %v855, 1.0
  %v868 = vadd.f32 %v857, 1.0
  %v869 = vadd.f32 %v859, 1.0
  %v870 = vadd.f32 %v861, 1.0
  %v871 = vadd.f32 %v863, 1.0
  %v872 = vrcp.pop %v864
  %v873 = vmul.f32 1.0, %v872
  %v874 = vrcp.pop %v865
  %v875 = vmul.f32 1.0, %v874
  %v876 = vrcp.pop %v866
  %v877 = vmul.f32 1.0, %v876
  %v878 = vrcp.pop %v867
  %v879 = vmul.f32 1.0, %v878
  %v880 = vrcp.pop %v868
  %v881 = vmul.f32 1.0, %v880
  %v882 = vrcp.pop %v869
  %v883 = vmul.f32 1.0, %v882
  %v884 = vrcp.pop %v870
  %v885 = vmul.f32 1.0, %v884
  %v886 = vrcp.pop %v871
  %v887 = vmul.f32 1.0, %v886
  %v888 = vadd.f32 %v739, %v63
  %v890 = vrot.slane %v888, 7
  %v891 = vrot.slane %v888, 1
  %v892 = vrot.slane %v888, 2
  %v893 = vrot.slane %v888, 3
  %v894 = vrot.slane %v888, 4
  %v895 = vrot.slane %v888, 5
  %v896 = vrot.slane %v888, 6
  %v905 = vmul.f32 %v801, %v890
  %v906 = vmul.f32 %v803, %v888
  %v907 = vmul.f32 %v805, %v891
  %v908 = vmul.f32 %v807, %v892
  %v909 = vmul.f32 %v809, %v893
  %v910 = vmul.f32 %v811, %v894
  %v911 = vmul.f32 %v813, %v895
  %v912 = vmul.f32 %v815, %v896
  %v913 = vadd.f32 %v602, %v905
  %v914 = vadd.f32 %v605, %v906
  %v915 = vadd.f32 %v608, %v907
  %v916 = vadd.f32 %v611, %v908
  %v917 = vadd.f32 %v614, %v909
  %v918 = vadd.f32 %v617, %v910
  %v919 = vadd.f32 %v620, %v911
  %v920 = vadd.f32 %v623, %v912
  %v921 = vtanh.pop %v913
  %v922 = vtanh.pop %v914
  %v923 = vtanh.pop %v915
  %v924 = vtanh.pop %v916
  %v925 = vtanh.pop %v917
  %v926 = vtanh.pop %v918
  %v927 = vtanh.pop %v919
  %v928 = vtanh.pop %v920
  %v929 = vsub.f32 1.0, %v873
  %v930 = vsub.f32 1.0, %v875
  %v931 = vsub.f32 1.0, %v877
  %v932 = vsub.f32 1.0, %v879
  %v933 = vsub.f32 1.0, %v881
  %v934 = vsub.f32 1.0, %v883
  %v935 = vsub.f32 1.0, %v885
  %v936 = vsub.f32 1.0, %v887
  %v937 = vmul.f32 %v929, %v921
  %v938 = vmul.f32 %v930, %v922
  %v939 = vmul.f32 %v931, %v923
  %v940 = vmul.f32 %v932, %v924
  %v941 = vmul.f32 %v933, %v925
  %v942 = vmul.f32 %v934, %v926
  %v943 = vmul.f32 %v935, %v927
  %v944 = vmul.f32 %v936, %v928
  %v953 = vrot.slane %v541, 7
  %v954 = vrot.slane %v542, 7
  %v955 = vrot.slane %v543, 7
  %v956 = vrot.slane %v544, 7
  %v957 = vrot.slane %v545, 7
  %v958 = vrot.slane %v546, 7
  %v959 = vrot.slane %v547, 7
  %v960 = vrot.slane %v548, 7
  %v969 = vmul.f32 %v873, %v953
  %v970 = vmul.f32 %v875, %v954
  %v971 = vmul.f32 %v877, %v955
  %v972 = vmul.f32 %v879, %v956
  %v973 = vmul.f32 %v881, %v957
  %v974 = vmul.f32 %v883, %v958
  %v975 = vmul.f32 %v885, %v959
  %v976 = vmul.f32 %v887, %v960
  %v977 = vadd.f32 %v937, %v969
  %v978 = vadd.f32 %v938, %v970
  %v979 = vadd.f32 %v939, %v971
  %v980 = vadd.f32 %v940, %v972
  %v981 = vadd.f32 %v941, %v973
  %v982 = vadd.f32 %v942, %v974
  %v983 = vadd.f32 %v943, %v975
  %v984 = vadd.f32 %v944, %v976
  %v985 = vpack.c.bf16 %v977, %v977
  %v986 = vpack.c.bf16 %v978, %v978
  %v987 = vpack.c.bf16 %v979, %v979
  %v988 = vpack.c.bf16 %v980, %v980
  %v989 = vpack.c.bf16 %v981, %v981
  %v990 = vpack.c.bf16 %v982, %v982
  %v991 = vpack.c.bf16 %v983, %v983
  %v992 = vpack.c.bf16 %v984, %v984
  %vm993 = vsmask.f32 7938
  %vm994 = vmand %vm557, %vm993
  %v995 = vld [vmem:[%s4] sm:$0x1]
  %v996 = vsel %vm994, %v985, %v995
  %997 = vst [vmem:[%s4] sm:$0x1] %v996
  %v998 = vld [vmem:[%s4 + $0x4] sm:$0x1]
  %v999 = vsel %vm994, %v986, %v998
  %1000 = vst [vmem:[%s4 + $0x4] sm:$0x1] %v999
  %v1001 = vld [vmem:[%s4 + $0x8] sm:$0x1]
  %v1002 = vsel %vm994, %v987, %v1001
  %1003 = vst [vmem:[%s4 + $0x8] sm:$0x1] %v1002
  %v1004 = vld [vmem:[%s4 + $0xc] sm:$0x1]
  %v1005 = vsel %vm994, %v988, %v1004
  %1006 = vst [vmem:[%s4 + $0xc] sm:$0x1] %v1005
  %v1007 = vld [vmem:[%s4 + $0x10] sm:$0x1]
  %v1008 = vsel %vm994, %v989, %v1007
  %1009 = vst [vmem:[%s4 + $0x10] sm:$0x1] %v1008
  %v1010 = vld [vmem:[%s4 + $0x14] sm:$0x1]
  %v1011 = vsel %vm994, %v990, %v1010
  %1012 = vst [vmem:[%s4 + $0x14] sm:$0x1] %v1011
  %v1013 = vld [vmem:[%s4 + $0x18] sm:$0x1]
  %v1014 = vsel %vm994, %v991, %v1013
  %1015 = vst [vmem:[%s4 + $0x18] sm:$0x1] %v1014
  %v1016 = vld [vmem:[%s4 + $0x1c] sm:$0x1]
  %v1017 = vsel %vm994, %v992, %v1016
  %1018 = vst [vmem:[%s4 + $0x1c] sm:$0x1] %v1017
  %v1019 = vld [vmem:[%s0] sm:$0x22]
  %v1020 = vld [vmem:[%s0 + $0x8] sm:$0x2]
  %v1021 = vld [vmem:[%s0 + $0xc] sm:$0x22]
  %v1022 = vld [vmem:[%s0 + $0x14] sm:$0x2]
  %v1023 = vld [vmem:[%s0 + $0x18] sm:$0x22]
  %v1024 = vld [vmem:[%s0 + $0x20] sm:$0x2]
  %v1025 = vld [vmem:[%s0 + $0x24] sm:$0x22]
  %v1026 = vld [vmem:[%s0 + $0x2c] sm:$0x2]
  %v1027 = vld [vmem:[%s0 + $0x30] sm:$0x22]
  %v1028 = vld [vmem:[%s0 + $0x38] sm:$0x2]
  %v1029 = vld [vmem:[%s0 + $0x3c] sm:$0x22]
  %v1030 = vld [vmem:[%s0 + $0x44] sm:$0x2]
  %v1031 = vld [vmem:[%s0 + $0x48] sm:$0x22]
  %v1032 = vld [vmem:[%s0 + $0x50] sm:$0x2]
  %v1033 = vld [vmem:[%s0 + $0x54] sm:$0x22]
  %v1034 = vld [vmem:[%s0 + $0x5c] sm:$0x2]
  %v1035 = vunpack.c.l.bf16 %v1019
  %v1036 = vunpack.c.h.bf16 %v1019
  %v1037 = vunpack.c.l.bf16 %v1020
  %v1038 = vunpack.c.l.bf16 %v1021
  %v1039 = vunpack.c.h.bf16 %v1021
  %v1040 = vunpack.c.l.bf16 %v1022
  %v1041 = vunpack.c.l.bf16 %v1023
  %v1042 = vunpack.c.h.bf16 %v1023
  %v1043 = vunpack.c.l.bf16 %v1024
  %v1044 = vunpack.c.l.bf16 %v1025
  %v1045 = vunpack.c.h.bf16 %v1025
  %v1046 = vunpack.c.l.bf16 %v1026
  %v1047 = vunpack.c.l.bf16 %v1027
  %v1048 = vunpack.c.h.bf16 %v1027
  %v1049 = vunpack.c.l.bf16 %v1028
  %v1050 = vunpack.c.l.bf16 %v1029
  %v1051 = vunpack.c.h.bf16 %v1029
  %v1052 = vunpack.c.l.bf16 %v1030
  %v1053 = vunpack.c.l.bf16 %v1031
  %v1054 = vunpack.c.h.bf16 %v1031
  %v1055 = vunpack.c.l.bf16 %v1032
  %v1056 = vunpack.c.l.bf16 %v1033
  %v1057 = vunpack.c.h.bf16 %v1033
  %v1058 = vunpack.c.l.bf16 %v1034
  %v1067 = vunpack.c.l.b16 %v985
  %v1068 = vunpack.c.l.b16 %v986
  %v1069 = vunpack.c.l.b16 %v987
  %v1070 = vunpack.c.l.b16 %v988
  %v1071 = vunpack.c.l.b16 %v989
  %v1072 = vunpack.c.l.b16 %v990
  %v1073 = vunpack.c.l.b16 %v991
  %v1074 = vunpack.c.l.b16 %v992
  %v1075 = vrot.slane %v1067, 1
  %v1076 = vsel %vm641, %v1068, %v1075
  %v1077 = vrot.slane %v1069, 7
  %v1078 = vsel %vm644, %v1077, %v1076
  %v1079 = vrot.slane %v1070, 6
  %v1080 = vsel %vm647, %v1079, %v1078
  %v1081 = vrot.slane %v1071, 5
  %v1082 = vsel %vm650, %v1081, %v1080
  %v1083 = vrot.slane %v1072, 4
  %v1084 = vsel %vm653, %v1083, %v1082
  %v1085 = vrot.slane %v1073, 3
  %v1086 = vsel %vm656, %v1085, %v1084
  %v1087 = vrot.slane %v1074, 2
  %v1088 = vsel %vm659, %v1087, %v1086
  %v1089 = vpack.c.b16 %v1088, %v1088
  %1091 = vmatprep.subr.bf16.mxu0 %v188
  %1092 = vmatpush1.bf16.msra.mxu0 %v187
  %1093 = vmatprep.subr.bf16.mxu0 %v191
  %1094 = vmatpush1.bf16.msra.mxu0 %v190
  %1095 = vmatprep.subr.bf16.mxu0 %v194
  %1096 = vmatpush1.bf16.msra.mxu0 %v193
  %1097 = vmatprep.subr.bf16.mxu0 %v197
  %1098 = vmatpush1.bf16.msra.mxu0 %v196
  %1099 = vmatprep.subr.bf16.mxu0 %v200
  %1100 = vmatpush1.bf16.msra.mxu0 %v199
  %1101 = vmatprep.subr.bf16.mxu0 %v203
  %1102 = vmatpush1.bf16.msra.mxu0 %v202
  %1103 = vmatprep.subr.bf16.mxu0 %v206
  %1104 = vmatpush1.bf16.msra.mxu0 %v205
  %1105 = vmatprep.subr.bf16.mxu0 %v209
  %1106 = vmatpush1.bf16.msra.mxu0 %v208
  %1107 = vmatprep.subr.bf16.mxu0 0
  %1108 = vmatpush1.bf16.msra.mxu0 0
  %1109 = vmatprep.subr.bf16.mxu0 0
  %1110 = vmatpush1.bf16.msra.mxu0 0
  %1111 = vmatprep.subr.bf16.mxu0 0
  %1112 = vmatpush1.bf16.msra.mxu0 0
  %1113 = vmatprep.subr.bf16.mxu0 0
  %1114 = vmatpush1.bf16.msra.mxu0 0
  %1115 = vmatprep.subr.bf16.mxu0 0
  %1116 = vmatpush1.bf16.msra.mxu0 0
  %1117 = vmatprep.subr.bf16.mxu0 0
  %1118 = vmatpush1.bf16.msra.mxu0 0
  %1119 = vmatprep.subr.bf16.mxu0 0
  %1120 = vmatpush1.bf16.msra.mxu0 0
  %1121 = vmatprep.subr.bf16.mxu0 0
  %1122 = vmatpush1.bf16.msra.mxu0 0
  %1123 = vmatprep.mubr.bf16.mxu0 0
  %1124 = vmatmul.mubr.bf16.gmra.mrb[0].mxu0 %v1089
  %v1125 = vpop.f32.mrb[0].mxu0
  %v1126 = vadd.f32 0.0, %v1125
  %v1127 = vpop.f32.mrb[0].mxu0
  %v1128 = vadd.f32 0.0, %v1127
  %v1129 = vpop.f32.mrb[0].mxu0
  %v1130 = vpop.f32.mrb[0].mxu0
  %1131 = vdwg.mxu0
  %1132 = vmatprep.subr.bf16.mxu0 0
  %1133 = vmatpush1.bf16.msra.mxu0 %v189
  %1134 = vmatprep.subr.bf16.mxu0 0
  %1135 = vmatpush1.bf16.msra.mxu0 %v192
  %1136 = vmatprep.subr.bf16.mxu0 0
  %1137 = vmatpush1.bf16.msra.mxu0 %v195
  %1138 = vmatprep.subr.bf16.mxu0 0
  %1139 = vmatpush1.bf16.msra.mxu0 %v198
  %1140 = vmatprep.subr.bf16.mxu0 0
  %1141 = vmatpush1.bf16.msra.mxu0 %v201
  %1142 = vmatprep.subr.bf16.mxu0 0
  %1143 = vmatpush1.bf16.msra.mxu0 %v204
  %1144 = vmatprep.subr.bf16.mxu0 0
  %1145 = vmatpush1.bf16.msra.mxu0 %v207
  %1146 = vmatprep.subr.bf16.mxu0 0
  %1147 = vmatpush1.bf16.msra.mxu0 %v210
  %1148 = vmatprep.subr.bf16.mxu0 0
  %1149 = vmatpush1.bf16.msra.mxu0 0
  %1150 = vmatprep.subr.bf16.mxu0 0
  %1151 = vmatpush1.bf16.msra.mxu0 0
  %1152 = vmatprep.subr.bf16.mxu0 0
  %1153 = vmatpush1.bf16.msra.mxu0 0
  %1154 = vmatprep.subr.bf16.mxu0 0
  %1155 = vmatpush1.bf16.msra.mxu0 0
  %1156 = vmatprep.subr.bf16.mxu0 0
  %1157 = vmatpush1.bf16.msra.mxu0 0
  %1158 = vmatprep.subr.bf16.mxu0 0
  %1159 = vmatpush1.bf16.msra.mxu0 0
  %1160 = vmatprep.subr.bf16.mxu0 0
  %1161 = vmatpush1.bf16.msra.mxu0 0
  %1162 = vmatprep.subr.bf16.mxu0 0
  %1163 = vmatpush1.bf16.msra.mxu0 0
  %1164 = vmatprep.mubr.bf16.mxu0 0
  %1165 = vmatmul.mubr.bf16.gmra.mrb[0].mxu0 %v1089
  %v1166 = vpop.f32.mrb[0].mxu0
  %v1167 = vadd.f32 0.0, %v1166
  %v1168 = vpop.f32.mrb[0].mxu0
  %v1169 = vpop.f32.mrb[0].mxu0
  %v1170 = vpop.f32.mrb[0].mxu0
  %1171 = vdwg.mxu0
  %v1173 = vrot.slane %v1126, 6
  %v1174 = vrot.slane %v1126, 7
  %v1175 = vrot.slane %v1126, 1
  %v1176 = vrot.slane %v1126, 2
  %v1177 = vrot.slane %v1126, 3
  %v1178 = vrot.slane %v1126, 4
  %v1179 = vrot.slane %v1126, 5
  %v1188 = vadd.f32 %v1035, %v1173
  %v1189 = vadd.f32 %v1038, %v1174
  %v1190 = vadd.f32 %v1041, %v1126
  %v1191 = vadd.f32 %v1044, %v1175
  %v1192 = vadd.f32 %v1047, %v1176
  %v1193 = vadd.f32 %v1050, %v1177
  %v1194 = vadd.f32 %v1053, %v1178
  %v1195 = vadd.f32 %v1056, %v1179
  %v1196 = vxor.u32 %v1188, 2147483648
  %v1197 = vxor.u32 %v1189, 2147483648
  %v1198 = vxor.u32 %v1190, 2147483648
  %v1199 = vxor.u32 %v1191, 2147483648
  %v1200 = vxor.u32 %v1192, 2147483648
  %v1201 = vxor.u32 %v1193, 2147483648
  %v1202 = vxor.u32 %v1194, 2147483648
  %v1203 = vxor.u32 %v1195, 2147483648
  %v1204 = vmul.f32 %v1196, 1.442695
  %v1205 = vpow.pop %v1204
  %v1206 = vmul.f32 %v1197, 1.442695
  %v1207 = vpow.pop %v1206
  %v1208 = vmul.f32 %v1198, 1.442695
  %v1209 = vpow.pop %v1208
  %v1210 = vmul.f32 %v1199, 1.442695
  %v1211 = vpow.pop %v1210
  %v1212 = vmul.f32 %v1200, 1.442695
  %v1213 = vpow.pop %v1212
  %v1214 = vmul.f32 %v1201, 1.442695
  %v1215 = vpow.pop %v1214
  %v1216 = vmul.f32 %v1202, 1.442695
  %v1217 = vpow.pop %v1216
  %v1218 = vmul.f32 %v1203, 1.442695
  %v1219 = vpow.pop %v1218
  %v1220 = vadd.f32 %v1205, 1.0
  %v1221 = vadd.f32 %v1207, 1.0
  %v1222 = vadd.f32 %v1209, 1.0
  %v1223 = vadd.f32 %v1211, 1.0
  %v1224 = vadd.f32 %v1213, 1.0
  %v1225 = vadd.f32 %v1215, 1.0
  %v1226 = vadd.f32 %v1217, 1.0
  %v1227 = vadd.f32 %v1219, 1.0
  %v1228 = vrcp.pop %v1220
  %v1229 = vmul.f32 1.0, %v1228
  %v1230 = vrcp.pop %v1221
  %v1231 = vmul.f32 1.0, %v1230
  %v1232 = vrcp.pop %v1222
  %v1233 = vmul.f32 1.0, %v1232
  %v1234 = vrcp.pop %v1223
  %v1235 = vmul.f32 1.0, %v1234
  %v1236 = vrcp.pop %v1224
  %v1237 = vmul.f32 1.0, %v1236
  %v1238 = vrcp.pop %v1225
  %v1239 = vmul.f32 1.0, %v1238
  %v1240 = vrcp.pop %v1226
  %v1241 = vmul.f32 1.0, %v1240
  %v1242 = vrcp.pop %v1227
  %v1243 = vmul.f32 1.0, %v1242
  %v1245 = vrot.slane %v1128, 6
  %v1246 = vrot.slane %v1128, 7
  %v1247 = vrot.slane %v1128, 1
  %v1248 = vrot.slane %v1128, 2
  %v1249 = vrot.slane %v1128, 3
  %v1250 = vrot.slane %v1128, 4
  %v1251 = vrot.slane %v1128, 5
  %v1260 = vadd.f32 %v1036, %v1245
  %v1261 = vadd.f32 %v1039, %v1246
  %v1262 = vadd.f32 %v1042, %v1128
  %v1263 = vadd.f32 %v1045, %v1247
  %v1264 = vadd.f32 %v1048, %v1248
  %v1265 = vadd.f32 %v1051, %v1249
  %v1266 = vadd.f32 %v1054, %v1250
  %v1267 = vadd.f32 %v1057, %v1251
  %v1268 = vxor.u32 %v1260, 2147483648
  %v1269 = vxor.u32 %v1261, 2147483648
  %v1270 = vxor.u32 %v1262, 2147483648
  %v1271 = vxor.u32 %v1263, 2147483648
  %v1272 = vxor.u32 %v1264, 2147483648
  %v1273 = vxor.u32 %v1265, 2147483648
  %v1274 = vxor.u32 %v1266, 2147483648
  %v1275 = vxor.u32 %v1267, 2147483648
  %v1276 = vmul.f32 %v1268, 1.442695
  %v1277 = vpow.pop %v1276
  %v1278 = vmul.f32 %v1269, 1.442695
  %v1279 = vpow.pop %v1278
  %v1280 = vmul.f32 %v1270, 1.442695
  %v1281 = vpow.pop %v1280
  %v1282 = vmul.f32 %v1271, 1.442695
  %v1283 = vpow.pop %v1282
  %v1284 = vmul.f32 %v1272, 1.442695
  %v1285 = vpow.pop %v1284
  %v1286 = vmul.f32 %v1273, 1.442695
  %v1287 = vpow.pop %v1286
  %v1288 = vmul.f32 %v1274, 1.442695
  %v1289 = vpow.pop %v1288
  %v1290 = vmul.f32 %v1275, 1.442695
  %v1291 = vpow.pop %v1290
  %v1292 = vadd.f32 %v1277, 1.0
  %v1293 = vadd.f32 %v1279, 1.0
  %v1294 = vadd.f32 %v1281, 1.0
  %v1295 = vadd.f32 %v1283, 1.0
  %v1296 = vadd.f32 %v1285, 1.0
  %v1297 = vadd.f32 %v1287, 1.0
  %v1298 = vadd.f32 %v1289, 1.0
  %v1299 = vadd.f32 %v1291, 1.0
  %v1300 = vrcp.pop %v1292
  %v1301 = vmul.f32 1.0, %v1300
  %v1302 = vrcp.pop %v1293
  %v1303 = vmul.f32 1.0, %v1302
  %v1304 = vrcp.pop %v1294
  %v1305 = vmul.f32 1.0, %v1304
  %v1306 = vrcp.pop %v1295
  %v1307 = vmul.f32 1.0, %v1306
  %v1308 = vrcp.pop %v1296
  %v1309 = vmul.f32 1.0, %v1308
  %v1310 = vrcp.pop %v1297
  %v1311 = vmul.f32 1.0, %v1310
  %v1312 = vrcp.pop %v1298
  %v1313 = vmul.f32 1.0, %v1312
  %v1314 = vrcp.pop %v1299
  %v1315 = vmul.f32 1.0, %v1314
  %v1316 = vadd.f32 %v1167, %v63
  %v1318 = vrot.slane %v1316, 6
  %v1319 = vrot.slane %v1316, 7
  %v1320 = vrot.slane %v1316, 1
  %v1321 = vrot.slane %v1316, 2
  %v1322 = vrot.slane %v1316, 3
  %v1323 = vrot.slane %v1316, 4
  %v1324 = vrot.slane %v1316, 5
  %v1333 = vmul.f32 %v1229, %v1318
  %v1334 = vmul.f32 %v1231, %v1319
  %v1335 = vmul.f32 %v1233, %v1316
  %v1336 = vmul.f32 %v1235, %v1320
  %v1337 = vmul.f32 %v1237, %v1321
  %v1338 = vmul.f32 %v1239, %v1322
  %v1339 = vmul.f32 %v1241, %v1323
  %v1340 = vmul.f32 %v1243, %v1324
  %v1341 = vadd.f32 %v1037, %v1333
  %v1342 = vadd.f32 %v1040, %v1334
  %v1343 = vadd.f32 %v1043, %v1335
  %v1344 = vadd.f32 %v1046, %v1336
  %v1345 = vadd.f32 %v1049, %v1337
  %v1346 = vadd.f32 %v1052, %v1338
  %v1347 = vadd.f32 %v1055, %v1339
  %v1348 = vadd.f32 %v1058, %v1340
  %v1349 = vtanh.pop %v1341
  %v1350 = vtanh.pop %v1342
  %v1351 = vtanh.pop %v1343
  %v1352 = vtanh.pop %v1344
  %v1353 = vtanh.pop %v1345
  %v1354 = vtanh.pop %v1346
  %v1355 = vtanh.pop %v1347
  %v1356 = vtanh.pop %v1348
  %v1357 = vsub.f32 1.0, %v1301
  %v1358 = vsub.f32 1.0, %v1303
  %v1359 = vsub.f32 1.0, %v1305
  %v1360 = vsub.f32 1.0, %v1307
  %v1361 = vsub.f32 1.0, %v1309
  %v1362 = vsub.f32 1.0, %v1311
  %v1363 = vsub.f32 1.0, %v1313
  %v1364 = vsub.f32 1.0, %v1315
  %v1365 = vmul.f32 %v1357, %v1349
  %v1366 = vmul.f32 %v1358, %v1350
  %v1367 = vmul.f32 %v1359, %v1351
  %v1368 = vmul.f32 %v1360, %v1352
  %v1369 = vmul.f32 %v1361, %v1353
  %v1370 = vmul.f32 %v1362, %v1354
  %v1371 = vmul.f32 %v1363, %v1355
  %v1372 = vmul.f32 %v1364, %v1356
  %v1381 = vrot.slane %v977, 7
  %v1382 = vrot.slane %v978, 7
  %v1383 = vrot.slane %v979, 7
  %v1384 = vrot.slane %v980, 7
  %v1385 = vrot.slane %v981, 7
  %v1386 = vrot.slane %v982, 7
  %v1387 = vrot.slane %v983, 7
  %v1388 = vrot.slane %v984, 7
  %v1397 = vmul.f32 %v1301, %v1381
  %v1398 = vmul.f32 %v1303, %v1382
  %v1399 = vmul.f32 %v1305, %v1383
  %v1400 = vmul.f32 %v1307, %v1384
  %v1401 = vmul.f32 %v1309, %v1385
  %v1402 = vmul.f32 %v1311, %v1386
  %v1403 = vmul.f32 %v1313, %v1387
  %v1404 = vmul.f32 %v1315, %v1388
  %v1405 = vadd.f32 %v1365, %v1397
  %v1406 = vadd.f32 %v1366, %v1398
  %v1407 = vadd.f32 %v1367, %v1399
  %v1408 = vadd.f32 %v1368, %v1400
  %v1409 = vadd.f32 %v1369, %v1401
  %v1410 = vadd.f32 %v1370, %v1402
  %v1411 = vadd.f32 %v1371, %v1403
  %v1412 = vadd.f32 %v1372, %v1404
  %v1413 = vpack.c.bf16 %v1405, %v1405
  %v1414 = vpack.c.bf16 %v1406, %v1406
  %v1415 = vpack.c.bf16 %v1407, %v1407
  %v1416 = vpack.c.bf16 %v1408, %v1408
  %v1417 = vpack.c.bf16 %v1409, %v1409
  %v1418 = vpack.c.bf16 %v1410, %v1410
  %v1419 = vpack.c.bf16 %v1411, %v1411
  %v1420 = vpack.c.bf16 %v1412, %v1412
  %vm1421 = vcmask 1041409
  %vm1422 = vsmask.f32 1280
  %vm1423 = vmand %vm1421, %vm1422
  %v1424 = vld [vmem:[%s4] sm:$0x2]
  %v1425 = vsel %vm1423, %v1413, %v1424
  %1426 = vst [vmem:[%s4] sm:$0x2] %v1425
  %v1427 = vld [vmem:[%s4 + $0x4] sm:$0x2]
  %v1428 = vsel %vm1423, %v1414, %v1427
  %1429 = vst [vmem:[%s4 + $0x4] sm:$0x2] %v1428
  %v1430 = vld [vmem:[%s4 + $0x8] sm:$0x2]
  %v1431 = vsel %vm1423, %v1415, %v1430
  %1432 = vst [vmem:[%s4 + $0x8] sm:$0x2] %v1431
  %v1433 = vld [vmem:[%s4 + $0xc] sm:$0x2]
  %v1434 = vsel %vm1423, %v1416, %v1433
  %1435 = vst [vmem:[%s4 + $0xc] sm:$0x2] %v1434
  %v1436 = vld [vmem:[%s4 + $0x10] sm:$0x2]
  %v1437 = vsel %vm1423, %v1417, %v1436
  %1438 = vst [vmem:[%s4 + $0x10] sm:$0x2] %v1437
  %v1439 = vld [vmem:[%s4 + $0x14] sm:$0x2]
  %v1440 = vsel %vm1423, %v1418, %v1439
  %1441 = vst [vmem:[%s4 + $0x14] sm:$0x2] %v1440
  %v1442 = vld [vmem:[%s4 + $0x18] sm:$0x2]
  %v1443 = vsel %vm1423, %v1419, %v1442
  %1444 = vst [vmem:[%s4 + $0x18] sm:$0x2] %v1443
  %v1445 = vld [vmem:[%s4 + $0x1c] sm:$0x2]
  %v1446 = vsel %vm1423, %v1420, %v1445
  %1447 = vst [vmem:[%s4 + $0x1c] sm:$0x2] %v1446
  %v1448 = vld [vmem:[%s0] sm:$0x22]
  %v1449 = vld [vmem:[%s0 + $0x8] sm:$0x2]
  %v1450 = vld [vmem:[%s0 + $0xc] sm:$0x22]
  %v1451 = vld [vmem:[%s0 + $0x14] sm:$0x2]
  %v1452 = vld [vmem:[%s0 + $0x18] sm:$0x22]
  %v1453 = vld [vmem:[%s0 + $0x20] sm:$0x2]
  %v1454 = vld [vmem:[%s0 + $0x24] sm:$0x22]
  %v1455 = vld [vmem:[%s0 + $0x2c] sm:$0x2]
  %v1456 = vld [vmem:[%s0 + $0x30] sm:$0x22]
  %v1457 = vld [vmem:[%s0 + $0x38] sm:$0x2]
  %v1458 = vld [vmem:[%s0 + $0x3c] sm:$0x22]
  %v1459 = vld [vmem:[%s0 + $0x44] sm:$0x2]
  %v1460 = vld [vmem:[%s0 + $0x48] sm:$0x22]
  %v1461 = vld [vmem:[%s0 + $0x50] sm:$0x2]
  %v1462 = vld [vmem:[%s0 + $0x54] sm:$0x22]
  %v1463 = vld [vmem:[%s0 + $0x5c] sm:$0x2]
  %v1464 = vunpack.c.l.bf16 %v1448
  %v1465 = vunpack.c.h.bf16 %v1448
  %v1466 = vunpack.c.l.bf16 %v1449
  %v1467 = vunpack.c.l.bf16 %v1450
  %v1468 = vunpack.c.h.bf16 %v1450
  %v1469 = vunpack.c.l.bf16 %v1451
  %v1470 = vunpack.c.l.bf16 %v1452
  %v1471 = vunpack.c.h.bf16 %v1452
  %v1472 = vunpack.c.l.bf16 %v1453
  %v1473 = vunpack.c.l.bf16 %v1454
  %v1474 = vunpack.c.h.bf16 %v1454
  %v1475 = vunpack.c.l.bf16 %v1455
  %v1476 = vunpack.c.l.bf16 %v1456
  %v1477 = vunpack.c.h.bf16 %v1456
  %v1478 = vunpack.c.l.bf16 %v1457
  %v1479 = vunpack.c.l.bf16 %v1458
  %v1480 = vunpack.c.h.bf16 %v1458
  %v1481 = vunpack.c.l.bf16 %v1459
  %v1482 = vunpack.c.l.bf16 %v1460
  %v1483 = vunpack.c.h.bf16 %v1460
  %v1484 = vunpack.c.l.bf16 %v1461
  %v1485 = vunpack.c.l.bf16 %v1462
  %v1486 = vunpack.c.h.bf16 %v1462
  %v1487 = vunpack.c.l.bf16 %v1463
  %v1496 = vunpack.c.l.b16 %v1413
  %v1497 = vunpack.c.l.b16 %v1414
  %v1498 = vunpack.c.l.b16 %v1415
  %v1499 = vunpack.c.l.b16 %v1416
  %v1500 = vunpack.c.l.b16 %v1417
  %v1501 = vunpack.c.l.b16 %v1418
  %v1502 = vunpack.c.l.b16 %v1419
  %v1503 = vunpack.c.l.b16 %v1420
  %v1504 = vrot.slane %v1496, 2
  %v1505 = vrot.slane %v1497, 1
  %v1506 = vsel %vm641, %v1505, %v1504
  %v1507 = vsel %vm644, %v1498, %v1506
  %v1508 = vrot.slane %v1499, 7
  %v1509 = vsel %vm647, %v1508, %v1507
  %v1510 = vrot.slane %v1500, 6
  %v1511 = vsel %vm650, %v1510, %v1509
  %v1512 = vrot.slane %v1501, 5
  %v1513 = vsel %vm653, %v1512, %v1511
  %v1514 = vrot.slane %v1502, 4
  %v1515 = vsel %vm656, %v1514, %v1513
  %v1516 = vrot.slane %v1503, 3
  %v1517 = vsel %vm659, %v1516, %v1515
  %v1518 = vpack.c.b16 %v1517, %v1517
  %1520 = vmatprep.subr.bf16.mxu0 %v188
  %1521 = vmatpush1.bf16.msra.mxu0 %v187
  %1522 = vmatprep.subr.bf16.mxu0 %v191
  %1523 = vmatpush1.bf16.msra.mxu0 %v190
  %1524 = vmatprep.subr.bf16.mxu0 %v194
  %1525 = vmatpush1.bf16.msra.mxu0 %v193
  %1526 = vmatprep.subr.bf16.mxu0 %v197
  %1527 = vmatpush1.bf16.msra.mxu0 %v196
  %1528 = vmatprep.subr.bf16.mxu0 %v200
  %1529 = vmatpush1.bf16.msra.mxu0 %v199
  %1530 = vmatprep.subr.bf16.mxu0 %v203
  %1531 = vmatpush1.bf16.msra.mxu0 %v202
  %1532 = vmatprep.subr.bf16.mxu0 %v206
  %1533 = vmatpush1.bf16.msra.mxu0 %v205
  %1534 = vmatprep.subr.bf16.mxu0 %v209
  %1535 = vmatpush1.bf16.msra.mxu0 %v208
  %1536 = vmatprep.subr.bf16.mxu0 0
  %1537 = vmatpush1.bf16.msra.mxu0 0
  %1538 = vmatprep.subr.bf16.mxu0 0
  %1539 = vmatpush1.bf16.msra.mxu0 0
  %1540 = vmatprep.subr.bf16.mxu0 0
  %1541 = vmatpush1.bf16.msra.mxu0 0
  %1542 = vmatprep.subr.bf16.mxu0 0
  %1543 = vmatpush1.bf16.msra.mxu0 0
  %1544 = vmatprep.subr.bf16.mxu0 0
  %1545 = vmatpush1.bf16.msra.mxu0 0
  %1546 = vmatprep.subr.bf16.mxu0 0
  %1547 = vmatpush1.bf16.msra.mxu0 0
  %1548 = vmatprep.subr.bf16.mxu0 0
  %1549 = vmatpush1.bf16.msra.mxu0 0
  %1550 = vmatprep.subr.bf16.mxu0 0
  %1551 = vmatpush1.bf16.msra.mxu0 0
  %1552 = vmatprep.mubr.bf16.mxu0 0
  %1553 = vmatmul.mubr.bf16.gmra.mrb[0].mxu0 %v1518
  %v1554 = vpop.f32.mrb[0].mxu0
  %v1555 = vadd.f32 0.0, %v1554
  %v1556 = vpop.f32.mrb[0].mxu0
  %v1557 = vadd.f32 0.0, %v1556
  %v1558 = vpop.f32.mrb[0].mxu0
  %v1559 = vpop.f32.mrb[0].mxu0
  %1560 = vdwg.mxu0
  %1561 = vmatprep.subr.bf16.mxu0 0
  %1562 = vmatpush1.bf16.msra.mxu0 %v189
  %1563 = vmatprep.subr.bf16.mxu0 0
  %1564 = vmatpush1.bf16.msra.mxu0 %v192
  %1565 = vmatprep.subr.bf16.mxu0 0
  %1566 = vmatpush1.bf16.msra.mxu0 %v195
  %1567 = vmatprep.subr.bf16.mxu0 0
  %1568 = vmatpush1.bf16.msra.mxu0 %v198
  %1569 = vmatprep.subr.bf16.mxu0 0
  %1570 = vmatpush1.bf16.msra.mxu0 %v201
  %1571 = vmatprep.subr.bf16.mxu0 0
  %1572 = vmatpush1.bf16.msra.mxu0 %v204
  %1573 = vmatprep.subr.bf16.mxu0 0
  %1574 = vmatpush1.bf16.msra.mxu0 %v207
  %1575 = vmatprep.subr.bf16.mxu0 0
  %1576 = vmatpush1.bf16.msra.mxu0 %v210
  %1577 = vmatprep.subr.bf16.mxu0 0
  %1578 = vmatpush1.bf16.msra.mxu0 0
  %1579 = vmatprep.subr.bf16.mxu0 0
  %1580 = vmatpush1.bf16.msra.mxu0 0
  %1581 = vmatprep.subr.bf16.mxu0 0
  %1582 = vmatpush1.bf16.msra.mxu0 0
  %1583 = vmatprep.subr.bf16.mxu0 0
  %1584 = vmatpush1.bf16.msra.mxu0 0
  %1585 = vmatprep.subr.bf16.mxu0 0
  %1586 = vmatpush1.bf16.msra.mxu0 0
  %1587 = vmatprep.subr.bf16.mxu0 0
  %1588 = vmatpush1.bf16.msra.mxu0 0
  %1589 = vmatprep.subr.bf16.mxu0 0
  %1590 = vmatpush1.bf16.msra.mxu0 0
  %1591 = vmatprep.subr.bf16.mxu0 0
  %1592 = vmatpush1.bf16.msra.mxu0 0
  %1593 = vmatprep.mubr.bf16.mxu0 0
  %1594 = vmatmul.mubr.bf16.gmra.mrb[0].mxu0 %v1518
  %v1595 = vpop.f32.mrb[0].mxu0
  %v1596 = vadd.f32 0.0, %v1595
  %v1597 = vpop.f32.mrb[0].mxu0
  %v1598 = vpop.f32.mrb[0].mxu0
  %v1599 = vpop.f32.mrb[0].mxu0
  %1600 = vdwg.mxu0
  %v1602 = vrot.slane %v1555, 5
  %v1603 = vrot.slane %v1555, 6
  %v1604 = vrot.slane %v1555, 7
  %v1605 = vrot.slane %v1555, 1
  %v1606 = vrot.slane %v1555, 2
  %v1607 = vrot.slane %v1555, 3
  %v1608 = vrot.slane %v1555, 4
  %v1617 = vadd.f32 %v1464, %v1602
  %v1618 = vadd.f32 %v1467, %v1603
  %v1619 = vadd.f32 %v1470, %v1604
  %v1620 = vadd.f32 %v1473, %v1555
  %v1621 = vadd.f32 %v1476, %v1605
  %v1622 = vadd.f32 %v1479, %v1606
  %v1623 = vadd.f32 %v1482, %v1607
  %v1624 = vadd.f32 %v1485, %v1608
  %v1625 = vxor.u32 %v1617, 2147483648
  %v1626 = vxor.u32 %v1618, 2147483648
  %v1627 = vxor.u32 %v1619, 2147483648
  %v1628 = vxor.u32 %v1620, 2147483648
  %v1629 = vxor.u32 %v1621, 2147483648
  %v1630 = vxor.u32 %v1622, 2147483648
  %v1631 = vxor.u32 %v1623, 2147483648
  %v1632 = vxor.u32 %v1624, 2147483648
  %v1633 = vmul.f32 %v1625, 1.442695
  %v1634 = vpow.pop %v1633
  %v1635 = vmul.f32 %v1626, 1.442695
  %v1636 = vpow.pop %v1635
  %v1637 = vmul.f32 %v1627, 1.442695
  %v1638 = vpow.pop %v1637
  %v1639 = vmul.f32 %v1628, 1.442695
  %v1640 = vpow.pop %v1639
  %v1641 = vmul.f32 %v1629, 1.442695
  %v1642 = vpow.pop %v1641
  %v1643 = vmul.f32 %v1630, 1.442695
  %v1644 = vpow.pop %v1643
  %v1645 = vmul.f32 %v1631, 1.442695
  %v1646 = vpow.pop %v1645
  %v1647 = vmul.f32 %v1632, 1.442695
  %v1648 = vpow.pop %v1647
  %v1649 = vadd.f32 %v1634, 1.0
  %v1650 = vadd.f32 %v1636, 1.0
  %v1651 = vadd.f32 %v1638, 1.0
  %v1652 = vadd.f32 %v1640, 1.0
  %v1653 = vadd.f32 %v1642, 1.0
  %v1654 = vadd.f32 %v1644, 1.0
  %v1655 = vadd.f32 %v1646, 1.0
  %v1656 = vadd.f32 %v1648, 1.0
  %v1657 = vrcp.pop %v1649
  %v1658 = vmul.f32 1.0, %v1657
  %v1659 = vrcp.pop %v1650
  %v1660 = vmul.f32 1.0, %v1659
  %v1661 = vrcp.pop %v1651
  %v1662 = vmul.f32 1.0, %v1661
  %v1663 = vrcp.pop %v1652
  %v1664 = vmul.f32 1.0, %v1663
  %v1665 = vrcp.pop %v1653
  %v1666 = vmul.f32 1.0, %v1665
  %v1667 = vrcp.pop %v1654
  %v1668 = vmul.f32 1.0, %v1667
  %v1669 = vrcp.pop %v1655
  %v1670 = vmul.f32 1.0, %v1669
  %v1671 = vrcp.pop %v1656
  %v1672 = vmul.f32 1.0, %v1671
  %v1674 = vrot.slane %v1557, 5
  %v1675 = vrot.slane %v1557, 6
  %v1676 = vrot.slane %v1557, 7
  %v1677 = vrot.slane %v1557, 1
  %v1678 = vrot.slane %v1557, 2
  %v1679 = vrot.slane %v1557, 3
  %v1680 = vrot.slane %v1557, 4
  %v1689 = vadd.f32 %v1465, %v1674
  %v1690 = vadd.f32 %v1468, %v1675
  %v1691 = vadd.f32 %v1471, %v1676
  %v1692 = vadd.f32 %v1474, %v1557
  %v1693 = vadd.f32 %v1477, %v1677
  %v1694 = vadd.f32 %v1480, %v1678
  %v1695 = vadd.f32 %v1483, %v1679
  %v1696 = vadd.f32 %v1486, %v1680
  %v1697 = vxor.u32 %v1689, 2147483648
  %v1698 = vxor.u32 %v1690, 2147483648
  %v1699 = vxor.u32 %v1691, 2147483648
  %v1700 = vxor.u32 %v1692, 2147483648
  %v1701 = vxor.u32 %v1693, 2147483648
  %v1702 = vxor.u32 %v1694, 2147483648
  %v1703 = vxor.u32 %v1695, 2147483648
  %v1704 = vxor.u32 %v1696, 2147483648
  %v1705 = vmul.f32 %v1697, 1.442695
  %v1706 = vpow.pop %v1705
  %v1707 = vmul.f32 %v1698, 1.442695
  %v1708 = vpow.pop %v1707
  %v1709 = vmul.f32 %v1699, 1.442695
  %v1710 = vpow.pop %v1709
  %v1711 = vmul.f32 %v1700, 1.442695
  %v1712 = vpow.pop %v1711
  %v1713 = vmul.f32 %v1701, 1.442695
  %v1714 = vpow.pop %v1713
  %v1715 = vmul.f32 %v1702, 1.442695
  %v1716 = vpow.pop %v1715
  %v1717 = vmul.f32 %v1703, 1.442695
  %v1718 = vpow.pop %v1717
  %v1719 = vmul.f32 %v1704, 1.442695
  %v1720 = vpow.pop %v1719
  %v1721 = vadd.f32 %v1706, 1.0
  %v1722 = vadd.f32 %v1708, 1.0
  %v1723 = vadd.f32 %v1710, 1.0
  %v1724 = vadd.f32 %v1712, 1.0
  %v1725 = vadd.f32 %v1714, 1.0
  %v1726 = vadd.f32 %v1716, 1.0
  %v1727 = vadd.f32 %v1718, 1.0
  %v1728 = vadd.f32 %v1720, 1.0
  %v1729 = vrcp.pop %v1721
  %v1730 = vmul.f32 1.0, %v1729
  %v1731 = vrcp.pop %v1722
  %v1732 = vmul.f32 1.0, %v1731
  %v1733 = vrcp.pop %v1723
  %v1734 = vmul.f32 1.0, %v1733
  %v1735 = vrcp.pop %v1724
  %v1736 = vmul.f32 1.0, %v1735
  %v1737 = vrcp.pop %v1725
  %v1738 = vmul.f32 1.0, %v1737
  %v1739 = vrcp.pop %v1726
  %v1740 = vmul.f32 1.0, %v1739
  %v1741 = vrcp.pop %v1727
  %v1742 = vmul.f32 1.0, %v1741
  %v1743 = vrcp.pop %v1728
  %v1744 = vmul.f32 1.0, %v1743
  %v1745 = vadd.f32 %v1596, %v63
  %v1747 = vrot.slane %v1745, 5
  %v1748 = vrot.slane %v1745, 6
  %v1749 = vrot.slane %v1745, 7
  %v1750 = vrot.slane %v1745, 1
  %v1751 = vrot.slane %v1745, 2
  %v1752 = vrot.slane %v1745, 3
  %v1753 = vrot.slane %v1745, 4
  %v1762 = vmul.f32 %v1658, %v1747
  %v1763 = vmul.f32 %v1660, %v1748
  %v1764 = vmul.f32 %v1662, %v1749
  %v1765 = vmul.f32 %v1664, %v1745
  %v1766 = vmul.f32 %v1666, %v1750
  %v1767 = vmul.f32 %v1668, %v1751
  %v1768 = vmul.f32 %v1670, %v1752
  %v1769 = vmul.f32 %v1672, %v1753
  %v1770 = vadd.f32 %v1466, %v1762
  %v1771 = vadd.f32 %v1469, %v1763
  %v1772 = vadd.f32 %v1472, %v1764
  %v1773 = vadd.f32 %v1475, %v1765
  %v1774 = vadd.f32 %v1478, %v1766
  %v1775 = vadd.f32 %v1481, %v1767
  %v1776 = vadd.f32 %v1484, %v1768
  %v1777 = vadd.f32 %v1487, %v1769
  %v1778 = vtanh.pop %v1770
  %v1779 = vtanh.pop %v1771
  %v1780 = vtanh.pop %v1772
  %v1781 = vtanh.pop %v1773
  %v1782 = vtanh.pop %v1774
  %v1783 = vtanh.pop %v1775
  %v1784 = vtanh.pop %v1776
  %v1785 = vtanh.pop %v1777
  %v1786 = vsub.f32 1.0, %v1730
  %v1787 = vsub.f32 1.0, %v1732
  %v1788 = vsub.f32 1.0, %v1734
  %v1789 = vsub.f32 1.0, %v1736
  %v1790 = vsub.f32 1.0, %v1738
  %v1791 = vsub.f32 1.0, %v1740
  %v1792 = vsub.f32 1.0, %v1742
  %v1793 = vsub.f32 1.0, %v1744
  %v1794 = vmul.f32 %v1786, %v1778
  %v1795 = vmul.f32 %v1787, %v1779
  %v1796 = vmul.f32 %v1788, %v1780
  %v1797 = vmul.f32 %v1789, %v1781
  %v1798 = vmul.f32 %v1790, %v1782
  %v1799 = vmul.f32 %v1791, %v1783
  %v1800 = vmul.f32 %v1792, %v1784
  %v1801 = vmul.f32 %v1793, %v1785
  %v1810 = vrot.slane %v1405, 7
  %v1811 = vrot.slane %v1406, 7
  %v1812 = vrot.slane %v1407, 7
  %v1813 = vrot.slane %v1408, 7
  %v1814 = vrot.slane %v1409, 7
  %v1815 = vrot.slane %v1410, 7
  %v1816 = vrot.slane %v1411, 7
  %v1817 = vrot.slane %v1412, 7
  %v1826 = vmul.f32 %v1730, %v1810
  %v1827 = vmul.f32 %v1732, %v1811
  %v1828 = vmul.f32 %v1734, %v1812
  %v1829 = vmul.f32 %v1736, %v1813
  %v1830 = vmul.f32 %v1738, %v1814
  %v1831 = vmul.f32 %v1740, %v1815
  %v1832 = vmul.f32 %v1742, %v1816
  %v1833 = vmul.f32 %v1744, %v1817
  %v1834 = vadd.f32 %v1794, %v1826
  %v1835 = vadd.f32 %v1795, %v1827
  %v1836 = vadd.f32 %v1796, %v1828
  %v1837 = vadd.f32 %v1797, %v1829
  %v1838 = vadd.f32 %v1798, %v1830
  %v1839 = vadd.f32 %v1799, %v1831
  %v1840 = vadd.f32 %v1800, %v1832
  %v1841 = vadd.f32 %v1801, %v1833
  %v1842 = vpack.c.bf16 %v1834, %v1834
  %v1843 = vpack.c.bf16 %v1835, %v1835
  %v1844 = vpack.c.bf16 %v1836, %v1836
  %v1845 = vpack.c.bf16 %v1837, %v1837
  %v1846 = vpack.c.bf16 %v1838, %v1838
  %v1847 = vpack.c.bf16 %v1839, %v1839
  %v1848 = vpack.c.bf16 %v1840, %v1840
  %v1849 = vpack.c.bf16 %v1841, %v1841
  %vm1850 = vsmask.f32 7942
  %vm1851 = vmand %vm1421, %vm1850
  %v1852 = vld [vmem:[%s4] sm:$0x2]
  %v1853 = vsel %vm1851, %v1842, %v1852
  %1854 = vst [vmem:[%s4] sm:$0x2] %v1853
  %v1855 = vld [vmem:[%s4 + $0x4] sm:$0x2]
  %v1856 = vsel %vm1851, %v1843, %v1855
  %1857 = vst [vmem:[%s4 + $0x4] sm:$0x2] %v1856
  %v1858 = vld [vmem:[%s4 + $0x8] sm:$0x2]
  %v1859 = vsel %vm1851, %v1844, %v1858
  %1860 = vst [vmem:[%s4 + $0x8] sm:$0x2] %v1859
  %v1861 = vld [vmem:[%s4 + $0xc] sm:$0x2]
  %v1862 = vsel %vm1851, %v1845, %v1861
  %1863 = vst [vmem:[%s4 + $0xc] sm:$0x2] %v1862
  %v1864 = vld [vmem:[%s4 + $0x10] sm:$0x2]
  %v1865 = vsel %vm1851, %v1846, %v1864
  %1866 = vst [vmem:[%s4 + $0x10] sm:$0x2] %v1865
  %v1867 = vld [vmem:[%s4 + $0x14] sm:$0x2]
  %v1868 = vsel %vm1851, %v1847, %v1867
  %1869 = vst [vmem:[%s4 + $0x14] sm:$0x2] %v1868
  %v1870 = vld [vmem:[%s4 + $0x18] sm:$0x2]
  %v1871 = vsel %vm1851, %v1848, %v1870
  %1872 = vst [vmem:[%s4 + $0x18] sm:$0x2] %v1871
  %v1873 = vld [vmem:[%s4 + $0x1c] sm:$0x2]
  %v1874 = vsel %vm1851, %v1849, %v1873
  %1875 = vst [vmem:[%s4 + $0x1c] sm:$0x2] %v1874
  %v1876 = vld [vmem:[%s0] sm:$0x44]
  %v1877 = vld [vmem:[%s0 + $0x8] sm:$0x4]
  %v1878 = vld [vmem:[%s0 + $0xc] sm:$0x44]
  %v1879 = vld [vmem:[%s0 + $0x14] sm:$0x4]
  %v1880 = vld [vmem:[%s0 + $0x18] sm:$0x44]
  %v1881 = vld [vmem:[%s0 + $0x20] sm:$0x4]
  %v1882 = vld [vmem:[%s0 + $0x24] sm:$0x44]
  %v1883 = vld [vmem:[%s0 + $0x2c] sm:$0x4]
  %v1884 = vld [vmem:[%s0 + $0x30] sm:$0x44]
  %v1885 = vld [vmem:[%s0 + $0x38] sm:$0x4]
  %v1886 = vld [vmem:[%s0 + $0x3c] sm:$0x44]
  %v1887 = vld [vmem:[%s0 + $0x44] sm:$0x4]
  %v1888 = vld [vmem:[%s0 + $0x48] sm:$0x44]
  %v1889 = vld [vmem:[%s0 + $0x50] sm:$0x4]
  %v1890 = vld [vmem:[%s0 + $0x54] sm:$0x44]
  %v1891 = vld [vmem:[%s0 + $0x5c] sm:$0x4]
  %v1892 = vunpack.c.l.bf16 %v1876
  %v1893 = vunpack.c.h.bf16 %v1876
  %v1894 = vunpack.c.l.bf16 %v1877
  %v1895 = vunpack.c.l.bf16 %v1878
  %v1896 = vunpack.c.h.bf16 %v1878
  %v1897 = vunpack.c.l.bf16 %v1879
  %v1898 = vunpack.c.l.bf16 %v1880
  %v1899 = vunpack.c.h.bf16 %v1880
  %v1900 = vunpack.c.l.bf16 %v1881
  %v1901 = vunpack.c.l.bf16 %v1882
  %v1902 = vunpack.c.h.bf16 %v1882
  %v1903 = vunpack.c.l.bf16 %v1883
  %v1904 = vunpack.c.l.bf16 %v1884
  %v1905 = vunpack.c.h.bf16 %v1884
  %v1906 = vunpack.c.l.bf16 %v1885
  %v1907 = vunpack.c.l.bf16 %v1886
  %v1908 = vunpack.c.h.bf16 %v1886
  %v1909 = vunpack.c.l.bf16 %v1887
  %v1910 = vunpack.c.l.bf16 %v1888
  %v1911 = vunpack.c.h.bf16 %v1888
  %v1912 = vunpack.c.l.bf16 %v1889
  %v1913 = vunpack.c.l.bf16 %v1890
  %v1914 = vunpack.c.h.bf16 %v1890
  %v1915 = vunpack.c.l.bf16 %v1891
  %v1924 = vunpack.c.l.b16 %v1842
  %v1925 = vunpack.c.l.b16 %v1843
  %v1926 = vunpack.c.l.b16 %v1844
  %v1927 = vunpack.c.l.b16 %v1845
  %v1928 = vunpack.c.l.b16 %v1846
  %v1929 = vunpack.c.l.b16 %v1847
  %v1930 = vunpack.c.l.b16 %v1848
  %v1931 = vunpack.c.l.b16 %v1849
  %v1932 = vrot.slane %v1924, 3
  %v1933 = vrot.slane %v1925, 2
  %v1934 = vsel %vm641, %v1933, %v1932
  %v1935 = vrot.slane %v1926, 1
  %v1936 = vsel %vm644, %v1935, %v1934
  %v1937 = vsel %vm647, %v1927, %v1936
  %v1938 = vrot.slane %v1928, 7
  %v1939 = vsel %vm650, %v1938, %v1937
  %v1940 = vrot.slane %v1929, 6
  %v1941 = vsel %vm653, %v1940, %v1939
  %v1942 = vrot.slane %v1930, 5
  %v1943 = vsel %vm656, %v1942, %v1941
  %v1944 = vrot.slane %v1931, 4
  %v1945 = vsel %vm659, %v1944, %v1943
  %v1946 = vpack.c.b16 %v1945, %v1945
  %1948 = vmatprep.subr.bf16.mxu0 %v188
  %1949 = vmatpush1.bf16.msra.mxu0 %v187
  %1950 = vmatprep.subr.bf16.mxu0 %v191
  %1951 = vmatpush1.bf16.msra.mxu0 %v190
  %1952 = vmatprep.subr.bf16.mxu0 %v194
  %1953 = vmatpush1.bf16.msra.mxu0 %v193
  %1954 = vmatprep.subr.bf16.mxu0 %v197
  %1955 = vmatpush1.bf16.msra.mxu0 %v196
  %1956 = vmatprep.subr.bf16.mxu0 %v200
  %1957 = vmatpush1.bf16.msra.mxu0 %v199
  %1958 = vmatprep.subr.bf16.mxu0 %v203
  %1959 = vmatpush1.bf16.msra.mxu0 %v202
  %1960 = vmatprep.subr.bf16.mxu0 %v206
  %1961 = vmatpush1.bf16.msra.mxu0 %v205
  %1962 = vmatprep.subr.bf16.mxu0 %v209
  %1963 = vmatpush1.bf16.msra.mxu0 %v208
  %1964 = vmatprep.subr.bf16.mxu0 0
  %1965 = vmatpush1.bf16.msra.mxu0 0
  %1966 = vmatprep.subr.bf16.mxu0 0
  %1967 = vmatpush1.bf16.msra.mxu0 0
  %1968 = vmatprep.subr.bf16.mxu0 0
  %1969 = vmatpush1.bf16.msra.mxu0 0
  %1970 = vmatprep.subr.bf16.mxu0 0
  %1971 = vmatpush1.bf16.msra.mxu0 0
  %1972 = vmatprep.subr.bf16.mxu0 0
  %1973 = vmatpush1.bf16.msra.mxu0 0
  %1974 = vmatprep.subr.bf16.mxu0 0
  %1975 = vmatpush1.bf16.msra.mxu0 0
  %1976 = vmatprep.subr.bf16.mxu0 0
  %1977 = vmatpush1.bf16.msra.mxu0 0
  %1978 = vmatprep.subr.bf16.mxu0 0
  %1979 = vmatpush1.bf16.msra.mxu0 0
  %1980 = vmatprep.mubr.bf16.mxu0 0
  %1981 = vmatmul.mubr.bf16.gmra.mrb[0].mxu0 %v1946
  %v1982 = vpop.f32.mrb[0].mxu0
  %v1983 = vadd.f32 0.0, %v1982
  %v1984 = vpop.f32.mrb[0].mxu0
  %v1985 = vadd.f32 0.0, %v1984
  %v1986 = vpop.f32.mrb[0].mxu0
  %v1987 = vpop.f32.mrb[0].mxu0
  %1988 = vdwg.mxu0
  %1989 = vmatprep.subr.bf16.mxu0 0
  %1990 = vmatpush1.bf16.msra.mxu0 %v189
  %1991 = vmatprep.subr.bf16.mxu0 0
  %1992 = vmatpush1.bf16.msra.mxu0 %v192
  %1993 = vmatprep.subr.bf16.mxu0 0
  %1994 = vmatpush1.bf16.msra.mxu0 %v195
  %1995 = vmatprep.subr.bf16.mxu0 0
  %1996 = vmatpush1.bf16.msra.mxu0 %v198
  %1997 = vmatprep.subr.bf16.mxu0 0
  %1998 = vmatpush1.bf16.msra.mxu0 %v201
  %1999 = vmatprep.subr.bf16.mxu0 0
  %2000 = vmatpush1.bf16.msra.mxu0 %v204
  %2001 = vmatprep.subr.bf16.mxu0 0
  %2002 = vmatpush1.bf16.msra.mxu0 %v207
  %2003 = vmatprep.subr.bf16.mxu0 0
  %2004 = vmatpush1.bf16.msra.mxu0 %v210
  %2005 = vmatprep.subr.bf16.mxu0 0
  %2006 = vmatpush1.bf16.msra.mxu0 0
  %2007 = vmatprep.subr.bf16.mxu0 0
  %2008 = vmatpush1.bf16.msra.mxu0 0
  %2009 = vmatprep.subr.bf16.mxu0 0
  %2010 = vmatpush1.bf16.msra.mxu0 0
  %2011 = vmatprep.subr.bf16.mxu0 0
  %2012 = vmatpush1.bf16.msra.mxu0 0
  %2013 = vmatprep.subr.bf16.mxu0 0
  %2014 = vmatpush1.bf16.msra.mxu0 0
  %2015 = vmatprep.subr.bf16.mxu0 0
  %2016 = vmatpush1.bf16.msra.mxu0 0
  %2017 = vmatprep.subr.bf16.mxu0 0
  %2018 = vmatpush1.bf16.msra.mxu0 0
  %2019 = vmatprep.subr.bf16.mxu0 0
  %2020 = vmatpush1.bf16.msra.mxu0 0
  %2021 = vmatprep.mubr.bf16.mxu0 0
  %2022 = vmatmul.mubr.bf16.gmra.mrb[0].mxu0 %v1946
  %v2023 = vpop.f32.mrb[0].mxu0
  %v2024 = vadd.f32 0.0, %v2023
  %v2025 = vpop.f32.mrb[0].mxu0
  %v2026 = vpop.f32.mrb[0].mxu0
  %v2027 = vpop.f32.mrb[0].mxu0
  %2028 = vdwg.mxu0
  %v2030 = vrot.slane %v1983, 4
  %v2031 = vrot.slane %v1983, 5
  %v2032 = vrot.slane %v1983, 6
  %v2033 = vrot.slane %v1983, 7
  %v2034 = vrot.slane %v1983, 1
  %v2035 = vrot.slane %v1983, 2
  %v2036 = vrot.slane %v1983, 3
  %v2045 = vadd.f32 %v1892, %v2030
  %v2046 = vadd.f32 %v1895, %v2031
  %v2047 = vadd.f32 %v1898, %v2032
  %v2048 = vadd.f32 %v1901, %v2033
  %v2049 = vadd.f32 %v1904, %v1983
  %v2050 = vadd.f32 %v1907, %v2034
  %v2051 = vadd.f32 %v1910, %v2035
  %v2052 = vadd.f32 %v1913, %v2036
  %v2053 = vxor.u32 %v2045, 2147483648
  %v2054 = vxor.u32 %v2046, 2147483648
  %v2055 = vxor.u32 %v2047, 2147483648
  %v2056 = vxor.u32 %v2048, 2147483648
  %v2057 = vxor.u32 %v2049, 2147483648
  %v2058 = vxor.u32 %v2050, 2147483648
  %v2059 = vxor.u32 %v2051, 2147483648
  %v2060 = vxor.u32 %v2052, 2147483648
  %v2061 = vmul.f32 %v2053, 1.442695
  %v2062 = vpow.pop %v2061
  %v2063 = vmul.f32 %v2054, 1.442695
  %v2064 = vpow.pop %v2063
  %v2065 = vmul.f32 %v2055, 1.442695
  %v2066 = vpow.pop %v2065
  %v2067 = vmul.f32 %v2056, 1.442695
  %v2068 = vpow.pop %v2067
  %v2069 = vmul.f32 %v2057, 1.442695
  %v2070 = vpow.pop %v2069
  %v2071 = vmul.f32 %v2058, 1.442695
  %v2072 = vpow.pop %v2071
  %v2073 = vmul.f32 %v2059, 1.442695
  %v2074 = vpow.pop %v2073
  %v2075 = vmul.f32 %v2060, 1.442695
  %v2076 = vpow.pop %v2075
  %v2077 = vadd.f32 %v2062, 1.0
  %v2078 = vadd.f32 %v2064, 1.0
  %v2079 = vadd.f32 %v2066, 1.0
  %v2080 = vadd.f32 %v2068, 1.0
  %v2081 = vadd.f32 %v2070, 1.0
  %v2082 = vadd.f32 %v2072, 1.0
  %v2083 = vadd.f32 %v2074, 1.0
  %v2084 = vadd.f32 %v2076, 1.0
  %v2085 = vrcp.pop %v2077
  %v2086 = vmul.f32 1.0, %v2085
  %v2087 = vrcp.pop %v2078
  %v2088 = vmul.f32 1.0, %v2087
  %v2089 = vrcp.pop %v2079
  %v2090 = vmul.f32 1.0, %v2089
  %v2091 = vrcp.pop %v2080
  %v2092 = vmul.f32 1.0, %v2091
  %v2093 = vrcp.pop %v2081
  %v2094 = vmul.f32 1.0, %v2093
  %v2095 = vrcp.pop %v2082
  %v2096 = vmul.f32 1.0, %v2095
  %v2097 = vrcp.pop %v2083
  %v2098 = vmul.f32 1.0, %v2097
  %v2099 = vrcp.pop %v2084
  %v2100 = vmul.f32 1.0, %v2099
  %v2102 = vrot.slane %v1985, 4
  %v2103 = vrot.slane %v1985, 5
  %v2104 = vrot.slane %v1985, 6
  %v2105 = vrot.slane %v1985, 7
  %v2106 = vrot.slane %v1985, 1
  %v2107 = vrot.slane %v1985, 2
  %v2108 = vrot.slane %v1985, 3
  %v2117 = vadd.f32 %v1893, %v2102
  %v2118 = vadd.f32 %v1896, %v2103
  %v2119 = vadd.f32 %v1899, %v2104
  %v2120 = vadd.f32 %v1902, %v2105
  %v2121 = vadd.f32 %v1905, %v1985
  %v2122 = vadd.f32 %v1908, %v2106
  %v2123 = vadd.f32 %v1911, %v2107
  %v2124 = vadd.f32 %v1914, %v2108
  %v2125 = vxor.u32 %v2117, 2147483648
  %v2126 = vxor.u32 %v2118, 2147483648
  %v2127 = vxor.u32 %v2119, 2147483648
  %v2128 = vxor.u32 %v2120, 2147483648
  %v2129 = vxor.u32 %v2121, 2147483648
  %v2130 = vxor.u32 %v2122, 2147483648
  %v2131 = vxor.u32 %v2123, 2147483648
  %v2132 = vxor.u32 %v2124, 2147483648
  %v2133 = vmul.f32 %v2125, 1.442695
  %v2134 = vpow.pop %v2133
  %v2135 = vmul.f32 %v2126, 1.442695
  %v2136 = vpow.pop %v2135
  %v2137 = vmul.f32 %v2127, 1.442695
  %v2138 = vpow.pop %v2137
  %v2139 = vmul.f32 %v2128, 1.442695
  %v2140 = vpow.pop %v2139
  %v2141 = vmul.f32 %v2129, 1.442695
  %v2142 = vpow.pop %v2141
  %v2143 = vmul.f32 %v2130, 1.442695
  %v2144 = vpow.pop %v2143
  %v2145 = vmul.f32 %v2131, 1.442695
  %v2146 = vpow.pop %v2145
  %v2147 = vmul.f32 %v2132, 1.442695
  %v2148 = vpow.pop %v2147
  %v2149 = vadd.f32 %v2134, 1.0
  %v2150 = vadd.f32 %v2136, 1.0
  %v2151 = vadd.f32 %v2138, 1.0
  %v2152 = vadd.f32 %v2140, 1.0
  %v2153 = vadd.f32 %v2142, 1.0
  %v2154 = vadd.f32 %v2144, 1.0
  %v2155 = vadd.f32 %v2146, 1.0
  %v2156 = vadd.f32 %v2148, 1.0
  %v2157 = vrcp.pop %v2149
  %v2158 = vmul.f32 1.0, %v2157
  %v2159 = vrcp.pop %v2150
  %v2160 = vmul.f32 1.0, %v2159
  %v2161 = vrcp.pop %v2151
  %v2162 = vmul.f32 1.0, %v2161
  %v2163 = vrcp.pop %v2152
  %v2164 = vmul.f32 1.0, %v2163
  %v2165 = vrcp.pop %v2153
  %v2166 = vmul.f32 1.0, %v2165
  %v2167 = vrcp.pop %v2154
  %v2168 = vmul.f32 1.0, %v2167
  %v2169 = vrcp.pop %v2155
  %v2170 = vmul.f32 1.0, %v2169
  %v2171 = vrcp.pop %v2156
  %v2172 = vmul.f32 1.0, %v2171
  %v2173 = vadd.f32 %v2024, %v63
  %v2175 = vrot.slane %v2173, 4
  %v2176 = vrot.slane %v2173, 5
  %v2177 = vrot.slane %v2173, 6
  %v2178 = vrot.slane %v2173, 7
  %v2179 = vrot.slane %v2173, 1
  %v2180 = vrot.slane %v2173, 2
  %v2181 = vrot.slane %v2173, 3
  %v2190 = vmul.f32 %v2086, %v2175
  %v2191 = vmul.f32 %v2088, %v2176
  %v2192 = vmul.f32 %v2090, %v2177
  %v2193 = vmul.f32 %v2092, %v2178
  %v2194 = vmul.f32 %v2094, %v2173
  %v2195 = vmul.f32 %v2096, %v2179
  %v2196 = vmul.f32 %v2098, %v2180
  %v2197 = vmul.f32 %v2100, %v2181
  %v2198 = vadd.f32 %v1894, %v2190
  %v2199 = vadd.f32 %v1897, %v2191
  %v2200 = vadd.f32 %v1900, %v2192
  %v2201 = vadd.f32 %v1903, %v2193
  %v2202 = vadd.f32 %v1906, %v2194
  %v2203 = vadd.f32 %v1909, %v2195
  %v2204 = vadd.f32 %v1912, %v2196
  %v2205 = vadd.f32 %v1915, %v2197
  %v2206 = vtanh.pop %v2198
  %v2207 = vtanh.pop %v2199
  %v2208 = vtanh.pop %v2200
  %v2209 = vtanh.pop %v2201
  %v2210 = vtanh.pop %v2202
  %v2211 = vtanh.pop %v2203
  %v2212 = vtanh.pop %v2204
  %v2213 = vtanh.pop %v2205
  %v2214 = vsub.f32 1.0, %v2158
  %v2215 = vsub.f32 1.0, %v2160
  %v2216 = vsub.f32 1.0, %v2162
  %v2217 = vsub.f32 1.0, %v2164
  %v2218 = vsub.f32 1.0, %v2166
  %v2219 = vsub.f32 1.0, %v2168
  %v2220 = vsub.f32 1.0, %v2170
  %v2221 = vsub.f32 1.0, %v2172
  %v2222 = vmul.f32 %v2214, %v2206
  %v2223 = vmul.f32 %v2215, %v2207
  %v2224 = vmul.f32 %v2216, %v2208
  %v2225 = vmul.f32 %v2217, %v2209
  %v2226 = vmul.f32 %v2218, %v2210
  %v2227 = vmul.f32 %v2219, %v2211
  %v2228 = vmul.f32 %v2220, %v2212
  %v2229 = vmul.f32 %v2221, %v2213
  %v2238 = vrot.slane %v1834, 7
  %v2239 = vrot.slane %v1835, 7
  %v2240 = vrot.slane %v1836, 7
  %v2241 = vrot.slane %v1837, 7
  %v2242 = vrot.slane %v1838, 7
  %v2243 = vrot.slane %v1839, 7
  %v2244 = vrot.slane %v1840, 7
  %v2245 = vrot.slane %v1841, 7
  %v2254 = vmul.f32 %v2158, %v2238
  %v2255 = vmul.f32 %v2160, %v2239
  %v2256 = vmul.f32 %v2162, %v2240
  %v2257 = vmul.f32 %v2164, %v2241
  %v2258 = vmul.f32 %v2166, %v2242
  %v2259 = vmul.f32 %v2168, %v2243
  %v2260 = vmul.f32 %v2170, %v2244
  %v2261 = vmul.f32 %v2172, %v2245
  %v2262 = vadd.f32 %v2222, %v2254
  %v2263 = vadd.f32 %v2223, %v2255
  %v2264 = vadd.f32 %v2224, %v2256
  %v2265 = vadd.f32 %v2225, %v2257
  %v2266 = vadd.f32 %v2226, %v2258
  %v2267 = vadd.f32 %v2227, %v2259
  %v2268 = vadd.f32 %v2228, %v2260
  %v2269 = vadd.f32 %v2229, %v2261
  %v2270 = vpack.c.bf16 %v2262, %v2262
  %v2271 = vpack.c.bf16 %v2263, %v2263
  %v2272 = vpack.c.bf16 %v2264, %v2264
  %v2273 = vpack.c.bf16 %v2265, %v2265
  %v2274 = vpack.c.bf16 %v2266, %v2266
  %v2275 = vpack.c.bf16 %v2267, %v2267
  %v2276 = vpack.c.bf16 %v2268, %v2268
  %v2277 = vpack.c.bf16 %v2269, %v2269
  %vm2278 = vcmask 1042434
  %vm2279 = vsmask.f32 2304
  %vm2280 = vmand %vm2278, %vm2279
  %v2281 = vld [vmem:[%s4] sm:$0x4]
  %v2282 = vsel %vm2280, %v2270, %v2281
  %2283 = vst [vmem:[%s4] sm:$0x4] %v2282
  %v2284 = vld [vmem:[%s4 + $0x4] sm:$0x4]
  %v2285 = vsel %vm2280, %v2271, %v2284
  %2286 = vst [vmem:[%s4 + $0x4] sm:$0x4] %v2285
  %v2287 = vld [vmem:[%s4 + $0x8] sm:$0x4]
  %v2288 = vsel %vm2280, %v2272, %v2287
  %2289 = vst [vmem:[%s4 + $0x8] sm:$0x4] %v2288
  %v2290 = vld [vmem:[%s4 + $0xc] sm:$0x4]
  %v2291 = vsel %vm2280, %v2273, %v2290
  %2292 = vst [vmem:[%s4 + $0xc] sm:$0x4] %v2291
  %v2293 = vld [vmem:[%s4 + $0x10] sm:$0x4]
  %v2294 = vsel %vm2280, %v2274, %v2293
  %2295 = vst [vmem:[%s4 + $0x10] sm:$0x4] %v2294
  %v2296 = vld [vmem:[%s4 + $0x14] sm:$0x4]
  %v2297 = vsel %vm2280, %v2275, %v2296
  %2298 = vst [vmem:[%s4 + $0x14] sm:$0x4] %v2297
  %v2299 = vld [vmem:[%s4 + $0x18] sm:$0x4]
  %v2300 = vsel %vm2280, %v2276, %v2299
  %2301 = vst [vmem:[%s4 + $0x18] sm:$0x4] %v2300
  %v2302 = vld [vmem:[%s4 + $0x1c] sm:$0x4]
  %v2303 = vsel %vm2280, %v2277, %v2302
  %2304 = vst [vmem:[%s4 + $0x1c] sm:$0x4] %v2303
  %v2305 = vld [vmem:[%s0] sm:$0x44]
  %v2306 = vld [vmem:[%s0 + $0x8] sm:$0x4]
  %v2307 = vld [vmem:[%s0 + $0xc] sm:$0x44]
  %v2308 = vld [vmem:[%s0 + $0x14] sm:$0x4]
  %v2309 = vld [vmem:[%s0 + $0x18] sm:$0x44]
  %v2310 = vld [vmem:[%s0 + $0x20] sm:$0x4]
  %v2311 = vld [vmem:[%s0 + $0x24] sm:$0x44]
  %v2312 = vld [vmem:[%s0 + $0x2c] sm:$0x4]
  %v2313 = vld [vmem:[%s0 + $0x30] sm:$0x44]
  %v2314 = vld [vmem:[%s0 + $0x38] sm:$0x4]
  %v2315 = vld [vmem:[%s0 + $0x3c] sm:$0x44]
  %v2316 = vld [vmem:[%s0 + $0x44] sm:$0x4]
  %v2317 = vld [vmem:[%s0 + $0x48] sm:$0x44]
  %v2318 = vld [vmem:[%s0 + $0x50] sm:$0x4]
  %v2319 = vld [vmem:[%s0 + $0x54] sm:$0x44]
  %v2320 = vld [vmem:[%s0 + $0x5c] sm:$0x4]
  %v2321 = vunpack.c.l.bf16 %v2305
  %v2322 = vunpack.c.h.bf16 %v2305
  %v2323 = vunpack.c.l.bf16 %v2306
  %v2324 = vunpack.c.l.bf16 %v2307
  %v2325 = vunpack.c.h.bf16 %v2307
  %v2326 = vunpack.c.l.bf16 %v2308
  %v2327 = vunpack.c.l.bf16 %v2309
  %v2328 = vunpack.c.h.bf16 %v2309
  %v2329 = vunpack.c.l.bf16 %v2310
  %v2330 = vunpack.c.l.bf16 %v2311
  %v2331 = vunpack.c.h.bf16 %v2311
  %v2332 = vunpack.c.l.bf16 %v2312
  %v2333 = vunpack.c.l.bf16 %v2313
  %v2334 = vunpack.c.h.bf16 %v2313
  %v2335 = vunpack.c.l.bf16 %v2314
  %v2336 = vunpack.c.l.bf16 %v2315
  %v2337 = vunpack.c.h.bf16 %v2315
  %v2338 = vunpack.c.l.bf16 %v2316
  %v2339 = vunpack.c.l.bf16 %v2317
  %v2340 = vunpack.c.h.bf16 %v2317
  %v2341 = vunpack.c.l.bf16 %v2318
  %v2342 = vunpack.c.l.bf16 %v2319
  %v2343 = vunpack.c.h.bf16 %v2319
  %v2344 = vunpack.c.l.bf16 %v2320
  %v2353 = vunpack.c.l.b16 %v2270
  %v2354 = vunpack.c.l.b16 %v2271
  %v2355 = vunpack.c.l.b16 %v2272
  %v2356 = vunpack.c.l.b16 %v2273
  %v2357 = vunpack.c.l.b16 %v2274
  %v2358 = vunpack.c.l.b16 %v2275
  %v2359 = vunpack.c.l.b16 %v2276
  %v2360 = vunpack.c.l.b16 %v2277
  %v2361 = vrot.slane %v2353, 4
  %v2362 = vrot.slane %v2354, 3
  %v2363 = vsel %vm641, %v2362, %v2361
  %v2364 = vrot.slane %v2355, 2
  %v2365 = vsel %vm644, %v2364, %v2363
  %v2366 = vrot.slane %v2356, 1
  %v2367 = vsel %vm647, %v2366, %v2365
  %v2368 = vsel %vm650, %v2357, %v2367
  %v2369 = vrot.slane %v2358, 7
  %v2370 = vsel %vm653, %v2369, %v2368
  %v2371 = vrot.slane %v2359, 6
  %v2372 = vsel %vm656, %v2371, %v2370
  %v2373 = vrot.slane %v2360, 5
  %v2374 = vsel %vm659, %v2373, %v2372
  %v2375 = vpack.c.b16 %v2374, %v2374
  %2377 = vmatprep.subr.bf16.mxu0 %v188
  %2378 = vmatpush1.bf16.msra.mxu0 %v187
  %2379 = vmatprep.subr.bf16.mxu0 %v191
  %2380 = vmatpush1.bf16.msra.mxu0 %v190
  %2381 = vmatprep.subr.bf16.mxu0 %v194
  %2382 = vmatpush1.bf16.msra.mxu0 %v193
  %2383 = vmatprep.subr.bf16.mxu0 %v197
  %2384 = vmatpush1.bf16.msra.mxu0 %v196
  %2385 = vmatprep.subr.bf16.mxu0 %v200
  %2386 = vmatpush1.bf16.msra.mxu0 %v199
  %2387 = vmatprep.subr.bf16.mxu0 %v203
  %2388 = vmatpush1.bf16.msra.mxu0 %v202
  %2389 = vmatprep.subr.bf16.mxu0 %v206
  %2390 = vmatpush1.bf16.msra.mxu0 %v205
  %2391 = vmatprep.subr.bf16.mxu0 %v209
  %2392 = vmatpush1.bf16.msra.mxu0 %v208
  %2393 = vmatprep.subr.bf16.mxu0 0
  %2394 = vmatpush1.bf16.msra.mxu0 0
  %2395 = vmatprep.subr.bf16.mxu0 0
  %2396 = vmatpush1.bf16.msra.mxu0 0
  %2397 = vmatprep.subr.bf16.mxu0 0
  %2398 = vmatpush1.bf16.msra.mxu0 0
  %2399 = vmatprep.subr.bf16.mxu0 0
  %2400 = vmatpush1.bf16.msra.mxu0 0
  %2401 = vmatprep.subr.bf16.mxu0 0
  %2402 = vmatpush1.bf16.msra.mxu0 0
  %2403 = vmatprep.subr.bf16.mxu0 0
  %2404 = vmatpush1.bf16.msra.mxu0 0
  %2405 = vmatprep.subr.bf16.mxu0 0
  %2406 = vmatpush1.bf16.msra.mxu0 0
  %2407 = vmatprep.subr.bf16.mxu0 0
  %2408 = vmatpush1.bf16.msra.mxu0 0
  %2409 = vmatprep.mubr.bf16.mxu0 0
  %2410 = vmatmul.mubr.bf16.gmra.mrb[0].mxu0 %v2375
  %v2411 = vpop.f32.mrb[0].mxu0
  %v2412 = vadd.f32 0.0, %v2411
  %v2413 = vpop.f32.mrb[0].mxu0
  %v2414 = vadd.f32 0.0, %v2413
  %v2415 = vpop.f32.mrb[0].mxu0
  %v2416 = vpop.f32.mrb[0].mxu0
  %2417 = vdwg.mxu0
  %2418 = vmatprep.subr.bf16.mxu0 0
  %2419 = vmatpush1.bf16.msra.mxu0 %v189
  %2420 = vmatprep.subr.bf16.mxu0 0
  %2421 = vmatpush1.bf16.msra.mxu0 %v192
  %2422 = vmatprep.subr.bf16.mxu0 0
  %2423 = vmatpush1.bf16.msra.mxu0 %v195
  %2424 = vmatprep.subr.bf16.mxu0 0
  %2425 = vmatpush1.bf16.msra.mxu0 %v198
  %2426 = vmatprep.subr.bf16.mxu0 0
  %2427 = vmatpush1.bf16.msra.mxu0 %v201
  %2428 = vmatprep.subr.bf16.mxu0 0
  %2429 = vmatpush1.bf16.msra.mxu0 %v204
  %2430 = vmatprep.subr.bf16.mxu0 0
  %2431 = vmatpush1.bf16.msra.mxu0 %v207
  %2432 = vmatprep.subr.bf16.mxu0 0
  %2433 = vmatpush1.bf16.msra.mxu0 %v210
  %2434 = vmatprep.subr.bf16.mxu0 0
  %2435 = vmatpush1.bf16.msra.mxu0 0
  %2436 = vmatprep.subr.bf16.mxu0 0
  %2437 = vmatpush1.bf16.msra.mxu0 0
  %2438 = vmatprep.subr.bf16.mxu0 0
  %2439 = vmatpush1.bf16.msra.mxu0 0
  %2440 = vmatprep.subr.bf16.mxu0 0
  %2441 = vmatpush1.bf16.msra.mxu0 0
  %2442 = vmatprep.subr.bf16.mxu0 0
  %2443 = vmatpush1.bf16.msra.mxu0 0
  %2444 = vmatprep.subr.bf16.mxu0 0
  %2445 = vmatpush1.bf16.msra.mxu0 0
  %2446 = vmatprep.subr.bf16.mxu0 0
  %2447 = vmatpush1.bf16.msra.mxu0 0
  %2448 = vmatprep.subr.bf16.mxu0 0
  %2449 = vmatpush1.bf16.msra.mxu0 0
  %2450 = vmatprep.mubr.bf16.mxu0 0
  %2451 = vmatmul.mubr.bf16.gmra.mrb[0].mxu0 %v2375
  %v2452 = vpop.f32.mrb[0].mxu0
  %v2453 = vadd.f32 0.0, %v2452
  %v2454 = vpop.f32.mrb[0].mxu0
  %v2455 = vpop.f32.mrb[0].mxu0
  %v2456 = vpop.f32.mrb[0].mxu0
  %2457 = vdwg.mxu0
  %v2459 = vrot.slane %v2412, 3
  %v2460 = vrot.slane %v2412, 4
  %v2461 = vrot.slane %v2412, 5
  %v2462 = vrot.slane %v2412, 6
  %v2463 = vrot.slane %v2412, 7
  %v2464 = vrot.slane %v2412, 1
  %v2465 = vrot.slane %v2412, 2
  %v2474 = vadd.f32 %v2321, %v2459
  %v2475 = vadd.f32 %v2324, %v2460
  %v2476 = vadd.f32 %v2327, %v2461
  %v2477 = vadd.f32 %v2330, %v2462
  %v2478 = vadd.f32 %v2333, %v2463
  %v2479 = vadd.f32 %v2336, %v2412
  %v2480 = vadd.f32 %v2339, %v2464
  %v2481 = vadd.f32 %v2342, %v2465
  %v2482 = vxor.u32 %v2474, 2147483648
  %v2483 = vxor.u32 %v2475, 2147483648
  %v2484 = vxor.u32 %v2476, 2147483648
  %v2485 = vxor.u32 %v2477, 2147483648
  %v2486 = vxor.u32 %v2478, 2147483648
  %v2487 = vxor.u32 %v2479, 2147483648
  %v2488 = vxor.u32 %v2480, 2147483648
  %v2489 = vxor.u32 %v2481, 2147483648
  %v2490 = vmul.f32 %v2482, 1.442695
  %v2491 = vpow.pop %v2490
  %v2492 = vmul.f32 %v2483, 1.442695
  %v2493 = vpow.pop %v2492
  %v2494 = vmul.f32 %v2484, 1.442695
  %v2495 = vpow.pop %v2494
  %v2496 = vmul.f32 %v2485, 1.442695
  %v2497 = vpow.pop %v2496
  %v2498 = vmul.f32 %v2486, 1.442695
  %v2499 = vpow.pop %v2498
  %v2500 = vmul.f32 %v2487, 1.442695
  %v2501 = vpow.pop %v2500
  %v2502 = vmul.f32 %v2488, 1.442695
  %v2503 = vpow.pop %v2502
  %v2504 = vmul.f32 %v2489, 1.442695
  %v2505 = vpow.pop %v2504
  %v2506 = vadd.f32 %v2491, 1.0
  %v2507 = vadd.f32 %v2493, 1.0
  %v2508 = vadd.f32 %v2495, 1.0
  %v2509 = vadd.f32 %v2497, 1.0
  %v2510 = vadd.f32 %v2499, 1.0
  %v2511 = vadd.f32 %v2501, 1.0
  %v2512 = vadd.f32 %v2503, 1.0
  %v2513 = vadd.f32 %v2505, 1.0
  %v2514 = vrcp.pop %v2506
  %v2515 = vmul.f32 1.0, %v2514
  %v2516 = vrcp.pop %v2507
  %v2517 = vmul.f32 1.0, %v2516
  %v2518 = vrcp.pop %v2508
  %v2519 = vmul.f32 1.0, %v2518
  %v2520 = vrcp.pop %v2509
  %v2521 = vmul.f32 1.0, %v2520
  %v2522 = vrcp.pop %v2510
  %v2523 = vmul.f32 1.0, %v2522
  %v2524 = vrcp.pop %v2511
  %v2525 = vmul.f32 1.0, %v2524
  %v2526 = vrcp.pop %v2512
  %v2527 = vmul.f32 1.0, %v2526
  %v2528 = vrcp.pop %v2513
  %v2529 = vmul.f32 1.0, %v2528
  %v2531 = vrot.slane %v2414, 3
  %v2532 = vrot.slane %v2414, 4
  %v2533 = vrot.slane %v2414, 5
  %v2534 = vrot.slane %v2414, 6
  %v2535 = vrot.slane %v2414, 7
  %v2536 = vrot.slane %v2414, 1
  %v2537 = vrot.slane %v2414, 2
  %v2546 = vadd.f32 %v2322, %v2531
  %v2547 = vadd.f32 %v2325, %v2532
  %v2548 = vadd.f32 %v2328, %v2533
  %v2549 = vadd.f32 %v2331, %v2534
  %v2550 = vadd.f32 %v2334, %v2535
  %v2551 = vadd.f32 %v2337, %v2414
  %v2552 = vadd.f32 %v2340, %v2536
  %v2553 = vadd.f32 %v2343, %v2537
  %v2554 = vxor.u32 %v2546, 2147483648
  %v2555 = vxor.u32 %v2547, 2147483648
  %v2556 = vxor.u32 %v2548, 2147483648
  %v2557 = vxor.u32 %v2549, 2147483648
  %v2558 = vxor.u32 %v2550, 2147483648
  %v2559 = vxor.u32 %v2551, 2147483648
  %v2560 = vxor.u32 %v2552, 2147483648
  %v2561 = vxor.u32 %v2553, 2147483648
  %v2562 = vmul.f32 %v2554, 1.442695
  %v2563 = vpow.pop %v2562
  %v2564 = vmul.f32 %v2555, 1.442695
  %v2565 = vpow.pop %v2564
  %v2566 = vmul.f32 %v2556, 1.442695
  %v2567 = vpow.pop %v2566
  %v2568 = vmul.f32 %v2557, 1.442695
  %v2569 = vpow.pop %v2568
  %v2570 = vmul.f32 %v2558, 1.442695
  %v2571 = vpow.pop %v2570
  %v2572 = vmul.f32 %v2559, 1.442695
  %v2573 = vpow.pop %v2572
  %v2574 = vmul.f32 %v2560, 1.442695
  %v2575 = vpow.pop %v2574
  %v2576 = vmul.f32 %v2561, 1.442695
  %v2577 = vpow.pop %v2576
  %v2578 = vadd.f32 %v2563, 1.0
  %v2579 = vadd.f32 %v2565, 1.0
  %v2580 = vadd.f32 %v2567, 1.0
  %v2581 = vadd.f32 %v2569, 1.0
  %v2582 = vadd.f32 %v2571, 1.0
  %v2583 = vadd.f32 %v2573, 1.0
  %v2584 = vadd.f32 %v2575, 1.0
  %v2585 = vadd.f32 %v2577, 1.0
  %v2586 = vrcp.pop %v2578
  %v2587 = vmul.f32 1.0, %v2586
  %v2588 = vrcp.pop %v2579
  %v2589 = vmul.f32 1.0, %v2588
  %v2590 = vrcp.pop %v2580
  %v2591 = vmul.f32 1.0, %v2590
  %v2592 = vrcp.pop %v2581
  %v2593 = vmul.f32 1.0, %v2592
  %v2594 = vrcp.pop %v2582
  %v2595 = vmul.f32 1.0, %v2594
  %v2596 = vrcp.pop %v2583
  %v2597 = vmul.f32 1.0, %v2596
  %v2598 = vrcp.pop %v2584
  %v2599 = vmul.f32 1.0, %v2598
  %v2600 = vrcp.pop %v2585
  %v2601 = vmul.f32 1.0, %v2600
  %v2602 = vadd.f32 %v2453, %v63
  %v2604 = vrot.slane %v2602, 3
  %v2605 = vrot.slane %v2602, 4
  %v2606 = vrot.slane %v2602, 5
  %v2607 = vrot.slane %v2602, 6
  %v2608 = vrot.slane %v2602, 7
  %v2609 = vrot.slane %v2602, 1
  %v2610 = vrot.slane %v2602, 2
  %v2619 = vmul.f32 %v2515, %v2604
  %v2620 = vmul.f32 %v2517, %v2605
  %v2621 = vmul.f32 %v2519, %v2606
  %v2622 = vmul.f32 %v2521, %v2607
  %v2623 = vmul.f32 %v2523, %v2608
  %v2624 = vmul.f32 %v2525, %v2602
  %v2625 = vmul.f32 %v2527, %v2609
  %v2626 = vmul.f32 %v2529, %v2610
  %v2627 = vadd.f32 %v2323, %v2619
  %v2628 = vadd.f32 %v2326, %v2620
  %v2629 = vadd.f32 %v2329, %v2621
  %v2630 = vadd.f32 %v2332, %v2622
  %v2631 = vadd.f32 %v2335, %v2623
  %v2632 = vadd.f32 %v2338, %v2624
  %v2633 = vadd.f32 %v2341, %v2625
  %v2634 = vadd.f32 %v2344, %v2626
  %v2635 = vtanh.pop %v2627
  %v2636 = vtanh.pop %v2628
  %v2637 = vtanh.pop %v2629
  %v2638 = vtanh.pop %v2630
  %v2639 = vtanh.pop %v2631
  %v2640 = vtanh.pop %v2632
  %v2641 = vtanh.pop %v2633
  %v2642 = vtanh.pop %v2634
  %v2643 = vsub.f32 1.0, %v2587
  %v2644 = vsub.f32 1.0, %v2589
  %v2645 = vsub.f32 1.0, %v2591
  %v2646 = vsub.f32 1.0, %v2593
  %v2647 = vsub.f32 1.0, %v2595
  %v2648 = vsub.f32 1.0, %v2597
  %v2649 = vsub.f32 1.0, %v2599
  %v2650 = vsub.f32 1.0, %v2601
  %v2651 = vmul.f32 %v2643, %v2635
  %v2652 = vmul.f32 %v2644, %v2636
  %v2653 = vmul.f32 %v2645, %v2637
  %v2654 = vmul.f32 %v2646, %v2638
  %v2655 = vmul.f32 %v2647, %v2639
  %v2656 = vmul.f32 %v2648, %v2640
  %v2657 = vmul.f32 %v2649, %v2641
  %v2658 = vmul.f32 %v2650, %v2642
  %v2667 = vrot.slane %v2262, 7
  %v2668 = vrot.slane %v2263, 7
  %v2669 = vrot.slane %v2264, 7
  %v2670 = vrot.slane %v2265, 7
  %v2671 = vrot.slane %v2266, 7
  %v2672 = vrot.slane %v2267, 7
  %v2673 = vrot.slane %v2268, 7
  %v2674 = vrot.slane %v2269, 7
  %v2683 = vmul.f32 %v2587, %v2667
  %v2684 = vmul.f32 %v2589, %v2668
  %v2685 = vmul.f32 %v2591, %v2669
  %v2686 = vmul.f32 %v2593, %v2670
  %v2687 = vmul.f32 %v2595, %v2671
  %v2688 = vmul.f32 %v2597, %v2672
  %v2689 = vmul.f32 %v2599, %v2673
  %v2690 = vmul.f32 %v2601, %v2674
  %v2691 = vadd.f32 %v2651, %v2683
  %v2692 = vadd.f32 %v2652, %v2684
  %v2693 = vadd.f32 %v2653, %v2685
  %v2694 = vadd.f32 %v2654, %v2686
  %v2695 = vadd.f32 %v2655, %v2687
  %v2696 = vadd.f32 %v2656, %v2688
  %v2697 = vadd.f32 %v2657, %v2689
  %v2698 = vadd.f32 %v2658, %v2690
  %v2699 = vpack.c.bf16 %v2691, %v2691
  %v2700 = vpack.c.bf16 %v2692, %v2692
  %v2701 = vpack.c.bf16 %v2693, %v2693
  %v2702 = vpack.c.bf16 %v2694, %v2694
  %v2703 = vpack.c.bf16 %v2695, %v2695
  %v2704 = vpack.c.bf16 %v2696, %v2696
  %v2705 = vpack.c.bf16 %v2697, %v2697
  %v2706 = vpack.c.bf16 %v2698, %v2698
  %vm2707 = vsmask.f32 7946
  %vm2708 = vmand %vm2278, %vm2707
  %v2709 = vld [vmem:[%s4] sm:$0x4]
  %v2710 = vsel %vm2708, %v2699, %v2709
  %2711 = vst [vmem:[%s4] sm:$0x4] %v2710
  %v2712 = vld [vmem:[%s4 + $0x4] sm:$0x4]
  %v2713 = vsel %vm2708, %v2700, %v2712
  %2714 = vst [vmem:[%s4 + $0x4] sm:$0x4] %v2713
  %v2715 = vld [vmem:[%s4 + $0x8] sm:$0x4]
  %v2716 = vsel %vm2708, %v2701, %v2715
  %2717 = vst [vmem:[%s4 + $0x8] sm:$0x4] %v2716
  %v2718 = vld [vmem:[%s4 + $0xc] sm:$0x4]
  %v2719 = vsel %vm2708, %v2702, %v2718
  %2720 = vst [vmem:[%s4 + $0xc] sm:$0x4] %v2719
  %v2721 = vld [vmem:[%s4 + $0x10] sm:$0x4]
  %v2722 = vsel %vm2708, %v2703, %v2721
  %2723 = vst [vmem:[%s4 + $0x10] sm:$0x4] %v2722
  %v2724 = vld [vmem:[%s4 + $0x14] sm:$0x4]
  %v2725 = vsel %vm2708, %v2704, %v2724
  %2726 = vst [vmem:[%s4 + $0x14] sm:$0x4] %v2725
  %v2727 = vld [vmem:[%s4 + $0x18] sm:$0x4]
  %v2728 = vsel %vm2708, %v2705, %v2727
  %2729 = vst [vmem:[%s4 + $0x18] sm:$0x4] %v2728
  %v2730 = vld [vmem:[%s4 + $0x1c] sm:$0x4]
  %v2731 = vsel %vm2708, %v2706, %v2730
  %2732 = vst [vmem:[%s4 + $0x1c] sm:$0x4] %v2731
  %v2733 = vld [vmem:[%s0] sm:$0x88]
  %v2734 = vld [vmem:[%s0 + $0x8] sm:$0x8]
  %v2735 = vld [vmem:[%s0 + $0xc] sm:$0x88]
  %v2736 = vld [vmem:[%s0 + $0x14] sm:$0x8]
  %v2737 = vld [vmem:[%s0 + $0x18] sm:$0x88]
  %v2738 = vld [vmem:[%s0 + $0x20] sm:$0x8]
  %v2739 = vld [vmem:[%s0 + $0x24] sm:$0x88]
  %v2740 = vld [vmem:[%s0 + $0x2c] sm:$0x8]
  %v2741 = vld [vmem:[%s0 + $0x30] sm:$0x88]
  %v2742 = vld [vmem:[%s0 + $0x38] sm:$0x8]
  %v2743 = vld [vmem:[%s0 + $0x3c] sm:$0x88]
  %v2744 = vld [vmem:[%s0 + $0x44] sm:$0x8]
  %v2745 = vld [vmem:[%s0 + $0x48] sm:$0x88]
  %v2746 = vld [vmem:[%s0 + $0x50] sm:$0x8]
  %v2747 = vld [vmem:[%s0 + $0x54] sm:$0x88]
  %v2748 = vld [vmem:[%s0 + $0x5c] sm:$0x8]
  %v2749 = vunpack.c.l.bf16 %v2733
  %v2750 = vunpack.c.h.bf16 %v2733
  %v2751 = vunpack.c.l.bf16 %v2734
  %v2752 = vunpack.c.l.bf16 %v2735
  %v2753 = vunpack.c.h.bf16 %v2735
  %v2754 = vunpack.c.l.bf16 %v2736
  %v2755 = vunpack.c.l.bf16 %v2737
  %v2756 = vunpack.c.h.bf16 %v2737
  %v2757 = vunpack.c.l.bf16 %v2738
  %v2758 = vunpack.c.l.bf16 %v2739
  %v2759 = vunpack.c.h.bf16 %v2739
  %v2760 = vunpack.c.l.bf16 %v2740
  %v2761 = vunpack.c.l.bf16 %v2741
  %v2762 = vunpack.c.h.bf16 %v2741
  %v2763 = vunpack.c.l.bf16 %v2742
  %v2764 = vunpack.c.l.bf16 %v2743
  %v2765 = vunpack.c.h.bf16 %v2743
  %v2766 = vunpack.c.l.bf16 %v2744
  %v2767 = vunpack.c.l.bf16 %v2745
  %v2768 = vunpack.c.h.bf16 %v2745
  %v2769 = vunpack.c.l.bf16 %v2746
  %v2770 = vunpack.c.l.bf16 %v2747
  %v2771 = vunpack.c.h.bf16 %v2747
  %v2772 = vunpack.c.l.bf16 %v2748
  %v2781 = vunpack.c.l.b16 %v2699
  %v2782 = vunpack.c.l.b16 %v2700
  %v2783 = vunpack.c.l.b16 %v2701
  %v2784 = vunpack.c.l.b16 %v2702
  %v2785 = vunpack.c.l.b16 %v2703
  %v2786 = vunpack.c.l.b16 %v2704
  %v2787 = vunpack.c.l.b16 %v2705
  %v2788 = vunpack.c.l.b16 %v2706
  %v2789 = vrot.slane %v2781, 5
  %v2790 = vrot.slane %v2782, 4
  %v2791 = vsel %vm641, %v2790, %v2789
  %v2792 = vrot.slane %v2783, 3
  %v2793 = vsel %vm644, %v2792, %v2791
  %v2794 = vrot.slane %v2784, 2
  %v2795 = vsel %vm647, %v2794, %v2793
  %v2796 = vrot.slane %v2785, 1
  %v2797 = vsel %vm650, %v2796, %v2795
  %v2798 = vsel %vm653, %v2786, %v2797
  %v2799 = vrot.slane %v2787, 7
  %v2800 = vsel %vm656, %v2799, %v2798
  %v2801 = vrot.slane %v2788, 6
  %v2802 = vsel %vm659, %v2801, %v2800
  %v2803 = vpack.c.b16 %v2802, %v2802
  %2805 = vmatprep.subr.bf16.mxu0 %v188
  %2806 = vmatpush1.bf16.msra.mxu0 %v187
  %2807 = vmatprep.subr.bf16.mxu0 %v191
  %2808 = vmatpush1.bf16.msra.mxu0 %v190
  %2809 = vmatprep.subr.bf16.mxu0 %v194
  %2810 = vmatpush1.bf16.msra.mxu0 %v193
  %2811 = vmatprep.subr.bf16.mxu0 %v197
  %2812 = vmatpush1.bf16.msra.mxu0 %v196
  %2813 = vmatprep.subr.bf16.mxu0 %v200
  %2814 = vmatpush1.bf16.msra.mxu0 %v199
  %2815 = vmatprep.subr.bf16.mxu0 %v203
  %2816 = vmatpush1.bf16.msra.mxu0 %v202
  %2817 = vmatprep.subr.bf16.mxu0 %v206
  %2818 = vmatpush1.bf16.msra.mxu0 %v205
  %2819 = vmatprep.subr.bf16.mxu0 %v209
  %2820 = vmatpush1.bf16.msra.mxu0 %v208
  %2821 = vmatprep.subr.bf16.mxu0 0
  %2822 = vmatpush1.bf16.msra.mxu0 0
  %2823 = vmatprep.subr.bf16.mxu0 0
  %2824 = vmatpush1.bf16.msra.mxu0 0
  %2825 = vmatprep.subr.bf16.mxu0 0
  %2826 = vmatpush1.bf16.msra.mxu0 0
  %2827 = vmatprep.subr.bf16.mxu0 0
  %2828 = vmatpush1.bf16.msra.mxu0 0
  %2829 = vmatprep.subr.bf16.mxu0 0
  %2830 = vmatpush1.bf16.msra.mxu0 0
  %2831 = vmatprep.subr.bf16.mxu0 0
  %2832 = vmatpush1.bf16.msra.mxu0 0
  %2833 = vmatprep.subr.bf16.mxu0 0
  %2834 = vmatpush1.bf16.msra.mxu0 0
  %2835 = vmatprep.subr.bf16.mxu0 0
  %2836 = vmatpush1.bf16.msra.mxu0 0
  %2837 = vmatprep.mubr.bf16.mxu0 0
  %2838 = vmatmul.mubr.bf16.gmra.mrb[0].mxu0 %v2803
  %v2839 = vpop.f32.mrb[0].mxu0
  %v2840 = vadd.f32 0.0, %v2839
  %v2841 = vpop.f32.mrb[0].mxu0
  %v2842 = vadd.f32 0.0, %v2841
  %v2843 = vpop.f32.mrb[0].mxu0
  %v2844 = vpop.f32.mrb[0].mxu0
  %2845 = vdwg.mxu0
  %2846 = vmatprep.subr.bf16.mxu0 0
  %2847 = vmatpush1.bf16.msra.mxu0 %v189
  %2848 = vmatprep.subr.bf16.mxu0 0
  %2849 = vmatpush1.bf16.msra.mxu0 %v192
  %2850 = vmatprep.subr.bf16.mxu0 0
  %2851 = vmatpush1.bf16.msra.mxu0 %v195
  %2852 = vmatprep.subr.bf16.mxu0 0
  %2853 = vmatpush1.bf16.msra.mxu0 %v198
  %2854 = vmatprep.subr.bf16.mxu0 0
  %2855 = vmatpush1.bf16.msra.mxu0 %v201
  %2856 = vmatprep.subr.bf16.mxu0 0
  %2857 = vmatpush1.bf16.msra.mxu0 %v204
  %2858 = vmatprep.subr.bf16.mxu0 0
  %2859 = vmatpush1.bf16.msra.mxu0 %v207
  %2860 = vmatprep.subr.bf16.mxu0 0
  %2861 = vmatpush1.bf16.msra.mxu0 %v210
  %2862 = vmatprep.subr.bf16.mxu0 0
  %2863 = vmatpush1.bf16.msra.mxu0 0
  %2864 = vmatprep.subr.bf16.mxu0 0
  %2865 = vmatpush1.bf16.msra.mxu0 0
  %2866 = vmatprep.subr.bf16.mxu0 0
  %2867 = vmatpush1.bf16.msra.mxu0 0
  %2868 = vmatprep.subr.bf16.mxu0 0
  %2869 = vmatpush1.bf16.msra.mxu0 0
  %2870 = vmatprep.subr.bf16.mxu0 0
  %2871 = vmatpush1.bf16.msra.mxu0 0
  %2872 = vmatprep.subr.bf16.mxu0 0
  %2873 = vmatpush1.bf16.msra.mxu0 0
  %2874 = vmatprep.subr.bf16.mxu0 0
  %2875 = vmatpush1.bf16.msra.mxu0 0
  %2876 = vmatprep.subr.bf16.mxu0 0
  %2877 = vmatpush1.bf16.msra.mxu0 0
  %2878 = vmatprep.mubr.bf16.mxu0 0
  %2879 = vmatmul.mubr.bf16.gmra.mrb[0].mxu0 %v2803
  %v2880 = vpop.f32.mrb[0].mxu0
  %v2881 = vadd.f32 0.0, %v2880
  %v2882 = vpop.f32.mrb[0].mxu0
  %v2883 = vpop.f32.mrb[0].mxu0
  %v2884 = vpop.f32.mrb[0].mxu0
  %2885 = vdwg.mxu0
  %v2887 = vrot.slane %v2840, 2
  %v2888 = vrot.slane %v2840, 3
  %v2889 = vrot.slane %v2840, 4
  %v2890 = vrot.slane %v2840, 5
  %v2891 = vrot.slane %v2840, 6
  %v2892 = vrot.slane %v2840, 7
  %v2893 = vrot.slane %v2840, 1
  %v2902 = vadd.f32 %v2749, %v2887
  %v2903 = vadd.f32 %v2752, %v2888
  %v2904 = vadd.f32 %v2755, %v2889
  %v2905 = vadd.f32 %v2758, %v2890
  %v2906 = vadd.f32 %v2761, %v2891
  %v2907 = vadd.f32 %v2764, %v2892
  %v2908 = vadd.f32 %v2767, %v2840
  %v2909 = vadd.f32 %v2770, %v2893
  %v2910 = vxor.u32 %v2902, 2147483648
  %v2911 = vxor.u32 %v2903, 2147483648
  %v2912 = vxor.u32 %v2904, 2147483648
  %v2913 = vxor.u32 %v2905, 2147483648
  %v2914 = vxor.u32 %v2906, 2147483648
  %v2915 = vxor.u32 %v2907, 2147483648
  %v2916 = vxor.u32 %v2908, 2147483648
  %v2917 = vxor.u32 %v2909, 2147483648
  %v2918 = vmul.f32 %v2910, 1.442695
  %v2919 = vpow.pop %v2918
  %v2920 = vmul.f32 %v2911, 1.442695
  %v2921 = vpow.pop %v2920
  %v2922 = vmul.f32 %v2912, 1.442695
  %v2923 = vpow.pop %v2922
  %v2924 = vmul.f32 %v2913, 1.442695
  %v2925 = vpow.pop %v2924
  %v2926 = vmul.f32 %v2914, 1.442695
  %v2927 = vpow.pop %v2926
  %v2928 = vmul.f32 %v2915, 1.442695
  %v2929 = vpow.pop %v2928
  %v2930 = vmul.f32 %v2916, 1.442695
  %v2931 = vpow.pop %v2930
  %v2932 = vmul.f32 %v2917, 1.442695
  %v2933 = vpow.pop %v2932
  %v2934 = vadd.f32 %v2919, 1.0
  %v2935 = vadd.f32 %v2921, 1.0
  %v2936 = vadd.f32 %v2923, 1.0
  %v2937 = vadd.f32 %v2925, 1.0
  %v2938 = vadd.f32 %v2927, 1.0
  %v2939 = vadd.f32 %v2929, 1.0
  %v2940 = vadd.f32 %v2931, 1.0
  %v2941 = vadd.f32 %v2933, 1.0
  %v2942 = vrcp.pop %v2934
  %v2943 = vmul.f32 1.0, %v2942
  %v2944 = vrcp.pop %v2935
  %v2945 = vmul.f32 1.0, %v2944
  %v2946 = vrcp.pop %v2936
  %v2947 = vmul.f32 1.0, %v2946
  %v2948 = vrcp.pop %v2937
  %v2949 = vmul.f32 1.0, %v2948
  %v2950 = vrcp.pop %v2938
  %v2951 = vmul.f32 1.0, %v2950
  %v2952 = vrcp.pop %v2939
  %v2953 = vmul.f32 1.0, %v2952
  %v2954 = vrcp.pop %v2940
  %v2955 = vmul.f32 1.0, %v2954
  %v2956 = vrcp.pop %v2941
  %v2957 = vmul.f32 1.0, %v2956
  %v2959 = vrot.slane %v2842, 2
  %v2960 = vrot.slane %v2842, 3
  %v2961 = vrot.slane %v2842, 4
  %v2962 = vrot.slane %v2842, 5
  %v2963 = vrot.slane %v2842, 6
  %v2964 = vrot.slane %v2842, 7
  %v2965 = vrot.slane %v2842, 1
  %v2974 = vadd.f32 %v2750, %v2959
  %v2975 = vadd.f32 %v2753, %v2960
  %v2976 = vadd.f32 %v2756, %v2961
  %v2977 = vadd.f32 %v2759, %v2962
  %v2978 = vadd.f32 %v2762, %v2963
  %v2979 = vadd.f32 %v2765, %v2964
  %v2980 = vadd.f32 %v2768, %v2842
  %v2981 = vadd.f32 %v2771, %v2965
  %v2982 = vxor.u32 %v2974, 2147483648
  %v2983 = vxor.u32 %v2975, 2147483648
  %v2984 = vxor.u32 %v2976, 2147483648
  %v2985 = vxor.u32 %v2977, 2147483648
  %v2986 = vxor.u32 %v2978, 2147483648
  %v2987 = vxor.u32 %v2979, 2147483648
  %v2988 = vxor.u32 %v2980, 2147483648
  %v2989 = vxor.u32 %v2981, 2147483648
  %v2990 = vmul.f32 %v2982, 1.442695
  %v2991 = vpow.pop %v2990
  %v2992 = vmul.f32 %v2983, 1.442695
  %v2993 = vpow.pop %v2992
  %v2994 = vmul.f32 %v2984, 1.442695
  %v2995 = vpow.pop %v2994
  %v2996 = vmul.f32 %v2985, 1.442695
  %v2997 = vpow.pop %v2996
  %v2998 = vmul.f32 %v2986, 1.442695
  %v2999 = vpow.pop %v2998
  %v3000 = vmul.f32 %v2987, 1.442695
  %v3001 = vpow.pop %v3000
  %v3002 = vmul.f32 %v2988, 1.442695
  %v3003 = vpow.pop %v3002
  %v3004 = vmul.f32 %v2989, 1.442695
  %v3005 = vpow.pop %v3004
  %v3006 = vadd.f32 %v2991, 1.0
  %v3007 = vadd.f32 %v2993, 1.0
  %v3008 = vadd.f32 %v2995, 1.0
  %v3009 = vadd.f32 %v2997, 1.0
  %v3010 = vadd.f32 %v2999, 1.0
  %v3011 = vadd.f32 %v3001, 1.0
  %v3012 = vadd.f32 %v3003, 1.0
  %v3013 = vadd.f32 %v3005, 1.0
  %v3014 = vrcp.pop %v3006
  %v3015 = vmul.f32 1.0, %v3014
  %v3016 = vrcp.pop %v3007
  %v3017 = vmul.f32 1.0, %v3016
  %v3018 = vrcp.pop %v3008
  %v3019 = vmul.f32 1.0, %v3018
  %v3020 = vrcp.pop %v3009
  %v3021 = vmul.f32 1.0, %v3020
  %v3022 = vrcp.pop %v3010
  %v3023 = vmul.f32 1.0, %v3022
  %v3024 = vrcp.pop %v3011
  %v3025 = vmul.f32 1.0, %v3024
  %v3026 = vrcp.pop %v3012
  %v3027 = vmul.f32 1.0, %v3026
  %v3028 = vrcp.pop %v3013
  %v3029 = vmul.f32 1.0, %v3028
  %v3030 = vadd.f32 %v2881, %v63
  %v3032 = vrot.slane %v3030, 2
  %v3033 = vrot.slane %v3030, 3
  %v3034 = vrot.slane %v3030, 4
  %v3035 = vrot.slane %v3030, 5
  %v3036 = vrot.slane %v3030, 6
  %v3037 = vrot.slane %v3030, 7
  %v3038 = vrot.slane %v3030, 1
  %v3047 = vmul.f32 %v2943, %v3032
  %v3048 = vmul.f32 %v2945, %v3033
  %v3049 = vmul.f32 %v2947, %v3034
  %v3050 = vmul.f32 %v2949, %v3035
  %v3051 = vmul.f32 %v2951, %v3036
  %v3052 = vmul.f32 %v2953, %v3037
  %v3053 = vmul.f32 %v2955, %v3030
  %v3054 = vmul.f32 %v2957, %v3038
  %v3055 = vadd.f32 %v2751, %v3047
  %v3056 = vadd.f32 %v2754, %v3048
  %v3057 = vadd.f32 %v2757, %v3049
  %v3058 = vadd.f32 %v2760, %v3050
  %v3059 = vadd.f32 %v2763, %v3051
  %v3060 = vadd.f32 %v2766, %v3052
  %v3061 = vadd.f32 %v2769, %v3053
  %v3062 = vadd.f32 %v2772, %v3054
  %v3063 = vtanh.pop %v3055
  %v3064 = vtanh.pop %v3056
  %v3065 = vtanh.pop %v3057
  %v3066 = vtanh.pop %v3058
  %v3067 = vtanh.pop %v3059
  %v3068 = vtanh.pop %v3060
  %v3069 = vtanh.pop %v3061
  %v3070 = vtanh.pop %v3062
  %v3071 = vsub.f32 1.0, %v3015
  %v3072 = vsub.f32 1.0, %v3017
  %v3073 = vsub.f32 1.0, %v3019
  %v3074 = vsub.f32 1.0, %v3021
  %v3075 = vsub.f32 1.0, %v3023
  %v3076 = vsub.f32 1.0, %v3025
  %v3077 = vsub.f32 1.0, %v3027
  %v3078 = vsub.f32 1.0, %v3029
  %v3079 = vmul.f32 %v3071, %v3063
  %v3080 = vmul.f32 %v3072, %v3064
  %v3081 = vmul.f32 %v3073, %v3065
  %v3082 = vmul.f32 %v3074, %v3066
  %v3083 = vmul.f32 %v3075, %v3067
  %v3084 = vmul.f32 %v3076, %v3068
  %v3085 = vmul.f32 %v3077, %v3069
  %v3086 = vmul.f32 %v3078, %v3070
  %v3095 = vrot.slane %v2691, 7
  %v3096 = vrot.slane %v2692, 7
  %v3097 = vrot.slane %v2693, 7
  %v3098 = vrot.slane %v2694, 7
  %v3099 = vrot.slane %v2695, 7
  %v3100 = vrot.slane %v2696, 7
  %v3101 = vrot.slane %v2697, 7
  %v3102 = vrot.slane %v2698, 7
  %v3111 = vmul.f32 %v3015, %v3095
  %v3112 = vmul.f32 %v3017, %v3096
  %v3113 = vmul.f32 %v3019, %v3097
  %v3114 = vmul.f32 %v3021, %v3098
  %v3115 = vmul.f32 %v3023, %v3099
  %v3116 = vmul.f32 %v3025, %v3100
  %v3117 = vmul.f32 %v3027, %v3101
  %v3118 = vmul.f32 %v3029, %v3102
  %v3119 = vadd.f32 %v3079, %v3111
  %v3120 = vadd.f32 %v3080, %v3112
  %v3121 = vadd.f32 %v3081, %v3113
  %v3122 = vadd.f32 %v3082, %v3114
  %v3123 = vadd.f32 %v3083, %v3115
  %v3124 = vadd.f32 %v3084, %v3116
  %v3125 = vadd.f32 %v3085, %v3117
  %v3126 = vadd.f32 %v3086, %v3118
  %v3127 = vpack.c.bf16 %v3119, %v3119
  %v3128 = vpack.c.bf16 %v3120, %v3120
  %v3129 = vpack.c.bf16 %v3121, %v3121
  %v3130 = vpack.c.bf16 %v3122, %v3122
  %v3131 = vpack.c.bf16 %v3123, %v3123
  %v3132 = vpack.c.bf16 %v3124, %v3124
  %v3133 = vpack.c.bf16 %v3125, %v3125
  %v3134 = vpack.c.bf16 %v3126, %v3126
  %vm3135 = vcmask 1043459
  %vm3136 = vsmask.f32 3328
  %vm3137 = vmand %vm3135, %vm3136
  %v3138 = vld [vmem:[%s4] sm:$0x8]
  %v3139 = vsel %vm3137, %v3127, %v3138
  %3140 = vst [vmem:[%s4] sm:$0x8] %v3139
  %v3141 = vld [vmem:[%s4 + $0x4] sm:$0x8]
  %v3142 = vsel %vm3137, %v3128, %v3141
  %3143 = vst [vmem:[%s4 + $0x4] sm:$0x8] %v3142
  %v3144 = vld [vmem:[%s4 + $0x8] sm:$0x8]
  %v3145 = vsel %vm3137, %v3129, %v3144
  %3146 = vst [vmem:[%s4 + $0x8] sm:$0x8] %v3145
  %v3147 = vld [vmem:[%s4 + $0xc] sm:$0x8]
  %v3148 = vsel %vm3137, %v3130, %v3147
  %3149 = vst [vmem:[%s4 + $0xc] sm:$0x8] %v3148
  %v3150 = vld [vmem:[%s4 + $0x10] sm:$0x8]
  %v3151 = vsel %vm3137, %v3131, %v3150
  %3152 = vst [vmem:[%s4 + $0x10] sm:$0x8] %v3151
  %v3153 = vld [vmem:[%s4 + $0x14] sm:$0x8]
  %v3154 = vsel %vm3137, %v3132, %v3153
  %3155 = vst [vmem:[%s4 + $0x14] sm:$0x8] %v3154
  %v3156 = vld [vmem:[%s4 + $0x18] sm:$0x8]
  %v3157 = vsel %vm3137, %v3133, %v3156
  %3158 = vst [vmem:[%s4 + $0x18] sm:$0x8] %v3157
  %v3159 = vld [vmem:[%s4 + $0x1c] sm:$0x8]
  %v3160 = vsel %vm3137, %v3134, %v3159
  %3161 = vst [vmem:[%s4 + $0x1c] sm:$0x8] %v3160
  %v3162 = vld [vmem:[%s0] sm:$0x88]
  %v3163 = vld [vmem:[%s0 + $0x8] sm:$0x8]
  %v3164 = vld [vmem:[%s0 + $0xc] sm:$0x88]
  %v3165 = vld [vmem:[%s0 + $0x14] sm:$0x8]
  %v3166 = vld [vmem:[%s0 + $0x18] sm:$0x88]
  %v3167 = vld [vmem:[%s0 + $0x20] sm:$0x8]
  %v3168 = vld [vmem:[%s0 + $0x24] sm:$0x88]
  %v3169 = vld [vmem:[%s0 + $0x2c] sm:$0x8]
  %v3170 = vld [vmem:[%s0 + $0x30] sm:$0x88]
  %v3171 = vld [vmem:[%s0 + $0x38] sm:$0x8]
  %v3172 = vld [vmem:[%s0 + $0x3c] sm:$0x88]
  %v3173 = vld [vmem:[%s0 + $0x44] sm:$0x8]
  %v3174 = vld [vmem:[%s0 + $0x48] sm:$0x88]
  %v3175 = vld [vmem:[%s0 + $0x50] sm:$0x8]
  %v3176 = vld [vmem:[%s0 + $0x54] sm:$0x88]
  %v3177 = vld [vmem:[%s0 + $0x5c] sm:$0x8]
  %v3178 = vunpack.c.l.bf16 %v3162
  %v3179 = vunpack.c.h.bf16 %v3162
  %v3180 = vunpack.c.l.bf16 %v3163
  %v3181 = vunpack.c.l.bf16 %v3164
  %v3182 = vunpack.c.h.bf16 %v3164
  %v3183 = vunpack.c.l.bf16 %v3165
  %v3184 = vunpack.c.l.bf16 %v3166
  %v3185 = vunpack.c.h.bf16 %v3166
  %v3186 = vunpack.c.l.bf16 %v3167
  %v3187 = vunpack.c.l.bf16 %v3168
  %v3188 = vunpack.c.h.bf16 %v3168
  %v3189 = vunpack.c.l.bf16 %v3169
  %v3190 = vunpack.c.l.bf16 %v3170
  %v3191 = vunpack.c.h.bf16 %v3170
  %v3192 = vunpack.c.l.bf16 %v3171
  %v3193 = vunpack.c.l.bf16 %v3172
  %v3194 = vunpack.c.h.bf16 %v3172
  %v3195 = vunpack.c.l.bf16 %v3173
  %v3196 = vunpack.c.l.bf16 %v3174
  %v3197 = vunpack.c.h.bf16 %v3174
  %v3198 = vunpack.c.l.bf16 %v3175
  %v3199 = vunpack.c.l.bf16 %v3176
  %v3200 = vunpack.c.h.bf16 %v3176
  %v3201 = vunpack.c.l.bf16 %v3177
  %v3210 = vunpack.c.l.b16 %v3127
  %v3211 = vunpack.c.l.b16 %v3128
  %v3212 = vunpack.c.l.b16 %v3129
  %v3213 = vunpack.c.l.b16 %v3130
  %v3214 = vunpack.c.l.b16 %v3131
  %v3215 = vunpack.c.l.b16 %v3132
  %v3216 = vunpack.c.l.b16 %v3133
  %v3217 = vunpack.c.l.b16 %v3134
  %v3218 = vrot.slane %v3210, 6
  %v3219 = vrot.slane %v3211, 5
  %v3220 = vsel %vm641, %v3219, %v3218
  %v3221 = vrot.slane %v3212, 4
  %v3222 = vsel %vm644, %v3221, %v3220
  %v3223 = vrot.slane %v3213, 3
  %v3224 = vsel %vm647, %v3223, %v3222
  %v3225 = vrot.slane %v3214, 2
  %v3226 = vsel %vm650, %v3225, %v3224
  %v3227 = vrot.slane %v3215, 1
  %v3228 = vsel %vm653, %v3227, %v3226
  %v3229 = vsel %vm656, %v3216, %v3228
  %v3230 = vrot.slane %v3217, 7
  %v3231 = vsel %vm659, %v3230, %v3229
  %v3232 = vpack.c.b16 %v3231, %v3231
  %3234 = vmatprep.subr.bf16.mxu0 %v188
  %3235 = vmatpush1.bf16.msra.mxu0 %v187
  %3236 = vmatprep.subr.bf16.mxu0 %v191
  %3237 = vmatpush1.bf16.msra.mxu0 %v190
  %3238 = vmatprep.subr.bf16.mxu0 %v194
  %3239 = vmatpush1.bf16.msra.mxu0 %v193
  %3240 = vmatprep.subr.bf16.mxu0 %v197
  %3241 = vmatpush1.bf16.msra.mxu0 %v196
  %3242 = vmatprep.subr.bf16.mxu0 %v200
  %3243 = vmatpush1.bf16.msra.mxu0 %v199
  %3244 = vmatprep.subr.bf16.mxu0 %v203
  %3245 = vmatpush1.bf16.msra.mxu0 %v202
  %3246 = vmatprep.subr.bf16.mxu0 %v206
  %3247 = vmatpush1.bf16.msra.mxu0 %v205
  %3248 = vmatprep.subr.bf16.mxu0 %v209
  %3249 = vmatpush1.bf16.msra.mxu0 %v208
  %3250 = vmatprep.subr.bf16.mxu0 0
  %3251 = vmatpush1.bf16.msra.mxu0 0
  %3252 = vmatprep.subr.bf16.mxu0 0
  %3253 = vmatpush1.bf16.msra.mxu0 0
  %3254 = vmatprep.subr.bf16.mxu0 0
  %3255 = vmatpush1.bf16.msra.mxu0 0
  %3256 = vmatprep.subr.bf16.mxu0 0
  %3257 = vmatpush1.bf16.msra.mxu0 0
  %3258 = vmatprep.subr.bf16.mxu0 0
  %3259 = vmatpush1.bf16.msra.mxu0 0
  %3260 = vmatprep.subr.bf16.mxu0 0
  %3261 = vmatpush1.bf16.msra.mxu0 0
  %3262 = vmatprep.subr.bf16.mxu0 0
  %3263 = vmatpush1.bf16.msra.mxu0 0
  %3264 = vmatprep.subr.bf16.mxu0 0
  %3265 = vmatpush1.bf16.msra.mxu0 0
  %3266 = vmatprep.mubr.bf16.mxu0 0
  %3267 = vmatmul.mubr.bf16.gmra.mrb[0].mxu0 %v3232
  %v3268 = vpop.f32.mrb[0].mxu0
  %v3269 = vadd.f32 0.0, %v3268
  %v3270 = vpop.f32.mrb[0].mxu0
  %v3271 = vadd.f32 0.0, %v3270
  %v3272 = vpop.f32.mrb[0].mxu0
  %v3273 = vpop.f32.mrb[0].mxu0
  %3274 = vdwg.mxu0
  %3275 = vmatprep.subr.bf16.mxu0 0
  %3276 = vmatpush1.bf16.msra.mxu0 %v189
  %3277 = vmatprep.subr.bf16.mxu0 0
  %3278 = vmatpush1.bf16.msra.mxu0 %v192
  %3279 = vmatprep.subr.bf16.mxu0 0
  %3280 = vmatpush1.bf16.msra.mxu0 %v195
  %3281 = vmatprep.subr.bf16.mxu0 0
  %3282 = vmatpush1.bf16.msra.mxu0 %v198
  %3283 = vmatprep.subr.bf16.mxu0 0
  %3284 = vmatpush1.bf16.msra.mxu0 %v201
  %3285 = vmatprep.subr.bf16.mxu0 0
  %3286 = vmatpush1.bf16.msra.mxu0 %v204
  %3287 = vmatprep.subr.bf16.mxu0 0
  %3288 = vmatpush1.bf16.msra.mxu0 %v207
  %3289 = vmatprep.subr.bf16.mxu0 0
  %3290 = vmatpush1.bf16.msra.mxu0 %v210
  %3291 = vmatprep.subr.bf16.mxu0 0
  %3292 = vmatpush1.bf16.msra.mxu0 0
  %3293 = vmatprep.subr.bf16.mxu0 0
  %3294 = vmatpush1.bf16.msra.mxu0 0
  %3295 = vmatprep.subr.bf16.mxu0 0
  %3296 = vmatpush1.bf16.msra.mxu0 0
  %3297 = vmatprep.subr.bf16.mxu0 0
  %3298 = vmatpush1.bf16.msra.mxu0 0
  %3299 = vmatprep.subr.bf16.mxu0 0
  %3300 = vmatpush1.bf16.msra.mxu0 0
  %3301 = vmatprep.subr.bf16.mxu0 0
  %3302 = vmatpush1.bf16.msra.mxu0 0
  %3303 = vmatprep.subr.bf16.mxu0 0
  %3304 = vmatpush1.bf16.msra.mxu0 0
  %3305 = vmatprep.subr.bf16.mxu0 0
  %3306 = vmatpush1.bf16.msra.mxu0 0
  %3307 = vmatprep.mubr.bf16.mxu0 0
  %3308 = vmatmul.mubr.bf16.gmra.mrb[0].mxu0 %v3232
  %v3309 = vpop.f32.mrb[0].mxu0
  %v3310 = vadd.f32 0.0, %v3309
  %v3311 = vpop.f32.mrb[0].mxu0
  %v3312 = vpop.f32.mrb[0].mxu0
  %v3313 = vpop.f32.mrb[0].mxu0
  %3314 = vdwg.mxu0
  %v3316 = vrot.slane %v3269, 1
  %v3317 = vrot.slane %v3269, 2
  %v3318 = vrot.slane %v3269, 3
  %v3319 = vrot.slane %v3269, 4
  %v3320 = vrot.slane %v3269, 5
  %v3321 = vrot.slane %v3269, 6
  %v3322 = vrot.slane %v3269, 7
  %v3331 = vadd.f32 %v3178, %v3316
  %v3332 = vadd.f32 %v3181, %v3317
  %v3333 = vadd.f32 %v3184, %v3318
  %v3334 = vadd.f32 %v3187, %v3319
  %v3335 = vadd.f32 %v3190, %v3320
  %v3336 = vadd.f32 %v3193, %v3321
  %v3337 = vadd.f32 %v3196, %v3322
  %v3338 = vadd.f32 %v3199, %v3269
  %v3339 = vxor.u32 %v3331, 2147483648
  %v3340 = vxor.u32 %v3332, 2147483648
  %v3341 = vxor.u32 %v3333, 2147483648
  %v3342 = vxor.u32 %v3334, 2147483648
  %v3343 = vxor.u32 %v3335, 2147483648
  %v3344 = vxor.u32 %v3336, 2147483648
  %v3345 = vxor.u32 %v3337, 2147483648
  %v3346 = vxor.u32 %v3338, 2147483648
  %v3347 = vmul.f32 %v3339, 1.442695
  %v3348 = vpow.pop %v3347
  %v3349 = vmul.f32 %v3340, 1.442695
  %v3350 = vpow.pop %v3349
  %v3351 = vmul.f32 %v3341, 1.442695
  %v3352 = vpow.pop %v3351
  %v3353 = vmul.f32 %v3342, 1.442695
  %v3354 = vpow.pop %v3353
  %v3355 = vmul.f32 %v3343, 1.442695
  %v3356 = vpow.pop %v3355
  %v3357 = vmul.f32 %v3344, 1.442695
  %v3358 = vpow.pop %v3357
  %v3359 = vmul.f32 %v3345, 1.442695
  %v3360 = vpow.pop %v3359
  %v3361 = vmul.f32 %v3346, 1.442695
  %v3362 = vpow.pop %v3361
  %v3363 = vadd.f32 %v3348, 1.0
  %v3364 = vadd.f32 %v3350, 1.0
  %v3365 = vadd.f32 %v3352, 1.0
  %v3366 = vadd.f32 %v3354, 1.0
  %v3367 = vadd.f32 %v3356, 1.0
  %v3368 = vadd.f32 %v3358, 1.0
  %v3369 = vadd.f32 %v3360, 1.0
  %v3370 = vadd.f32 %v3362, 1.0
  %v3371 = vrcp.pop %v3363
  %v3372 = vmul.f32 1.0, %v3371
  %v3373 = vrcp.pop %v3364
  %v3374 = vmul.f32 1.0, %v3373
  %v3375 = vrcp.pop %v3365
  %v3376 = vmul.f32 1.0, %v3375
  %v3377 = vrcp.pop %v3366
  %v3378 = vmul.f32 1.0, %v3377
  %v3379 = vrcp.pop %v3367
  %v3380 = vmul.f32 1.0, %v3379
  %v3381 = vrcp.pop %v3368
  %v3382 = vmul.f32 1.0, %v3381
  %v3383 = vrcp.pop %v3369
  %v3384 = vmul.f32 1.0, %v3383
  %v3385 = vrcp.pop %v3370
  %v3386 = vmul.f32 1.0, %v3385
  %v3388 = vrot.slane %v3271, 1
  %v3389 = vrot.slane %v3271, 2
  %v3390 = vrot.slane %v3271, 3
  %v3391 = vrot.slane %v3271, 4
  %v3392 = vrot.slane %v3271, 5
  %v3393 = vrot.slane %v3271, 6
  %v3394 = vrot.slane %v3271, 7
  %v3403 = vadd.f32 %v3179, %v3388
  %v3404 = vadd.f32 %v3182, %v3389
  %v3405 = vadd.f32 %v3185, %v3390
  %v3406 = vadd.f32 %v3188, %v3391
  %v3407 = vadd.f32 %v3191, %v3392
  %v3408 = vadd.f32 %v3194, %v3393
  %v3409 = vadd.f32 %v3197, %v3394
  %v3410 = vadd.f32 %v3200, %v3271
  %v3411 = vxor.u32 %v3403, 2147483648
  %v3412 = vxor.u32 %v3404, 2147483648
  %v3413 = vxor.u32 %v3405, 2147483648
  %v3414 = vxor.u32 %v3406, 2147483648
  %v3415 = vxor.u32 %v3407, 2147483648
  %v3416 = vxor.u32 %v3408, 2147483648
  %v3417 = vxor.u32 %v3409, 2147483648
  %v3418 = vxor.u32 %v3410, 2147483648
  %v3419 = vmul.f32 %v3411, 1.442695
  %v3420 = vpow.pop %v3419
  %v3421 = vmul.f32 %v3412, 1.442695
  %v3422 = vpow.pop %v3421
  %v3423 = vmul.f32 %v3413, 1.442695
  %v3424 = vpow.pop %v3423
  %v3425 = vmul.f32 %v3414, 1.442695
  %v3426 = vpow.pop %v3425
  %v3427 = vmul.f32 %v3415, 1.442695
  %v3428 = vpow.pop %v3427
  %v3429 = vmul.f32 %v3416, 1.442695
  %v3430 = vpow.pop %v3429
  %v3431 = vmul.f32 %v3417, 1.442695
  %v3432 = vpow.pop %v3431
  %v3433 = vmul.f32 %v3418, 1.442695
  %v3434 = vpow.pop %v3433
  %v3435 = vadd.f32 %v3420, 1.0
  %v3436 = vadd.f32 %v3422, 1.0
  %v3437 = vadd.f32 %v3424, 1.0
  %v3438 = vadd.f32 %v3426, 1.0
  %v3439 = vadd.f32 %v3428, 1.0
  %v3440 = vadd.f32 %v3430, 1.0
  %v3441 = vadd.f32 %v3432, 1.0
  %v3442 = vadd.f32 %v3434, 1.0
  %v3443 = vrcp.pop %v3435
  %v3444 = vmul.f32 1.0, %v3443
  %v3445 = vrcp.pop %v3436
  %v3446 = vmul.f32 1.0, %v3445
  %v3447 = vrcp.pop %v3437
  %v3448 = vmul.f32 1.0, %v3447
  %v3449 = vrcp.pop %v3438
  %v3450 = vmul.f32 1.0, %v3449
  %v3451 = vrcp.pop %v3439
  %v3452 = vmul.f32 1.0, %v3451
  %v3453 = vrcp.pop %v3440
  %v3454 = vmul.f32 1.0, %v3453
  %v3455 = vrcp.pop %v3441
  %v3456 = vmul.f32 1.0, %v3455
  %v3457 = vrcp.pop %v3442
  %v3458 = vmul.f32 1.0, %v3457
  %v3459 = vadd.f32 %v3310, %v63
  %v3461 = vrot.slane %v3459, 1
  %v3462 = vrot.slane %v3459, 2
  %v3463 = vrot.slane %v3459, 3
  %v3464 = vrot.slane %v3459, 4
  %v3465 = vrot.slane %v3459, 5
  %v3466 = vrot.slane %v3459, 6
  %v3467 = vrot.slane %v3459, 7
  %v3476 = vmul.f32 %v3372, %v3461
  %v3477 = vmul.f32 %v3374, %v3462
  %v3478 = vmul.f32 %v3376, %v3463
  %v3479 = vmul.f32 %v3378, %v3464
  %v3480 = vmul.f32 %v3380, %v3465
  %v3481 = vmul.f32 %v3382, %v3466
  %v3482 = vmul.f32 %v3384, %v3467
  %v3483 = vmul.f32 %v3386, %v3459
  %v3484 = vadd.f32 %v3180, %v3476
  %v3485 = vadd.f32 %v3183, %v3477
  %v3486 = vadd.f32 %v3186, %v3478
  %v3487 = vadd.f32 %v3189, %v3479
  %v3488 = vadd.f32 %v3192, %v3480
  %v3489 = vadd.f32 %v3195, %v3481
  %v3490 = vadd.f32 %v3198, %v3482
  %v3491 = vadd.f32 %v3201, %v3483
  %v3492 = vtanh.pop %v3484
  %v3493 = vtanh.pop %v3485
  %v3494 = vtanh.pop %v3486
  %v3495 = vtanh.pop %v3487
  %v3496 = vtanh.pop %v3488
  %v3497 = vtanh.pop %v3489
  %v3498 = vtanh.pop %v3490
  %v3499 = vtanh.pop %v3491
  %v3500 = vsub.f32 1.0, %v3444
  %v3501 = vsub.f32 1.0, %v3446
  %v3502 = vsub.f32 1.0, %v3448
  %v3503 = vsub.f32 1.0, %v3450
  %v3504 = vsub.f32 1.0, %v3452
  %v3505 = vsub.f32 1.0, %v3454
  %v3506 = vsub.f32 1.0, %v3456
  %v3507 = vsub.f32 1.0, %v3458
  %v3508 = vmul.f32 %v3500, %v3492
  %v3509 = vmul.f32 %v3501, %v3493
  %v3510 = vmul.f32 %v3502, %v3494
  %v3511 = vmul.f32 %v3503, %v3495
  %v3512 = vmul.f32 %v3504, %v3496
  %v3513 = vmul.f32 %v3505, %v3497
  %v3514 = vmul.f32 %v3506, %v3498
  %v3515 = vmul.f32 %v3507, %v3499
  %v3524 = vrot.slane %v3119, 7
  %v3525 = vrot.slane %v3120, 7
  %v3526 = vrot.slane %v3121, 7
  %v3527 = vrot.slane %v3122, 7
  %v3528 = vrot.slane %v3123, 7
  %v3529 = vrot.slane %v3124, 7
  %v3530 = vrot.slane %v3125, 7
  %v3531 = vrot.slane %v3126, 7
  %v3540 = vmul.f32 %v3444, %v3524
  %v3541 = vmul.f32 %v3446, %v3525
  %v3542 = vmul.f32 %v3448, %v3526
  %v3543 = vmul.f32 %v3450, %v3527
  %v3544 = vmul.f32 %v3452, %v3528
  %v3545 = vmul.f32 %v3454, %v3529
  %v3546 = vmul.f32 %v3456, %v3530
  %v3547 = vmul.f32 %v3458, %v3531
  %v3548 = vadd.f32 %v3508, %v3540
  %v3549 = vadd.f32 %v3509, %v3541
  %v3550 = vadd.f32 %v3510, %v3542
  %v3551 = vadd.f32 %v3511, %v3543
  %v3552 = vadd.f32 %v3512, %v3544
  %v3553 = vadd.f32 %v3513, %v3545
  %v3554 = vadd.f32 %v3514, %v3546
  %v3555 = vadd.f32 %v3515, %v3547
  %v3556 = vpack.c.bf16 %v3548, %v3548
  %v3557 = vpack.c.bf16 %v3549, %v3549
  %v3558 = vpack.c.bf16 %v3550, %v3550
  %v3559 = vpack.c.bf16 %v3551, %v3551
  %v3560 = vpack.c.bf16 %v3552, %v3552
  %v3561 = vpack.c.bf16 %v3553, %v3553
  %v3562 = vpack.c.bf16 %v3554, %v3554
  %v3563 = vpack.c.bf16 %v3555, %v3555
  %vm3564 = vsmask.f32 7950
  %vm3565 = vmand %vm3135, %vm3564
  %v3566 = vld [vmem:[%s4] sm:$0x8]
  %v3567 = vsel %vm3565, %v3556, %v3566
  %3568 = vst [vmem:[%s4] sm:$0x8] %v3567
  %v3569 = vld [vmem:[%s4 + $0x4] sm:$0x8]
  %v3570 = vsel %vm3565, %v3557, %v3569
  %3571 = vst [vmem:[%s4 + $0x4] sm:$0x8] %v3570
  %v3572 = vld [vmem:[%s4 + $0x8] sm:$0x8]
  %v3573 = vsel %vm3565, %v3558, %v3572
  %3574 = vst [vmem:[%s4 + $0x8] sm:$0x8] %v3573
  %v3575 = vld [vmem:[%s4 + $0xc] sm:$0x8]
  %v3576 = vsel %vm3565, %v3559, %v3575
  %3577 = vst [vmem:[%s4 + $0xc] sm:$0x8] %v3576
  %v3578 = vld [vmem:[%s4 + $0x10] sm:$0x8]
  %v3579 = vsel %vm3565, %v3560, %v3578
  %3580 = vst [vmem:[%s4 + $0x10] sm:$0x8] %v3579
  %v3581 = vld [vmem:[%s4 + $0x14] sm:$0x8]
  %v3582 = vsel %vm3565, %v3561, %v3581
  %3583 = vst [vmem:[%s4 + $0x14] sm:$0x8] %v3582
  %v3584 = vld [vmem:[%s4 + $0x18] sm:$0x8]
  %v3585 = vsel %vm3565, %v3562, %v3584
  %3586 = vst [vmem:[%s4 + $0x18] sm:$0x8] %v3585
  %v3587 = vld [vmem:[%s4 + $0x1c] sm:$0x8]
  %v3588 = vsel %vm3565, %v3563, %v3587
  %3589 = vst [vmem:[%s4 + $0x1c] sm:$0x8] %v3588
  %v3598 = vrot.slane %v3549, 7
  %v3599 = vrot.slane %v3550, 6
  %v3600 = vsel %vm641, %v3599, %v3598
  %v3601 = vrot.slane %v3551, 5
  %v3602 = vsel %vm644, %v3601, %v3600
  %v3603 = vrot.slane %v3552, 4
  %v3604 = vsel %vm647, %v3603, %v3602
  %v3605 = vrot.slane %v3553, 3
  %v3606 = vsel %vm650, %v3605, %v3604
  %v3607 = vrot.slane %v3554, 2
  %v3608 = vsel %vm653, %v3607, %v3606
  %v3609 = vrot.slane %v3555, 1
  %v3610 = vsel %vm656, %v3609, %v3608
  %3613 = vst [vmem:[#allocation2 - $0x7] sm:$0x80] %v3548
  %3614 = vst [vmem:[#allocation2 + $0x1] sm:$0x7f] %v3610
  // Predicated region
  $region22: #{forward.10} parent=0 // pred_check
    %p3615 = pneg %p20
  $region23: #{forward.10} parent=0 // pred_check_branch
    %3617 = sbr.rel (%p3615) target = $region25
  $region24: #{forward.10} parent=0 // pred_region
    %3618 = vst [vmem:[%s5 - $0x7] sm:$0x80] %v3548
    %3619 = vst [vmem:[%s5 + $0x1] sm:$0x7f] %v3610
  $region25: #{forward.10} parent=0 // pred_fallthru
    _
  // Predicated region
  $region26: #{forward.10} parent=0 // pred_check
    _
  $region27: #{forward.10} parent=0 // pred_check_branch
    %3621 = sbr.rel (0) target = $region29
  $region28: #{forward.10} parent=0 // pred_region
    _
  $region29: #{forward.10} parent=0 // pred_fallthru
    _
  // Predicated region
  $region30: #{forward.10} parent=0 // pred_check
    _
  $region31: #{forward.10} parent=0 // pred_check_branch
    %3623 = sbr.rel (0) target = $region33
  $region32: #{forward.10} parent=0 // pred_region
    _
  $region33: #{forward.10} parent=0 // pred_fallthru
    _
  // Predicated region
  $region34: #{forward.10} parent=0 // pred_check
    _
  $region35: #{forward.10} parent=0 // pred_check_branch
    %3625 = sbr.rel (0) target = $region37
  $region36: #{forward.10} parent=0 // pred_region
    _
  $region37: #{forward.10} parent=0 // pred_fallthru
    _
  // Predicated region
  $region38: #{forward.10} parent=0 // pred_check
    _
  $region39: #{forward.10} parent=0 // pred_check_branch
    %3627 = sbr.rel (0) target = $region41
  $region40: #{forward.10} parent=0 // pred_region
    _
  $region41: #{forward.10} parent=0 // pred_fallthru
    _

</llo_original>
